<compile_context>
chip_gen: v7x
topology: tpu7x:2x2x1
jax: 0.10.0
libtpu: 0.0.40
codegen_flags: <defaults>
</compile_context>

<pallas_src>
import functools

import jax
import jax.numpy as jnp
from jax import lax
from jax.experimental import pallas as pl
from jax.experimental.pallas import tpu as pltpu

EPS = 1e-8
LRELU_SLOPE = 0.2


# ----------------------------------------------------------------------------
# Fused kernel:
#   step j (j = 0..grid-1):
#     pixel-norm(z) @ W_fmt[:, tile_j] + b  -> leaky_relu
#     scatter the tile's pixels into the zero-padded NHWC slab (VMEM scratch)
#   last step additionally:
#     pixel-norm -> 3x3 conv (9 shifted MXU matmuls) + bias -> leaky_relu
#     -> pixel-norm -> 1x1 to_rgb (lane-dense, out-features padded to 128)
# ----------------------------------------------------------------------------
def _make_fused_kernel(B, K, C, tile_n, H=4, W=4):
    rows_per_step = tile_n // (W * C)          # spatial rows of the 4x4 map per step
    assert rows_per_step * W * C == tile_n

    def kernel(z_ref, wf_ref, bf_ref, wc3_ref, bc3_ref, wrgb_ref, brgb_ref,
               o_ref, hp_ref):
        j = pl.program_id(0)

        # hp_ref is the zero-padded NHWC activation slab (B, H+2, W+2, C).
        # VMEM scratch is uninitialized and persists across calls, so it must be
        # cleared on every invocation (first grid step) before interior writes.
        @pl.when(j == 0)
        def _():
            hp_ref[...] = jnp.zeros_like(hp_ref)

        # ---- format layer tile: pixel-norm(z) @ W[:, tile] + b, leaky relu ----
        z = z_ref[...]                                           # (B, K) f32
        inv = lax.rsqrt(jnp.mean(z * z, axis=1, keepdims=True) + EPS)
        zn = z * inv                                             # pixel norm over latent
        w = wf_ref[...].astype(jnp.float32)                      # bf16 HBM -> f32 MXU
        y = jnp.dot(zn, w, preferred_element_type=jnp.float32) + bf_ref[...]
        y = jnp.where(y >= 0.0, y, LRELU_SLOPE * y)              # (B, tile_n)

        # W_fmt columns were permuted at init to (h, w, c) order, so each 256-lane
        # chunk of `y` is exactly one pixel's channel vector: scatter it into the
        # padded slab with plain lane slices (no in-kernel reshape / relayout of
        # the matmul result).
        for r in range(rows_per_step):
            pi = 1 + j * rows_per_step + r                       # padded row index
            for wj in range(W):
                off = (r * W + wj) * C
                hp_ref[:, pi, 1 + wj, :] = y[:, off:off + C]

        # ---- last step: norm -> 3x3 conv -> leaky -> norm -> 1x1 to_rgb -------
        @pl.when(j == pl.num_programs(0) - 1)
        def _():
            hp = hp_ref[...]                                     # (B, H+2, W+2, C)
            # pre-conv pixel norm over channels; zero border stays zero
            inv1 = lax.rsqrt(jnp.mean(hp * hp, axis=-1, keepdims=True) + EPS)
            xn = hp * inv1

            # 9 shifted MXU matmuls == 3x3 conv with pad=1; accumulate in f32
            acc = jnp.zeros((B, H, W, C), jnp.float32)
            for di in range(3):
                for dj in range(3):
                    tap = xn[:, di:di + H, dj:dj + W, :]         # (B, H, W, C)
                    acc = acc + lax.dot_general(
                        tap, wc3_ref[di, dj].astype(jnp.float32),
                        dimension_numbers=(((3,), (0,)), ((), ())),
                        preferred_element_type=jnp.float32)
            acc = acc + bc3_ref[...].reshape(1, 1, 1, C)
            act = jnp.where(acc >= 0.0, acc, LRELU_SLOPE * acc)  # leaky relu 0.2

            inv2 = lax.rsqrt(jnp.mean(act * act, axis=-1, keepdims=True) + EPS)
            nrm = act * inv2                                     # post-conv pixel norm

            rgb = lax.dot_general(
                nrm, wrgb_ref[...].astype(jnp.float32),          # (C, rgb_pad)
                dimension_numbers=(((3,), (0,)), ((), ())),
                preferred_element_type=jnp.float32)
            o_ref[...] = rgb + brgb_ref[...].reshape(1, 1, 1, brgb_ref.shape[-1])

    return kernel


def fused_generator_call(z, kp, *, tile_n=2048):
    B, K = z.shape
    C = kp["w_c3"].shape[-1]
    N = kp["w_fmt"].shape[1]
    rgb_pad = kp["w_rgb"].shape[-1]
    assert N % tile_n == 0

    kernel = _make_fused_kernel(B, K, C, tile_n)
    return pl.pallas_call(
        kernel,
        out_shape=jax.ShapeDtypeStruct((B, 4, 4, rgb_pad), jnp.float32),
        grid_spec=pltpu.PrefetchScalarGridSpec(
            num_scalar_prefetch=0,
            grid=(N // tile_n,),
            in_specs=[
                pl.BlockSpec((B, K), lambda j: (0, 0)),               # z
                pl.BlockSpec((K, tile_n), lambda j: (0, j)),          # w_fmt (bf16)
                pl.BlockSpec((1, tile_n), lambda j: (0, j)),          # b_fmt
                pl.BlockSpec((3, 3, C, C), lambda j: (0, 0, 0, 0)),   # w_c3 (bf16)
                pl.BlockSpec((1, C), lambda j: (0, 0)),               # b_c3
                pl.BlockSpec((C, rgb_pad), lambda j: (0, 0)),         # w_rgb (bf16)
                pl.BlockSpec((1, rgb_pad), lambda j: (0, 0)),         # b_rgb
            ],
            out_specs=pl.BlockSpec((B, 4, 4, rgb_pad), lambda j: (0, 0, 0, 0)),
            scratch_shapes=[pltpu.VMEM((B, 6, 6, C), jnp.float32)],   # padded NHWC slab
        ),
        compiler_params=pltpu.CompilerParams(
            # grid axis carries the scratch-slab dependency -> must be arbitrary
            dimension_semantics=("arbitrary",),
            vmem_limit_bytes=32 << 20,
        ),
    )(z, kp["w_fmt"], kp["b_fmt"], kp["w_c3"], kp["b_c3"], kp["w_rgb"], kp["b_rgb"])


# ----------------------------------------------------------------------------
# Parameter construction (deterministic, PyTorch-shaped) + one-time preparation
# into kernel-friendly layouts (transposed, scaled, permuted, bf16, padded).
# ----------------------------------------------------------------------------
def init_params(key, frames_per_clip, dim_latent=1024, depth=256):
    dim_out = 3 * frames_per_clip
    k1, k2, k3 = jax.random.split(key, 3)
    torch_params = {
        "w_fmt": jax.random.normal(k1, (16 * depth, dim_latent), jnp.float32),  # (out, in)
        "b_fmt": jnp.zeros((16 * depth,), jnp.float32),
        "w_c3": jax.random.normal(k2, (depth, depth, 3, 3), jnp.float32),        # OIHW
        "b_c3": jnp.zeros((depth,), jnp.float32),
        "w_rgb": jax.random.normal(k3, (dim_out, depth, 1, 1), jnp.float32),     # OIHW
        "b_rgb": jnp.zeros((dim_out,), jnp.float32),
    }
    scales = {
        "fmt": jnp.sqrt(2.0 / dim_latent),
        "c3": jnp.sqrt(2.0 / (depth * 3 * 3)),
        "rgb": jnp.sqrt(2.0 / (depth * 1 * 1)),
    }
    return torch_params, scales


def prepare_kernel_params(torch_params, scales, depth=256):
    """One-time (init) weight prep; the jitted forward never rewrites weights."""
    dim_out = torch_params["w_rgb"].shape[0]
    rgb_pad = ((dim_out + 127) // 128) * 128                      # lane-dense to_rgb

    w_fmt_t = torch_params["w_fmt"].T * scales["fmt"]             # (K, 16*depth), cols (C,H,W)
    K = w_fmt_t.shape[0]
    # Permute output features (C,H,W) -> (H,W,C) so each 256-lane chunk of a
    # matmul tile is one pixel's channel vector (NHWC order).
    w_fmt_nhwc = (w_fmt_t.reshape(K, depth, 4, 4)
                  .transpose(0, 2, 3, 1).reshape(K, 16 * depth))
    b_fmt_nhwc = (torch_params["b_fmt"].reshape(depth, 4, 4)
                  .transpose(1, 2, 0).reshape(1, 16 * depth))

    w_rgb_t = torch_params["w_rgb"][:, :, 0, 0].T * scales["rgb"]  # (depth, dim_out)
    w_rgb_p = jnp.pad(w_rgb_t, ((0, 0), (0, rgb_pad - dim_out)))
    b_rgb_p = jnp.pad(torch_params["b_rgb"][None, :], ((0, 0), (0, rgb_pad - dim_out)))

    return {
        "w_fmt": w_fmt_nhwc.astype(jnp.bfloat16),                  # (1024, 4096) bf16
        "b_fmt": b_fmt_nhwc,                                       # (1, 4096) f32
        "w_c3": (torch_params["w_c3"].transpose(2, 3, 1, 0)        # HWIO
                 * scales["c3"]).astype(jnp.bfloat16),             # (3,3,256,256) bf16
        "b_c3": torch_params["b_c3"][None, :],                     # (1, 256) f32
        "w_rgb": w_rgb_p.astype(jnp.bfloat16),                     # (256, 128) bf16
        "b_rgb": b_rgb_p,                                          # (1, 128) f32
    }


# ----------------------------------------------------------------------------
# Full forward: single fused Pallas kernel + tiny final slice/transpose/view.
# ----------------------------------------------------------------------------
@functools.partial(jax.jit, static_argnums=(2,))
def generator_forward(z, kparams, frames_per_clip):
    B = z.shape[0]
    dim_out = 3 * frames_per_clip
    y = fused_generator_call(z, kparams, tile_n=2048)             # (B, 4, 4, rgb_pad) NHWC
    # drop lane padding + NHWC->NCHW (768 B), then the GeneratorFormat view
    y = y[..., :dim_out].transpose(0, 3, 1, 2)                    # (B, dim_out, 4, 4)
    return y.reshape(B, 3, frames_per_clip, 4, 4)


# ----------------------------------------------------------------------------
# Pure-JAX reference (mirrors the PyTorch graph in NCHW).  It uses the same
# bf16-quantized weights the kernel streams from HBM so the tolerance check
# validates the kernel, not the storage precision choice.
# ----------------------------------------------------------------------------
def reference_forward(z, params, scales, frames_per_clip):
    def pixel_norm(x, axis):
        return x * lax.rsqrt(jnp.mean(x * x, axis=axis, keepdims=True) + EPS)

    def lrelu(x):
        return jnp.where(x >= 0.0, x, LRELU_SLOPE * x)

    def q(w):  # identical bf16 weight-storage quantization as prepare_kernel_params
        return w.astype(jnp.bfloat16).astype(jnp.float32)

    B = z.shape[0]
    depth = params["w_c3"].shape[0]
    w_fmt = q(params["w_fmt"] * scales["fmt"])
    w_c3 = q(params["w_c3"] * scales["c3"])
    w_rgb = q(params["w_rgb"] * scales["rgb"])

    x = pixel_norm(z, 1)
    x = lrelu(jnp.dot(x, w_fmt.T, precision=lax.Precision.HIGHEST) + params["b_fmt"])
    x = x.reshape(B, depth, 4, 4)
    x = pixel_norm(x, 1)
    x = lax.conv_general_dilated(
        x, w_c3, (1, 1), [(1, 1), (1, 1)],
        dimension_numbers=("NCHW", "OIHW", "NCHW"),
        precision=lax.Precision.HIGHEST) + params["b_c3"][None, :, None, None]
    x = pixel_norm(lrelu(x), 1)
    x = lax.conv_general_dilated(
        x, w_rgb, (1, 1), [(0, 0), (0, 0)],
        dimension_numbers=("NCHW", "OIHW", "NCHW"),
        precision=lax.Precision.HIGHEST) + params["b_rgb"][None, :, None, None]
    return x.reshape(B, 3, frames_per_clip, 4, 4)


if __name__ == "__main__":
    frames_per_clip = 2
    batch = 2
    dim_latent = 1024

    key = jax.random.PRNGKey(0)
    k_param, k_z = jax.random.split(key)
    torch_params, scales = init_params(k_param, frames_per_clip)
    kparams = prepare_kernel_params(torch_params, scales)
    z = jax.random.normal(k_z, (batch, dim_latent), jnp.float32)

    out = generator_forward(z, kparams, frames_per_clip)
    out = jax.block_until_ready(out)

    ref = reference_forward(z, torch_params, scales, frames_per_clip)
    assert out.shape == (batch, 3, frames_per_clip, 4, 4), out.shape
    max_err = float(jnp.max(jnp.abs(out - ref)))
    assert jnp.allclose(out, ref, rtol=2e-3, atol=2e-3), max_err

    print("KERNEL_OK")
</pallas_src>

<mosaic_0001>
module attributes {stable_mosaic.version = 11 : i64} {
  func.func @kernel(%arg0: i32, %arg1: memref<2x1024xf32, #tpu.memory_space<vmem>>, %arg2: memref<1024x2048xbf16, #tpu.memory_space<vmem>>, %arg3: memref<1x2048xf32, #tpu.memory_space<vmem>>, %arg4: memref<3x3x256x256xbf16, #tpu.memory_space<vmem>>, %arg5: memref<1x256xf32, #tpu.memory_space<vmem>>, %arg6: memref<256x128xbf16, #tpu.memory_space<vmem>>, %arg7: memref<1x128xf32, #tpu.memory_space<vmem>>, %arg8: memref<2x4x4x128xf32, #tpu.memory_space<vmem>>, %arg9: memref<2x6x6x256xf32, #tpu.memory_space<vmem>>) attributes {dimension_semantics = [#tpu.dimension_semantics<arbitrary>], iteration_bounds = array<i64: 2>, scalar_prefetch = 0 : i64, scratch_operands = 1 : i64, tpu.core_type = #tpu.core_type<tc>, window_params = [{pipeline_mode = #tpu.pipeline_mode<synchronous>, transform_indices = @transform_0, window_bounds = array<i64: 2, 1024>}, {transform_indices = @transform_1, window_bounds = array<i64: 1024, 2048>}, {transform_indices = @transform_2, window_bounds = array<i64: 1, 2048>}, {pipeline_mode = #tpu.pipeline_mode<synchronous>, transform_indices = @transform_3, window_bounds = array<i64: 3, 3, 256, 256>}, {pipeline_mode = #tpu.pipeline_mode<synchronous>, transform_indices = @transform_4, window_bounds = array<i64: 1, 256>}, {pipeline_mode = #tpu.pipeline_mode<synchronous>, transform_indices = @transform_5, window_bounds = array<i64: 256, 128>}, {pipeline_mode = #tpu.pipeline_mode<synchronous>, transform_indices = @transform_6, window_bounds = array<i64: 1, 128>}, {pipeline_mode = #tpu.pipeline_mode<synchronous>, transform_indices = @transform_7, window_bounds = array<i64: 2, 4, 4, 128>}]} {
    %c0_i32 = arith.constant 0 : i32
    %0 = arith.cmpi eq, %arg0, %c0_i32 : i32
    %1 = arith.extui %0 : i1 to i32
    %c0_i32_0 = arith.constant 0 : i32
    %2 = arith.cmpi ne, %1, %c0_i32_0 : i32
    scf.if %2 {
      %cst_37 = arith.constant 0.000000e+00 : f32
      %74 = vector.broadcast %cst_37 : f32 to vector<2x6x6x256xf32>
      %c0_38 = arith.constant 0 : index
      %c0_39 = arith.constant 0 : index
      %c0_40 = arith.constant 0 : index
      %c0_41 = arith.constant 0 : index
      %75 = vector.load %arg9[%c0_38, %c0_39, %c0_40, %c0_41] : memref<2x6x6x256xf32, #tpu.memory_space<vmem>>, vector<2x6x6x256xf32>
      tpu.vector_store %arg9[%c0_38, %c0_39, %c0_40, %c0_41], %74 {strides = array<i32>} : memref<2x6x6x256xf32, #tpu.memory_space<vmem>>, vector<2x6x6x256xf32>,
    } else {
    }
    %c0 = arith.constant 0 : index
    %c0_1 = arith.constant 0 : index
    %3 = vector.load %arg1[%c0, %c0_1] : memref<2x1024xf32, #tpu.memory_space<vmem>>, vector<2x1024xf32>
    %4 = arith.mulf %3, %3 : vector<2x1024xf32>
    %cst = arith.constant dense<0.000000e+00> : vector<2xf32>
    %5 = vector.multi_reduction <add>, %4, %cst [1] : vector<2x1024xf32> to vector<2xf32>
    %6 = vector.shape_cast %5 : vector<2xf32> to vector<2x1xf32>
    %cst_2 = arith.constant 1.024000e+03 : f32
    %7 = vector.broadcast %cst_2 : f32 to vector<2x1xf32>
    %8 = arith.divf %6, %7 : vector<2x1xf32>
    %cst_3 = arith.constant 9.99999993E-9 : f32
    %9 = vector.broadcast %cst_3 : f32 to vector<2x1xf32>
    %10 = arith.addf %8, %9 : vector<2x1xf32>
    %11 = math.rsqrt %10 : vector<2x1xf32>
    %12 = vector.broadcast %11 : vector<2x1xf32> to vector<2x1024xf32>
    %13 = arith.mulf %3, %12 : vector<2x1024xf32>
    %c0_4 = arith.constant 0 : index
    %c0_5 = arith.constant 0 : index
    %14 = vector.load %arg2[%c0_4, %c0_5] : memref<1024x2048xbf16, #tpu.memory_space<vmem>>, vector<1024x2048xbf16>
    %15 = arith.extf %14 : vector<1024x2048xbf16> to vector<1024x2048xf32>
    %cst_6 = arith.constant dense<0.000000e+00> : vector<2x2048xf32>
    %16 = tpu.matmul %13, %15, %cst_6 {dimension_numbers = #tpu.dot_dimension_numbers<[1], [0], [0], [1], [0, 0, 1, 1], [], []>} : vector<2x1024xf32>, vector<1024x2048xf32>, vector<2x2048xf32> -> vector<2x2048xf32>
    %c0_7 = arith.constant 0 : index
    %c0_8 = arith.constant 0 : index
    %17 = vector.load %arg3[%c0_7, %c0_8] : memref<1x2048xf32, #tpu.memory_space<vmem>>, vector<1x2048xf32>
    %18 = vector.broadcast %17 : vector<1x2048xf32> to vector<2x2048xf32>
    %19 = arith.addf %16, %18 : vector<2x2048xf32>
    %cst_9 = arith.constant 0.000000e+00 : f32
    %20 = vector.broadcast %cst_9 : f32 to vector<2x2048xf32>
    %21 = arith.cmpf oge, %19, %20 : vector<2x2048xf32>
    %cst_10 = arith.constant 2.000000e-01 : f32
    %22 = vector.broadcast %cst_10 : f32 to vector<2x2048xf32>
    %23 = arith.mulf %22, %19 : vector<2x2048xf32>
    %24 = arith.select %21, %19, %23 : vector<2x2048xi1>, vector<2x2048xf32>
    %c2_i32 = arith.constant 2 : i32
    %25 = arith.muli %arg0, %c2_i32 : i32
    %c1_i32 = arith.constant 1 : i32
    %26 = arith.addi %c1_i32, %25 : i32
    %c0_i32_11 = arith.constant 0 : i32
    %27 = arith.addi %26, %c0_i32_11 : i32
    %28 = vector.extract_strided_slice %24 {offsets = [0, 0], sizes = [2, 256], strides = [1, 1]} : vector<2x2048xf32> to vector<2x256xf32>
    %c0_12 = arith.constant 0 : index
    %29 = arith.index_cast %27 : i32 to index
    %c1 = arith.constant 1 : index
    %c0_13 = arith.constant 0 : index
    %30 = vector.load %arg9[%c0_12, %29, %c1, %c0_13] : memref<2x6x6x256xf32, #tpu.memory_space<vmem>>, vector<2x1x1x256xf32>
    %31 = vector.shape_cast %30 : vector<2x1x1x256xf32> to vector<2x256xf32>
    %32 = vector.shape_cast %28 : vector<2x256xf32> to vector<2x1x1x256xf32>
    tpu.vector_store %arg9[%c0_12, %29, %c1, %c0_13], %32 {strides = array<i32>} : memref<2x6x6x256xf32, #tpu.memory_space<vmem>>, vector<2x1x1x256xf32>,
    %33 = vector.extract_strided_slice %24 {offsets = [0, 256], sizes = [2, 256], strides = [1, 1]} : vector<2x2048xf32> to vector<2x256xf32>
    %c0_14 = arith.constant 0 : index
    %34 = arith.index_cast %27 : i32 to index
    %c2 = arith.constant 2 : index
    %c0_15 = arith.constant 0 : index
    %35 = vector.load %arg9[%c0_14, %34, %c2, %c0_15] : memref<2x6x6x256xf32, #tpu.memory_space<vmem>>, vector<2x1x1x256xf32>
    %36 = vector.shape_cast %35 : vector<2x1x1x256xf32> to vector<2x256xf32>
    %37 = vector.shape_cast %33 : vector<2x256xf32> to vector<2x1x1x256xf32>
    tpu.vector_store %arg9[%c0_14, %34, %c2, %c0_15], %37 {strides = array<i32>} : memref<2x6x6x256xf32, #tpu.memory_space<vmem>>, vector<2x1x1x256xf32>,
    %38 = vector.extract_strided_slice %24 {offsets = [0, 512], sizes = [2, 256], strides = [1, 1]} : vector<2x2048xf32> to vector<2x256xf32>
    %c0_16 = arith.constant 0 : index
    %39 = arith.index_cast %27 : i32 to index
    %c3 = arith.constant 3 : index
    %c0_17 = arith.constant 0 : index
    %40 = vector.load %arg9[%c0_16, %39, %c3, %c0_17] : memref<2x6x6x256xf32, #tpu.memory_space<vmem>>, vector<2x1x1x256xf32>
    %41 = vector.shape_cast %40 : vector<2x1x1x256xf32> to vector<2x256xf32>
    %42 = vector.shape_cast %38 : vector<2x256xf32> to vector<2x1x1x256xf32>
    tpu.vector_store %arg9[%c0_16, %39, %c3, %c0_17], %42 {strides = array<i32>} : memref<2x6x6x256xf32, #tpu.memory_space<vmem>>, vector<2x1x1x256xf32>,
    %43 = vector.extract_strided_slice %24 {offsets = [0, 768], sizes = [2, 256], strides = [1, 1]} : vector<2x2048xf32> to vector<2x256xf32>
    %c0_18 = arith.constant 0 : index
    %44 = arith.index_cast %27 : i32 to index
    %c4 = arith.constant 4 : index
    %c0_19 = arith.constant 0 : index
    %45 = vector.load %arg9[%c0_18, %44, %c4, %c0_19] : memref<2x6x6x256xf32, #tpu.memory_space<vmem>>, vector<2x1x1x256xf32>
    %46 = vector.shape_cast %45 : vector<2x1x1x256xf32> to vector<2x256xf32>
    %47 = vector.shape_cast %43 : vector<2x256xf32> to vector<2x1x1x256xf32>
    tpu.vector_store %arg9[%c0_18, %44, %c4, %c0_19], %47 {strides = array<i32>} : memref<2x6x6x256xf32, #tpu.memory_space<vmem>>, vector<2x1x1x256xf32>,
    %c2_i32_20 = arith.constant 2 : i32
    %48 = arith.muli %arg0, %c2_i32_20 : i32
    %c1_i32_21 = arith.constant 1 : i32
    %49 = arith.addi %c1_i32_21, %48 : i32
    %c1_i32_22 = arith.constant 1 : i32
    %50 = arith.addi %49, %c1_i32_22 : i32
    %51 = vector.extract_strided_slice %24 {offsets = [0, 1024], sizes = [2, 256], strides = [1, 1]} : vector<2x2048xf32> to vector<2x256xf32>
    %c0_23 = arith.constant 0 : index
    %52 = arith.index_cast %50 : i32 to index
    %c1_24 = arith.constant 1 : index
    %c0_25 = arith.constant 0 : index
    %53 = vector.load %arg9[%c0_23, %52, %c1_24, %c0_25] : memref<2x6x6x256xf32, #tpu.memory_space<vmem>>, vector<2x1x1x256xf32>
    %54 = vector.shape_cast %53 : vector<2x1x1x256xf32> to vector<2x256xf32>
    %55 = vector.shape_cast %51 : vector<2x256xf32> to vector<2x1x1x256xf32>
    tpu.vector_store %arg9[%c0_23, %52, %c1_24, %c0_25], %55 {strides = array<i32>} : memref<2x6x6x256xf32, #tpu.memory_space<vmem>>, vector<2x1x1x256xf32>,
    %56 = vector.extract_strided_slice %24 {offsets = [0, 1280], sizes = [2, 256], strides = [1, 1]} : vector<2x2048xf32> to vector<2x256xf32>
    %c0_26 = arith.constant 0 : index
    %57 = arith.index_cast %50 : i32 to index
    %c2_27 = arith.constant 2 : index
    %c0_28 = arith.constant 0 : index
    %58 = vector.load %arg9[%c0_26, %57, %c2_27, %c0_28] : memref<2x6x6x256xf32, #tpu.memory_space<vmem>>, vector<2x1x1x256xf32>
    %59 = vector.shape_cast %58 : vector<2x1x1x256xf32> to vector<2x256xf32>
    %60 = vector.shape_cast %56 : vector<2x256xf32> to vector<2x1x1x256xf32>
    tpu.vector_store %arg9[%c0_26, %57, %c2_27, %c0_28], %60 {strides = array<i32>} : memref<2x6x6x256xf32, #tpu.memory_space<vmem>>, vector<2x1x1x256xf32>,
    %61 = vector.extract_strided_slice %24 {offsets = [0, 1536], sizes = [2, 256], strides = [1, 1]} : vector<2x2048xf32> to vector<2x256xf32>
    %c0_29 = arith.constant 0 : index
    %62 = arith.index_cast %50 : i32 to index
    %c3_30 = arith.constant 3 : index
    %c0_31 = arith.constant 0 : index
    %63 = vector.load %arg9[%c0_29, %62, %c3_30, %c0_31] : memref<2x6x6x256xf32, #tpu.memory_space<vmem>>, vector<2x1x1x256xf32>
    %64 = vector.shape_cast %63 : vector<2x1x1x256xf32> to vector<2x256xf32>
    %65 = vector.shape_cast %61 : vector<2x256xf32> to vector<2x1x1x256xf32>
    tpu.vector_store %arg9[%c0_29, %62, %c3_30, %c0_31], %65 {strides = array<i32>} : memref<2x6x6x256xf32, #tpu.memory_space<vmem>>, vector<2x1x1x256xf32>,
    %66 = vector.extract_strided_slice %24 {offsets = [0, 1792], sizes = [2, 256], strides = [1, 1]} : vector<2x2048xf32> to vector<2x256xf32>
    %c0_32 = arith.constant 0 : index
    %67 = arith.index_cast %50 : i32 to index
    %c4_33 = arith.constant 4 : index
    %c0_34 = arith.constant 0 : index
    %68 = vector.load %arg9[%c0_32, %67, %c4_33, %c0_34] : memref<2x6x6x256xf32, #tpu.memory_space<vmem>>, vector<2x1x1x256xf32>
    %69 = vector.shape_cast %68 : vector<2x1x1x256xf32> to vector<2x256xf32>
    %70 = vector.shape_cast %66 : vector<2x256xf32> to vector<2x1x1x256xf32>
    tpu.vector_store %arg9[%c0_32, %67, %c4_33, %c0_34], %70 {strides = array<i32>} : memref<2x6x6x256xf32, #tpu.memory_space<vmem>>, vector<2x1x1x256xf32>,
    %c1_i32_35 = arith.constant 1 : i32
    %71 = arith.cmpi eq, %arg0, %c1_i32_35 : i32
    %72 = arith.extui %71 : i1 to i32
    %c0_i32_36 = arith.constant 0 : i32
    %73 = arith.cmpi ne, %72, %c0_i32_36 : i32
    scf.if %73 {
      %c0_37 = arith.constant 0 : index
      %c0_38 = arith.constant 0 : index
      %c0_39 = arith.constant 0 : index
      %c0_40 = arith.constant 0 : index
      %74 = vector.load %arg9[%c0_37, %c0_38, %c0_39, %c0_40] : memref<2x6x6x256xf32, #tpu.memory_space<vmem>>, vector<2x6x6x256xf32>
      %75 = arith.mulf %74, %74 : vector<2x6x6x256xf32>
      %cst_41 = arith.constant dense<0.000000e+00> : vector<2x6x6xf32>
      %76 = vector.multi_reduction <add>, %75, %cst_41 [3] : vector<2x6x6x256xf32> to vector<2x6x6xf32>
      %77 = vector.shape_cast %76 : vector<2x6x6xf32> to vector<2x6x6x1xf32>
      %cst_42 = arith.constant 2.560000e+02 : f32
      %78 = vector.broadcast %cst_42 : f32 to vector<2x6x6x1xf32>
      %79 = arith.divf %77, %78 : vector<2x6x6x1xf32>
      %cst_43 = arith.constant 9.99999993E-9 : f32
      %80 = vector.broadcast %cst_43 : f32 to vector<2x6x6x1xf32>
      %81 = arith.addf %79, %80 : vector<2x6x6x1xf32>
      %82 = math.rsqrt %81 : vector<2x6x6x1xf32>
      %83 = vector.broadcast %82 : vector<2x6x6x1xf32> to vector<2x6x6x256xf32>
      %84 = arith.mulf %74, %83 : vector<2x6x6x256xf32>
      %cst_44 = arith.constant 0.000000e+00 : f32
      %85 = vector.broadcast %cst_44 : f32 to vector<2x4x4x256xf32>
      %86 = vector.extract_strided_slice %84 {offsets = [0, 0, 0, 0], sizes = [2, 4, 4, 256], strides = [1, 1, 1, 1]} : vector<2x6x6x256xf32> to vector<2x4x4x256xf32>
      %c0_45 = arith.constant 0 : index
      %c0_46 = arith.constant 0 : index
      %c0_47 = arith.constant 0 : index
      %c0_48 = arith.constant 0 : index
      %87 = vector.load %arg4[%c0_45, %c0_46, %c0_47, %c0_48] : memref<3x3x256x256xbf16, #tpu.memory_space<vmem>>, vector<1x1x256x256xbf16>
      %88 = vector.shape_cast %87 : vector<1x1x256x256xbf16> to vector<256x256xbf16>
      %89 = arith.extf %88 : vector<256x256xbf16> to vector<256x256xf32>
      %cst_49 = arith.constant dense<0.000000e+00> : vector<2x4x4x256xf32>
      %90 = tpu.matmul %86, %89, %cst_49 {dimension_numbers = #tpu.dot_dimension_numbers<[3], [0], [0, 1, 2], [1], [0, 0, 0, 1, 0, 2, 1, 1], [], []>} : vector<2x4x4x256xf32>, vector<256x256xf32>, vector<2x4x4x256xf32> -> vector<2x4x4x256xf32>
      %91 = arith.addf %85, %90 : vector<2x4x4x256xf32>
      %92 = vector.extract_strided_slice %84 {offsets = [0, 0, 1, 0], sizes = [2, 4, 4, 256], strides = [1, 1, 1, 1]} : vector<2x6x6x256xf32> to vector<2x4x4x256xf32>
      %c0_50 = arith.constant 0 : index
      %c1_51 = arith.constant 1 : index
      %c0_52 = arith.constant 0 : index
      %c0_53 = arith.constant 0 : index
      %93 = vector.load %arg4[%c0_50, %c1_51, %c0_52, %c0_53] : memref<3x3x256x256xbf16, #tpu.memory_space<vmem>>, vector<1x1x256x256xbf16>
      %94 = vector.shape_cast %93 : vector<1x1x256x256xbf16> to vector<256x256xbf16>
      %95 = arith.extf %94 : vector<256x256xbf16> to vector<256x256xf32>
      %cst_54 = arith.constant dense<0.000000e+00> : vector<2x4x4x256xf32>
      %96 = tpu.matmul %92, %95, %cst_54 {dimension_numbers = #tpu.dot_dimension_numbers<[3], [0], [0, 1, 2], [1], [0, 0, 0, 1, 0, 2, 1, 1], [], []>} : vector<2x4x4x256xf32>, vector<256x256xf32>, vector<2x4x4x256xf32> -> vector<2x4x4x256xf32>
      %97 = arith.addf %91, %96 : vector<2x4x4x256xf32>
      %98 = vector.extract_strided_slice %84 {offsets = [0, 0, 2, 0], sizes = [2, 4, 4, 256], strides = [1, 1, 1, 1]} : vector<2x6x6x256xf32> to vector<2x4x4x256xf32>
      %c0_55 = arith.constant 0 : index
      %c2_56 = arith.constant 2 : index
      %c0_57 = arith.constant 0 : index
      %c0_58 = arith.constant 0 : index
      %99 = vector.load %arg4[%c0_55, %c2_56, %c0_57, %c0_58] : memref<3x3x256x256xbf16, #tpu.memory_space<vmem>>, vector<1x1x256x256xbf16>
      %100 = vector.shape_cast %99 : vector<1x1x256x256xbf16> to vector<256x256xbf16>
      %101 = arith.extf %100 : vector<256x256xbf16> to vector<256x256xf32>
      %cst_59 = arith.constant dense<0.000000e+00> : vector<2x4x4x256xf32>
      %102 = tpu.matmul %98, %101, %cst_59 {dimension_numbers = #tpu.dot_dimension_numbers<[3], [0], [0, 1, 2], [1], [0, 0, 0, 1, 0, 2, 1, 1], [], []>} : vector<2x4x4x256xf32>, vector<256x256xf32>, vector<2x4x4x256xf32> -> vector<2x4x4x256xf32>
      %103 = arith.addf %97, %102 : vector<2x4x4x256xf32>
      %104 = vector.extract_strided_slice %84 {offsets = [0, 1, 0, 0], sizes = [2, 4, 4, 256], strides = [1, 1, 1, 1]} : vector<2x6x6x256xf32> to vector<2x4x4x256xf32>
      %c1_60 = arith.constant 1 : index
      %c0_61 = arith.constant 0 : index
      %c0_62 = arith.constant 0 : index
      %c0_63 = arith.constant 0 : index
      %105 = vector.load %arg4[%c1_60, %c0_61, %c0_62, %c0_63] : memref<3x3x256x256xbf16, #tpu.memory_space<vmem>>, vector<1x1x256x256xbf16>
      %106 = vector.shape_cast %105 : vector<1x1x256x256xbf16> to vector<256x256xbf16>
      %107 = arith.extf %106 : vector<256x256xbf16> to vector<256x256xf32>
      %cst_64 = arith.constant dense<0.000000e+00> : vector<2x4x4x256xf32>
      %108 = tpu.matmul %104, %107, %cst_64 {dimension_numbers = #tpu.dot_dimension_numbers<[3], [0], [0, 1, 2], [1], [0, 0, 0, 1, 0, 2, 1, 1], [], []>} : vector<2x4x4x256xf32>, vector<256x256xf32>, vector<2x4x4x256xf32> -> vector<2x4x4x256xf32>
      %109 = arith.addf %103, %108 : vector<2x4x4x256xf32>
      %110 = vector.extract_strided_slice %84 {offsets = [0, 1, 1, 0], sizes = [2, 4, 4, 256], strides = [1, 1, 1, 1]} : vector<2x6x6x256xf32> to vector<2x4x4x256xf32>
      %c1_65 = arith.constant 1 : index
      %c1_66 = arith.constant 1 : index
      %c0_67 = arith.constant 0 : index
      %c0_68 = arith.constant 0 : index
      %111 = vector.load %arg4[%c1_65, %c1_66, %c0_67, %c0_68] : memref<3x3x256x256xbf16, #tpu.memory_space<vmem>>, vector<1x1x256x256xbf16>
      %112 = vector.shape_cast %111 : vector<1x1x256x256xbf16> to vector<256x256xbf16>
      %113 = arith.extf %112 : vector<256x256xbf16> to vector<256x256xf32>
      %cst_69 = arith.constant dense<0.000000e+00> : vector<2x4x4x256xf32>
      %114 = tpu.matmul %110, %113, %cst_69 {dimension_numbers = #tpu.dot_dimension_numbers<[3], [0], [0, 1, 2], [1], [0, 0, 0, 1, 0, 2, 1, 1], [], []>} : vector<2x4x4x256xf32>, vector<256x256xf32>, vector<2x4x4x256xf32> -> vector<2x4x4x256xf32>
      %115 = arith.addf %109, %114 : vector<2x4x4x256xf32>
      %116 = vector.extract_strided_slice %84 {offsets = [0, 1, 2, 0], sizes = [2, 4, 4, 256], strides = [1, 1, 1, 1]} : vector<2x6x6x256xf32> to vector<2x4x4x256xf32>
      %c1_70 = arith.constant 1 : index
      %c2_71 = arith.constant 2 : index
      %c0_72 = arith.constant 0 : index
      %c0_73 = arith.constant 0 : index
      %117 = vector.load %arg4[%c1_70, %c2_71, %c0_72, %c0_73] : memref<3x3x256x256xbf16, #tpu.memory_space<vmem>>, vector<1x1x256x256xbf16>
      %118 = vector.shape_cast %117 : vector<1x1x256x256xbf16> to vector<256x256xbf16>
      %119 = arith.extf %118 : vector<256x256xbf16> to vector<256x256xf32>
      %cst_74 = arith.constant dense<0.000000e+00> : vector<2x4x4x256xf32>
      %120 = tpu.matmul %116, %119, %cst_74 {dimension_numbers = #tpu.dot_dimension_numbers<[3], [0], [0, 1, 2], [1], [0, 0, 0, 1, 0, 2, 1, 1], [], []>} : vector<2x4x4x256xf32>, vector<256x256xf32>, vector<2x4x4x256xf32> -> vector<2x4x4x256xf32>
      %121 = arith.addf %115, %120 : vector<2x4x4x256xf32>
      %122 = vector.extract_strided_slice %84 {offsets = [0, 2, 0, 0], sizes = [2, 4, 4, 256], strides = [1, 1, 1, 1]} : vector<2x6x6x256xf32> to vector<2x4x4x256xf32>
      %c2_75 = arith.constant 2 : index
      %c0_76 = arith.constant 0 : index
      %c0_77 = arith.constant 0 : index
      %c0_78 = arith.constant 0 : index
      %123 = vector.load %arg4[%c2_75, %c0_76, %c0_77, %c0_78] : memref<3x3x256x256xbf16, #tpu.memory_space<vmem>>, vector<1x1x256x256xbf16>
      %124 = vector.shape_cast %123 : vector<1x1x256x256xbf16> to vector<256x256xbf16>
      %125 = arith.extf %124 : vector<256x256xbf16> to vector<256x256xf32>
      %cst_79 = arith.constant dense<0.000000e+00> : vector<2x4x4x256xf32>
      %126 = tpu.matmul %122, %125, %cst_79 {dimension_numbers = #tpu.dot_dimension_numbers<[3], [0], [0, 1, 2], [1], [0, 0, 0, 1, 0, 2, 1, 1], [], []>} : vector<2x4x4x256xf32>, vector<256x256xf32>, vector<2x4x4x256xf32> -> vector<2x4x4x256xf32>
      %127 = arith.addf %121, %126 : vector<2x4x4x256xf32>
      %128 = vector.extract_strided_slice %84 {offsets = [0, 2, 1, 0], sizes = [2, 4, 4, 256], strides = [1, 1, 1, 1]} : vector<2x6x6x256xf32> to vector<2x4x4x256xf32>
      %c2_80 = arith.constant 2 : index
      %c1_81 = arith.constant 1 : index
      %c0_82 = arith.constant 0 : index
      %c0_83 = arith.constant 0 : index
      %129 = vector.load %arg4[%c2_80, %c1_81, %c0_82, %c0_83] : memref<3x3x256x256xbf16, #tpu.memory_space<vmem>>, vector<1x1x256x256xbf16>
      %130 = vector.shape_cast %129 : vector<1x1x256x256xbf16> to vector<256x256xbf16>
      %131 = arith.extf %130 : vector<256x256xbf16> to vector<256x256xf32>
      %cst_84 = arith.constant dense<0.000000e+00> : vector<2x4x4x256xf32>
      %132 = tpu.matmul %128, %131, %cst_84 {dimension_numbers = #tpu.dot_dimension_numbers<[3], [0], [0, 1, 2], [1], [0, 0, 0, 1, 0, 2, 1, 1], [], []>} : vector<2x4x4x256xf32>, vector<256x256xf32>, vector<2x4x4x256xf32> -> vector<2x4x4x256xf32>
      %133 = arith.addf %127, %132 : vector<2x4x4x256xf32>
      %134 = vector.extract_strided_slice %84 {offsets = [0, 2, 2, 0], sizes = [2, 4, 4, 256], strides = [1, 1, 1, 1]} : vector<2x6x6x256xf32> to vector<2x4x4x256xf32>
      %c2_85 = arith.constant 2 : index
      %c2_86 = arith.constant 2 : index
      %c0_87 = arith.constant 0 : index
      %c0_88 = arith.constant 0 : index
      %135 = vector.load %arg4[%c2_85, %c2_86, %c0_87, %c0_88] : memref<3x3x256x256xbf16, #tpu.memory_space<vmem>>, vector<1x1x256x256xbf16>
      %136 = vector.shape_cast %135 : vector<1x1x256x256xbf16> to vector<256x256xbf16>
      %137 = arith.extf %136 : vector<256x256xbf16> to vector<256x256xf32>
      %cst_89 = arith.constant dense<0.000000e+00> : vector<2x4x4x256xf32>
      %138 = tpu.matmul %134, %137, %cst_89 {dimension_numbers = #tpu.dot_dimension_numbers<[3], [0], [0, 1, 2], [1], [0, 0, 0, 1, 0, 2, 1, 1], [], []>} : vector<2x4x4x256xf32>, vector<256x256xf32>, vector<2x4x4x256xf32> -> vector<2x4x4x256xf32>
      %139 = arith.addf %133, %138 : vector<2x4x4x256xf32>
      %c0_90 = arith.constant 0 : index
      %c0_91 = arith.constant 0 : index
      %140 = vector.load %arg5[%c0_90, %c0_91] : memref<1x256xf32, #tpu.memory_space<vmem>>, vector<1x256xf32>
      %141 = vector.shape_cast %140 : vector<1x256xf32> to vector<1x1x1x256xf32>
      %142 = vector.broadcast %141 : vector<1x1x1x256xf32> to vector<2x4x4x256xf32>
      %143 = arith.addf %139, %142 : vector<2x4x4x256xf32>
      %cst_92 = arith.constant 0.000000e+00 : f32
      %144 = vector.broadcast %cst_92 : f32 to vector<2x4x4x256xf32>
      %145 = arith.cmpf oge, %143, %144 : vector<2x4x4x256xf32>
      %cst_93 = arith.constant 2.000000e-01 : f32
      %146 = vector.broadcast %cst_93 : f32 to vector<2x4x4x256xf32>
      %147 = arith.mulf %146, %143 : vector<2x4x4x256xf32>
      %148 = arith.select %145, %143, %147 : vector<2x4x4x256xi1>, vector<2x4x4x256xf32>
      %149 = arith.mulf %148, %148 : vector<2x4x4x256xf32>
      %cst_94 = arith.constant dense<0.000000e+00> : vector<2x4x4xf32>
      %150 = vector.multi_reduction <add>, %149, %cst_94 [3] : vector<2x4x4x256xf32> to vector<2x4x4xf32>
      %151 = vector.shape_cast %150 : vector<2x4x4xf32> to vector<2x4x4x1xf32>
      %cst_95 = arith.constant 2.560000e+02 : f32
      %152 = vector.broadcast %cst_95 : f32 to vector<2x4x4x1xf32>
      %153 = arith.divf %151, %152 : vector<2x4x4x1xf32>
      %cst_96 = arith.constant 9.99999993E-9 : f32
      %154 = vector.broadcast %cst_96 : f32 to vector<2x4x4x1xf32>
      %155 = arith.addf %153, %154 : vector<2x4x4x1xf32>
      %156 = math.rsqrt %155 : vector<2x4x4x1xf32>
      %157 = vector.broadcast %156 : vector<2x4x4x1xf32> to vector<2x4x4x256xf32>
      %158 = arith.mulf %148, %157 : vector<2x4x4x256xf32>
      %c0_97 = arith.constant 0 : index
      %c0_98 = arith.constant 0 : index
      %159 = vector.load %arg6[%c0_97, %c0_98] : memref<256x128xbf16, #tpu.memory_space<vmem>>, vector<256x128xbf16>
      %160 = arith.extf %159 : vector<256x128xbf16> to vector<256x128xf32>
      %cst_99 = arith.constant dense<0.000000e+00> : vector<2x4x4x128xf32>
      %161 = tpu.matmul %158, %160, %cst_99 {dimension_numbers = #tpu.dot_dimension_numbers<[3], [0], [0, 1, 2], [1], [0, 0, 0, 1, 0, 2, 1, 1], [], []>} : vector<2x4x4x256xf32>, vector<256x128xf32>, vector<2x4x4x128xf32> -> vector<2x4x4x128xf32>
      %c0_100 = arith.constant 0 : index
      %c0_101 = arith.constant 0 : index
      %162 = vector.load %arg7[%c0_100, %c0_101] : memref<1x128xf32, #tpu.memory_space<vmem>>, vector<1x128xf32>
      %163 = vector.shape_cast %162 : vector<1x128xf32> to vector<1x1x1x128xf32>
      %164 = vector.broadcast %163 : vector<1x1x1x128xf32> to vector<2x4x4x128xf32>
      %165 = arith.addf %161, %164 : vector<2x4x4x128xf32>
      %c0_102 = arith.constant 0 : index
      %c0_103 = arith.constant 0 : index
      %c0_104 = arith.constant 0 : index
      %c0_105 = arith.constant 0 : index
      %166 = vector.load %arg8[%c0_102, %c0_103, %c0_104, %c0_105] : memref<2x4x4x128xf32, #tpu.memory_space<vmem>>, vector<2x4x4x128xf32>
      tpu.vector_store %arg8[%c0_102, %c0_103, %c0_104, %c0_105], %165 {strides = array<i32>} : memref<2x4x4x128xf32, #tpu.memory_space<vmem>>, vector<2x4x4x128xf32>,
    } else {
    }
    return
  }
  func.func @transform_0(%arg0: i32) -> (i32, i32) {
    %c0_i32 = arith.constant 0 : i32
    %c0_i32_0 = arith.constant 0 : i32
    %c0_i32_1 = arith.constant 0 : i32
    return %c0_i32, %c0_i32_0 : i32, i32
  }
  func.func @transform_1(%arg0: i32) -> (i32, i32) {
    %c0_i32 = arith.constant 0 : i32
    %c0_i32_0 = arith.constant 0 : i32
    return %c0_i32, %arg0 : i32, i32
  }
  func.func @transform_2(%arg0: i32) -> (i32, i32) {
    %c0_i32 = arith.constant 0 : i32
    %c0_i32_0 = arith.constant 0 : i32
    return %c0_i32, %arg0 : i32, i32
  }
  func.func @transform_3(%arg0: i32) -> (i32, i32, i32, i32) {
    %c0_i32 = arith.constant 0 : i32
    %c0_i32_0 = arith.constant 0 : i32
    %c0_i32_1 = arith.constant 0 : i32
    %c0_i32_2 = arith.constant 0 : i32
    %c0_i32_3 = arith.constant 0 : i32
    return %c0_i32, %c0_i32_0, %c0_i32_1, %c0_i32_2 : i32, i32, i32, i32
  }
  func.func @transform_4(%arg0: i32) -> (i32, i32) {
    %c0_i32 = arith.constant 0 : i32
    %c0_i32_0 = arith.constant 0 : i32
    %c0_i32_1 = arith.constant 0 : i32
    return %c0_i32, %c0_i32_0 : i32, i32
  }
  func.func @transform_5(%arg0: i32) -> (i32, i32) {
    %c0_i32 = arith.constant 0 : i32
    %c0_i32_0 = arith.constant 0 : i32
    %c0_i32_1 = arith.constant 0 : i32
    return %c0_i32, %c0_i32_0 : i32, i32
  }
  func.func @transform_6(%arg0: i32) -> (i32, i32) {
    %c0_i32 = arith.constant 0 : i32
    %c0_i32_0 = arith.constant 0 : i32
    %c0_i32_1 = arith.constant 0 : i32
    return %c0_i32, %c0_i32_0 : i32, i32
  }
  func.func @transform_7(%arg0: i32) -> (i32, i32, i32, i32) {
    %c0_i32 = arith.constant 0 : i32
    %c0_i32_0 = arith.constant 0 : i32
    %c0_i32_1 = arith.constant 0 : i32
    %c0_i32_2 = arith.constant 0 : i32
    %c0_i32_3 = arith.constant 0 : i32
    return %c0_i32, %c0_i32_0, %c0_i32_1, %c0_i32_2 : i32, i32, i32, i32
  }
}

</mosaic_0001>

<llo_original>
// kernel: generator_forward.1
$region0: #{generator_forward.1}
  #allocation0 [shape = 'u32[]', space=smem, size = 0x4, offset = 0x4, fixed_abs, tag = 'smem constant byte address 0x4 - core index']
  #allocation1 [shape = 'u32[144,128]{1,0:T(1,128)}', space=vmem, size = 0x12000, scoped, tag = 'internal scratch']
  #allocation2 [shape = 'f32[2,6,6,256]{3,2,1,0:T(8,128)}', space=vmem, size = 0x18000, scoped, tag = 'scratch operand']
  %s0 = inlined_call_operand.hbm [shape: f32[2,1024], index: 0, kind: input, shape index: {}]
  %s1 = inlined_call_operand.hbm [shape: bf16[1024,4096], index: 1, kind: input, shape index: {}]
  %s2 = inlined_call_operand.hbm [shape: f32[1,4096], index: 2, kind: input, shape index: {}]
  %s3 = inlined_call_operand.hbm [shape: bf16[3,3,256,256], index: 3, kind: input, shape index: {}]
  %s4 = inlined_call_operand.hbm [shape: f32[1,256], index: 4, kind: input, shape index: {}]
  %s5 = inlined_call_operand.hbm [shape: bf16[256,128], index: 5, kind: input, shape index: {}]
  %s6 = inlined_call_operand.hbm [shape: f32[1,128], index: 6, kind: input, shape index: {}]
  %s7 = inlined_call_operand.vmem [shape: f32[2,4,4,128], index: 7, kind: output, shape index: {}]
  %s8 = sld [smem:[#allocation0]]
  $region97: #{generator_forward.1} parent=0
    _
  %s10 = ssub.s32 1, %s8
  %s11 = scalar_select 0, %s10, %s8
  $region1: #{generator_forward.1} parent=0
    #allocation3 [shape = 'u8[8192]{0}', space=vmem, size = 0x2000, scoped, tag = 'input window, operand 0, single buffered']
    #allocation4 [shape = 's32[2]{0}', space=sflag, size = 0x8, scoped, tag = 'scoped memory for generator_forward.1']
    #allocation5 [shape = 'u8[8388608]{0}', space=vmem, size = 0x800000, scoped, tag = 'input window, operand 1']
    #allocation6 [shape = 's32[2]{0}', space=sflag, size = 0x8, scoped, tag = 'scoped memory for generator_forward.1']
    #allocation7 [shape = 'u8[16384]{0}', space=vmem, size = 0x4000, scoped, tag = 'input window, operand 2']
    #allocation8 [shape = 'u8[1179648]{0}', space=vmem, size = 0x120000, scoped, tag = 'input window, operand 3, single buffered']
    #allocation9 [shape = 's32[1]{0}', space=sflag, size = 0x4, scoped, tag = 'scoped memory for generator_forward.1']
    #allocation10 [shape = 'u8[1024]{0}', space=vmem, size = 0x400, scoped, tag = 'input window, operand 4, single buffered']
    #allocation11 [shape = 'u8[65536]{0}', space=vmem, size = 0x10000, scoped, tag = 'input window, operand 5, single buffered']
    #allocation12 [shape = 's32[1]{0}', space=sflag, size = 0x4, scoped, tag = 'scoped memory for generator_forward.1']
    #allocation13 [shape = 'u8[512]{0}', space=vmem, size = 0x400, scoped, tag = 'input window, operand 6, single buffered']
    %12 = vsyncpa [#allocation4], 0
    %13 = vsyncpa [#allocation6], 0
    %s14 = scalar_lea.sflag [#allocation6], 1
    %15 = vsyncpa %s14, 0
    %16 = vsyncpa [#allocation9], 0
    %17 = vsyncpa [#allocation12], 0
    loop: start=0, step=1, limit=4
    $region2: #{generator_forward.1} parent=1 // loop_pre_header
      _
    $region3: #{generator_forward.1} parent=1 // loop_header
      %s19 = sphi 0, %s23
      %p20 = scmp.ge.s32.totalorder %s19, 4
      %s27 = sphi 0, %s27
      %s29 = sphi 0, %s27
      %s30 = sphi 0, %s29
      %s44 = sphi 0, %s30
      %s50 = sphi 0, %s52
      %s53 = sphi 0, %s50
      %s54 = sphi 0, %s53
      %s70 = sphi 0, %s54
      %s76 = sphi 0, %s78
      %s79 = sphi 0, %s76
      %s80 = sphi 0, %s79
      %s96 = sphi 0, %s80
      %s100 = sphi 0, %s100
      %s102 = sphi 0, %s100
      %s103 = sphi 0, %s102
      %s117 = sphi 0, %s103
      %s121 = sphi 0, %s121
      %s123 = sphi 0, %s121
      %s124 = sphi 0, %s123
      %s138 = sphi 0, %s124
      %s142 = sphi 0, %s142
      %s144 = sphi 0, %s142
      %s145 = sphi 0, %s144
      %s159 = sphi 0, %s145
      %s163 = sphi 0, %s163
      %s165 = sphi 0, %s163
      %s166 = sphi 0, %s165
      %s180 = sphi 0, %s166
      %s184 = sphi 0, %s184
      %s186 = sphi 0, %s184
      %s187 = sphi 0, %s186
      %s201 = sphi 0, %s187
    $region4: #{generator_forward.1} parent=1 // loop_header_branch
      %22 = sbr.rel (%p20) target = $region8
    $region5: #{generator_forward.1} parent=1 // loop_body
      %s24 = ssub.s32 %s19, 1
      %s25 = ssub.s32 %s19, 2
      %s26 = sadd.s32 %s19, 1
      %s28 = sadd.s32 %s27, 1
      %p31 = scmp.eq.s32.totalorder %s19, 1
      %p32 = scmp.ne.s32.totalorder %s27, %s29
      %p33 = scmp.eq.s32.totalorder %s19, 0
      %p34 = por %p32, %p33
      %p35 = scmp.ne.s32.totalorder %s27, %s29
      %p36 = scmp.eq.s32.totalorder %s24, 1
      %p37 = por %p35, %p36
      %p38 = scmp.ne.s32.totalorder %s29, %s30
      %p39 = scmp.eq.s32.totalorder %s24, 0
      %p40 = por %p38, %p39
      %p41 = scmp.ne.s32.totalorder %s29, %s30
      %p42 = scmp.eq.s32.totalorder %s25, 1
      %p43 = por %p41, %p42
      %p45 = scmp.ne.s32.totalorder %s30, %s44
      %p46 = scmp.eq.s32.totalorder %s25, 0
      %p47 = por %p45, %p46
      %s48 = ssub.s32 %s19, %s26
      %p49 = scmp.eq.s32.totalorder %s48, 0
      %s51 = sadd.s32 %s50, 1
      %s52 = scalar_select %p49, %s50, %s51
      %p55 = pneg %p49
      %p56 = scmp.eq.s32.totalorder %s19, 1
      %p57 = por %p55, %p56
      %p58 = scmp.ne.s32.totalorder %s50, %s53
      %p59 = scmp.eq.s32.totalorder %s19, 0
      %p60 = por %p58, %p59
      %p61 = scmp.ne.s32.totalorder %s50, %s53
      %p62 = scmp.eq.s32.totalorder %s24, 1
      %p63 = por %p61, %p62
      %p64 = scmp.ne.s32.totalorder %s53, %s54
      %p65 = scmp.eq.s32.totalorder %s24, 0
      %p66 = por %p64, %p65
      %p67 = scmp.ne.s32.totalorder %s53, %s54
      %p68 = scmp.eq.s32.totalorder %s25, 1
      %p69 = por %p67, %p68
      %p71 = scmp.ne.s32.totalorder %s54, %s70
      %p72 = scmp.eq.s32.totalorder %s25, 0
      %p73 = por %p71, %p72
      %s74 = ssub.s32 %s19, %s26
      %p75 = scmp.eq.s32.totalorder %s74, 0
      %s77 = sadd.s32 %s76, 1
      %s78 = scalar_select %p75, %s76, %s77
      %p81 = pneg %p75
      %p82 = scmp.eq.s32.totalorder %s19, 1
      %p83 = por %p81, %p82
      %p84 = scmp.ne.s32.totalorder %s76, %s79
      %p85 = scmp.eq.s32.totalorder %s19, 0
      %p86 = por %p84, %p85
      %p87 = scmp.ne.s32.totalorder %s76, %s79
      %p88 = scmp.eq.s32.totalorder %s24, 1
      %p89 = por %p87, %p88
      %p90 = scmp.ne.s32.totalorder %s79, %s80
      %p91 = scmp.eq.s32.totalorder %s24, 0
      %p92 = por %p90, %p91
      %p93 = scmp.ne.s32.totalorder %s79, %s80
      %p94 = scmp.eq.s32.totalorder %s25, 1
      %p95 = por %p93, %p94
      %p97 = scmp.ne.s32.totalorder %s80, %s96
      %p98 = scmp.eq.s32.totalorder %s25, 0
      %p99 = por %p97, %p98
      %s101 = sadd.s32 %s100, 1
      %p104 = scmp.eq.s32.totalorder %s19, 1
      %p105 = scmp.ne.s32.totalorder %s100, %s102
      %p106 = scmp.eq.s32.totalorder %s19, 0
      %p107 = por %p105, %p106
      %p108 = scmp.ne.s32.totalorder %s100, %s102
      %p109 = scmp.eq.s32.totalorder %s24, 1
      %p110 = por %p108, %p109
      %p111 = scmp.ne.s32.totalorder %s102, %s103
      %p112 = scmp.eq.s32.totalorder %s24, 0
      %p113 = por %p111, %p112
      %p114 = scmp.ne.s32.totalorder %s102, %s103
      %p115 = scmp.eq.s32.totalorder %s25, 1
      %p116 = por %p114, %p115
      %p118 = scmp.ne.s32.totalorder %s103, %s117
      %p119 = scmp.eq.s32.totalorder %s25, 0
      %p120 = por %p118, %p119
      %s122 = sadd.s32 %s121, 1
      %p125 = scmp.eq.s32.totalorder %s19, 1
      %p126 = scmp.ne.s32.totalorder %s121, %s123
      %p127 = scmp.eq.s32.totalorder %s19, 0
      %p128 = por %p126, %p127
      %p129 = scmp.ne.s32.totalorder %s121, %s123
      %p130 = scmp.eq.s32.totalorder %s24, 1
      %p131 = por %p129, %p130
      %p132 = scmp.ne.s32.totalorder %s123, %s124
      %p133 = scmp.eq.s32.totalorder %s24, 0
      %p134 = por %p132, %p133
      %p135 = scmp.ne.s32.totalorder %s123, %s124
      %p136 = scmp.eq.s32.totalorder %s25, 1
      %p137 = por %p135, %p136
      %p139 = scmp.ne.s32.totalorder %s124, %s138
      %p140 = scmp.eq.s32.totalorder %s25, 0
      %p141 = por %p139, %p140
      %s143 = sadd.s32 %s142, 1
      %p146 = scmp.eq.s32.totalorder %s19, 1
      %p147 = scmp.ne.s32.totalorder %s142, %s144
      %p148 = scmp.eq.s32.totalorder %s19, 0
      %p149 = por %p147, %p148
      %p150 = scmp.ne.s32.totalorder %s142, %s144
      %p151 = scmp.eq.s32.totalorder %s24, 1
      %p152 = por %p150, %p151
      %p153 = scmp.ne.s32.totalorder %s144, %s145
      %p154 = scmp.eq.s32.totalorder %s24, 0
      %p155 = por %p153, %p154
      %p156 = scmp.ne.s32.totalorder %s144, %s145
      %p157 = scmp.eq.s32.totalorder %s25, 1
      %p158 = por %p156, %p157
      %p160 = scmp.ne.s32.totalorder %s145, %s159
      %p161 = scmp.eq.s32.totalorder %s25, 0
      %p162 = por %p160, %p161
      %s164 = sadd.s32 %s163, 1
      %p167 = scmp.eq.s32.totalorder %s19, 1
      %p168 = scmp.ne.s32.totalorder %s163, %s165
      %p169 = scmp.eq.s32.totalorder %s19, 0
      %p170 = por %p168, %p169
      %p171 = scmp.ne.s32.totalorder %s163, %s165
      %p172 = scmp.eq.s32.totalorder %s24, 1
      %p173 = por %p171, %p172
      %p174 = scmp.ne.s32.totalorder %s165, %s166
      %p175 = scmp.eq.s32.totalorder %s24, 0
      %p176 = por %p174, %p175
      %p177 = scmp.ne.s32.totalorder %s165, %s166
      %p178 = scmp.eq.s32.totalorder %s25, 1
      %p179 = por %p177, %p178
      %p181 = scmp.ne.s32.totalorder %s166, %s180
      %p182 = scmp.eq.s32.totalorder %s25, 0
      %p183 = por %p181, %p182
      %s185 = sadd.s32 %s184, 1
      %p188 = scmp.eq.s32.totalorder %s19, 1
      %p189 = scmp.ne.s32.totalorder %s184, %s186
      %p190 = scmp.eq.s32.totalorder %s19, 0
      %p191 = por %p189, %p190
      %p192 = scmp.ne.s32.totalorder %s184, %s186
      %p193 = scmp.eq.s32.totalorder %s24, 1
      %p194 = por %p192, %p193
      %p195 = scmp.ne.s32.totalorder %s186, %s187
      %p196 = scmp.eq.s32.totalorder %s24, 0
      %p197 = por %p195, %p196
      %p198 = scmp.ne.s32.totalorder %s186, %s187
      %p199 = scmp.eq.s32.totalorder %s25, 1
      %p200 = por %p198, %p199
      %p202 = scmp.ne.s32.totalorder %s187, %s201
      %p203 = scmp.eq.s32.totalorder %s25, 0
      %p204 = por %p202, %p203
      %p205 = scmp.le.s32.totalorder 1, %s19
      %p206 = scmp.lt.s32.totalorder %s19, 3
      %p207 = pnand %p205, %p206
      %p208 = pneg %p207
      // Predicated region
      $region9: #{generator_forward.1} parent=5 // pred_check
        _
      $region10: #{generator_forward.1} parent=5 // pred_check_branch
        %210 = sbr.rel (%p207) target = $region12
      $region11: #{generator_forward.1} parent=5 // pred_region
        %s211 = ssub.s32 %s19, 1
        // Predicated region
        $region13: #{generator_forward.1} parent=11 // pred_check
          %p212 = pneg %p40
        $region14: #{generator_forward.1} parent=11 // pred_check_branch
          %214 = sbr.rel (%p212) target = $region16
        $region15: #{generator_forward.1} parent=11 // pred_region
          %s216 = ssub.s32 256, 256
          %217 = vsyncadd [#allocation4], %s216
          %s219 = sshll.u32 [#allocation3], 4
          %s220 = int_to_ptr.vmem [resolvable:$true] %s219
          %222 = dma.hbm_to_vmem [thread:$0]  %s0, 256, %s220, [#allocation4]
        $region16: #{generator_forward.1} parent=11 // pred_fallthru
          _
        // Predicated region
        $region17: #{generator_forward.1} parent=11 // pred_check
          %p223 = pneg %p113
        $region18: #{generator_forward.1} parent=11 // pred_check_branch
          %225 = sbr.rel (%p223) target = $region20
        $region19: #{generator_forward.1} parent=11 // pred_region
          %s227 = ssub.s32 36864, 36864
          %228 = vsyncadd [#allocation9], %s227
          %s229 = sshll.u32 [#allocation8], 4
          %s230 = int_to_ptr.vmem [resolvable:$true] %s229
          %235 = dma.hbm_to_vmem [thread:$0]  %s3, 36864, %s230, [#allocation9], 128, 128, 8
        $region20: #{generator_forward.1} parent=11 // pred_fallthru
          _
        // Predicated region
        $region21: #{generator_forward.1} parent=11 // pred_check
          %p236 = pneg %p134
        $region22: #{generator_forward.1} parent=11 // pred_check_branch
          %238 = sbr.rel (%p236) target = $region24
        $region23: #{generator_forward.1} parent=11 // pred_region
          %s240 = ssub.s32 32, 32
          %241 = vsyncadd [#allocation9], %s240
          %s243 = sshll.u32 [#allocation10], 4
          %s244 = int_to_ptr.vmem [resolvable:$true] %s243
          %246 = dma.hbm_to_vmem [thread:$0]  %s4, 32, %s244, [#allocation9]
        $region24: #{generator_forward.1} parent=11 // pred_fallthru
          _
        // Predicated region
        $region25: #{generator_forward.1} parent=11 // pred_check
          %p247 = pneg %p155
        $region26: #{generator_forward.1} parent=11 // pred_check_branch
          %249 = sbr.rel (%p247) target = $region28
        $region27: #{generator_forward.1} parent=11 // pred_region
          %s251 = ssub.s32 2048, 2048
          %252 = vsyncadd [#allocation12], %s251
          %s253 = sshll.u32 [#allocation11], 4
          %s254 = int_to_ptr.vmem [resolvable:$true] %s253
          %259 = dma.hbm_to_vmem [thread:$0]  %s5, 2048, %s254, [#allocation12], 64, 64, 4
        $region28: #{generator_forward.1} parent=11 // pred_fallthru
          _
        // Predicated region
        $region29: #{generator_forward.1} parent=11 // pred_check
          %p260 = pneg %p176
        $region30: #{generator_forward.1} parent=11 // pred_check_branch
          %262 = sbr.rel (%p260) target = $region32
        $region31: #{generator_forward.1} parent=11 // pred_region
          %s264 = ssub.s32 16, 16
          %265 = vsyncadd [#allocation12], %s264
          %s267 = sshll.u32 [#allocation13], 4
          %s268 = int_to_ptr.vmem [resolvable:$true] %s267
          %270 = dma.hbm_to_vmem [thread:$0]  %s6, 16, %s268, [#allocation12]
        $region32: #{generator_forward.1} parent=11 // pred_fallthru
          _
      $region12: #{generator_forward.1} parent=5 // pred_fallthru
        _
      %p271 = scmp.lt.s32.totalorder %s19, 2
      // Predicated region
      $region33: #{generator_forward.1} parent=5 // pred_check
        %p272 = pneg %p271
      $region34: #{generator_forward.1} parent=5 // pred_check_branch
        %274 = sbr.rel (%p272) target = $region36
      $region35: #{generator_forward.1} parent=5 // pred_region
        // Predicated region
        $region37: #{generator_forward.1} parent=35 // pred_check
          %p275 = pneg %p60
        $region38: #{generator_forward.1} parent=35 // pred_check_branch
          %277 = sbr.rel (%p275) target = $region40
        $region39: #{generator_forward.1} parent=35 // pred_region
          %s278 = sand.u32 %s19, 1
          %s279 = scalar_lea.sflag [#allocation6], %s278
          %s280 = sand.u32 %s50, 1
          %s281 = smul.addr %s280, 8192
          %s282 = scalar_lea.vmem [#allocation5], %s281
          %s283 = smul.u32 16, %s19
          %s285 = ssub.s32 131072, 131072
          %286 = vsyncadd %s279, %s285
          %s287 = smul.addr %s283, 64
          %s288 = scalar_lea.hbm %s1, %s287
          %s289 = sshll.u32 %s282, 4
          %s290 = int_to_ptr.vmem [resolvable:$true] %s289
          %295 = dma.hbm_to_vmem [thread:$0]  %s288, 131072, %s290, %s279, 2048, 1024, 64
        $region40: #{generator_forward.1} parent=35 // pred_fallthru
          _
        // Predicated region
        $region41: #{generator_forward.1} parent=35 // pred_check
          %p296 = pneg %p86
        $region42: #{generator_forward.1} parent=35 // pred_check_branch
          %298 = sbr.rel (%p296) target = $region44
        $region43: #{generator_forward.1} parent=35 // pred_region
          %s299 = sand.u32 %s19, 1
          %s300 = scalar_lea.sflag [#allocation6], %s299
          %s301 = sand.u32 %s76, 1
          %s302 = smul.addr %s301, 16
          %s303 = scalar_lea.vmem [#allocation7], %s302
          %s304 = smul.u32 16, %s19
          %s306 = ssub.s32 256, 256
          %307 = vsyncadd %s300, %s306
          %s308 = smul.addr %s304, 16
          %s309 = scalar_lea.hbm %s2, %s308
          %s311 = sshll.u32 %s303, 4
          %s312 = int_to_ptr.vmem [resolvable:$true] %s311
          %314 = dma.hbm_to_vmem [thread:$0]  %s309, 256, %s312, %s300
        $region44: #{generator_forward.1} parent=35 // pred_fallthru
          _
      $region36: #{generator_forward.1} parent=5 // pred_fallthru
        _
      %p315 = scmp.le.s32.totalorder 1, %s19
      %p316 = scmp.lt.s32.totalorder %s19, 3
      %p317 = pnand %p315, %p316
      %p318 = pneg %p317
      // Predicated region
      $region45: #{generator_forward.1} parent=5 // pred_check
        _
      $region46: #{generator_forward.1} parent=5 // pred_check_branch
        %320 = sbr.rel (%p317) target = $region48
      $region47: #{generator_forward.1} parent=5 // pred_region
        %s321 = ssub.s32 %s19, 1
        // Predicated region
        $region49: #{generator_forward.1} parent=47 // pred_check
          %p322 = pneg %p40
        $region50: #{generator_forward.1} parent=47 // pred_check_branch
          %324 = sbr.rel (%p322) target = $region52
        $region51: #{generator_forward.1} parent=47 // pred_region
          %325 = dma.done [#allocation4], 256
        $region52: #{generator_forward.1} parent=47 // pred_fallthru
          _
        %s326 = sand.u32 %s24, 1
        %s327 = scalar_lea.sflag [#allocation6], %s326
        %s328 = sand.u32 %s53, 1
        %s329 = smul.addr %s328, 8192
        %s330 = scalar_lea.vmem [#allocation5], %s329
        // Predicated region
        $region53: #{generator_forward.1} parent=47 // pred_check
          %p331 = pneg %p66
        $region54: #{generator_forward.1} parent=47 // pred_check_branch
          %333 = sbr.rel (%p331) target = $region56
        $region55: #{generator_forward.1} parent=47 // pred_region
          %334 = dma.done %s327, 131072
        $region56: #{generator_forward.1} parent=47 // pred_fallthru
          _
        %s335 = sand.u32 %s24, 1
        %s336 = scalar_lea.sflag [#allocation6], %s335
        %s337 = sand.u32 %s79, 1
        %s338 = smul.addr %s337, 16
        %s339 = scalar_lea.vmem [#allocation7], %s338
        // Predicated region
        $region57: #{generator_forward.1} parent=47 // pred_check
          %p340 = pneg %p92
        $region58: #{generator_forward.1} parent=47 // pred_check_branch
          %342 = sbr.rel (%p340) target = $region60
        $region59: #{generator_forward.1} parent=47 // pred_region
          %343 = dma.done %s336, 256
        $region60: #{generator_forward.1} parent=47 // pred_fallthru
          _
        // Predicated region
        $region61: #{generator_forward.1} parent=47 // pred_check
          %p344 = pneg %p113
        $region62: #{generator_forward.1} parent=47 // pred_check_branch
          %346 = sbr.rel (%p344) target = $region64
        $region63: #{generator_forward.1} parent=47 // pred_region
          %347 = dma.done [#allocation9], 36864
        $region64: #{generator_forward.1} parent=47 // pred_fallthru
          _
        // Predicated region
        $region65: #{generator_forward.1} parent=47 // pred_check
          %p348 = pneg %p134
        $region66: #{generator_forward.1} parent=47 // pred_check_branch
          %350 = sbr.rel (%p348) target = $region68
        $region67: #{generator_forward.1} parent=47 // pred_region
          %351 = dma.done [#allocation9], 32
        $region68: #{generator_forward.1} parent=47 // pred_fallthru
          _
        // Predicated region
        $region69: #{generator_forward.1} parent=47 // pred_check
          %p352 = pneg %p155
        $region70: #{generator_forward.1} parent=47 // pred_check_branch
          %354 = sbr.rel (%p352) target = $region72
        $region71: #{generator_forward.1} parent=47 // pred_region
          %355 = dma.done [#allocation12], 2048
        $region72: #{generator_forward.1} parent=47 // pred_fallthru
          _
        // Predicated region
        $region73: #{generator_forward.1} parent=47 // pred_check
          %p356 = pneg %p176
        $region74: #{generator_forward.1} parent=47 // pred_check_branch
          %358 = sbr.rel (%p356) target = $region76
        $region75: #{generator_forward.1} parent=47 // pred_region
          %359 = dma.done [#allocation12], 16
        $region76: #{generator_forward.1} parent=47 // pred_fallthru
          _
        %p360 = pneg %p40
        %p361 = pneg %p37
        %s362 = sand.u32 %s24, 1
        %s363 = scalar_lea.sflag [#allocation6], %s362
        %s364 = sand.u32 %s53, 1
        %s365 = smul.addr %s364, 8192
        %s366 = scalar_lea.vmem [#allocation5], %s365
        %p367 = pneg %p66
        %p368 = pneg %p63
        %s369 = sand.u32 %s24, 1
        %s370 = scalar_lea.sflag [#allocation6], %s369
        %s371 = sand.u32 %s79, 1
        %s372 = smul.addr %s371, 16
        %s373 = scalar_lea.vmem [#allocation7], %s372
        %p374 = pneg %p92
        %p375 = pneg %p89
        %p376 = pneg %p113
        %p377 = pneg %p110
        %p378 = pneg %p134
        %p379 = pneg %p131
        %p380 = pneg %p155
        %p381 = pneg %p152
        %p382 = pneg %p176
        %p383 = pneg %p173
        %p384 = pneg %p197
        %p385 = pneg %p194
        %s386 = smul.u32 16, %s24
        %s387 = smul.u32 16, %s24
        %p388 = scmp.eq.s32.totalorder %s24, 0
        // Predicated region
        $region77: #{generator_forward.1} parent=47 // pred_check
          %p389 = pneg %p388
        $region78: #{generator_forward.1} parent=47 // pred_check_branch
          %391 = sbr.rel (%p389) target = $region80
        $region79: #{generator_forward.1} parent=47 // pred_region
          %392 = vst [vmem:[#allocation2] sm:$0x3f] 0.0
          %393 = vst [vmem:[#allocation2 + $0x8] sm:$0x3f] 0.0
          %394 = vst [vmem:[#allocation2 + $0x10] sm:$0x3f] 0.0
          %395 = vst [vmem:[#allocation2 + $0x18] sm:$0x3f] 0.0
          %396 = vst [vmem:[#allocation2 + $0x20] sm:$0x3f] 0.0
          %397 = vst [vmem:[#allocation2 + $0x28] sm:$0x3f] 0.0
          %398 = vst [vmem:[#allocation2 + $0x30] sm:$0x3f] 0.0
          %399 = vst [vmem:[#allocation2 + $0x38] sm:$0x3f] 0.0
          %400 = vst [vmem:[#allocation2 + $0x40] sm:$0x3f] 0.0
          %401 = vst [vmem:[#allocation2 + $0x48] sm:$0x3f] 0.0
          %402 = vst [vmem:[#allocation2 + $0x50] sm:$0x3f] 0.0
          %403 = vst [vmem:[#allocation2 + $0x58] sm:$0x3f] 0.0
          %404 = vst [vmem:[#allocation2 + $0x60] sm:$0x3f] 0.0
          %405 = vst [vmem:[#allocation2 + $0x68] sm:$0x3f] 0.0
          %406 = vst [vmem:[#allocation2 + $0x70] sm:$0x3f] 0.0
          %407 = vst [vmem:[#allocation2 + $0x78] sm:$0x3f] 0.0
          %408 = vst [vmem:[#allocation2 + $0x80] sm:$0x3f] 0.0
          %409 = vst [vmem:[#allocation2 + $0x88] sm:$0x3f] 0.0
          %410 = vst [vmem:[#allocation2 + $0x90] sm:$0x3f] 0.0
          %411 = vst [vmem:[#allocation2 + $0x98] sm:$0x3f] 0.0
          %412 = vst [vmem:[#allocation2 + $0xa0] sm:$0x3f] 0.0
          %413 = vst [vmem:[#allocation2 + $0xa8] sm:$0x3f] 0.0
          %414 = vst [vmem:[#allocation2 + $0xb0] sm:$0x3f] 0.0
          %415 = vst [vmem:[#allocation2 + $0xb8] sm:$0x3f] 0.0
        $region80: #{generator_forward.1} parent=47 // pred_fallthru
          _
        %v416 = vld [vmem:[#allocation3] sm:$0xff]
        %v417 = vld [vmem:[#allocation3 + $0x8] sm:$0xff]
        %v418 = vmul.f32 %v416, %v416
        %v419 = vmul.f32 %v417, %v417
        %v422 = vcombine.high %v418, %v418
        %v424 = vunpack.c.l.s4 1983009808
        %v425 = vunpack.c.0.s8 %v424
        %v426 = vlaneseq
        %v427 = vshrl.u32 %v426, 7
        %v428 = vsub.s32 %v425, %v427
        %v429 = vrot.slane %v418, %v428
        %v431 = vunpack.c.l.s4 1983009808
        %v432 = vunpack.c.0.s8 %v431
        %v433 = vlaneseq
        %v434 = vshrl.u32 %v433, 7
        %v435 = vsub.s32 %v432, %v434
        %v436 = vrot.slane %v422, %v435
        %v437 = vcombine.high %v429, %v429
        %v438 = vcombine.high %v436, %v436
        %v439 = vcombine.high %v419, %v419
        %v441 = vunpack.c.l.s4 1983009808
        %v442 = vunpack.c.0.s8 %v441
        %v443 = vlaneseq
        %v444 = vshrl.u32 %v443, 7
        %v445 = vsub.s32 %v442, %v444
        %v446 = vrot.slane %v419, %v445
        %v448 = vunpack.c.l.s4 1983009808
        %v449 = vunpack.c.0.s8 %v448
        %v450 = vlaneseq
        %v451 = vshrl.u32 %v450, 7
        %v452 = vsub.s32 %v449, %v451
        %v453 = vrot.slane %v439, %v452
        %v454 = vcombine.high %v446, %v446
        %v455 = vcombine.high %v453, %v453
        %vm464 = vcmask 1041408
        %v465 = vsel %vm464, %v429, 0.0
        %v466 = vsel %vm464, %v437, 0.0
        %v467 = vadd.f32 %v465, %v466
        %v468 = vsel %vm464, %v436, 0.0
        %v469 = vadd.f32 %v467, %v468
        %v470 = vsel %vm464, %v438, 0.0
        %v471 = vadd.f32 %v469, %v470
        %v472 = vsel %vm464, %v446, 0.0
        %v473 = vadd.f32 %v471, %v472
        %v474 = vsel %vm464, %v454, 0.0
        %v475 = vadd.f32 %v473, %v474
        %v476 = vsel %vm464, %v453, 0.0
        %v477 = vadd.f32 %v475, %v476
        %v478 = vsel %vm464, %v455, 0.0
        %v479 = vadd.f32 %v477, %v478
        %480 = vadd.xlane.f32.xlu0 %v479
        %v481 = vpop.xlane.xlu0 %480
        %v482 = vrcp.pop 1024.0
        %v483 = vmul.f32 %v481, %v482
        %v484 = vadd.f32 %v483, 1e-08
        %v485 = vrsqrt.pop %v484
        %v488 = vunpack.c.l.s4 269488144
        %v489 = vunpack.c.0.s8 %v488
        %v490 = vlaneseq
        %v491 = vshrl.u32 %v490, 7
        %v492 = vsub.s32 %v489, %v491
        %v493 = vrot.slane %v485, %v492
        %v495 = vmul.f32 %v416, %v493
        %v496 = vmul.f32 %v417, %v493
        %v497 = vld [vmem:[%s330] sm:$0xff]
        %v498 = vld [vmem:[%s330 + $0x8] sm:$0xff]
        %v499 = vld [vmem:[%s330 + $0x10] sm:$0xff]
        %v500 = vld [vmem:[%s330 + $0x18] sm:$0xff]
        %v501 = vld [vmem:[%s330 + $0x20] sm:$0xff]
        %v502 = vld [vmem:[%s330 + $0x28] sm:$0xff]
        %v503 = vld [vmem:[%s330 + $0x30] sm:$0xff]
        %v504 = vld [vmem:[%s330 + $0x38] sm:$0xff]
        %v505 = vld [vmem:[%s330 + $0x40] sm:$0xff]
        %v506 = vld [vmem:[%s330 + $0x48] sm:$0xff]
        %v507 = vld [vmem:[%s330 + $0x50] sm:$0xff]
        %v508 = vld [vmem:[%s330 + $0x58] sm:$0xff]
        %v509 = vld [vmem:[%s330 + $0x60] sm:$0xff]
        %v510 = vld [vmem:[%s330 + $0x68] sm:$0xff]
        %v511 = vld [vmem:[%s330 + $0x70] sm:$0xff]
        %v512 = vld [vmem:[%s330 + $0x78] sm:$0xff]
        %v513 = vld [vmem:[%s330 + $0x80] sm:$0xff]
        %v514 = vld [vmem:[%s330 + $0x88] sm:$0xff]
        %v515 = vld [vmem:[%s330 + $0x90] sm:$0xff]
        %v516 = vld [vmem:[%s330 + $0x98] sm:$0xff]
        %v517 = vld [vmem:[%s330 + $0xa0] sm:$0xff]
        %v518 = vld [vmem:[%s330 + $0xa8] sm:$0xff]
        %v519 = vld [vmem:[%s330 + $0xb0] sm:$0xff]
        %v520 = vld [vmem:[%s330 + $0xb8] sm:$0xff]
        %v521 = vld [vmem:[%s330 + $0xc0] sm:$0xff]
        %v522 = vld [vmem:[%s330 + $0xc8] sm:$0xff]
        %v523 = vld [vmem:[%s330 + $0xd0] sm:$0xff]
        %v524 = vld [vmem:[%s330 + $0xd8] sm:$0xff]
        %v525 = vld [vmem:[%s330 + $0xe0] sm:$0xff]
        %v526 = vld [vmem:[%s330 + $0xe8] sm:$0xff]
        %v527 = vld [vmem:[%s330 + $0xf0] sm:$0xff]
        %v528 = vld [vmem:[%s330 + $0xf8] sm:$0xff]
        %v529 = vld [vmem:[%s330 + $0x100] sm:$0xff]
        %v530 = vld [vmem:[%s330 + $0x108] sm:$0xff]
        %v531 = vld [vmem:[%s330 + $0x110] sm:$0xff]
        %v532 = vld [vmem:[%s330 + $0x118] sm:$0xff]
        %v533 = vld [vmem:[%s330 + $0x120] sm:$0xff]
        %v534 = vld [vmem:[%s330 + $0x128] sm:$0xff]
        %v535 = vld [vmem:[%s330 + $0x130] sm:$0xff]
        %v536 = vld [vmem:[%s330 + $0x138] sm:$0xff]
        %v537 = vld [vmem:[%s330 + $0x140] sm:$0xff]
        %v538 = vld [vmem:[%s330 + $0x148] sm:$0xff]
        %v539 = vld [vmem:[%s330 + $0x150] sm:$0xff]
        %v540 = vld [vmem:[%s330 + $0x158] sm:$0xff]
        %v541 = vld [vmem:[%s330 + $0x160] sm:$0xff]
        %v542 = vld [vmem:[%s330 + $0x168] sm:$0xff]
        %v543 = vld [vmem:[%s330 + $0x170] sm:$0xff]
        %v544 = vld [vmem:[%s330 + $0x178] sm:$0xff]
        %v545 = vld [vmem:[%s330 + $0x180] sm:$0xff]
        %v546 = vld [vmem:[%s330 + $0x188] sm:$0xff]
        %v547 = vld [vmem:[%s330 + $0x190] sm:$0xff]
        %v548 = vld [vmem:[%s330 + $0x198] sm:$0xff]
        %v549 = vld [vmem:[%s330 + $0x1a0] sm:$0xff]
        %v550 = vld [vmem:[%s330 + $0x1a8] sm:$0xff]
        %v551 = vld [vmem:[%s330 + $0x1b0] sm:$0xff]
        %v552 = vld [vmem:[%s330 + $0x1b8] sm:$0xff]
        %v553 = vld [vmem:[%s330 + $0x1c0] sm:$0xff]
        %v554 = vld [vmem:[%s330 + $0x1c8] sm:$0xff]
        %v555 = vld [vmem:[%s330 + $0x1d0] sm:$0xff]
        %v556 = vld [vmem:[%s330 + $0x1d8] sm:$0xff]
        %v557 = vld [vmem:[%s330 + $0x1e0] sm:$0xff]
        %v558 = vld [vmem:[%s330 + $0x1e8] sm:$0xff]
        %v559 = vld [vmem:[%s330 + $0x1f0] sm:$0xff]
        %v560 = vld [vmem:[%s330 + $0x1f8] sm:$0xff]
        %v561 = vld [vmem:[%s330 + $0x200] sm:$0xff]
        %v562 = vld [vmem:[%s330 + $0x208] sm:$0xff]
        %v563 = vld [vmem:[%s330 + $0x210] sm:$0xff]
        %v564 = vld [vmem:[%s330 + $0x218] sm:$0xff]
        %v565 = vld [vmem:[%s330 + $0x220] sm:$0xff]
        %v566 = vld [vmem:[%s330 + $0x228] sm:$0xff]
        %v567 = vld [vmem:[%s330 + $0x230] sm:$0xff]
        %v568 = vld [vmem:[%s330 + $0x238] sm:$0xff]
        %v569 = vld [vmem:[%s330 + $0x240] sm:$0xff]
        %v570 = vld [vmem:[%s330 + $0x248] sm:$0xff]
        %v571 = vld [vmem:[%s330 + $0x250] sm:$0xff]
        %v572 = vld [vmem:[%s330 + $0x258] sm:$0xff]
        %v573 = vld [vmem:[%s330 + $0x260] sm:$0xff]
        %v574 = vld [vmem:[%s330 + $0x268] sm:$0xff]
        %v575 = vld [vmem:[%s330 + $0x270] sm:$0xff]
        %v576 = vld [vmem:[%s330 + $0x278] sm:$0xff]
        %v577 = vld [vmem:[%s330 + $0x280] sm:$0xff]
        %v578 = vld [vmem:[%s330 + $0x288] sm:$0xff]
        %v579 = vld [vmem:[%s330 + $0x290] sm:$0xff]
        %v580 = vld [vmem:[%s330 + $0x298] sm:$0xff]
        %v581 = vld [vmem:[%s330 + $0x2a0] sm:$0xff]
        %v582 = vld [vmem:[%s330 + $0x2a8] sm:$0xff]
        %v583 = vld [vmem:[%s330 + $0x2b0] sm:$0xff]
        %v584 = vld [vmem:[%s330 + $0x2b8] sm:$0xff]
        %v585 = vld [vmem:[%s330 + $0x2c0] sm:$0xff]
        %v586 = vld [vmem:[%s330 + $0x2c8] sm:$0xff]
        %v587 = vld [vmem:[%s330 + $0x2d0] sm:$0xff]
        %v588 = vld [vmem:[%s330 + $0x2d8] sm:$0xff]
        %v589 = vld [vmem:[%s330 + $0x2e0] sm:$0xff]
        %v590 = vld [vmem:[%s330 + $0x2e8] sm:$0xff]
        %v591 = vld [vmem:[%s330 + $0x2f0] sm:$0xff]
        %v592 = vld [vmem:[%s330 + $0x2f8] sm:$0xff]
        %v593 = vld [vmem:[%s330 + $0x300] sm:$0xff]
        %v594 = vld [vmem:[%s330 + $0x308] sm:$0xff]
        %v595 = vld [vmem:[%s330 + $0x310] sm:$0xff]
        %v596 = vld [vmem:[%s330 + $0x318] sm:$0xff]
        %v597 = vld [vmem:[%s330 + $0x320] sm:$0xff]
        %v598 = vld [vmem:[%s330 + $0x328] sm:$0xff]
        %v599 = vld [vmem:[%s330 + $0x330] sm:$0xff]
        %v600 = vld [vmem:[%s330 + $0x338] sm:$0xff]
        %v601 = vld [vmem:[%s330 + $0x340] sm:$0xff]
        %v602 = vld [vmem:[%s330 + $0x348] sm:$0xff]
        %v603 = vld [vmem:[%s330 + $0x350] sm:$0xff]
        %v604 = vld [vmem:[%s330 + $0x358] sm:$0xff]
        %v605 = vld [vmem:[%s330 + $0x360] sm:$0xff]
        %v606 = vld [vmem:[%s330 + $0x368] sm:$0xff]
        %v607 = vld [vmem:[%s330 + $0x370] sm:$0xff]
        %v608 = vld [vmem:[%s330 + $0x378] sm:$0xff]
        %v609 = vld [vmem:[%s330 + $0x380] sm:$0xff]
        %v610 = vld [vmem:[%s330 + $0x388] sm:$0xff]
        %v611 = vld [vmem:[%s330 + $0x390] sm:$0xff]
        %v612 = vld [vmem:[%s330 + $0x398] sm:$0xff]
        %v613 = vld [vmem:[%s330 + $0x3a0] sm:$0xff]
        %v614 = vld [vmem:[%s330 + $0x3a8] sm:$0xff]
        %v615 = vld [vmem:[%s330 + $0x3b0] sm:$0xff]
        %v616 = vld [vmem:[%s330 + $0x3b8] sm:$0xff]
        %v617 = vld [vmem:[%s330 + $0x3c0] sm:$0xff]
        %v618 = vld [vmem:[%s330 + $0x3c8] sm:$0xff]
        %v619 = vld [vmem:[%s330 + $0x3d0] sm:$0xff]
        %v620 = vld [vmem:[%s330 + $0x3d8] sm:$0xff]
        %v621 = vld [vmem:[%s330 + $0x3e0] sm:$0xff]
        %v622 = vld [vmem:[%s330 + $0x3e8] sm:$0xff]
        %v623 = vld [vmem:[%s330 + $0x3f0] sm:$0xff]
        %v624 = vld [vmem:[%s330 + $0x3f8] sm:$0xff]
        %v625 = vld [vmem:[%s330 + $0x400] sm:$0xff]
        %v626 = vld [vmem:[%s330 + $0x408] sm:$0xff]
        %v627 = vld [vmem:[%s330 + $0x410] sm:$0xff]
        %v628 = vld [vmem:[%s330 + $0x418] sm:$0xff]
        %v629 = vld [vmem:[%s330 + $0x420] sm:$0xff]
        %v630 = vld [vmem:[%s330 + $0x428] sm:$0xff]
        %v631 = vld [vmem:[%s330 + $0x430] sm:$0xff]
        %v632 = vld [vmem:[%s330 + $0x438] sm:$0xff]
        %v633 = vld [vmem:[%s330 + $0x440] sm:$0xff]
        %v634 = vld [vmem:[%s330 + $0x448] sm:$0xff]
        %v635 = vld [vmem:[%s330 + $0x450] sm:$0xff]
        %v636 = vld [vmem:[%s330 + $0x458] sm:$0xff]
        %v637 = vld [vmem:[%s330 + $0x460] sm:$0xff]
        %v638 = vld [vmem:[%s330 + $0x468] sm:$0xff]
        %v639 = vld [vmem:[%s330 + $0x470] sm:$0xff]
        %v640 = vld [vmem:[%s330 + $0x478] sm:$0xff]
        %v641 = vld [vmem:[%s330 + $0x480] sm:$0xff]
        %v642 = vld [vmem:[%s330 + $0x488] sm:$0xff]
        %v643 = vld [vmem:[%s330 + $0x490] sm:$0xff]
        %v644 = vld [vmem:[%s330 + $0x498] sm:$0xff]
        %v645 = vld [vmem:[%s330 + $0x4a0] sm:$0xff]
        %v646 = vld [vmem:[%s330 + $0x4a8] sm:$0xff]
        %v647 = vld [vmem:[%s330 + $0x4b0] sm:$0xff]
        %v648 = vld [vmem:[%s330 + $0x4b8] sm:$0xff]
        %v649 = vld [vmem:[%s330 + $0x4c0] sm:$0xff]
        %v650 = vld [vmem:[%s330 + $0x4c8] sm:$0xff]
        %v651 = vld [vmem:[%s330 + $0x4d0] sm:$0xff]
        %v652 = vld [vmem:[%s330 + $0x4d8] sm:$0xff]
        %v653 = vld [vmem:[%s330 + $0x4e0] sm:$0xff]
        %v654 = vld [vmem:[%s330 + $0x4e8] sm:$0xff]
        %v655 = vld [vmem:[%s330 + $0x4f0] sm:$0xff]
        %v656 = vld [vmem:[%s330 + $0x4f8] sm:$0xff]
        %v657 = vld [vmem:[%s330 + $0x500] sm:$0xff]
        %v658 = vld [vmem:[%s330 + $0x508] sm:$0xff]
        %v659 = vld [vmem:[%s330 + $0x510] sm:$0xff]
        %v660 = vld [vmem:[%s330 + $0x518] sm:$0xff]
        %v661 = vld [vmem:[%s330 + $0x520] sm:$0xff]
        %v662 = vld [vmem:[%s330 + $0x528] sm:$0xff]
        %v663 = vld [vmem:[%s330 + $0x530] sm:$0xff]
        %v664 = vld [vmem:[%s330 + $0x538] sm:$0xff]
        %v665 = vld [vmem:[%s330 + $0x540] sm:$0xff]
        %v666 = vld [vmem:[%s330 + $0x548] sm:$0xff]
        %v667 = vld [vmem:[%s330 + $0x550] sm:$0xff]
        %v668 = vld [vmem:[%s330 + $0x558] sm:$0xff]
        %v669 = vld [vmem:[%s330 + $0x560] sm:$0xff]
        %v670 = vld [vmem:[%s330 + $0x568] sm:$0xff]
        %v671 = vld [vmem:[%s330 + $0x570] sm:$0xff]
        %v672 = vld [vmem:[%s330 + $0x578] sm:$0xff]
        %v673 = vld [vmem:[%s330 + $0x580] sm:$0xff]
        %v674 = vld [vmem:[%s330 + $0x588] sm:$0xff]
        %v675 = vld [vmem:[%s330 + $0x590] sm:$0xff]
        %v676 = vld [vmem:[%s330 + $0x598] sm:$0xff]
        %v677 = vld [vmem:[%s330 + $0x5a0] sm:$0xff]
        %v678 = vld [vmem:[%s330 + $0x5a8] sm:$0xff]
        %v679 = vld [vmem:[%s330 + $0x5b0] sm:$0xff]
        %v680 = vld [vmem:[%s330 + $0x5b8] sm:$0xff]
        %v681 = vld [vmem:[%s330 + $0x5c0] sm:$0xff]
        %v682 = vld [vmem:[%s330 + $0x5c8] sm:$0xff]
        %v683 = vld [vmem:[%s330 + $0x5d0] sm:$0xff]
        %v684 = vld [vmem:[%s330 + $0x5d8] sm:$0xff]
        %v685 = vld [vmem:[%s330 + $0x5e0] sm:$0xff]
        %v686 = vld [vmem:[%s330 + $0x5e8] sm:$0xff]
        %v687 = vld [vmem:[%s330 + $0x5f0] sm:$0xff]
        %v688 = vld [vmem:[%s330 + $0x5f8] sm:$0xff]
        %v689 = vld [vmem:[%s330 + $0x600] sm:$0xff]
        %v690 = vld [vmem:[%s330 + $0x608] sm:$0xff]
        %v691 = vld [vmem:[%s330 + $0x610] sm:$0xff]
        %v692 = vld [vmem:[%s330 + $0x618] sm:$0xff]
        %v693 = vld [vmem:[%s330 + $0x620] sm:$0xff]
        %v694 = vld [vmem:[%s330 + $0x628] sm:$0xff]
        %v695 = vld [vmem:[%s330 + $0x630] sm:$0xff]
        %v696 = vld [vmem:[%s330 + $0x638] sm:$0xff]
        %v697 = vld [vmem:[%s330 + $0x640] sm:$0xff]
        %v698 = vld [vmem:[%s330 + $0x648] sm:$0xff]
        %v699 = vld [vmem:[%s330 + $0x650] sm:$0xff]
        %v700 = vld [vmem:[%s330 + $0x658] sm:$0xff]
        %v701 = vld [vmem:[%s330 + $0x660] sm:$0xff]
        %v702 = vld [vmem:[%s330 + $0x668] sm:$0xff]
        %v703 = vld [vmem:[%s330 + $0x670] sm:$0xff]
        %v704 = vld [vmem:[%s330 + $0x678] sm:$0xff]
        %v705 = vld [vmem:[%s330 + $0x680] sm:$0xff]
        %v706 = vld [vmem:[%s330 + $0x688] sm:$0xff]
        %v707 = vld [vmem:[%s330 + $0x690] sm:$0xff]
        %v708 = vld [vmem:[%s330 + $0x698] sm:$0xff]
        %v709 = vld [vmem:[%s330 + $0x6a0] sm:$0xff]
        %v710 = vld [vmem:[%s330 + $0x6a8] sm:$0xff]
        %v711 = vld [vmem:[%s330 + $0x6b0] sm:$0xff]
        %v712 = vld [vmem:[%s330 + $0x6b8] sm:$0xff]
        %v713 = vld [vmem:[%s330 + $0x6c0] sm:$0xff]
        %v714 = vld [vmem:[%s330 + $0x6c8] sm:$0xff]
        %v715 = vld [vmem:[%s330 + $0x6d0] sm:$0xff]
        %v716 = vld [vmem:[%s330 + $0x6d8] sm:$0xff]
        %v717 = vld [vmem:[%s330 + $0x6e0] sm:$0xff]
        %v718 = vld [vmem:[%s330 + $0x6e8] sm:$0xff]
        %v719 = vld [vmem:[%s330 + $0x6f0] sm:$0xff]
        %v720 = vld [vmem:[%s330 + $0x6f8] sm:$0xff]
        %v721 = vld [vmem:[%s330 + $0x700] sm:$0xff]
        %v722 = vld [vmem:[%s330 + $0x708] sm:$0xff]
        %v723 = vld [vmem:[%s330 + $0x710] sm:$0xff]
        %v724 = vld [vmem:[%s330 + $0x718] sm:$0xff]
        %v725 = vld [vmem:[%s330 + $0x720] sm:$0xff]
        %v726 = vld [vmem:[%s330 + $0x728] sm:$0xff]
        %v727 = vld [vmem:[%s330 + $0x730] sm:$0xff]
        %v728 = vld [vmem:[%s330 + $0x738] sm:$0xff]
        %v729 = vld [vmem:[%s330 + $0x740] sm:$0xff]
        %v730 = vld [vmem:[%s330 + $0x748] sm:$0xff]
        %v731 = vld [vmem:[%s330 + $0x750] sm:$0xff]
        %v732 = vld [vmem:[%s330 + $0x758] sm:$0xff]
        %v733 = vld [vmem:[%s330 + $0x760] sm:$0xff]
        %v734 = vld [vmem:[%s330 + $0x768] sm:$0xff]
        %v735 = vld [vmem:[%s330 + $0x770] sm:$0xff]
        %v736 = vld [vmem:[%s330 + $0x778] sm:$0xff]
        %v737 = vld [vmem:[%s330 + $0x780] sm:$0xff]
        %v738 = vld [vmem:[%s330 + $0x788] sm:$0xff]
        %v739 = vld [vmem:[%s330 + $0x790] sm:$0xff]
        %v740 = vld [vmem:[%s330 + $0x798] sm:$0xff]
        %v741 = vld [vmem:[%s330 + $0x7a0] sm:$0xff]
        %v742 = vld [vmem:[%s330 + $0x7a8] sm:$0xff]
        %v743 = vld [vmem:[%s330 + $0x7b0] sm:$0xff]
        %v744 = vld [vmem:[%s330 + $0x7b8] sm:$0xff]
        %v745 = vld [vmem:[%s330 + $0x7c0] sm:$0xff]
        %v746 = vld [vmem:[%s330 + $0x7c8] sm:$0xff]
        %v747 = vld [vmem:[%s330 + $0x7d0] sm:$0xff]
        %v748 = vld [vmem:[%s330 + $0x7d8] sm:$0xff]
        %v749 = vld [vmem:[%s330 + $0x7e0] sm:$0xff]
        %v750 = vld [vmem:[%s330 + $0x7e8] sm:$0xff]
        %v751 = vld [vmem:[%s330 + $0x7f0] sm:$0xff]
        %v752 = vld [vmem:[%s330 + $0x7f8] sm:$0xff]
        %v753 = vld [vmem:[%s330 + $0x800] sm:$0xff]
        %v754 = vld [vmem:[%s330 + $0x808] sm:$0xff]
        %v755 = vld [vmem:[%s330 + $0x810] sm:$0xff]
        %v756 = vld [vmem:[%s330 + $0x818] sm:$0xff]
        %v757 = vld [vmem:[%s330 + $0x820] sm:$0xff]
        %v758 = vld [vmem:[%s330 + $0x828] sm:$0xff]
        %v759 = vld [vmem:[%s330 + $0x830] sm:$0xff]
        %v760 = vld [vmem:[%s330 + $0x838] sm:$0xff]
        %v761 = vld [vmem:[%s330 + $0x840] sm:$0xff]
        %v762 = vld [vmem:[%s330 + $0x848] sm:$0xff]
        %v763 = vld [vmem:[%s330 + $0x850] sm:$0xff]
        %v764 = vld [vmem:[%s330 + $0x858] sm:$0xff]
        %v765 = vld [vmem:[%s330 + $0x860] sm:$0xff]
        %v766 = vld [vmem:[%s330 + $0x868] sm:$0xff]
        %v767 = vld [vmem:[%s330 + $0x870] sm:$0xff]
        %v768 = vld [vmem:[%s330 + $0x878] sm:$0xff]
        %v769 = vld [vmem:[%s330 + $0x880] sm:$0xff]
        %v770 = vld [vmem:[%s330 + $0x888] sm:$0xff]
        %v771 = vld [vmem:[%s330 + $0x890] sm:$0xff]
        %v772 = vld [vmem:[%s330 + $0x898] sm:$0xff]
        %v773 = vld [vmem:[%s330 + $0x8a0] sm:$0xff]
        %v774 = vld [vmem:[%s330 + $0x8a8] sm:$0xff]
        %v775 = vld [vmem:[%s330 + $0x8b0] sm:$0xff]
        %v776 = vld [vmem:[%s330 + $0x8b8] sm:$0xff]
        %v777 = vld [vmem:[%s330 + $0x8c0] sm:$0xff]
        %v778 = vld [vmem:[%s330 + $0x8c8] sm:$0xff]
        %v779 = vld [vmem:[%s330 + $0x8d0] sm:$0xff]
        %v780 = vld [vmem:[%s330 + $0x8d8] sm:$0xff]
        %v781 = vld [vmem:[%s330 + $0x8e0] sm:$0xff]
        %v782 = vld [vmem:[%s330 + $0x8e8] sm:$0xff]
        %v783 = vld [vmem:[%s330 + $0x8f0] sm:$0xff]
        %v784 = vld [vmem:[%s330 + $0x8f8] sm:$0xff]
        %v785 = vld [vmem:[%s330 + $0x900] sm:$0xff]
        %v786 = vld [vmem:[%s330 + $0x908] sm:$0xff]
        %v787 = vld [vmem:[%s330 + $0x910] sm:$0xff]
        %v788 = vld [vmem:[%s330 + $0x918] sm:$0xff]
        %v789 = vld [vmem:[%s330 + $0x920] sm:$0xff]
        %v790 = vld [vmem:[%s330 + $0x928] sm:$0xff]
        %v791 = vld [vmem:[%s330 + $0x930] sm:$0xff]
        %v792 = vld [vmem:[%s330 + $0x938] sm:$0xff]
        %v793 = vld [vmem:[%s330 + $0x940] sm:$0xff]
        %v794 = vld [vmem:[%s330 + $0x948] sm:$0xff]
        %v795 = vld [vmem:[%s330 + $0x950] sm:$0xff]
        %v796 = vld [vmem:[%s330 + $0x958] sm:$0xff]
        %v797 = vld [vmem:[%s330 + $0x960] sm:$0xff]
        %v798 = vld [vmem:[%s330 + $0x968] sm:$0xff]
        %v799 = vld [vmem:[%s330 + $0x970] sm:$0xff]
        %v800 = vld [vmem:[%s330 + $0x978] sm:$0xff]
        %v801 = vld [vmem:[%s330 + $0x980] sm:$0xff]
        %v802 = vld [vmem:[%s330 + $0x988] sm:$0xff]
        %v803 = vld [vmem:[%s330 + $0x990] sm:$0xff]
        %v804 = vld [vmem:[%s330 + $0x998] sm:$0xff]
        %v805 = vld [vmem:[%s330 + $0x9a0] sm:$0xff]
        %v806 = vld [vmem:[%s330 + $0x9a8] sm:$0xff]
        %v807 = vld [vmem:[%s330 + $0x9b0] sm:$0xff]
        %v808 = vld [vmem:[%s330 + $0x9b8] sm:$0xff]
        %v809 = vld [vmem:[%s330 + $0x9c0] sm:$0xff]
        %v810 = vld [vmem:[%s330 + $0x9c8] sm:$0xff]
        %v811 = vld [vmem:[%s330 + $0x9d0] sm:$0xff]
        %v812 = vld [vmem:[%s330 + $0x9d8] sm:$0xff]
        %v813 = vld [vmem:[%s330 + $0x9e0] sm:$0xff]
        %v814 = vld [vmem:[%s330 + $0x9e8] sm:$0xff]
        %v815 = vld [vmem:[%s330 + $0x9f0] sm:$0xff]
        %v816 = vld [vmem:[%s330 + $0x9f8] sm:$0xff]
        %v817 = vld [vmem:[%s330 + $0xa00] sm:$0xff]
        %v818 = vld [vmem:[%s330 + $0xa08] sm:$0xff]
        %v819 = vld [vmem:[%s330 + $0xa10] sm:$0xff]
        %v820 = vld [vmem:[%s330 + $0xa18] sm:$0xff]
        %v821 = vld [vmem:[%s330 + $0xa20] sm:$0xff]
        %v822 = vld [vmem:[%s330 + $0xa28] sm:$0xff]
        %v823 = vld [vmem:[%s330 + $0xa30] sm:$0xff]
        %v824 = vld [vmem:[%s330 + $0xa38] sm:$0xff]
        %v825 = vld [vmem:[%s330 + $0xa40] sm:$0xff]
        %v826 = vld [vmem:[%s330 + $0xa48] sm:$0xff]
        %v827 = vld [vmem:[%s330 + $0xa50] sm:$0xff]
        %v828 = vld [vmem:[%s330 + $0xa58] sm:$0xff]
        %v829 = vld [vmem:[%s330 + $0xa60] sm:$0xff]
        %v830 = vld [vmem:[%s330 + $0xa68] sm:$0xff]
        %v831 = vld [vmem:[%s330 + $0xa70] sm:$0xff]
        %v832 = vld [vmem:[%s330 + $0xa78] sm:$0xff]
        %v833 = vld [vmem:[%s330 + $0xa80] sm:$0xff]
        %v834 = vld [vmem:[%s330 + $0xa88] sm:$0xff]
        %v835 = vld [vmem:[%s330 + $0xa90] sm:$0xff]
        %v836 = vld [vmem:[%s330 + $0xa98] sm:$0xff]
        %v837 = vld [vmem:[%s330 + $0xaa0] sm:$0xff]
        %v838 = vld [vmem:[%s330 + $0xaa8] sm:$0xff]
        %v839 = vld [vmem:[%s330 + $0xab0] sm:$0xff]
        %v840 = vld [vmem:[%s330 + $0xab8] sm:$0xff]
        %v841 = vld [vmem:[%s330 + $0xac0] sm:$0xff]
        %v842 = vld [vmem:[%s330 + $0xac8] sm:$0xff]
        %v843 = vld [vmem:[%s330 + $0xad0] sm:$0xff]
        %v844 = vld [vmem:[%s330 + $0xad8] sm:$0xff]
        %v845 = vld [vmem:[%s330 + $0xae0] sm:$0xff]
        %v846 = vld [vmem:[%s330 + $0xae8] sm:$0xff]
        %v847 = vld [vmem:[%s330 + $0xaf0] sm:$0xff]
        %v848 = vld [vmem:[%s330 + $0xaf8] sm:$0xff]
        %v849 = vld [vmem:[%s330 + $0xb00] sm:$0xff]
        %v850 = vld [vmem:[%s330 + $0xb08] sm:$0xff]
        %v851 = vld [vmem:[%s330 + $0xb10] sm:$0xff]
        %v852 = vld [vmem:[%s330 + $0xb18] sm:$0xff]
        %v853 = vld [vmem:[%s330 + $0xb20] sm:$0xff]
        %v854 = vld [vmem:[%s330 + $0xb28] sm:$0xff]
        %v855 = vld [vmem:[%s330 + $0xb30] sm:$0xff]
        %v856 = vld [vmem:[%s330 + $0xb38] sm:$0xff]
        %v857 = vld [vmem:[%s330 + $0xb40] sm:$0xff]
        %v858 = vld [vmem:[%s330 + $0xb48] sm:$0xff]
        %v859 = vld [vmem:[%s330 + $0xb50] sm:$0xff]
        %v860 = vld [vmem:[%s330 + $0xb58] sm:$0xff]
        %v861 = vld [vmem:[%s330 + $0xb60] sm:$0xff]
        %v862 = vld [vmem:[%s330 + $0xb68] sm:$0xff]
        %v863 = vld [vmem:[%s330 + $0xb70] sm:$0xff]
        %v864 = vld [vmem:[%s330 + $0xb78] sm:$0xff]
        %v865 = vld [vmem:[%s330 + $0xb80] sm:$0xff]
        %v866 = vld [vmem:[%s330 + $0xb88] sm:$0xff]
        %v867 = vld [vmem:[%s330 + $0xb90] sm:$0xff]
        %v868 = vld [vmem:[%s330 + $0xb98] sm:$0xff]
        %v869 = vld [vmem:[%s330 + $0xba0] sm:$0xff]
        %v870 = vld [vmem:[%s330 + $0xba8] sm:$0xff]
        %v871 = vld [vmem:[%s330 + $0xbb0] sm:$0xff]
        %v872 = vld [vmem:[%s330 + $0xbb8] sm:$0xff]
        %v873 = vld [vmem:[%s330 + $0xbc0] sm:$0xff]
        %v874 = vld [vmem:[%s330 + $0xbc8] sm:$0xff]
        %v875 = vld [vmem:[%s330 + $0xbd0] sm:$0xff]
        %v876 = vld [vmem:[%s330 + $0xbd8] sm:$0xff]
        %v877 = vld [vmem:[%s330 + $0xbe0] sm:$0xff]
        %v878 = vld [vmem:[%s330 + $0xbe8] sm:$0xff]
        %v879 = vld [vmem:[%s330 + $0xbf0] sm:$0xff]
        %v880 = vld [vmem:[%s330 + $0xbf8] sm:$0xff]
        %v881 = vld [vmem:[%s330 + $0xc00] sm:$0xff]
        %v882 = vld [vmem:[%s330 + $0xc08] sm:$0xff]
        %v883 = vld [vmem:[%s330 + $0xc10] sm:$0xff]
        %v884 = vld [vmem:[%s330 + $0xc18] sm:$0xff]
        %v885 = vld [vmem:[%s330 + $0xc20] sm:$0xff]
        %v886 = vld [vmem:[%s330 + $0xc28] sm:$0xff]
        %v887 = vld [vmem:[%s330 + $0xc30] sm:$0xff]
        %v888 = vld [vmem:[%s330 + $0xc38] sm:$0xff]
        %v889 = vld [vmem:[%s330 + $0xc40] sm:$0xff]
        %v890 = vld [vmem:[%s330 + $0xc48] sm:$0xff]
        %v891 = vld [vmem:[%s330 + $0xc50] sm:$0xff]
        %v892 = vld [vmem:[%s330 + $0xc58] sm:$0xff]
        %v893 = vld [vmem:[%s330 + $0xc60] sm:$0xff]
        %v894 = vld [vmem:[%s330 + $0xc68] sm:$0xff]
        %v895 = vld [vmem:[%s330 + $0xc70] sm:$0xff]
        %v896 = vld [vmem:[%s330 + $0xc78] sm:$0xff]
        %v897 = vld [vmem:[%s330 + $0xc80] sm:$0xff]
        %v898 = vld [vmem:[%s330 + $0xc88] sm:$0xff]
        %v899 = vld [vmem:[%s330 + $0xc90] sm:$0xff]
        %v900 = vld [vmem:[%s330 + $0xc98] sm:$0xff]
        %v901 = vld [vmem:[%s330 + $0xca0] sm:$0xff]
        %v902 = vld [vmem:[%s330 + $0xca8] sm:$0xff]
        %v903 = vld [vmem:[%s330 + $0xcb0] sm:$0xff]
        %v904 = vld [vmem:[%s330 + $0xcb8] sm:$0xff]
        %v905 = vld [vmem:[%s330 + $0xcc0] sm:$0xff]
        %v906 = vld [vmem:[%s330 + $0xcc8] sm:$0xff]
        %v907 = vld [vmem:[%s330 + $0xcd0] sm:$0xff]
        %v908 = vld [vmem:[%s330 + $0xcd8] sm:$0xff]
        %v909 = vld [vmem:[%s330 + $0xce0] sm:$0xff]
        %v910 = vld [vmem:[%s330 + $0xce8] sm:$0xff]
        %v911 = vld [vmem:[%s330 + $0xcf0] sm:$0xff]
        %v912 = vld [vmem:[%s330 + $0xcf8] sm:$0xff]
        %v913 = vld [vmem:[%s330 + $0xd00] sm:$0xff]
        %v914 = vld [vmem:[%s330 + $0xd08] sm:$0xff]
        %v915 = vld [vmem:[%s330 + $0xd10] sm:$0xff]
        %v916 = vld [vmem:[%s330 + $0xd18] sm:$0xff]
        %v917 = vld [vmem:[%s330 + $0xd20] sm:$0xff]
        %v918 = vld [vmem:[%s330 + $0xd28] sm:$0xff]
        %v919 = vld [vmem:[%s330 + $0xd30] sm:$0xff]
        %v920 = vld [vmem:[%s330 + $0xd38] sm:$0xff]
        %v921 = vld [vmem:[%s330 + $0xd40] sm:$0xff]
        %v922 = vld [vmem:[%s330 + $0xd48] sm:$0xff]
        %v923 = vld [vmem:[%s330 + $0xd50] sm:$0xff]
        %v924 = vld [vmem:[%s330 + $0xd58] sm:$0xff]
        %v925 = vld [vmem:[%s330 + $0xd60] sm:$0xff]
        %v926 = vld [vmem:[%s330 + $0xd68] sm:$0xff]
        %v927 = vld [vmem:[%s330 + $0xd70] sm:$0xff]
        %v928 = vld [vmem:[%s330 + $0xd78] sm:$0xff]
        %v929 = vld [vmem:[%s330 + $0xd80] sm:$0xff]
        %v930 = vld [vmem:[%s330 + $0xd88] sm:$0xff]
        %v931 = vld [vmem:[%s330 + $0xd90] sm:$0xff]
        %v932 = vld [vmem:[%s330 + $0xd98] sm:$0xff]
        %v933 = vld [vmem:[%s330 + $0xda0] sm:$0xff]
        %v934 = vld [vmem:[%s330 + $0xda8] sm:$0xff]
        %v935 = vld [vmem:[%s330 + $0xdb0] sm:$0xff]
        %v936 = vld [vmem:[%s330 + $0xdb8] sm:$0xff]
        %v937 = vld [vmem:[%s330 + $0xdc0] sm:$0xff]
        %v938 = vld [vmem:[%s330 + $0xdc8] sm:$0xff]
        %v939 = vld [vmem:[%s330 + $0xdd0] sm:$0xff]
        %v940 = vld [vmem:[%s330 + $0xdd8] sm:$0xff]
        %v941 = vld [vmem:[%s330 + $0xde0] sm:$0xff]
        %v942 = vld [vmem:[%s330 + $0xde8] sm:$0xff]
        %v943 = vld [vmem:[%s330 + $0xdf0] sm:$0xff]
        %v944 = vld [vmem:[%s330 + $0xdf8] sm:$0xff]
        %v945 = vld [vmem:[%s330 + $0xe00] sm:$0xff]
        %v946 = vld [vmem:[%s330 + $0xe08] sm:$0xff]
        %v947 = vld [vmem:[%s330 + $0xe10] sm:$0xff]
        %v948 = vld [vmem:[%s330 + $0xe18] sm:$0xff]
        %v949 = vld [vmem:[%s330 + $0xe20] sm:$0xff]
        %v950 = vld [vmem:[%s330 + $0xe28] sm:$0xff]
        %v951 = vld [vmem:[%s330 + $0xe30] sm:$0xff]
        %v952 = vld [vmem:[%s330 + $0xe38] sm:$0xff]
        %v953 = vld [vmem:[%s330 + $0xe40] sm:$0xff]
        %v954 = vld [vmem:[%s330 + $0xe48] sm:$0xff]
        %v955 = vld [vmem:[%s330 + $0xe50] sm:$0xff]
        %v956 = vld [vmem:[%s330 + $0xe58] sm:$0xff]
        %v957 = vld [vmem:[%s330 + $0xe60] sm:$0xff]
        %v958 = vld [vmem:[%s330 + $0xe68] sm:$0xff]
        %v959 = vld [vmem:[%s330 + $0xe70] sm:$0xff]
        %v960 = vld [vmem:[%s330 + $0xe78] sm:$0xff]
        %v961 = vld [vmem:[%s330 + $0xe80] sm:$0xff]
        %v962 = vld [vmem:[%s330 + $0xe88] sm:$0xff]
        %v963 = vld [vmem:[%s330 + $0xe90] sm:$0xff]
        %v964 = vld [vmem:[%s330 + $0xe98] sm:$0xff]
        %v965 = vld [vmem:[%s330 + $0xea0] sm:$0xff]
        %v966 = vld [vmem:[%s330 + $0xea8] sm:$0xff]
        %v967 = vld [vmem:[%s330 + $0xeb0] sm:$0xff]
        %v968 = vld [vmem:[%s330 + $0xeb8] sm:$0xff]
        %v969 = vld [vmem:[%s330 + $0xec0] sm:$0xff]
        %v970 = vld [vmem:[%s330 + $0xec8] sm:$0xff]
        %v971 = vld [vmem:[%s330 + $0xed0] sm:$0xff]
        %v972 = vld [vmem:[%s330 + $0xed8] sm:$0xff]
        %v973 = vld [vmem:[%s330 + $0xee0] sm:$0xff]
        %v974 = vld [vmem:[%s330 + $0xee8] sm:$0xff]
        %v975 = vld [vmem:[%s330 + $0xef0] sm:$0xff]
        %v976 = vld [vmem:[%s330 + $0xef8] sm:$0xff]
        %v977 = vld [vmem:[%s330 + $0xf00] sm:$0xff]
        %v978 = vld [vmem:[%s330 + $0xf08] sm:$0xff]
        %v979 = vld [vmem:[%s330 + $0xf10] sm:$0xff]
        %v980 = vld [vmem:[%s330 + $0xf18] sm:$0xff]
        %v981 = vld [vmem:[%s330 + $0xf20] sm:$0xff]
        %v982 = vld [vmem:[%s330 + $0xf28] sm:$0xff]
        %v983 = vld [vmem:[%s330 + $0xf30] sm:$0xff]
        %v984 = vld [vmem:[%s330 + $0xf38] sm:$0xff]
        %v985 = vld [vmem:[%s330 + $0xf40] sm:$0xff]
        %v986 = vld [vmem:[%s330 + $0xf48] sm:$0xff]
        %v987 = vld [vmem:[%s330 + $0xf50] sm:$0xff]
        %v988 = vld [vmem:[%s330 + $0xf58] sm:$0xff]
        %v989 = vld [vmem:[%s330 + $0xf60] sm:$0xff]
        %v990 = vld [vmem:[%s330 + $0xf68] sm:$0xff]
        %v991 = vld [vmem:[%s330 + $0xf70] sm:$0xff]
        %v992 = vld [vmem:[%s330 + $0xf78] sm:$0xff]
        %v993 = vld [vmem:[%s330 + $0xf80] sm:$0xff]
        %v994 = vld [vmem:[%s330 + $0xf88] sm:$0xff]
        %v995 = vld [vmem:[%s330 + $0xf90] sm:$0xff]
        %v996 = vld [vmem:[%s330 + $0xf98] sm:$0xff]
        %v997 = vld [vmem:[%s330 + $0xfa0] sm:$0xff]
        %v998 = vld [vmem:[%s330 + $0xfa8] sm:$0xff]
        %v999 = vld [vmem:[%s330 + $0xfb0] sm:$0xff]
        %v1000 = vld [vmem:[%s330 + $0xfb8] sm:$0xff]
        %v1001 = vld [vmem:[%s330 + $0xfc0] sm:$0xff]
        %v1002 = vld [vmem:[%s330 + $0xfc8] sm:$0xff]
        %v1003 = vld [vmem:[%s330 + $0xfd0] sm:$0xff]
        %v1004 = vld [vmem:[%s330 + $0xfd8] sm:$0xff]
        %v1005 = vld [vmem:[%s330 + $0xfe0] sm:$0xff]
        %v1006 = vld [vmem:[%s330 + $0xfe8] sm:$0xff]
        %v1007 = vld [vmem:[%s330 + $0xff0] sm:$0xff]
        %v1008 = vld [vmem:[%s330 + $0xff8] sm:$0xff]
        %v1009 = vld [vmem:[%s330 + $0x1000] sm:$0xff]
        %v1010 = vld [vmem:[%s330 + $0x1008] sm:$0xff]
        %v1011 = vld [vmem:[%s330 + $0x1010] sm:$0xff]
        %v1012 = vld [vmem:[%s330 + $0x1018] sm:$0xff]
        %v1013 = vld [vmem:[%s330 + $0x1020] sm:$0xff]
        %v1014 = vld [vmem:[%s330 + $0x1028] sm:$0xff]
        %v1015 = vld [vmem:[%s330 + $0x1030] sm:$0xff]
        %v1016 = vld [vmem:[%s330 + $0x1038] sm:$0xff]
        %v1017 = vld [vmem:[%s330 + $0x1040] sm:$0xff]
        %v1018 = vld [vmem:[%s330 + $0x1048] sm:$0xff]
        %v1019 = vld [vmem:[%s330 + $0x1050] sm:$0xff]
        %v1020 = vld [vmem:[%s330 + $0x1058] sm:$0xff]
        %v1021 = vld [vmem:[%s330 + $0x1060] sm:$0xff]
        %v1022 = vld [vmem:[%s330 + $0x1068] sm:$0xff]
        %v1023 = vld [vmem:[%s330 + $0x1070] sm:$0xff]
        %v1024 = vld [vmem:[%s330 + $0x1078] sm:$0xff]
        %v1025 = vld [vmem:[%s330 + $0x1080] sm:$0xff]
        %v1026 = vld [vmem:[%s330 + $0x1088] sm:$0xff]
        %v1027 = vld [vmem:[%s330 + $0x1090] sm:$0xff]
        %v1028 = vld [vmem:[%s330 + $0x1098] sm:$0xff]
        %v1029 = vld [vmem:[%s330 + $0x10a0] sm:$0xff]
        %v1030 = vld [vmem:[%s330 + $0x10a8] sm:$0xff]
        %v1031 = vld [vmem:[%s330 + $0x10b0] sm:$0xff]
        %v1032 = vld [vmem:[%s330 + $0x10b8] sm:$0xff]
        %v1033 = vld [vmem:[%s330 + $0x10c0] sm:$0xff]
        %v1034 = vld [vmem:[%s330 + $0x10c8] sm:$0xff]
        %v1035 = vld [vmem:[%s330 + $0x10d0] sm:$0xff]
        %v1036 = vld [vmem:[%s330 + $0x10d8] sm:$0xff]
        %v1037 = vld [vmem:[%s330 + $0x10e0] sm:$0xff]
        %v1038 = vld [vmem:[%s330 + $0x10e8] sm:$0xff]
        %v1039 = vld [vmem:[%s330 + $0x10f0] sm:$0xff]
        %v1040 = vld [vmem:[%s330 + $0x10f8] sm:$0xff]
        %v1041 = vld [vmem:[%s330 + $0x1100] sm:$0xff]
        %v1042 = vld [vmem:[%s330 + $0x1108] sm:$0xff]
        %v1043 = vld [vmem:[%s330 + $0x1110] sm:$0xff]
        %v1044 = vld [vmem:[%s330 + $0x1118] sm:$0xff]
        %v1045 = vld [vmem:[%s330 + $0x1120] sm:$0xff]
        %v1046 = vld [vmem:[%s330 + $0x1128] sm:$0xff]
        %v1047 = vld [vmem:[%s330 + $0x1130] sm:$0xff]
        %v1048 = vld [vmem:[%s330 + $0x1138] sm:$0xff]
        %v1049 = vld [vmem:[%s330 + $0x1140] sm:$0xff]
        %v1050 = vld [vmem:[%s330 + $0x1148] sm:$0xff]
        %v1051 = vld [vmem:[%s330 + $0x1150] sm:$0xff]
        %v1052 = vld [vmem:[%s330 + $0x1158] sm:$0xff]
        %v1053 = vld [vmem:[%s330 + $0x1160] sm:$0xff]
        %v1054 = vld [vmem:[%s330 + $0x1168] sm:$0xff]
        %v1055 = vld [vmem:[%s330 + $0x1170] sm:$0xff]
        %v1056 = vld [vmem:[%s330 + $0x1178] sm:$0xff]
        %v1057 = vld [vmem:[%s330 + $0x1180] sm:$0xff]
        %v1058 = vld [vmem:[%s330 + $0x1188] sm:$0xff]
        %v1059 = vld [vmem:[%s330 + $0x1190] sm:$0xff]
        %v1060 = vld [vmem:[%s330 + $0x1198] sm:$0xff]
        %v1061 = vld [vmem:[%s330 + $0x11a0] sm:$0xff]
        %v1062 = vld [vmem:[%s330 + $0x11a8] sm:$0xff]
        %v1063 = vld [vmem:[%s330 + $0x11b0] sm:$0xff]
        %v1064 = vld [vmem:[%s330 + $0x11b8] sm:$0xff]
        %v1065 = vld [vmem:[%s330 + $0x11c0] sm:$0xff]
        %v1066 = vld [vmem:[%s330 + $0x11c8] sm:$0xff]
        %v1067 = vld [vmem:[%s330 + $0x11d0] sm:$0xff]
        %v1068 = vld [vmem:[%s330 + $0x11d8] sm:$0xff]
        %v1069 = vld [vmem:[%s330 + $0x11e0] sm:$0xff]
        %v1070 = vld [vmem:[%s330 + $0x11e8] sm:$0xff]
        %v1071 = vld [vmem:[%s330 + $0x11f0] sm:$0xff]
        %v1072 = vld [vmem:[%s330 + $0x11f8] sm:$0xff]
        %v1073 = vld [vmem:[%s330 + $0x1200] sm:$0xff]
        %v1074 = vld [vmem:[%s330 + $0x1208] sm:$0xff]
        %v1075 = vld [vmem:[%s330 + $0x1210] sm:$0xff]
        %v1076 = vld [vmem:[%s330 + $0x1218] sm:$0xff]
        %v1077 = vld [vmem:[%s330 + $0x1220] sm:$0xff]
        %v1078 = vld [vmem:[%s330 + $0x1228] sm:$0xff]
        %v1079 = vld [vmem:[%s330 + $0x1230] sm:$0xff]
        %v1080 = vld [vmem:[%s330 + $0x1238] sm:$0xff]
        %v1081 = vld [vmem:[%s330 + $0x1240] sm:$0xff]
        %v1082 = vld [vmem:[%s330 + $0x1248] sm:$0xff]
        %v1083 = vld [vmem:[%s330 + $0x1250] sm:$0xff]
        %v1084 = vld [vmem:[%s330 + $0x1258] sm:$0xff]
        %v1085 = vld [vmem:[%s330 + $0x1260] sm:$0xff]
        %v1086 = vld [vmem:[%s330 + $0x1268] sm:$0xff]
        %v1087 = vld [vmem:[%s330 + $0x1270] sm:$0xff]
        %v1088 = vld [vmem:[%s330 + $0x1278] sm:$0xff]
        %v1089 = vld [vmem:[%s330 + $0x1280] sm:$0xff]
        %v1090 = vld [vmem:[%s330 + $0x1288] sm:$0xff]
        %v1091 = vld [vmem:[%s330 + $0x1290] sm:$0xff]
        %v1092 = vld [vmem:[%s330 + $0x1298] sm:$0xff]
        %v1093 = vld [vmem:[%s330 + $0x12a0] sm:$0xff]
        %v1094 = vld [vmem:[%s330 + $0x12a8] sm:$0xff]
        %v1095 = vld [vmem:[%s330 + $0x12b0] sm:$0xff]
        %v1096 = vld [vmem:[%s330 + $0x12b8] sm:$0xff]
        %v1097 = vld [vmem:[%s330 + $0x12c0] sm:$0xff]
        %v1098 = vld [vmem:[%s330 + $0x12c8] sm:$0xff]
        %v1099 = vld [vmem:[%s330 + $0x12d0] sm:$0xff]
        %v1100 = vld [vmem:[%s330 + $0x12d8] sm:$0xff]
        %v1101 = vld [vmem:[%s330 + $0x12e0] sm:$0xff]
        %v1102 = vld [vmem:[%s330 + $0x12e8] sm:$0xff]
        %v1103 = vld [vmem:[%s330 + $0x12f0] sm:$0xff]
        %v1104 = vld [vmem:[%s330 + $0x12f8] sm:$0xff]
        %v1105 = vld [vmem:[%s330 + $0x1300] sm:$0xff]
        %v1106 = vld [vmem:[%s330 + $0x1308] sm:$0xff]
        %v1107 = vld [vmem:[%s330 + $0x1310] sm:$0xff]
        %v1108 = vld [vmem:[%s330 + $0x1318] sm:$0xff]
        %v1109 = vld [vmem:[%s330 + $0x1320] sm:$0xff]
        %v1110 = vld [vmem:[%s330 + $0x1328] sm:$0xff]
        %v1111 = vld [vmem:[%s330 + $0x1330] sm:$0xff]
        %v1112 = vld [vmem:[%s330 + $0x1338] sm:$0xff]
        %v1113 = vld [vmem:[%s330 + $0x1340] sm:$0xff]
        %v1114 = vld [vmem:[%s330 + $0x1348] sm:$0xff]
        %v1115 = vld [vmem:[%s330 + $0x1350] sm:$0xff]
        %v1116 = vld [vmem:[%s330 + $0x1358] sm:$0xff]
        %v1117 = vld [vmem:[%s330 + $0x1360] sm:$0xff]
        %v1118 = vld [vmem:[%s330 + $0x1368] sm:$0xff]
        %v1119 = vld [vmem:[%s330 + $0x1370] sm:$0xff]
        %v1120 = vld [vmem:[%s330 + $0x1378] sm:$0xff]
        %v1121 = vld [vmem:[%s330 + $0x1380] sm:$0xff]
        %v1122 = vld [vmem:[%s330 + $0x1388] sm:$0xff]
        %v1123 = vld [vmem:[%s330 + $0x1390] sm:$0xff]
        %v1124 = vld [vmem:[%s330 + $0x1398] sm:$0xff]
        %v1125 = vld [vmem:[%s330 + $0x13a0] sm:$0xff]
        %v1126 = vld [vmem:[%s330 + $0x13a8] sm:$0xff]
        %v1127 = vld [vmem:[%s330 + $0x13b0] sm:$0xff]
        %v1128 = vld [vmem:[%s330 + $0x13b8] sm:$0xff]
        %v1129 = vld [vmem:[%s330 + $0x13c0] sm:$0xff]
        %v1130 = vld [vmem:[%s330 + $0x13c8] sm:$0xff]
        %v1131 = vld [vmem:[%s330 + $0x13d0] sm:$0xff]
        %v1132 = vld [vmem:[%s330 + $0x13d8] sm:$0xff]
        %v1133 = vld [vmem:[%s330 + $0x13e0] sm:$0xff]
        %v1134 = vld [vmem:[%s330 + $0x13e8] sm:$0xff]
        %v1135 = vld [vmem:[%s330 + $0x13f0] sm:$0xff]
        %v1136 = vld [vmem:[%s330 + $0x13f8] sm:$0xff]
        %v1137 = vld [vmem:[%s330 + $0x1400] sm:$0xff]
        %v1138 = vld [vmem:[%s330 + $0x1408] sm:$0xff]
        %v1139 = vld [vmem:[%s330 + $0x1410] sm:$0xff]
        %v1140 = vld [vmem:[%s330 + $0x1418] sm:$0xff]
        %v1141 = vld [vmem:[%s330 + $0x1420] sm:$0xff]
        %v1142 = vld [vmem:[%s330 + $0x1428] sm:$0xff]
        %v1143 = vld [vmem:[%s330 + $0x1430] sm:$0xff]
        %v1144 = vld [vmem:[%s330 + $0x1438] sm:$0xff]
        %v1145 = vld [vmem:[%s330 + $0x1440] sm:$0xff]
        %v1146 = vld [vmem:[%s330 + $0x1448] sm:$0xff]
        %v1147 = vld [vmem:[%s330 + $0x1450] sm:$0xff]
        %v1148 = vld [vmem:[%s330 + $0x1458] sm:$0xff]
        %v1149 = vld [vmem:[%s330 + $0x1460] sm:$0xff]
        %v1150 = vld [vmem:[%s330 + $0x1468] sm:$0xff]
        %v1151 = vld [vmem:[%s330 + $0x1470] sm:$0xff]
        %v1152 = vld [vmem:[%s330 + $0x1478] sm:$0xff]
        %v1153 = vld [vmem:[%s330 + $0x1480] sm:$0xff]
        %v1154 = vld [vmem:[%s330 + $0x1488] sm:$0xff]
        %v1155 = vld [vmem:[%s330 + $0x1490] sm:$0xff]
        %v1156 = vld [vmem:[%s330 + $0x1498] sm:$0xff]
        %v1157 = vld [vmem:[%s330 + $0x14a0] sm:$0xff]
        %v1158 = vld [vmem:[%s330 + $0x14a8] sm:$0xff]
        %v1159 = vld [vmem:[%s330 + $0x14b0] sm:$0xff]
        %v1160 = vld [vmem:[%s330 + $0x14b8] sm:$0xff]
        %v1161 = vld [vmem:[%s330 + $0x14c0] sm:$0xff]
        %v1162 = vld [vmem:[%s330 + $0x14c8] sm:$0xff]
        %v1163 = vld [vmem:[%s330 + $0x14d0] sm:$0xff]
        %v1164 = vld [vmem:[%s330 + $0x14d8] sm:$0xff]
        %v1165 = vld [vmem:[%s330 + $0x14e0] sm:$0xff]
        %v1166 = vld [vmem:[%s330 + $0x14e8] sm:$0xff]
        %v1167 = vld [vmem:[%s330 + $0x14f0] sm:$0xff]
        %v1168 = vld [vmem:[%s330 + $0x14f8] sm:$0xff]
        %v1169 = vld [vmem:[%s330 + $0x1500] sm:$0xff]
        %v1170 = vld [vmem:[%s330 + $0x1508] sm:$0xff]
        %v1171 = vld [vmem:[%s330 + $0x1510] sm:$0xff]
        %v1172 = vld [vmem:[%s330 + $0x1518] sm:$0xff]
        %v1173 = vld [vmem:[%s330 + $0x1520] sm:$0xff]
        %v1174 = vld [vmem:[%s330 + $0x1528] sm:$0xff]
        %v1175 = vld [vmem:[%s330 + $0x1530] sm:$0xff]
        %v1176 = vld [vmem:[%s330 + $0x1538] sm:$0xff]
        %v1177 = vld [vmem:[%s330 + $0x1540] sm:$0xff]
        %v1178 = vld [vmem:[%s330 + $0x1548] sm:$0xff]
        %v1179 = vld [vmem:[%s330 + $0x1550] sm:$0xff]
        %v1180 = vld [vmem:[%s330 + $0x1558] sm:$0xff]
        %v1181 = vld [vmem:[%s330 + $0x1560] sm:$0xff]
        %v1182 = vld [vmem:[%s330 + $0x1568] sm:$0xff]
        %v1183 = vld [vmem:[%s330 + $0x1570] sm:$0xff]
        %v1184 = vld [vmem:[%s330 + $0x1578] sm:$0xff]
        %v1185 = vld [vmem:[%s330 + $0x1580] sm:$0xff]
        %v1186 = vld [vmem:[%s330 + $0x1588] sm:$0xff]
        %v1187 = vld [vmem:[%s330 + $0x1590] sm:$0xff]
        %v1188 = vld [vmem:[%s330 + $0x1598] sm:$0xff]
        %v1189 = vld [vmem:[%s330 + $0x15a0] sm:$0xff]
        %v1190 = vld [vmem:[%s330 + $0x15a8] sm:$0xff]
        %v1191 = vld [vmem:[%s330 + $0x15b0] sm:$0xff]
        %v1192 = vld [vmem:[%s330 + $0x15b8] sm:$0xff]
        %v1193 = vld [vmem:[%s330 + $0x15c0] sm:$0xff]
        %v1194 = vld [vmem:[%s330 + $0x15c8] sm:$0xff]
        %v1195 = vld [vmem:[%s330 + $0x15d0] sm:$0xff]
        %v1196 = vld [vmem:[%s330 + $0x15d8] sm:$0xff]
        %v1197 = vld [vmem:[%s330 + $0x15e0] sm:$0xff]
        %v1198 = vld [vmem:[%s330 + $0x15e8] sm:$0xff]
        %v1199 = vld [vmem:[%s330 + $0x15f0] sm:$0xff]
        %v1200 = vld [vmem:[%s330 + $0x15f8] sm:$0xff]
        %v1201 = vld [vmem:[%s330 + $0x1600] sm:$0xff]
        %v1202 = vld [vmem:[%s330 + $0x1608] sm:$0xff]
        %v1203 = vld [vmem:[%s330 + $0x1610] sm:$0xff]
        %v1204 = vld [vmem:[%s330 + $0x1618] sm:$0xff]
        %v1205 = vld [vmem:[%s330 + $0x1620] sm:$0xff]
        %v1206 = vld [vmem:[%s330 + $0x1628] sm:$0xff]
        %v1207 = vld [vmem:[%s330 + $0x1630] sm:$0xff]
        %v1208 = vld [vmem:[%s330 + $0x1638] sm:$0xff]
        %v1209 = vld [vmem:[%s330 + $0x1640] sm:$0xff]
        %v1210 = vld [vmem:[%s330 + $0x1648] sm:$0xff]
        %v1211 = vld [vmem:[%s330 + $0x1650] sm:$0xff]
        %v1212 = vld [vmem:[%s330 + $0x1658] sm:$0xff]
        %v1213 = vld [vmem:[%s330 + $0x1660] sm:$0xff]
        %v1214 = vld [vmem:[%s330 + $0x1668] sm:$0xff]
        %v1215 = vld [vmem:[%s330 + $0x1670] sm:$0xff]
        %v1216 = vld [vmem:[%s330 + $0x1678] sm:$0xff]
        %v1217 = vld [vmem:[%s330 + $0x1680] sm:$0xff]
        %v1218 = vld [vmem:[%s330 + $0x1688] sm:$0xff]
        %v1219 = vld [vmem:[%s330 + $0x1690] sm:$0xff]
        %v1220 = vld [vmem:[%s330 + $0x1698] sm:$0xff]
        %v1221 = vld [vmem:[%s330 + $0x16a0] sm:$0xff]
        %v1222 = vld [vmem:[%s330 + $0x16a8] sm:$0xff]
        %v1223 = vld [vmem:[%s330 + $0x16b0] sm:$0xff]
        %v1224 = vld [vmem:[%s330 + $0x16b8] sm:$0xff]
        %v1225 = vld [vmem:[%s330 + $0x16c0] sm:$0xff]
        %v1226 = vld [vmem:[%s330 + $0x16c8] sm:$0xff]
        %v1227 = vld [vmem:[%s330 + $0x16d0] sm:$0xff]
        %v1228 = vld [vmem:[%s330 + $0x16d8] sm:$0xff]
        %v1229 = vld [vmem:[%s330 + $0x16e0] sm:$0xff]
        %v1230 = vld [vmem:[%s330 + $0x16e8] sm:$0xff]
        %v1231 = vld [vmem:[%s330 + $0x16f0] sm:$0xff]
        %v1232 = vld [vmem:[%s330 + $0x16f8] sm:$0xff]
        %v1233 = vld [vmem:[%s330 + $0x1700] sm:$0xff]
        %v1234 = vld [vmem:[%s330 + $0x1708] sm:$0xff]
        %v1235 = vld [vmem:[%s330 + $0x1710] sm:$0xff]
        %v1236 = vld [vmem:[%s330 + $0x1718] sm:$0xff]
        %v1237 = vld [vmem:[%s330 + $0x1720] sm:$0xff]
        %v1238 = vld [vmem:[%s330 + $0x1728] sm:$0xff]
        %v1239 = vld [vmem:[%s330 + $0x1730] sm:$0xff]
        %v1240 = vld [vmem:[%s330 + $0x1738] sm:$0xff]
        %v1241 = vld [vmem:[%s330 + $0x1740] sm:$0xff]
        %v1242 = vld [vmem:[%s330 + $0x1748] sm:$0xff]
        %v1243 = vld [vmem:[%s330 + $0x1750] sm:$0xff]
        %v1244 = vld [vmem:[%s330 + $0x1758] sm:$0xff]
        %v1245 = vld [vmem:[%s330 + $0x1760] sm:$0xff]
        %v1246 = vld [vmem:[%s330 + $0x1768] sm:$0xff]
        %v1247 = vld [vmem:[%s330 + $0x1770] sm:$0xff]
        %v1248 = vld [vmem:[%s330 + $0x1778] sm:$0xff]
        %v1249 = vld [vmem:[%s330 + $0x1780] sm:$0xff]
        %v1250 = vld [vmem:[%s330 + $0x1788] sm:$0xff]
        %v1251 = vld [vmem:[%s330 + $0x1790] sm:$0xff]
        %v1252 = vld [vmem:[%s330 + $0x1798] sm:$0xff]
        %v1253 = vld [vmem:[%s330 + $0x17a0] sm:$0xff]
        %v1254 = vld [vmem:[%s330 + $0x17a8] sm:$0xff]
        %v1255 = vld [vmem:[%s330 + $0x17b0] sm:$0xff]
        %v1256 = vld [vmem:[%s330 + $0x17b8] sm:$0xff]
        %v1257 = vld [vmem:[%s330 + $0x17c0] sm:$0xff]
        %v1258 = vld [vmem:[%s330 + $0x17c8] sm:$0xff]
        %v1259 = vld [vmem:[%s330 + $0x17d0] sm:$0xff]
        %v1260 = vld [vmem:[%s330 + $0x17d8] sm:$0xff]
        %v1261 = vld [vmem:[%s330 + $0x17e0] sm:$0xff]
        %v1262 = vld [vmem:[%s330 + $0x17e8] sm:$0xff]
        %v1263 = vld [vmem:[%s330 + $0x17f0] sm:$0xff]
        %v1264 = vld [vmem:[%s330 + $0x17f8] sm:$0xff]
        %v1265 = vld [vmem:[%s330 + $0x1800] sm:$0xff]
        %v1266 = vld [vmem:[%s330 + $0x1808] sm:$0xff]
        %v1267 = vld [vmem:[%s330 + $0x1810] sm:$0xff]
        %v1268 = vld [vmem:[%s330 + $0x1818] sm:$0xff]
        %v1269 = vld [vmem:[%s330 + $0x1820] sm:$0xff]
        %v1270 = vld [vmem:[%s330 + $0x1828] sm:$0xff]
        %v1271 = vld [vmem:[%s330 + $0x1830] sm:$0xff]
        %v1272 = vld [vmem:[%s330 + $0x1838] sm:$0xff]
        %v1273 = vld [vmem:[%s330 + $0x1840] sm:$0xff]
        %v1274 = vld [vmem:[%s330 + $0x1848] sm:$0xff]
        %v1275 = vld [vmem:[%s330 + $0x1850] sm:$0xff]
        %v1276 = vld [vmem:[%s330 + $0x1858] sm:$0xff]
        %v1277 = vld [vmem:[%s330 + $0x1860] sm:$0xff]
        %v1278 = vld [vmem:[%s330 + $0x1868] sm:$0xff]
        %v1279 = vld [vmem:[%s330 + $0x1870] sm:$0xff]
        %v1280 = vld [vmem:[%s330 + $0x1878] sm:$0xff]
        %v1281 = vld [vmem:[%s330 + $0x1880] sm:$0xff]
        %v1282 = vld [vmem:[%s330 + $0x1888] sm:$0xff]
        %v1283 = vld [vmem:[%s330 + $0x1890] sm:$0xff]
        %v1284 = vld [vmem:[%s330 + $0x1898] sm:$0xff]
        %v1285 = vld [vmem:[%s330 + $0x18a0] sm:$0xff]
        %v1286 = vld [vmem:[%s330 + $0x18a8] sm:$0xff]
        %v1287 = vld [vmem:[%s330 + $0x18b0] sm:$0xff]
        %v1288 = vld [vmem:[%s330 + $0x18b8] sm:$0xff]
        %v1289 = vld [vmem:[%s330 + $0x18c0] sm:$0xff]
        %v1290 = vld [vmem:[%s330 + $0x18c8] sm:$0xff]
        %v1291 = vld [vmem:[%s330 + $0x18d0] sm:$0xff]
        %v1292 = vld [vmem:[%s330 + $0x18d8] sm:$0xff]
        %v1293 = vld [vmem:[%s330 + $0x18e0] sm:$0xff]
        %v1294 = vld [vmem:[%s330 + $0x18e8] sm:$0xff]
        %v1295 = vld [vmem:[%s330 + $0x18f0] sm:$0xff]
        %v1296 = vld [vmem:[%s330 + $0x18f8] sm:$0xff]
        %v1297 = vld [vmem:[%s330 + $0x1900] sm:$0xff]
        %v1298 = vld [vmem:[%s330 + $0x1908] sm:$0xff]
        %v1299 = vld [vmem:[%s330 + $0x1910] sm:$0xff]
        %v1300 = vld [vmem:[%s330 + $0x1918] sm:$0xff]
        %v1301 = vld [vmem:[%s330 + $0x1920] sm:$0xff]
        %v1302 = vld [vmem:[%s330 + $0x1928] sm:$0xff]
        %v1303 = vld [vmem:[%s330 + $0x1930] sm:$0xff]
        %v1304 = vld [vmem:[%s330 + $0x1938] sm:$0xff]
        %v1305 = vld [vmem:[%s330 + $0x1940] sm:$0xff]
        %v1306 = vld [vmem:[%s330 + $0x1948] sm:$0xff]
        %v1307 = vld [vmem:[%s330 + $0x1950] sm:$0xff]
        %v1308 = vld [vmem:[%s330 + $0x1958] sm:$0xff]
        %v1309 = vld [vmem:[%s330 + $0x1960] sm:$0xff]
        %v1310 = vld [vmem:[%s330 + $0x1968] sm:$0xff]
        %v1311 = vld [vmem:[%s330 + $0x1970] sm:$0xff]
        %v1312 = vld [vmem:[%s330 + $0x1978] sm:$0xff]
        %v1313 = vld [vmem:[%s330 + $0x1980] sm:$0xff]
        %v1314 = vld [vmem:[%s330 + $0x1988] sm:$0xff]
        %v1315 = vld [vmem:[%s330 + $0x1990] sm:$0xff]
        %v1316 = vld [vmem:[%s330 + $0x1998] sm:$0xff]
        %v1317 = vld [vmem:[%s330 + $0x19a0] sm:$0xff]
        %v1318 = vld [vmem:[%s330 + $0x19a8] sm:$0xff]
        %v1319 = vld [vmem:[%s330 + $0x19b0] sm:$0xff]
        %v1320 = vld [vmem:[%s330 + $0x19b8] sm:$0xff]
        %v1321 = vld [vmem:[%s330 + $0x19c0] sm:$0xff]
        %v1322 = vld [vmem:[%s330 + $0x19c8] sm:$0xff]
        %v1323 = vld [vmem:[%s330 + $0x19d0] sm:$0xff]
        %v1324 = vld [vmem:[%s330 + $0x19d8] sm:$0xff]
        %v1325 = vld [vmem:[%s330 + $0x19e0] sm:$0xff]
        %v1326 = vld [vmem:[%s330 + $0x19e8] sm:$0xff]
        %v1327 = vld [vmem:[%s330 + $0x19f0] sm:$0xff]
        %v1328 = vld [vmem:[%s330 + $0x19f8] sm:$0xff]
        %v1329 = vld [vmem:[%s330 + $0x1a00] sm:$0xff]
        %v1330 = vld [vmem:[%s330 + $0x1a08] sm:$0xff]
        %v1331 = vld [vmem:[%s330 + $0x1a10] sm:$0xff]
        %v1332 = vld [vmem:[%s330 + $0x1a18] sm:$0xff]
        %v1333 = vld [vmem:[%s330 + $0x1a20] sm:$0xff]
        %v1334 = vld [vmem:[%s330 + $0x1a28] sm:$0xff]
        %v1335 = vld [vmem:[%s330 + $0x1a30] sm:$0xff]
        %v1336 = vld [vmem:[%s330 + $0x1a38] sm:$0xff]
        %v1337 = vld [vmem:[%s330 + $0x1a40] sm:$0xff]
        %v1338 = vld [vmem:[%s330 + $0x1a48] sm:$0xff]
        %v1339 = vld [vmem:[%s330 + $0x1a50] sm:$0xff]
        %v1340 = vld [vmem:[%s330 + $0x1a58] sm:$0xff]
        %v1341 = vld [vmem:[%s330 + $0x1a60] sm:$0xff]
        %v1342 = vld [vmem:[%s330 + $0x1a68] sm:$0xff]
        %v1343 = vld [vmem:[%s330 + $0x1a70] sm:$0xff]
        %v1344 = vld [vmem:[%s330 + $0x1a78] sm:$0xff]
        %v1345 = vld [vmem:[%s330 + $0x1a80] sm:$0xff]
        %v1346 = vld [vmem:[%s330 + $0x1a88] sm:$0xff]
        %v1347 = vld [vmem:[%s330 + $0x1a90] sm:$0xff]
        %v1348 = vld [vmem:[%s330 + $0x1a98] sm:$0xff]
        %v1349 = vld [vmem:[%s330 + $0x1aa0] sm:$0xff]
        %v1350 = vld [vmem:[%s330 + $0x1aa8] sm:$0xff]
        %v1351 = vld [vmem:[%s330 + $0x1ab0] sm:$0xff]
        %v1352 = vld [vmem:[%s330 + $0x1ab8] sm:$0xff]
        %v1353 = vld [vmem:[%s330 + $0x1ac0] sm:$0xff]
        %v1354 = vld [vmem:[%s330 + $0x1ac8] sm:$0xff]
        %v1355 = vld [vmem:[%s330 + $0x1ad0] sm:$0xff]
        %v1356 = vld [vmem:[%s330 + $0x1ad8] sm:$0xff]
        %v1357 = vld [vmem:[%s330 + $0x1ae0] sm:$0xff]
        %v1358 = vld [vmem:[%s330 + $0x1ae8] sm:$0xff]
        %v1359 = vld [vmem:[%s330 + $0x1af0] sm:$0xff]
        %v1360 = vld [vmem:[%s330 + $0x1af8] sm:$0xff]
        %v1361 = vld [vmem:[%s330 + $0x1b00] sm:$0xff]
        %v1362 = vld [vmem:[%s330 + $0x1b08] sm:$0xff]
        %v1363 = vld [vmem:[%s330 + $0x1b10] sm:$0xff]
        %v1364 = vld [vmem:[%s330 + $0x1b18] sm:$0xff]
        %v1365 = vld [vmem:[%s330 + $0x1b20] sm:$0xff]
        %v1366 = vld [vmem:[%s330 + $0x1b28] sm:$0xff]
        %v1367 = vld [vmem:[%s330 + $0x1b30] sm:$0xff]
        %v1368 = vld [vmem:[%s330 + $0x1b38] sm:$0xff]
        %v1369 = vld [vmem:[%s330 + $0x1b40] sm:$0xff]
        %v1370 = vld [vmem:[%s330 + $0x1b48] sm:$0xff]
        %v1371 = vld [vmem:[%s330 + $0x1b50] sm:$0xff]
        %v1372 = vld [vmem:[%s330 + $0x1b58] sm:$0xff]
        %v1373 = vld [vmem:[%s330 + $0x1b60] sm:$0xff]
        %v1374 = vld [vmem:[%s330 + $0x1b68] sm:$0xff]
        %v1375 = vld [vmem:[%s330 + $0x1b70] sm:$0xff]
        %v1376 = vld [vmem:[%s330 + $0x1b78] sm:$0xff]
        %v1377 = vld [vmem:[%s330 + $0x1b80] sm:$0xff]
        %v1378 = vld [vmem:[%s330 + $0x1b88] sm:$0xff]
        %v1379 = vld [vmem:[%s330 + $0x1b90] sm:$0xff]
        %v1380 = vld [vmem:[%s330 + $0x1b98] sm:$0xff]
        %v1381 = vld [vmem:[%s330 + $0x1ba0] sm:$0xff]
        %v1382 = vld [vmem:[%s330 + $0x1ba8] sm:$0xff]
        %v1383 = vld [vmem:[%s330 + $0x1bb0] sm:$0xff]
        %v1384 = vld [vmem:[%s330 + $0x1bb8] sm:$0xff]
        %v1385 = vld [vmem:[%s330 + $0x1bc0] sm:$0xff]
        %v1386 = vld [vmem:[%s330 + $0x1bc8] sm:$0xff]
        %v1387 = vld [vmem:[%s330 + $0x1bd0] sm:$0xff]
        %v1388 = vld [vmem:[%s330 + $0x1bd8] sm:$0xff]
        %v1389 = vld [vmem:[%s330 + $0x1be0] sm:$0xff]
        %v1390 = vld [vmem:[%s330 + $0x1be8] sm:$0xff]
        %v1391 = vld [vmem:[%s330 + $0x1bf0] sm:$0xff]
        %v1392 = vld [vmem:[%s330 + $0x1bf8] sm:$0xff]
        %v1393 = vld [vmem:[%s330 + $0x1c00] sm:$0xff]
        %v1394 = vld [vmem:[%s330 + $0x1c08] sm:$0xff]
        %v1395 = vld [vmem:[%s330 + $0x1c10] sm:$0xff]
        %v1396 = vld [vmem:[%s330 + $0x1c18] sm:$0xff]
        %v1397 = vld [vmem:[%s330 + $0x1c20] sm:$0xff]
        %v1398 = vld [vmem:[%s330 + $0x1c28] sm:$0xff]
        %v1399 = vld [vmem:[%s330 + $0x1c30] sm:$0xff]
        %v1400 = vld [vmem:[%s330 + $0x1c38] sm:$0xff]
        %v1401 = vld [vmem:[%s330 + $0x1c40] sm:$0xff]
        %v1402 = vld [vmem:[%s330 + $0x1c48] sm:$0xff]
        %v1403 = vld [vmem:[%s330 + $0x1c50] sm:$0xff]
        %v1404 = vld [vmem:[%s330 + $0x1c58] sm:$0xff]
        %v1405 = vld [vmem:[%s330 + $0x1c60] sm:$0xff]
        %v1406 = vld [vmem:[%s330 + $0x1c68] sm:$0xff]
        %v1407 = vld [vmem:[%s330 + $0x1c70] sm:$0xff]
        %v1408 = vld [vmem:[%s330 + $0x1c78] sm:$0xff]
        %v1409 = vld [vmem:[%s330 + $0x1c80] sm:$0xff]
        %v1410 = vld [vmem:[%s330 + $0x1c88] sm:$0xff]
        %v1411 = vld [vmem:[%s330 + $0x1c90] sm:$0xff]
        %v1412 = vld [vmem:[%s330 + $0x1c98] sm:$0xff]
        %v1413 = vld [vmem:[%s330 + $0x1ca0] sm:$0xff]
        %v1414 = vld [vmem:[%s330 + $0x1ca8] sm:$0xff]
        %v1415 = vld [vmem:[%s330 + $0x1cb0] sm:$0xff]
        %v1416 = vld [vmem:[%s330 + $0x1cb8] sm:$0xff]
        %v1417 = vld [vmem:[%s330 + $0x1cc0] sm:$0xff]
        %v1418 = vld [vmem:[%s330 + $0x1cc8] sm:$0xff]
        %v1419 = vld [vmem:[%s330 + $0x1cd0] sm:$0xff]
        %v1420 = vld [vmem:[%s330 + $0x1cd8] sm:$0xff]
        %v1421 = vld [vmem:[%s330 + $0x1ce0] sm:$0xff]
        %v1422 = vld [vmem:[%s330 + $0x1ce8] sm:$0xff]
        %v1423 = vld [vmem:[%s330 + $0x1cf0] sm:$0xff]
        %v1424 = vld [vmem:[%s330 + $0x1cf8] sm:$0xff]
        %v1425 = vld [vmem:[%s330 + $0x1d00] sm:$0xff]
        %v1426 = vld [vmem:[%s330 + $0x1d08] sm:$0xff]
        %v1427 = vld [vmem:[%s330 + $0x1d10] sm:$0xff]
        %v1428 = vld [vmem:[%s330 + $0x1d18] sm:$0xff]
        %v1429 = vld [vmem:[%s330 + $0x1d20] sm:$0xff]
        %v1430 = vld [vmem:[%s330 + $0x1d28] sm:$0xff]
        %v1431 = vld [vmem:[%s330 + $0x1d30] sm:$0xff]
        %v1432 = vld [vmem:[%s330 + $0x1d38] sm:$0xff]
        %v1433 = vld [vmem:[%s330 + $0x1d40] sm:$0xff]
        %v1434 = vld [vmem:[%s330 + $0x1d48] sm:$0xff]
        %v1435 = vld [vmem:[%s330 + $0x1d50] sm:$0xff]
        %v1436 = vld [vmem:[%s330 + $0x1d58] sm:$0xff]
        %v1437 = vld [vmem:[%s330 + $0x1d60] sm:$0xff]
        %v1438 = vld [vmem:[%s330 + $0x1d68] sm:$0xff]
        %v1439 = vld [vmem:[%s330 + $0x1d70] sm:$0xff]
        %v1440 = vld [vmem:[%s330 + $0x1d78] sm:$0xff]
        %v1441 = vld [vmem:[%s330 + $0x1d80] sm:$0xff]
        %v1442 = vld [vmem:[%s330 + $0x1d88] sm:$0xff]
        %v1443 = vld [vmem:[%s330 + $0x1d90] sm:$0xff]
        %v1444 = vld [vmem:[%s330 + $0x1d98] sm:$0xff]
        %v1445 = vld [vmem:[%s330 + $0x1da0] sm:$0xff]
        %v1446 = vld [vmem:[%s330 + $0x1da8] sm:$0xff]
        %v1447 = vld [vmem:[%s330 + $0x1db0] sm:$0xff]
        %v1448 = vld [vmem:[%s330 + $0x1db8] sm:$0xff]
        %v1449 = vld [vmem:[%s330 + $0x1dc0] sm:$0xff]
        %v1450 = vld [vmem:[%s330 + $0x1dc8] sm:$0xff]
        %v1451 = vld [vmem:[%s330 + $0x1dd0] sm:$0xff]
        %v1452 = vld [vmem:[%s330 + $0x1dd8] sm:$0xff]
        %v1453 = vld [vmem:[%s330 + $0x1de0] sm:$0xff]
        %v1454 = vld [vmem:[%s330 + $0x1de8] sm:$0xff]
        %v1455 = vld [vmem:[%s330 + $0x1df0] sm:$0xff]
        %v1456 = vld [vmem:[%s330 + $0x1df8] sm:$0xff]
        %v1457 = vld [vmem:[%s330 + $0x1e00] sm:$0xff]
        %v1458 = vld [vmem:[%s330 + $0x1e08] sm:$0xff]
        %v1459 = vld [vmem:[%s330 + $0x1e10] sm:$0xff]
        %v1460 = vld [vmem:[%s330 + $0x1e18] sm:$0xff]
        %v1461 = vld [vmem:[%s330 + $0x1e20] sm:$0xff]
        %v1462 = vld [vmem:[%s330 + $0x1e28] sm:$0xff]
        %v1463 = vld [vmem:[%s330 + $0x1e30] sm:$0xff]
        %v1464 = vld [vmem:[%s330 + $0x1e38] sm:$0xff]
        %v1465 = vld [vmem:[%s330 + $0x1e40] sm:$0xff]
        %v1466 = vld [vmem:[%s330 + $0x1e48] sm:$0xff]
        %v1467 = vld [vmem:[%s330 + $0x1e50] sm:$0xff]
        %v1468 = vld [vmem:[%s330 + $0x1e58] sm:$0xff]
        %v1469 = vld [vmem:[%s330 + $0x1e60] sm:$0xff]
        %v1470 = vld [vmem:[%s330 + $0x1e68] sm:$0xff]
        %v1471 = vld [vmem:[%s330 + $0x1e70] sm:$0xff]
        %v1472 = vld [vmem:[%s330 + $0x1e78] sm:$0xff]
        %v1473 = vld [vmem:[%s330 + $0x1e80] sm:$0xff]
        %v1474 = vld [vmem:[%s330 + $0x1e88] sm:$0xff]
        %v1475 = vld [vmem:[%s330 + $0x1e90] sm:$0xff]
        %v1476 = vld [vmem:[%s330 + $0x1e98] sm:$0xff]
        %v1477 = vld [vmem:[%s330 + $0x1ea0] sm:$0xff]
        %v1478 = vld [vmem:[%s330 + $0x1ea8] sm:$0xff]
        %v1479 = vld [vmem:[%s330 + $0x1eb0] sm:$0xff]
        %v1480 = vld [vmem:[%s330 + $0x1eb8] sm:$0xff]
        %v1481 = vld [vmem:[%s330 + $0x1ec0] sm:$0xff]
        %v1482 = vld [vmem:[%s330 + $0x1ec8] sm:$0xff]
        %v1483 = vld [vmem:[%s330 + $0x1ed0] sm:$0xff]
        %v1484 = vld [vmem:[%s330 + $0x1ed8] sm:$0xff]
        %v1485 = vld [vmem:[%s330 + $0x1ee0] sm:$0xff]
        %v1486 = vld [vmem:[%s330 + $0x1ee8] sm:$0xff]
        %v1487 = vld [vmem:[%s330 + $0x1ef0] sm:$0xff]
        %v1488 = vld [vmem:[%s330 + $0x1ef8] sm:$0xff]
        %v1489 = vld [vmem:[%s330 + $0x1f00] sm:$0xff]
        %v1490 = vld [vmem:[%s330 + $0x1f08] sm:$0xff]
        %v1491 = vld [vmem:[%s330 + $0x1f10] sm:$0xff]
        %v1492 = vld [vmem:[%s330 + $0x1f18] sm:$0xff]
        %v1493 = vld [vmem:[%s330 + $0x1f20] sm:$0xff]
        %v1494 = vld [vmem:[%s330 + $0x1f28] sm:$0xff]
        %v1495 = vld [vmem:[%s330 + $0x1f30] sm:$0xff]
        %v1496 = vld [vmem:[%s330 + $0x1f38] sm:$0xff]
        %v1497 = vld [vmem:[%s330 + $0x1f40] sm:$0xff]
        %v1498 = vld [vmem:[%s330 + $0x1f48] sm:$0xff]
        %v1499 = vld [vmem:[%s330 + $0x1f50] sm:$0xff]
        %v1500 = vld [vmem:[%s330 + $0x1f58] sm:$0xff]
        %v1501 = vld [vmem:[%s330 + $0x1f60] sm:$0xff]
        %v1502 = vld [vmem:[%s330 + $0x1f68] sm:$0xff]
        %v1503 = vld [vmem:[%s330 + $0x1f70] sm:$0xff]
        %v1504 = vld [vmem:[%s330 + $0x1f78] sm:$0xff]
        %v1505 = vld [vmem:[%s330 + $0x1f80] sm:$0xff]
        %v1506 = vld [vmem:[%s330 + $0x1f88] sm:$0xff]
        %v1507 = vld [vmem:[%s330 + $0x1f90] sm:$0xff]
        %v1508 = vld [vmem:[%s330 + $0x1f98] sm:$0xff]
        %v1509 = vld [vmem:[%s330 + $0x1fa0] sm:$0xff]
        %v1510 = vld [vmem:[%s330 + $0x1fa8] sm:$0xff]
        %v1511 = vld [vmem:[%s330 + $0x1fb0] sm:$0xff]
        %v1512 = vld [vmem:[%s330 + $0x1fb8] sm:$0xff]
        %v1513 = vld [vmem:[%s330 + $0x1fc0] sm:$0xff]
        %v1514 = vld [vmem:[%s330 + $0x1fc8] sm:$0xff]
        %v1515 = vld [vmem:[%s330 + $0x1fd0] sm:$0xff]
        %v1516 = vld [vmem:[%s330 + $0x1fd8] sm:$0xff]
        %v1517 = vld [vmem:[%s330 + $0x1fe0] sm:$0xff]
        %v1518 = vld [vmem:[%s330 + $0x1fe8] sm:$0xff]
        %v1519 = vld [vmem:[%s330 + $0x1ff0] sm:$0xff]
        %v1520 = vld [vmem:[%s330 + $0x1ff8] sm:$0xff]
        %v1521 = vunpack.c.l.bf16 %v497
        %v1522 = vunpack.c.h.bf16 %v497
        %v1523 = vunpack.c.l.bf16 %v498
        %v1524 = vunpack.c.h.bf16 %v498
        %v1525 = vunpack.c.l.bf16 %v499
        %v1526 = vunpack.c.h.bf16 %v499
        %v1527 = vunpack.c.l.bf16 %v500
        %v1528 = vunpack.c.h.bf16 %v500
        %v1529 = vunpack.c.l.bf16 %v501
        %v1530 = vunpack.c.h.bf16 %v501
        %v1531 = vunpack.c.l.bf16 %v502
        %v1532 = vunpack.c.h.bf16 %v502
        %v1533 = vunpack.c.l.bf16 %v503
        %v1534 = vunpack.c.h.bf16 %v503
        %v1535 = vunpack.c.l.bf16 %v504
        %v1536 = vunpack.c.h.bf16 %v504
        %v1537 = vunpack.c.l.bf16 %v505
        %v1538 = vunpack.c.h.bf16 %v505
        %v1539 = vunpack.c.l.bf16 %v506
        %v1540 = vunpack.c.h.bf16 %v506
        %v1541 = vunpack.c.l.bf16 %v507
        %v1542 = vunpack.c.h.bf16 %v507
        %v1543 = vunpack.c.l.bf16 %v508
        %v1544 = vunpack.c.h.bf16 %v508
        %v1545 = vunpack.c.l.bf16 %v509
        %v1546 = vunpack.c.h.bf16 %v509
        %v1547 = vunpack.c.l.bf16 %v510
        %v1548 = vunpack.c.h.bf16 %v510
        %v1549 = vunpack.c.l.bf16 %v511
        %v1550 = vunpack.c.h.bf16 %v511
        %v1551 = vunpack.c.l.bf16 %v512
        %v1552 = vunpack.c.h.bf16 %v512
        %v1553 = vunpack.c.l.bf16 %v513
        %v1554 = vunpack.c.h.bf16 %v513
        %v1555 = vunpack.c.l.bf16 %v514
        %v1556 = vunpack.c.h.bf16 %v514
        %v1557 = vunpack.c.l.bf16 %v515
        %v1558 = vunpack.c.h.bf16 %v515
        %v1559 = vunpack.c.l.bf16 %v516
        %v1560 = vunpack.c.h.bf16 %v516
        %v1561 = vunpack.c.l.bf16 %v517
        %v1562 = vunpack.c.h.bf16 %v517
        %v1563 = vunpack.c.l.bf16 %v518
        %v1564 = vunpack.c.h.bf16 %v518
        %v1565 = vunpack.c.l.bf16 %v519
        %v1566 = vunpack.c.h.bf16 %v519
        %v1567 = vunpack.c.l.bf16 %v520
        %v1568 = vunpack.c.h.bf16 %v520
        %v1569 = vunpack.c.l.bf16 %v521
        %v1570 = vunpack.c.h.bf16 %v521
        %v1571 = vunpack.c.l.bf16 %v522
        %v1572 = vunpack.c.h.bf16 %v522
        %v1573 = vunpack.c.l.bf16 %v523
        %v1574 = vunpack.c.h.bf16 %v523
        %v1575 = vunpack.c.l.bf16 %v524
        %v1576 = vunpack.c.h.bf16 %v524
        %v1577 = vunpack.c.l.bf16 %v525
        %v1578 = vunpack.c.h.bf16 %v525
        %v1579 = vunpack.c.l.bf16 %v526
        %v1580 = vunpack.c.h.bf16 %v526
        %v1581 = vunpack.c.l.bf16 %v527
        %v1582 = vunpack.c.h.bf16 %v527
        %v1583 = vunpack.c.l.bf16 %v528
        %v1584 = vunpack.c.h.bf16 %v528
        %v1585 = vunpack.c.l.bf16 %v529
        %v1586 = vunpack.c.h.bf16 %v529
        %v1587 = vunpack.c.l.bf16 %v530
        %v1588 = vunpack.c.h.bf16 %v530
        %v1589 = vunpack.c.l.bf16 %v531
        %v1590 = vunpack.c.h.bf16 %v531
        %v1591 = vunpack.c.l.bf16 %v532
        %v1592 = vunpack.c.h.bf16 %v532
        %v1593 = vunpack.c.l.bf16 %v533
        %v1594 = vunpack.c.h.bf16 %v533
        %v1595 = vunpack.c.l.bf16 %v534
        %v1596 = vunpack.c.h.bf16 %v534
        %v1597 = vunpack.c.l.bf16 %v535
        %v1598 = vunpack.c.h.bf16 %v535
        %v1599 = vunpack.c.l.bf16 %v536
        %v1600 = vunpack.c.h.bf16 %v536
        %v1601 = vunpack.c.l.bf16 %v537
        %v1602 = vunpack.c.h.bf16 %v537
        %v1603 = vunpack.c.l.bf16 %v538
        %v1604 = vunpack.c.h.bf16 %v538
        %v1605 = vunpack.c.l.bf16 %v539
        %v1606 = vunpack.c.h.bf16 %v539
        %v1607 = vunpack.c.l.bf16 %v540
        %v1608 = vunpack.c.h.bf16 %v540
        %v1609 = vunpack.c.l.bf16 %v541
        %v1610 = vunpack.c.h.bf16 %v541
        %v1611 = vunpack.c.l.bf16 %v542
        %v1612 = vunpack.c.h.bf16 %v542
        %v1613 = vunpack.c.l.bf16 %v543
        %v1614 = vunpack.c.h.bf16 %v543
        %v1615 = vunpack.c.l.bf16 %v544
        %v1616 = vunpack.c.h.bf16 %v544
        %v1617 = vunpack.c.l.bf16 %v545
        %v1618 = vunpack.c.h.bf16 %v545
        %v1619 = vunpack.c.l.bf16 %v546
        %v1620 = vunpack.c.h.bf16 %v546
        %v1621 = vunpack.c.l.bf16 %v547
        %v1622 = vunpack.c.h.bf16 %v547
        %v1623 = vunpack.c.l.bf16 %v548
        %v1624 = vunpack.c.h.bf16 %v548
        %v1625 = vunpack.c.l.bf16 %v549
        %v1626 = vunpack.c.h.bf16 %v549
        %v1627 = vunpack.c.l.bf16 %v550
        %v1628 = vunpack.c.h.bf16 %v550
        %v1629 = vunpack.c.l.bf16 %v551
        %v1630 = vunpack.c.h.bf16 %v551
        %v1631 = vunpack.c.l.bf16 %v552
        %v1632 = vunpack.c.h.bf16 %v552
        %v1633 = vunpack.c.l.bf16 %v553
        %v1634 = vunpack.c.h.bf16 %v553
        %v1635 = vunpack.c.l.bf16 %v554
        %v1636 = vunpack.c.h.bf16 %v554
        %v1637 = vunpack.c.l.bf16 %v555
        %v1638 = vunpack.c.h.bf16 %v555
        %v1639 = vunpack.c.l.bf16 %v556
        %v1640 = vunpack.c.h.bf16 %v556
        %v1641 = vunpack.c.l.bf16 %v557
        %v1642 = vunpack.c.h.bf16 %v557
        %v1643 = vunpack.c.l.bf16 %v558
        %v1644 = vunpack.c.h.bf16 %v558
        %v1645 = vunpack.c.l.bf16 %v559
        %v1646 = vunpack.c.h.bf16 %v559
        %v1647 = vunpack.c.l.bf16 %v560
        %v1648 = vunpack.c.h.bf16 %v560
        %v1649 = vunpack.c.l.bf16 %v561
        %v1650 = vunpack.c.h.bf16 %v561
        %v1651 = vunpack.c.l.bf16 %v562
        %v1652 = vunpack.c.h.bf16 %v562
        %v1653 = vunpack.c.l.bf16 %v563
        %v1654 = vunpack.c.h.bf16 %v563
        %v1655 = vunpack.c.l.bf16 %v564
        %v1656 = vunpack.c.h.bf16 %v564
        %v1657 = vunpack.c.l.bf16 %v565
        %v1658 = vunpack.c.h.bf16 %v565
        %v1659 = vunpack.c.l.bf16 %v566
        %v1660 = vunpack.c.h.bf16 %v566
        %v1661 = vunpack.c.l.bf16 %v567
        %v1662 = vunpack.c.h.bf16 %v567
        %v1663 = vunpack.c.l.bf16 %v568
        %v1664 = vunpack.c.h.bf16 %v568
        %v1665 = vunpack.c.l.bf16 %v569
        %v1666 = vunpack.c.h.bf16 %v569
        %v1667 = vunpack.c.l.bf16 %v570
        %v1668 = vunpack.c.h.bf16 %v570
        %v1669 = vunpack.c.l.bf16 %v571
        %v1670 = vunpack.c.h.bf16 %v571
        %v1671 = vunpack.c.l.bf16 %v572
        %v1672 = vunpack.c.h.bf16 %v572
        %v1673 = vunpack.c.l.bf16 %v573
        %v1674 = vunpack.c.h.bf16 %v573
        %v1675 = vunpack.c.l.bf16 %v574
        %v1676 = vunpack.c.h.bf16 %v574
        %v1677 = vunpack.c.l.bf16 %v575
        %v1678 = vunpack.c.h.bf16 %v575
        %v1679 = vunpack.c.l.bf16 %v576
        %v1680 = vunpack.c.h.bf16 %v576
        %v1681 = vunpack.c.l.bf16 %v577
        %v1682 = vunpack.c.h.bf16 %v577
        %v1683 = vunpack.c.l.bf16 %v578
        %v1684 = vunpack.c.h.bf16 %v578
        %v1685 = vunpack.c.l.bf16 %v579
        %v1686 = vunpack.c.h.bf16 %v579
        %v1687 = vunpack.c.l.bf16 %v580
        %v1688 = vunpack.c.h.bf16 %v580
        %v1689 = vunpack.c.l.bf16 %v581
        %v1690 = vunpack.c.h.bf16 %v581
        %v1691 = vunpack.c.l.bf16 %v582
        %v1692 = vunpack.c.h.bf16 %v582
        %v1693 = vunpack.c.l.bf16 %v583
        %v1694 = vunpack.c.h.bf16 %v583
        %v1695 = vunpack.c.l.bf16 %v584
        %v1696 = vunpack.c.h.bf16 %v584
        %v1697 = vunpack.c.l.bf16 %v585
        %v1698 = vunpack.c.h.bf16 %v585
        %v1699 = vunpack.c.l.bf16 %v586
        %v1700 = vunpack.c.h.bf16 %v586
        %v1701 = vunpack.c.l.bf16 %v587
        %v1702 = vunpack.c.h.bf16 %v587
        %v1703 = vunpack.c.l.bf16 %v588
        %v1704 = vunpack.c.h.bf16 %v588
        %v1705 = vunpack.c.l.bf16 %v589
        %v1706 = vunpack.c.h.bf16 %v589
        %v1707 = vunpack.c.l.bf16 %v590
        %v1708 = vunpack.c.h.bf16 %v590
        %v1709 = vunpack.c.l.bf16 %v591
        %v1710 = vunpack.c.h.bf16 %v591
        %v1711 = vunpack.c.l.bf16 %v592
        %v1712 = vunpack.c.h.bf16 %v592
        %v1713 = vunpack.c.l.bf16 %v593
        %v1714 = vunpack.c.h.bf16 %v593
        %v1715 = vunpack.c.l.bf16 %v594
        %v1716 = vunpack.c.h.bf16 %v594
        %v1717 = vunpack.c.l.bf16 %v595
        %v1718 = vunpack.c.h.bf16 %v595
        %v1719 = vunpack.c.l.bf16 %v596
        %v1720 = vunpack.c.h.bf16 %v596
        %v1721 = vunpack.c.l.bf16 %v597
        %v1722 = vunpack.c.h.bf16 %v597
        %v1723 = vunpack.c.l.bf16 %v598
        %v1724 = vunpack.c.h.bf16 %v598
        %v1725 = vunpack.c.l.bf16 %v599
        %v1726 = vunpack.c.h.bf16 %v599
        %v1727 = vunpack.c.l.bf16 %v600
        %v1728 = vunpack.c.h.bf16 %v600
        %v1729 = vunpack.c.l.bf16 %v601
        %v1730 = vunpack.c.h.bf16 %v601
        %v1731 = vunpack.c.l.bf16 %v602
        %v1732 = vunpack.c.h.bf16 %v602
        %v1733 = vunpack.c.l.bf16 %v603
        %v1734 = vunpack.c.h.bf16 %v603
        %v1735 = vunpack.c.l.bf16 %v604
        %v1736 = vunpack.c.h.bf16 %v604
        %v1737 = vunpack.c.l.bf16 %v605
        %v1738 = vunpack.c.h.bf16 %v605
        %v1739 = vunpack.c.l.bf16 %v606
        %v1740 = vunpack.c.h.bf16 %v606
        %v1741 = vunpack.c.l.bf16 %v607
        %v1742 = vunpack.c.h.bf16 %v607
        %v1743 = vunpack.c.l.bf16 %v608
        %v1744 = vunpack.c.h.bf16 %v608
        %v1745 = vunpack.c.l.bf16 %v609
        %v1746 = vunpack.c.h.bf16 %v609
        %v1747 = vunpack.c.l.bf16 %v610
        %v1748 = vunpack.c.h.bf16 %v610
        %v1749 = vunpack.c.l.bf16 %v611
        %v1750 = vunpack.c.h.bf16 %v611
        %v1751 = vunpack.c.l.bf16 %v612
        %v1752 = vunpack.c.h.bf16 %v612
        %v1753 = vunpack.c.l.bf16 %v613
        %v1754 = vunpack.c.h.bf16 %v613
        %v1755 = vunpack.c.l.bf16 %v614
        %v1756 = vunpack.c.h.bf16 %v614
        %v1757 = vunpack.c.l.bf16 %v615
        %v1758 = vunpack.c.h.bf16 %v615
        %v1759 = vunpack.c.l.bf16 %v616
        %v1760 = vunpack.c.h.bf16 %v616
        %v1761 = vunpack.c.l.bf16 %v617
        %v1762 = vunpack.c.h.bf16 %v617
        %v1763 = vunpack.c.l.bf16 %v618
        %v1764 = vunpack.c.h.bf16 %v618
        %v1765 = vunpack.c.l.bf16 %v619
        %v1766 = vunpack.c.h.bf16 %v619
        %v1767 = vunpack.c.l.bf16 %v620
        %v1768 = vunpack.c.h.bf16 %v620
        %v1769 = vunpack.c.l.bf16 %v621
        %v1770 = vunpack.c.h.bf16 %v621
        %v1771 = vunpack.c.l.bf16 %v622
        %v1772 = vunpack.c.h.bf16 %v622
        %v1773 = vunpack.c.l.bf16 %v623
        %v1774 = vunpack.c.h.bf16 %v623
        %v1775 = vunpack.c.l.bf16 %v624
        %v1776 = vunpack.c.h.bf16 %v624
        %v1777 = vunpack.c.l.bf16 %v625
        %v1778 = vunpack.c.h.bf16 %v625
        %v1779 = vunpack.c.l.bf16 %v626
        %v1780 = vunpack.c.h.bf16 %v626
        %v1781 = vunpack.c.l.bf16 %v627
        %v1782 = vunpack.c.h.bf16 %v627
        %v1783 = vunpack.c.l.bf16 %v628
        %v1784 = vunpack.c.h.bf16 %v628
        %v1785 = vunpack.c.l.bf16 %v629
        %v1786 = vunpack.c.h.bf16 %v629
        %v1787 = vunpack.c.l.bf16 %v630
        %v1788 = vunpack.c.h.bf16 %v630
        %v1789 = vunpack.c.l.bf16 %v631
        %v1790 = vunpack.c.h.bf16 %v631
        %v1791 = vunpack.c.l.bf16 %v632
        %v1792 = vunpack.c.h.bf16 %v632
        %v1793 = vunpack.c.l.bf16 %v633
        %v1794 = vunpack.c.h.bf16 %v633
        %v1795 = vunpack.c.l.bf16 %v634
        %v1796 = vunpack.c.h.bf16 %v634
        %v1797 = vunpack.c.l.bf16 %v635
        %v1798 = vunpack.c.h.bf16 %v635
        %v1799 = vunpack.c.l.bf16 %v636
        %v1800 = vunpack.c.h.bf16 %v636
        %v1801 = vunpack.c.l.bf16 %v637
        %v1802 = vunpack.c.h.bf16 %v637
        %v1803 = vunpack.c.l.bf16 %v638
        %v1804 = vunpack.c.h.bf16 %v638
        %v1805 = vunpack.c.l.bf16 %v639
        %v1806 = vunpack.c.h.bf16 %v639
        %v1807 = vunpack.c.l.bf16 %v640
        %v1808 = vunpack.c.h.bf16 %v640
        %v1809 = vunpack.c.l.bf16 %v641
        %v1810 = vunpack.c.h.bf16 %v641
        %v1811 = vunpack.c.l.bf16 %v642
        %v1812 = vunpack.c.h.bf16 %v642
        %v1813 = vunpack.c.l.bf16 %v643
        %v1814 = vunpack.c.h.bf16 %v643
        %v1815 = vunpack.c.l.bf16 %v644
        %v1816 = vunpack.c.h.bf16 %v644
        %v1817 = vunpack.c.l.bf16 %v645
        %v1818 = vunpack.c.h.bf16 %v645
        %v1819 = vunpack.c.l.bf16 %v646
        %v1820 = vunpack.c.h.bf16 %v646
        %v1821 = vunpack.c.l.bf16 %v647
        %v1822 = vunpack.c.h.bf16 %v647
        %v1823 = vunpack.c.l.bf16 %v648
        %v1824 = vunpack.c.h.bf16 %v648
        %v1825 = vunpack.c.l.bf16 %v649
        %v1826 = vunpack.c.h.bf16 %v649
        %v1827 = vunpack.c.l.bf16 %v650
        %v1828 = vunpack.c.h.bf16 %v650
        %v1829 = vunpack.c.l.bf16 %v651
        %v1830 = vunpack.c.h.bf16 %v651
        %v1831 = vunpack.c.l.bf16 %v652
        %v1832 = vunpack.c.h.bf16 %v652
        %v1833 = vunpack.c.l.bf16 %v653
        %v1834 = vunpack.c.h.bf16 %v653
        %v1835 = vunpack.c.l.bf16 %v654
        %v1836 = vunpack.c.h.bf16 %v654
        %v1837 = vunpack.c.l.bf16 %v655
        %v1838 = vunpack.c.h.bf16 %v655
        %v1839 = vunpack.c.l.bf16 %v656
        %v1840 = vunpack.c.h.bf16 %v656
        %v1841 = vunpack.c.l.bf16 %v657
        %v1842 = vunpack.c.h.bf16 %v657
        %v1843 = vunpack.c.l.bf16 %v658
        %v1844 = vunpack.c.h.bf16 %v658
        %v1845 = vunpack.c.l.bf16 %v659
        %v1846 = vunpack.c.h.bf16 %v659
        %v1847 = vunpack.c.l.bf16 %v660
        %v1848 = vunpack.c.h.bf16 %v660
        %v1849 = vunpack.c.l.bf16 %v661
        %v1850 = vunpack.c.h.bf16 %v661
        %v1851 = vunpack.c.l.bf16 %v662
        %v1852 = vunpack.c.h.bf16 %v662
        %v1853 = vunpack.c.l.bf16 %v663
        %v1854 = vunpack.c.h.bf16 %v663
        %v1855 = vunpack.c.l.bf16 %v664
        %v1856 = vunpack.c.h.bf16 %v664
        %v1857 = vunpack.c.l.bf16 %v665
        %v1858 = vunpack.c.h.bf16 %v665
        %v1859 = vunpack.c.l.bf16 %v666
        %v1860 = vunpack.c.h.bf16 %v666
        %v1861 = vunpack.c.l.bf16 %v667
        %v1862 = vunpack.c.h.bf16 %v667
        %v1863 = vunpack.c.l.bf16 %v668
        %v1864 = vunpack.c.h.bf16 %v668
        %v1865 = vunpack.c.l.bf16 %v669
        %v1866 = vunpack.c.h.bf16 %v669
        %v1867 = vunpack.c.l.bf16 %v670
        %v1868 = vunpack.c.h.bf16 %v670
        %v1869 = vunpack.c.l.bf16 %v671
        %v1870 = vunpack.c.h.bf16 %v671
        %v1871 = vunpack.c.l.bf16 %v672
        %v1872 = vunpack.c.h.bf16 %v672
        %v1873 = vunpack.c.l.bf16 %v673
        %v1874 = vunpack.c.h.bf16 %v673
        %v1875 = vunpack.c.l.bf16 %v674
        %v1876 = vunpack.c.h.bf16 %v674
        %v1877 = vunpack.c.l.bf16 %v675
        %v1878 = vunpack.c.h.bf16 %v675
        %v1879 = vunpack.c.l.bf16 %v676
        %v1880 = vunpack.c.h.bf16 %v676
        %v1881 = vunpack.c.l.bf16 %v677
        %v1882 = vunpack.c.h.bf16 %v677
        %v1883 = vunpack.c.l.bf16 %v678
        %v1884 = vunpack.c.h.bf16 %v678
        %v1885 = vunpack.c.l.bf16 %v679
        %v1886 = vunpack.c.h.bf16 %v679
        %v1887 = vunpack.c.l.bf16 %v680
        %v1888 = vunpack.c.h.bf16 %v680
        %v1889 = vunpack.c.l.bf16 %v681
        %v1890 = vunpack.c.h.bf16 %v681
        %v1891 = vunpack.c.l.bf16 %v682
        %v1892 = vunpack.c.h.bf16 %v682
        %v1893 = vunpack.c.l.bf16 %v683
        %v1894 = vunpack.c.h.bf16 %v683
        %v1895 = vunpack.c.l.bf16 %v684
        %v1896 = vunpack.c.h.bf16 %v684
        %v1897 = vunpack.c.l.bf16 %v685
        %v1898 = vunpack.c.h.bf16 %v685
        %v1899 = vunpack.c.l.bf16 %v686
        %v1900 = vunpack.c.h.bf16 %v686
        %v1901 = vunpack.c.l.bf16 %v687
        %v1902 = vunpack.c.h.bf16 %v687
        %v1903 = vunpack.c.l.bf16 %v688
        %v1904 = vunpack.c.h.bf16 %v688
        %v1905 = vunpack.c.l.bf16 %v689
        %v1906 = vunpack.c.h.bf16 %v689
        %v1907 = vunpack.c.l.bf16 %v690
        %v1908 = vunpack.c.h.bf16 %v690
        %v1909 = vunpack.c.l.bf16 %v691
        %v1910 = vunpack.c.h.bf16 %v691
        %v1911 = vunpack.c.l.bf16 %v692
        %v1912 = vunpack.c.h.bf16 %v692
        %v1913 = vunpack.c.l.bf16 %v693
        %v1914 = vunpack.c.h.bf16 %v693
        %v1915 = vunpack.c.l.bf16 %v694
        %v1916 = vunpack.c.h.bf16 %v694
        %v1917 = vunpack.c.l.bf16 %v695
        %v1918 = vunpack.c.h.bf16 %v695
        %v1919 = vunpack.c.l.bf16 %v696
        %v1920 = vunpack.c.h.bf16 %v696
        %v1921 = vunpack.c.l.bf16 %v697
        %v1922 = vunpack.c.h.bf16 %v697
        %v1923 = vunpack.c.l.bf16 %v698
        %v1924 = vunpack.c.h.bf16 %v698
        %v1925 = vunpack.c.l.bf16 %v699
        %v1926 = vunpack.c.h.bf16 %v699
        %v1927 = vunpack.c.l.bf16 %v700
        %v1928 = vunpack.c.h.bf16 %v700
        %v1929 = vunpack.c.l.bf16 %v701
        %v1930 = vunpack.c.h.bf16 %v701
        %v1931 = vunpack.c.l.bf16 %v702
        %v1932 = vunpack.c.h.bf16 %v702
        %v1933 = vunpack.c.l.bf16 %v703
        %v1934 = vunpack.c.h.bf16 %v703
        %v1935 = vunpack.c.l.bf16 %v704
        %v1936 = vunpack.c.h.bf16 %v704
        %v1937 = vunpack.c.l.bf16 %v705
        %v1938 = vunpack.c.h.bf16 %v705
        %v1939 = vunpack.c.l.bf16 %v706
        %v1940 = vunpack.c.h.bf16 %v706
        %v1941 = vunpack.c.l.bf16 %v707
        %v1942 = vunpack.c.h.bf16 %v707
        %v1943 = vunpack.c.l.bf16 %v708
        %v1944 = vunpack.c.h.bf16 %v708
        %v1945 = vunpack.c.l.bf16 %v709
        %v1946 = vunpack.c.h.bf16 %v709
        %v1947 = vunpack.c.l.bf16 %v710
        %v1948 = vunpack.c.h.bf16 %v710
        %v1949 = vunpack.c.l.bf16 %v711
        %v1950 = vunpack.c.h.bf16 %v711
        %v1951 = vunpack.c.l.bf16 %v712
        %v1952 = vunpack.c.h.bf16 %v712
        %v1953 = vunpack.c.l.bf16 %v713
        %v1954 = vunpack.c.h.bf16 %v713
        %v1955 = vunpack.c.l.bf16 %v714
        %v1956 = vunpack.c.h.bf16 %v714
        %v1957 = vunpack.c.l.bf16 %v715
        %v1958 = vunpack.c.h.bf16 %v715
        %v1959 = vunpack.c.l.bf16 %v716
        %v1960 = vunpack.c.h.bf16 %v716
        %v1961 = vunpack.c.l.bf16 %v717
        %v1962 = vunpack.c.h.bf16 %v717
        %v1963 = vunpack.c.l.bf16 %v718
        %v1964 = vunpack.c.h.bf16 %v718
        %v1965 = vunpack.c.l.bf16 %v719
        %v1966 = vunpack.c.h.bf16 %v719
        %v1967 = vunpack.c.l.bf16 %v720
        %v1968 = vunpack.c.h.bf16 %v720
        %v1969 = vunpack.c.l.bf16 %v721
        %v1970 = vunpack.c.h.bf16 %v721
        %v1971 = vunpack.c.l.bf16 %v722
        %v1972 = vunpack.c.h.bf16 %v722
        %v1973 = vunpack.c.l.bf16 %v723
        %v1974 = vunpack.c.h.bf16 %v723
        %v1975 = vunpack.c.l.bf16 %v724
        %v1976 = vunpack.c.h.bf16 %v724
        %v1977 = vunpack.c.l.bf16 %v725
        %v1978 = vunpack.c.h.bf16 %v725
        %v1979 = vunpack.c.l.bf16 %v726
        %v1980 = vunpack.c.h.bf16 %v726
        %v1981 = vunpack.c.l.bf16 %v727
        %v1982 = vunpack.c.h.bf16 %v727
        %v1983 = vunpack.c.l.bf16 %v728
        %v1984 = vunpack.c.h.bf16 %v728
        %v1985 = vunpack.c.l.bf16 %v729
        %v1986 = vunpack.c.h.bf16 %v729
        %v1987 = vunpack.c.l.bf16 %v730
        %v1988 = vunpack.c.h.bf16 %v730
        %v1989 = vunpack.c.l.bf16 %v731
        %v1990 = vunpack.c.h.bf16 %v731
        %v1991 = vunpack.c.l.bf16 %v732
        %v1992 = vunpack.c.h.bf16 %v732
        %v1993 = vunpack.c.l.bf16 %v733
        %v1994 = vunpack.c.h.bf16 %v733
        %v1995 = vunpack.c.l.bf16 %v734
        %v1996 = vunpack.c.h.bf16 %v734
        %v1997 = vunpack.c.l.bf16 %v735
        %v1998 = vunpack.c.h.bf16 %v735
        %v1999 = vunpack.c.l.bf16 %v736
        %v2000 = vunpack.c.h.bf16 %v736
        %v2001 = vunpack.c.l.bf16 %v737
        %v2002 = vunpack.c.h.bf16 %v737
        %v2003 = vunpack.c.l.bf16 %v738
        %v2004 = vunpack.c.h.bf16 %v738
        %v2005 = vunpack.c.l.bf16 %v739
        %v2006 = vunpack.c.h.bf16 %v739
        %v2007 = vunpack.c.l.bf16 %v740
        %v2008 = vunpack.c.h.bf16 %v740
        %v2009 = vunpack.c.l.bf16 %v741
        %v2010 = vunpack.c.h.bf16 %v741
        %v2011 = vunpack.c.l.bf16 %v742
        %v2012 = vunpack.c.h.bf16 %v742
        %v2013 = vunpack.c.l.bf16 %v743
        %v2014 = vunpack.c.h.bf16 %v743
        %v2015 = vunpack.c.l.bf16 %v744
        %v2016 = vunpack.c.h.bf16 %v744
        %v2017 = vunpack.c.l.bf16 %v745
        %v2018 = vunpack.c.h.bf16 %v745
        %v2019 = vunpack.c.l.bf16 %v746
        %v2020 = vunpack.c.h.bf16 %v746
        %v2021 = vunpack.c.l.bf16 %v747
        %v2022 = vunpack.c.h.bf16 %v747
        %v2023 = vunpack.c.l.bf16 %v748
        %v2024 = vunpack.c.h.bf16 %v748
        %v2025 = vunpack.c.l.bf16 %v749
        %v2026 = vunpack.c.h.bf16 %v749
        %v2027 = vunpack.c.l.bf16 %v750
        %v2028 = vunpack.c.h.bf16 %v750
        %v2029 = vunpack.c.l.bf16 %v751
        %v2030 = vunpack.c.h.bf16 %v751
        %v2031 = vunpack.c.l.bf16 %v752
        %v2032 = vunpack.c.h.bf16 %v752
        %v2033 = vunpack.c.l.bf16 %v753
        %v2034 = vunpack.c.h.bf16 %v753
        %v2035 = vunpack.c.l.bf16 %v754
        %v2036 = vunpack.c.h.bf16 %v754
        %v2037 = vunpack.c.l.bf16 %v755
        %v2038 = vunpack.c.h.bf16 %v755
        %v2039 = vunpack.c.l.bf16 %v756
        %v2040 = vunpack.c.h.bf16 %v756
        %v2041 = vunpack.c.l.bf16 %v757
        %v2042 = vunpack.c.h.bf16 %v757
        %v2043 = vunpack.c.l.bf16 %v758
        %v2044 = vunpack.c.h.bf16 %v758
        %v2045 = vunpack.c.l.bf16 %v759
        %v2046 = vunpack.c.h.bf16 %v759
        %v2047 = vunpack.c.l.bf16 %v760
        %v2048 = vunpack.c.h.bf16 %v760
        %v2049 = vunpack.c.l.bf16 %v761
        %v2050 = vunpack.c.h.bf16 %v761
        %v2051 = vunpack.c.l.bf16 %v762
        %v2052 = vunpack.c.h.bf16 %v762
        %v2053 = vunpack.c.l.bf16 %v763
        %v2054 = vunpack.c.h.bf16 %v763
        %v2055 = vunpack.c.l.bf16 %v764
        %v2056 = vunpack.c.h.bf16 %v764
        %v2057 = vunpack.c.l.bf16 %v765
        %v2058 = vunpack.c.h.bf16 %v765
        %v2059 = vunpack.c.l.bf16 %v766
        %v2060 = vunpack.c.h.bf16 %v766
        %v2061 = vunpack.c.l.bf16 %v767
        %v2062 = vunpack.c.h.bf16 %v767
        %v2063 = vunpack.c.l.bf16 %v768
        %v2064 = vunpack.c.h.bf16 %v768
        %v2065 = vunpack.c.l.bf16 %v769
        %v2066 = vunpack.c.h.bf16 %v769
        %v2067 = vunpack.c.l.bf16 %v770
        %v2068 = vunpack.c.h.bf16 %v770
        %v2069 = vunpack.c.l.bf16 %v771
        %v2070 = vunpack.c.h.bf16 %v771
        %v2071 = vunpack.c.l.bf16 %v772
        %v2072 = vunpack.c.h.bf16 %v772
        %v2073 = vunpack.c.l.bf16 %v773
        %v2074 = vunpack.c.h.bf16 %v773
        %v2075 = vunpack.c.l.bf16 %v774
        %v2076 = vunpack.c.h.bf16 %v774
        %v2077 = vunpack.c.l.bf16 %v775
        %v2078 = vunpack.c.h.bf16 %v775
        %v2079 = vunpack.c.l.bf16 %v776
        %v2080 = vunpack.c.h.bf16 %v776
        %v2081 = vunpack.c.l.bf16 %v777
        %v2082 = vunpack.c.h.bf16 %v777
        %v2083 = vunpack.c.l.bf16 %v778
        %v2084 = vunpack.c.h.bf16 %v778
        %v2085 = vunpack.c.l.bf16 %v779
        %v2086 = vunpack.c.h.bf16 %v779
        %v2087 = vunpack.c.l.bf16 %v780
        %v2088 = vunpack.c.h.bf16 %v780
        %v2089 = vunpack.c.l.bf16 %v781
        %v2090 = vunpack.c.h.bf16 %v781
        %v2091 = vunpack.c.l.bf16 %v782
        %v2092 = vunpack.c.h.bf16 %v782
        %v2093 = vunpack.c.l.bf16 %v783
        %v2094 = vunpack.c.h.bf16 %v783
        %v2095 = vunpack.c.l.bf16 %v784
        %v2096 = vunpack.c.h.bf16 %v784
        %v2097 = vunpack.c.l.bf16 %v785
        %v2098 = vunpack.c.h.bf16 %v785
        %v2099 = vunpack.c.l.bf16 %v786
        %v2100 = vunpack.c.h.bf16 %v786
        %v2101 = vunpack.c.l.bf16 %v787
        %v2102 = vunpack.c.h.bf16 %v787
        %v2103 = vunpack.c.l.bf16 %v788
        %v2104 = vunpack.c.h.bf16 %v788
        %v2105 = vunpack.c.l.bf16 %v789
        %v2106 = vunpack.c.h.bf16 %v789
        %v2107 = vunpack.c.l.bf16 %v790
        %v2108 = vunpack.c.h.bf16 %v790
        %v2109 = vunpack.c.l.bf16 %v791
        %v2110 = vunpack.c.h.bf16 %v791
        %v2111 = vunpack.c.l.bf16 %v792
        %v2112 = vunpack.c.h.bf16 %v792
        %v2113 = vunpack.c.l.bf16 %v793
        %v2114 = vunpack.c.h.bf16 %v793
        %v2115 = vunpack.c.l.bf16 %v794
        %v2116 = vunpack.c.h.bf16 %v794
        %v2117 = vunpack.c.l.bf16 %v795
        %v2118 = vunpack.c.h.bf16 %v795
        %v2119 = vunpack.c.l.bf16 %v796
        %v2120 = vunpack.c.h.bf16 %v796
        %v2121 = vunpack.c.l.bf16 %v797
        %v2122 = vunpack.c.h.bf16 %v797
        %v2123 = vunpack.c.l.bf16 %v798
        %v2124 = vunpack.c.h.bf16 %v798
        %v2125 = vunpack.c.l.bf16 %v799
        %v2126 = vunpack.c.h.bf16 %v799
        %v2127 = vunpack.c.l.bf16 %v800
        %v2128 = vunpack.c.h.bf16 %v800
        %v2129 = vunpack.c.l.bf16 %v801
        %v2130 = vunpack.c.h.bf16 %v801
        %v2131 = vunpack.c.l.bf16 %v802
        %v2132 = vunpack.c.h.bf16 %v802
        %v2133 = vunpack.c.l.bf16 %v803
        %v2134 = vunpack.c.h.bf16 %v803
        %v2135 = vunpack.c.l.bf16 %v804
        %v2136 = vunpack.c.h.bf16 %v804
        %v2137 = vunpack.c.l.bf16 %v805
        %v2138 = vunpack.c.h.bf16 %v805
        %v2139 = vunpack.c.l.bf16 %v806
        %v2140 = vunpack.c.h.bf16 %v806
        %v2141 = vunpack.c.l.bf16 %v807
        %v2142 = vunpack.c.h.bf16 %v807
        %v2143 = vunpack.c.l.bf16 %v808
        %v2144 = vunpack.c.h.bf16 %v808
        %v2145 = vunpack.c.l.bf16 %v809
        %v2146 = vunpack.c.h.bf16 %v809
        %v2147 = vunpack.c.l.bf16 %v810
        %v2148 = vunpack.c.h.bf16 %v810
        %v2149 = vunpack.c.l.bf16 %v811
        %v2150 = vunpack.c.h.bf16 %v811
        %v2151 = vunpack.c.l.bf16 %v812
        %v2152 = vunpack.c.h.bf16 %v812
        %v2153 = vunpack.c.l.bf16 %v813
        %v2154 = vunpack.c.h.bf16 %v813
        %v2155 = vunpack.c.l.bf16 %v814
        %v2156 = vunpack.c.h.bf16 %v814
        %v2157 = vunpack.c.l.bf16 %v815
        %v2158 = vunpack.c.h.bf16 %v815
        %v2159 = vunpack.c.l.bf16 %v816
        %v2160 = vunpack.c.h.bf16 %v816
        %v2161 = vunpack.c.l.bf16 %v817
        %v2162 = vunpack.c.h.bf16 %v817
        %v2163 = vunpack.c.l.bf16 %v818
        %v2164 = vunpack.c.h.bf16 %v818
        %v2165 = vunpack.c.l.bf16 %v819
        %v2166 = vunpack.c.h.bf16 %v819
        %v2167 = vunpack.c.l.bf16 %v820
        %v2168 = vunpack.c.h.bf16 %v820
        %v2169 = vunpack.c.l.bf16 %v821
        %v2170 = vunpack.c.h.bf16 %v821
        %v2171 = vunpack.c.l.bf16 %v822
        %v2172 = vunpack.c.h.bf16 %v822
        %v2173 = vunpack.c.l.bf16 %v823
        %v2174 = vunpack.c.h.bf16 %v823
        %v2175 = vunpack.c.l.bf16 %v824
        %v2176 = vunpack.c.h.bf16 %v824
        %v2177 = vunpack.c.l.bf16 %v825
        %v2178 = vunpack.c.h.bf16 %v825
        %v2179 = vunpack.c.l.bf16 %v826
        %v2180 = vunpack.c.h.bf16 %v826
        %v2181 = vunpack.c.l.bf16 %v827
        %v2182 = vunpack.c.h.bf16 %v827
        %v2183 = vunpack.c.l.bf16 %v828
        %v2184 = vunpack.c.h.bf16 %v828
        %v2185 = vunpack.c.l.bf16 %v829
        %v2186 = vunpack.c.h.bf16 %v829
        %v2187 = vunpack.c.l.bf16 %v830
        %v2188 = vunpack.c.h.bf16 %v830
        %v2189 = vunpack.c.l.bf16 %v831
        %v2190 = vunpack.c.h.bf16 %v831
        %v2191 = vunpack.c.l.bf16 %v832
        %v2192 = vunpack.c.h.bf16 %v832
        %v2193 = vunpack.c.l.bf16 %v833
        %v2194 = vunpack.c.h.bf16 %v833
        %v2195 = vunpack.c.l.bf16 %v834
        %v2196 = vunpack.c.h.bf16 %v834
        %v2197 = vunpack.c.l.bf16 %v835
        %v2198 = vunpack.c.h.bf16 %v835
        %v2199 = vunpack.c.l.bf16 %v836
        %v2200 = vunpack.c.h.bf16 %v836
        %v2201 = vunpack.c.l.bf16 %v837
        %v2202 = vunpack.c.h.bf16 %v837
        %v2203 = vunpack.c.l.bf16 %v838
        %v2204 = vunpack.c.h.bf16 %v838
        %v2205 = vunpack.c.l.bf16 %v839
        %v2206 = vunpack.c.h.bf16 %v839
        %v2207 = vunpack.c.l.bf16 %v840
        %v2208 = vunpack.c.h.bf16 %v840
        %v2209 = vunpack.c.l.bf16 %v841
        %v2210 = vunpack.c.h.bf16 %v841
        %v2211 = vunpack.c.l.bf16 %v842
        %v2212 = vunpack.c.h.bf16 %v842
        %v2213 = vunpack.c.l.bf16 %v843
        %v2214 = vunpack.c.h.bf16 %v843
        %v2215 = vunpack.c.l.bf16 %v844
        %v2216 = vunpack.c.h.bf16 %v844
        %v2217 = vunpack.c.l.bf16 %v845
        %v2218 = vunpack.c.h.bf16 %v845
        %v2219 = vunpack.c.l.bf16 %v846
        %v2220 = vunpack.c.h.bf16 %v846
        %v2221 = vunpack.c.l.bf16 %v847
        %v2222 = vunpack.c.h.bf16 %v847
        %v2223 = vunpack.c.l.bf16 %v848
        %v2224 = vunpack.c.h.bf16 %v848
        %v2225 = vunpack.c.l.bf16 %v849
        %v2226 = vunpack.c.h.bf16 %v849
        %v2227 = vunpack.c.l.bf16 %v850
        %v2228 = vunpack.c.h.bf16 %v850
        %v2229 = vunpack.c.l.bf16 %v851
        %v2230 = vunpack.c.h.bf16 %v851
        %v2231 = vunpack.c.l.bf16 %v852
        %v2232 = vunpack.c.h.bf16 %v852
        %v2233 = vunpack.c.l.bf16 %v853
        %v2234 = vunpack.c.h.bf16 %v853
        %v2235 = vunpack.c.l.bf16 %v854
        %v2236 = vunpack.c.h.bf16 %v854
        %v2237 = vunpack.c.l.bf16 %v855
        %v2238 = vunpack.c.h.bf16 %v855
        %v2239 = vunpack.c.l.bf16 %v856
        %v2240 = vunpack.c.h.bf16 %v856
        %v2241 = vunpack.c.l.bf16 %v857
        %v2242 = vunpack.c.h.bf16 %v857
        %v2243 = vunpack.c.l.bf16 %v858
        %v2244 = vunpack.c.h.bf16 %v858
        %v2245 = vunpack.c.l.bf16 %v859
        %v2246 = vunpack.c.h.bf16 %v859
        %v2247 = vunpack.c.l.bf16 %v860
        %v2248 = vunpack.c.h.bf16 %v860
        %v2249 = vunpack.c.l.bf16 %v861
        %v2250 = vunpack.c.h.bf16 %v861
        %v2251 = vunpack.c.l.bf16 %v862
        %v2252 = vunpack.c.h.bf16 %v862
        %v2253 = vunpack.c.l.bf16 %v863
        %v2254 = vunpack.c.h.bf16 %v863
        %v2255 = vunpack.c.l.bf16 %v864
        %v2256 = vunpack.c.h.bf16 %v864
        %v2257 = vunpack.c.l.bf16 %v865
        %v2258 = vunpack.c.h.bf16 %v865
        %v2259 = vunpack.c.l.bf16 %v866
        %v2260 = vunpack.c.h.bf16 %v866
        %v2261 = vunpack.c.l.bf16 %v867
        %v2262 = vunpack.c.h.bf16 %v867
        %v2263 = vunpack.c.l.bf16 %v868
        %v2264 = vunpack.c.h.bf16 %v868
        %v2265 = vunpack.c.l.bf16 %v869
        %v2266 = vunpack.c.h.bf16 %v869
        %v2267 = vunpack.c.l.bf16 %v870
        %v2268 = vunpack.c.h.bf16 %v870
        %v2269 = vunpack.c.l.bf16 %v871
        %v2270 = vunpack.c.h.bf16 %v871
        %v2271 = vunpack.c.l.bf16 %v872
        %v2272 = vunpack.c.h.bf16 %v872
        %v2273 = vunpack.c.l.bf16 %v873
        %v2274 = vunpack.c.h.bf16 %v873
        %v2275 = vunpack.c.l.bf16 %v874
        %v2276 = vunpack.c.h.bf16 %v874
        %v2277 = vunpack.c.l.bf16 %v875
        %v2278 = vunpack.c.h.bf16 %v875
        %v2279 = vunpack.c.l.bf16 %v876
        %v2280 = vunpack.c.h.bf16 %v876
        %v2281 = vunpack.c.l.bf16 %v877
        %v2282 = vunpack.c.h.bf16 %v877
        %v2283 = vunpack.c.l.bf16 %v878
        %v2284 = vunpack.c.h.bf16 %v878
        %v2285 = vunpack.c.l.bf16 %v879
        %v2286 = vunpack.c.h.bf16 %v879
        %v2287 = vunpack.c.l.bf16 %v880
        %v2288 = vunpack.c.h.bf16 %v880
        %v2289 = vunpack.c.l.bf16 %v881
        %v2290 = vunpack.c.h.bf16 %v881
        %v2291 = vunpack.c.l.bf16 %v882
        %v2292 = vunpack.c.h.bf16 %v882
        %v2293 = vunpack.c.l.bf16 %v883
        %v2294 = vunpack.c.h.bf16 %v883
        %v2295 = vunpack.c.l.bf16 %v884
        %v2296 = vunpack.c.h.bf16 %v884
        %v2297 = vunpack.c.l.bf16 %v885
        %v2298 = vunpack.c.h.bf16 %v885
        %v2299 = vunpack.c.l.bf16 %v886
        %v2300 = vunpack.c.h.bf16 %v886
        %v2301 = vunpack.c.l.bf16 %v887
        %v2302 = vunpack.c.h.bf16 %v887
        %v2303 = vunpack.c.l.bf16 %v888
        %v2304 = vunpack.c.h.bf16 %v888
        %v2305 = vunpack.c.l.bf16 %v889
        %v2306 = vunpack.c.h.bf16 %v889
        %v2307 = vunpack.c.l.bf16 %v890
        %v2308 = vunpack.c.h.bf16 %v890
        %v2309 = vunpack.c.l.bf16 %v891
        %v2310 = vunpack.c.h.bf16 %v891
        %v2311 = vunpack.c.l.bf16 %v892
        %v2312 = vunpack.c.h.bf16 %v892
        %v2313 = vunpack.c.l.bf16 %v893
        %v2314 = vunpack.c.h.bf16 %v893
        %v2315 = vunpack.c.l.bf16 %v894
        %v2316 = vunpack.c.h.bf16 %v894
        %v2317 = vunpack.c.l.bf16 %v895
        %v2318 = vunpack.c.h.bf16 %v895
        %v2319 = vunpack.c.l.bf16 %v896
        %v2320 = vunpack.c.h.bf16 %v896
        %v2321 = vunpack.c.l.bf16 %v897
        %v2322 = vunpack.c.h.bf16 %v897
        %v2323 = vunpack.c.l.bf16 %v898
        %v2324 = vunpack.c.h.bf16 %v898
        %v2325 = vunpack.c.l.bf16 %v899
        %v2326 = vunpack.c.h.bf16 %v899
        %v2327 = vunpack.c.l.bf16 %v900
        %v2328 = vunpack.c.h.bf16 %v900
        %v2329 = vunpack.c.l.bf16 %v901
        %v2330 = vunpack.c.h.bf16 %v901
        %v2331 = vunpack.c.l.bf16 %v902
        %v2332 = vunpack.c.h.bf16 %v902
        %v2333 = vunpack.c.l.bf16 %v903
        %v2334 = vunpack.c.h.bf16 %v903
        %v2335 = vunpack.c.l.bf16 %v904
        %v2336 = vunpack.c.h.bf16 %v904
        %v2337 = vunpack.c.l.bf16 %v905
        %v2338 = vunpack.c.h.bf16 %v905
        %v2339 = vunpack.c.l.bf16 %v906
        %v2340 = vunpack.c.h.bf16 %v906
        %v2341 = vunpack.c.l.bf16 %v907
        %v2342 = vunpack.c.h.bf16 %v907
        %v2343 = vunpack.c.l.bf16 %v908
        %v2344 = vunpack.c.h.bf16 %v908
        %v2345 = vunpack.c.l.bf16 %v909
        %v2346 = vunpack.c.h.bf16 %v909
        %v2347 = vunpack.c.l.bf16 %v910
        %v2348 = vunpack.c.h.bf16 %v910
        %v2349 = vunpack.c.l.bf16 %v911
        %v2350 = vunpack.c.h.bf16 %v911
        %v2351 = vunpack.c.l.bf16 %v912
        %v2352 = vunpack.c.h.bf16 %v912
        %v2353 = vunpack.c.l.bf16 %v913
        %v2354 = vunpack.c.h.bf16 %v913
        %v2355 = vunpack.c.l.bf16 %v914
        %v2356 = vunpack.c.h.bf16 %v914
        %v2357 = vunpack.c.l.bf16 %v915
        %v2358 = vunpack.c.h.bf16 %v915
        %v2359 = vunpack.c.l.bf16 %v916
        %v2360 = vunpack.c.h.bf16 %v916
        %v2361 = vunpack.c.l.bf16 %v917
        %v2362 = vunpack.c.h.bf16 %v917
        %v2363 = vunpack.c.l.bf16 %v918
        %v2364 = vunpack.c.h.bf16 %v918
        %v2365 = vunpack.c.l.bf16 %v919
        %v2366 = vunpack.c.h.bf16 %v919
        %v2367 = vunpack.c.l.bf16 %v920
        %v2368 = vunpack.c.h.bf16 %v920
        %v2369 = vunpack.c.l.bf16 %v921
        %v2370 = vunpack.c.h.bf16 %v921
        %v2371 = vunpack.c.l.bf16 %v922
        %v2372 = vunpack.c.h.bf16 %v922
        %v2373 = vunpack.c.l.bf16 %v923
        %v2374 = vunpack.c.h.bf16 %v923
        %v2375 = vunpack.c.l.bf16 %v924
        %v2376 = vunpack.c.h.bf16 %v924
        %v2377 = vunpack.c.l.bf16 %v925
        %v2378 = vunpack.c.h.bf16 %v925
        %v2379 = vunpack.c.l.bf16 %v926
        %v2380 = vunpack.c.h.bf16 %v926
        %v2381 = vunpack.c.l.bf16 %v927
        %v2382 = vunpack.c.h.bf16 %v927
        %v2383 = vunpack.c.l.bf16 %v928
        %v2384 = vunpack.c.h.bf16 %v928
        %v2385 = vunpack.c.l.bf16 %v929
        %v2386 = vunpack.c.h.bf16 %v929
        %v2387 = vunpack.c.l.bf16 %v930
        %v2388 = vunpack.c.h.bf16 %v930
        %v2389 = vunpack.c.l.bf16 %v931
        %v2390 = vunpack.c.h.bf16 %v931
        %v2391 = vunpack.c.l.bf16 %v932
        %v2392 = vunpack.c.h.bf16 %v932
        %v2393 = vunpack.c.l.bf16 %v933
        %v2394 = vunpack.c.h.bf16 %v933
        %v2395 = vunpack.c.l.bf16 %v934
        %v2396 = vunpack.c.h.bf16 %v934
        %v2397 = vunpack.c.l.bf16 %v935
        %v2398 = vunpack.c.h.bf16 %v935
        %v2399 = vunpack.c.l.bf16 %v936
        %v2400 = vunpack.c.h.bf16 %v936
        %v2401 = vunpack.c.l.bf16 %v937
        %v2402 = vunpack.c.h.bf16 %v937
        %v2403 = vunpack.c.l.bf16 %v938
        %v2404 = vunpack.c.h.bf16 %v938
        %v2405 = vunpack.c.l.bf16 %v939
        %v2406 = vunpack.c.h.bf16 %v939
        %v2407 = vunpack.c.l.bf16 %v940
        %v2408 = vunpack.c.h.bf16 %v940
        %v2409 = vunpack.c.l.bf16 %v941
        %v2410 = vunpack.c.h.bf16 %v941
        %v2411 = vunpack.c.l.bf16 %v942
        %v2412 = vunpack.c.h.bf16 %v942
        %v2413 = vunpack.c.l.bf16 %v943
        %v2414 = vunpack.c.h.bf16 %v943
        %v2415 = vunpack.c.l.bf16 %v944
        %v2416 = vunpack.c.h.bf16 %v944
        %v2417 = vunpack.c.l.bf16 %v945
        %v2418 = vunpack.c.h.bf16 %v945
        %v2419 = vunpack.c.l.bf16 %v946
        %v2420 = vunpack.c.h.bf16 %v946
        %v2421 = vunpack.c.l.bf16 %v947
        %v2422 = vunpack.c.h.bf16 %v947
        %v2423 = vunpack.c.l.bf16 %v948
        %v2424 = vunpack.c.h.bf16 %v948
        %v2425 = vunpack.c.l.bf16 %v949
        %v2426 = vunpack.c.h.bf16 %v949
        %v2427 = vunpack.c.l.bf16 %v950
        %v2428 = vunpack.c.h.bf16 %v950
        %v2429 = vunpack.c.l.bf16 %v951
        %v2430 = vunpack.c.h.bf16 %v951
        %v2431 = vunpack.c.l.bf16 %v952
        %v2432 = vunpack.c.h.bf16 %v952
        %v2433 = vunpack.c.l.bf16 %v953
        %v2434 = vunpack.c.h.bf16 %v953
        %v2435 = vunpack.c.l.bf16 %v954
        %v2436 = vunpack.c.h.bf16 %v954
        %v2437 = vunpack.c.l.bf16 %v955
        %v2438 = vunpack.c.h.bf16 %v955
        %v2439 = vunpack.c.l.bf16 %v956
        %v2440 = vunpack.c.h.bf16 %v956
        %v2441 = vunpack.c.l.bf16 %v957
        %v2442 = vunpack.c.h.bf16 %v957
        %v2443 = vunpack.c.l.bf16 %v958
        %v2444 = vunpack.c.h.bf16 %v958
        %v2445 = vunpack.c.l.bf16 %v959
        %v2446 = vunpack.c.h.bf16 %v959
        %v2447 = vunpack.c.l.bf16 %v960
        %v2448 = vunpack.c.h.bf16 %v960
        %v2449 = vunpack.c.l.bf16 %v961
        %v2450 = vunpack.c.h.bf16 %v961
        %v2451 = vunpack.c.l.bf16 %v962
        %v2452 = vunpack.c.h.bf16 %v962
        %v2453 = vunpack.c.l.bf16 %v963
        %v2454 = vunpack.c.h.bf16 %v963
        %v2455 = vunpack.c.l.bf16 %v964
        %v2456 = vunpack.c.h.bf16 %v964
        %v2457 = vunpack.c.l.bf16 %v965
        %v2458 = vunpack.c.h.bf16 %v965
        %v2459 = vunpack.c.l.bf16 %v966
        %v2460 = vunpack.c.h.bf16 %v966
        %v2461 = vunpack.c.l.bf16 %v967
        %v2462 = vunpack.c.h.bf16 %v967
        %v2463 = vunpack.c.l.bf16 %v968
        %v2464 = vunpack.c.h.bf16 %v968
        %v2465 = vunpack.c.l.bf16 %v969
        %v2466 = vunpack.c.h.bf16 %v969
        %v2467 = vunpack.c.l.bf16 %v970
        %v2468 = vunpack.c.h.bf16 %v970
        %v2469 = vunpack.c.l.bf16 %v971
        %v2470 = vunpack.c.h.bf16 %v971
        %v2471 = vunpack.c.l.bf16 %v972
        %v2472 = vunpack.c.h.bf16 %v972
        %v2473 = vunpack.c.l.bf16 %v973
        %v2474 = vunpack.c.h.bf16 %v973
        %v2475 = vunpack.c.l.bf16 %v974
        %v2476 = vunpack.c.h.bf16 %v974
        %v2477 = vunpack.c.l.bf16 %v975
        %v2478 = vunpack.c.h.bf16 %v975
        %v2479 = vunpack.c.l.bf16 %v976
        %v2480 = vunpack.c.h.bf16 %v976
        %v2481 = vunpack.c.l.bf16 %v977
        %v2482 = vunpack.c.h.bf16 %v977
        %v2483 = vunpack.c.l.bf16 %v978
        %v2484 = vunpack.c.h.bf16 %v978
        %v2485 = vunpack.c.l.bf16 %v979
        %v2486 = vunpack.c.h.bf16 %v979
        %v2487 = vunpack.c.l.bf16 %v980
        %v2488 = vunpack.c.h.bf16 %v980
        %v2489 = vunpack.c.l.bf16 %v981
        %v2490 = vunpack.c.h.bf16 %v981
        %v2491 = vunpack.c.l.bf16 %v982
        %v2492 = vunpack.c.h.bf16 %v982
        %v2493 = vunpack.c.l.bf16 %v983
        %v2494 = vunpack.c.h.bf16 %v983
        %v2495 = vunpack.c.l.bf16 %v984
        %v2496 = vunpack.c.h.bf16 %v984
        %v2497 = vunpack.c.l.bf16 %v985
        %v2498 = vunpack.c.h.bf16 %v985
        %v2499 = vunpack.c.l.bf16 %v986
        %v2500 = vunpack.c.h.bf16 %v986
        %v2501 = vunpack.c.l.bf16 %v987
        %v2502 = vunpack.c.h.bf16 %v987
        %v2503 = vunpack.c.l.bf16 %v988
        %v2504 = vunpack.c.h.bf16 %v988
        %v2505 = vunpack.c.l.bf16 %v989
        %v2506 = vunpack.c.h.bf16 %v989
        %v2507 = vunpack.c.l.bf16 %v990
        %v2508 = vunpack.c.h.bf16 %v990
        %v2509 = vunpack.c.l.bf16 %v991
        %v2510 = vunpack.c.h.bf16 %v991
        %v2511 = vunpack.c.l.bf16 %v992
        %v2512 = vunpack.c.h.bf16 %v992
        %v2513 = vunpack.c.l.bf16 %v993
        %v2514 = vunpack.c.h.bf16 %v993
        %v2515 = vunpack.c.l.bf16 %v994
        %v2516 = vunpack.c.h.bf16 %v994
        %v2517 = vunpack.c.l.bf16 %v995
        %v2518 = vunpack.c.h.bf16 %v995
        %v2519 = vunpack.c.l.bf16 %v996
        %v2520 = vunpack.c.h.bf16 %v996
        %v2521 = vunpack.c.l.bf16 %v997
        %v2522 = vunpack.c.h.bf16 %v997
        %v2523 = vunpack.c.l.bf16 %v998
        %v2524 = vunpack.c.h.bf16 %v998
        %v2525 = vunpack.c.l.bf16 %v999
        %v2526 = vunpack.c.h.bf16 %v999
        %v2527 = vunpack.c.l.bf16 %v1000
        %v2528 = vunpack.c.h.bf16 %v1000
        %v2529 = vunpack.c.l.bf16 %v1001
        %v2530 = vunpack.c.h.bf16 %v1001
        %v2531 = vunpack.c.l.bf16 %v1002
        %v2532 = vunpack.c.h.bf16 %v1002
        %v2533 = vunpack.c.l.bf16 %v1003
        %v2534 = vunpack.c.h.bf16 %v1003
        %v2535 = vunpack.c.l.bf16 %v1004
        %v2536 = vunpack.c.h.bf16 %v1004
        %v2537 = vunpack.c.l.bf16 %v1005
        %v2538 = vunpack.c.h.bf16 %v1005
        %v2539 = vunpack.c.l.bf16 %v1006
        %v2540 = vunpack.c.h.bf16 %v1006
        %v2541 = vunpack.c.l.bf16 %v1007
        %v2542 = vunpack.c.h.bf16 %v1007
        %v2543 = vunpack.c.l.bf16 %v1008
        %v2544 = vunpack.c.h.bf16 %v1008
        %v2545 = vunpack.c.l.bf16 %v1009
        %v2546 = vunpack.c.h.bf16 %v1009
        %v2547 = vunpack.c.l.bf16 %v1010
        %v2548 = vunpack.c.h.bf16 %v1010
        %v2549 = vunpack.c.l.bf16 %v1011
        %v2550 = vunpack.c.h.bf16 %v1011
        %v2551 = vunpack.c.l.bf16 %v1012
        %v2552 = vunpack.c.h.bf16 %v1012
        %v2553 = vunpack.c.l.bf16 %v1013
        %v2554 = vunpack.c.h.bf16 %v1013
        %v2555 = vunpack.c.l.bf16 %v1014
        %v2556 = vunpack.c.h.bf16 %v1014
        %v2557 = vunpack.c.l.bf16 %v1015
        %v2558 = vunpack.c.h.bf16 %v1015
        %v2559 = vunpack.c.l.bf16 %v1016
        %v2560 = vunpack.c.h.bf16 %v1016
        %v2561 = vunpack.c.l.bf16 %v1017
        %v2562 = vunpack.c.h.bf16 %v1017
        %v2563 = vunpack.c.l.bf16 %v1018
        %v2564 = vunpack.c.h.bf16 %v1018
        %v2565 = vunpack.c.l.bf16 %v1019
        %v2566 = vunpack.c.h.bf16 %v1019
        %v2567 = vunpack.c.l.bf16 %v1020
        %v2568 = vunpack.c.h.bf16 %v1020
        %v2569 = vunpack.c.l.bf16 %v1021
        %v2570 = vunpack.c.h.bf16 %v1021
        %v2571 = vunpack.c.l.bf16 %v1022
        %v2572 = vunpack.c.h.bf16 %v1022
        %v2573 = vunpack.c.l.bf16 %v1023
        %v2574 = vunpack.c.h.bf16 %v1023
        %v2575 = vunpack.c.l.bf16 %v1024
        %v2576 = vunpack.c.h.bf16 %v1024
        %v2577 = vunpack.c.l.bf16 %v1025
        %v2578 = vunpack.c.h.bf16 %v1025
        %v2579 = vunpack.c.l.bf16 %v1026
        %v2580 = vunpack.c.h.bf16 %v1026
        %v2581 = vunpack.c.l.bf16 %v1027
        %v2582 = vunpack.c.h.bf16 %v1027
        %v2583 = vunpack.c.l.bf16 %v1028
        %v2584 = vunpack.c.h.bf16 %v1028
        %v2585 = vunpack.c.l.bf16 %v1029
        %v2586 = vunpack.c.h.bf16 %v1029
        %v2587 = vunpack.c.l.bf16 %v1030
        %v2588 = vunpack.c.h.bf16 %v1030
        %v2589 = vunpack.c.l.bf16 %v1031
        %v2590 = vunpack.c.h.bf16 %v1031
        %v2591 = vunpack.c.l.bf16 %v1032
        %v2592 = vunpack.c.h.bf16 %v1032
        %v2593 = vunpack.c.l.bf16 %v1033
        %v2594 = vunpack.c.h.bf16 %v1033
        %v2595 = vunpack.c.l.bf16 %v1034
        %v2596 = vunpack.c.h.bf16 %v1034
        %v2597 = vunpack.c.l.bf16 %v1035
        %v2598 = vunpack.c.h.bf16 %v1035
        %v2599 = vunpack.c.l.bf16 %v1036
        %v2600 = vunpack.c.h.bf16 %v1036
        %v2601 = vunpack.c.l.bf16 %v1037
        %v2602 = vunpack.c.h.bf16 %v1037
        %v2603 = vunpack.c.l.bf16 %v1038
        %v2604 = vunpack.c.h.bf16 %v1038
        %v2605 = vunpack.c.l.bf16 %v1039
        %v2606 = vunpack.c.h.bf16 %v1039
        %v2607 = vunpack.c.l.bf16 %v1040
        %v2608 = vunpack.c.h.bf16 %v1040
        %v2609 = vunpack.c.l.bf16 %v1041
        %v2610 = vunpack.c.h.bf16 %v1041
        %v2611 = vunpack.c.l.bf16 %v1042
        %v2612 = vunpack.c.h.bf16 %v1042
        %v2613 = vunpack.c.l.bf16 %v1043
        %v2614 = vunpack.c.h.bf16 %v1043
        %v2615 = vunpack.c.l.bf16 %v1044
        %v2616 = vunpack.c.h.bf16 %v1044
        %v2617 = vunpack.c.l.bf16 %v1045
        %v2618 = vunpack.c.h.bf16 %v1045
        %v2619 = vunpack.c.l.bf16 %v1046
        %v2620 = vunpack.c.h.bf16 %v1046
        %v2621 = vunpack.c.l.bf16 %v1047
        %v2622 = vunpack.c.h.bf16 %v1047
        %v2623 = vunpack.c.l.bf16 %v1048
        %v2624 = vunpack.c.h.bf16 %v1048
        %v2625 = vunpack.c.l.bf16 %v1049
        %v2626 = vunpack.c.h.bf16 %v1049
        %v2627 = vunpack.c.l.bf16 %v1050
        %v2628 = vunpack.c.h.bf16 %v1050
        %v2629 = vunpack.c.l.bf16 %v1051
        %v2630 = vunpack.c.h.bf16 %v1051
        %v2631 = vunpack.c.l.bf16 %v1052
        %v2632 = vunpack.c.h.bf16 %v1052
        %v2633 = vunpack.c.l.bf16 %v1053
        %v2634 = vunpack.c.h.bf16 %v1053
        %v2635 = vunpack.c.l.bf16 %v1054
        %v2636 = vunpack.c.h.bf16 %v1054
        %v2637 = vunpack.c.l.bf16 %v1055
        %v2638 = vunpack.c.h.bf16 %v1055
        %v2639 = vunpack.c.l.bf16 %v1056
        %v2640 = vunpack.c.h.bf16 %v1056
        %v2641 = vunpack.c.l.bf16 %v1057
        %v2642 = vunpack.c.h.bf16 %v1057
        %v2643 = vunpack.c.l.bf16 %v1058
        %v2644 = vunpack.c.h.bf16 %v1058
        %v2645 = vunpack.c.l.bf16 %v1059
        %v2646 = vunpack.c.h.bf16 %v1059
        %v2647 = vunpack.c.l.bf16 %v1060
        %v2648 = vunpack.c.h.bf16 %v1060
        %v2649 = vunpack.c.l.bf16 %v1061
        %v2650 = vunpack.c.h.bf16 %v1061
        %v2651 = vunpack.c.l.bf16 %v1062
        %v2652 = vunpack.c.h.bf16 %v1062
        %v2653 = vunpack.c.l.bf16 %v1063
        %v2654 = vunpack.c.h.bf16 %v1063
        %v2655 = vunpack.c.l.bf16 %v1064
        %v2656 = vunpack.c.h.bf16 %v1064
        %v2657 = vunpack.c.l.bf16 %v1065
        %v2658 = vunpack.c.h.bf16 %v1065
        %v2659 = vunpack.c.l.bf16 %v1066
        %v2660 = vunpack.c.h.bf16 %v1066
        %v2661 = vunpack.c.l.bf16 %v1067
        %v2662 = vunpack.c.h.bf16 %v1067
        %v2663 = vunpack.c.l.bf16 %v1068
        %v2664 = vunpack.c.h.bf16 %v1068
        %v2665 = vunpack.c.l.bf16 %v1069
        %v2666 = vunpack.c.h.bf16 %v1069
        %v2667 = vunpack.c.l.bf16 %v1070
        %v2668 = vunpack.c.h.bf16 %v1070
        %v2669 = vunpack.c.l.bf16 %v1071
        %v2670 = vunpack.c.h.bf16 %v1071
        %v2671 = vunpack.c.l.bf16 %v1072
        %v2672 = vunpack.c.h.bf16 %v1072
        %v2673 = vunpack.c.l.bf16 %v1073
        %v2674 = vunpack.c.h.bf16 %v1073
        %v2675 = vunpack.c.l.bf16 %v1074
        %v2676 = vunpack.c.h.bf16 %v1074
        %v2677 = vunpack.c.l.bf16 %v1075
        %v2678 = vunpack.c.h.bf16 %v1075
        %v2679 = vunpack.c.l.bf16 %v1076
        %v2680 = vunpack.c.h.bf16 %v1076
        %v2681 = vunpack.c.l.bf16 %v1077
        %v2682 = vunpack.c.h.bf16 %v1077
        %v2683 = vunpack.c.l.bf16 %v1078
        %v2684 = vunpack.c.h.bf16 %v1078
        %v2685 = vunpack.c.l.bf16 %v1079
        %v2686 = vunpack.c.h.bf16 %v1079
        %v2687 = vunpack.c.l.bf16 %v1080
        %v2688 = vunpack.c.h.bf16 %v1080
        %v2689 = vunpack.c.l.bf16 %v1081
        %v2690 = vunpack.c.h.bf16 %v1081
        %v2691 = vunpack.c.l.bf16 %v1082
        %v2692 = vunpack.c.h.bf16 %v1082
        %v2693 = vunpack.c.l.bf16 %v1083
        %v2694 = vunpack.c.h.bf16 %v1083
        %v2695 = vunpack.c.l.bf16 %v1084
        %v2696 = vunpack.c.h.bf16 %v1084
        %v2697 = vunpack.c.l.bf16 %v1085
        %v2698 = vunpack.c.h.bf16 %v1085
        %v2699 = vunpack.c.l.bf16 %v1086
        %v2700 = vunpack.c.h.bf16 %v1086
        %v2701 = vunpack.c.l.bf16 %v1087
        %v2702 = vunpack.c.h.bf16 %v1087
        %v2703 = vunpack.c.l.bf16 %v1088
        %v2704 = vunpack.c.h.bf16 %v1088
        %v2705 = vunpack.c.l.bf16 %v1089
        %v2706 = vunpack.c.h.bf16 %v1089
        %v2707 = vunpack.c.l.bf16 %v1090
        %v2708 = vunpack.c.h.bf16 %v1090
        %v2709 = vunpack.c.l.bf16 %v1091
        %v2710 = vunpack.c.h.bf16 %v1091
        %v2711 = vunpack.c.l.bf16 %v1092
        %v2712 = vunpack.c.h.bf16 %v1092
        %v2713 = vunpack.c.l.bf16 %v1093
        %v2714 = vunpack.c.h.bf16 %v1093
        %v2715 = vunpack.c.l.bf16 %v1094
        %v2716 = vunpack.c.h.bf16 %v1094
        %v2717 = vunpack.c.l.bf16 %v1095
        %v2718 = vunpack.c.h.bf16 %v1095
        %v2719 = vunpack.c.l.bf16 %v1096
        %v2720 = vunpack.c.h.bf16 %v1096
        %v2721 = vunpack.c.l.bf16 %v1097
        %v2722 = vunpack.c.h.bf16 %v1097
        %v2723 = vunpack.c.l.bf16 %v1098
        %v2724 = vunpack.c.h.bf16 %v1098
        %v2725 = vunpack.c.l.bf16 %v1099
        %v2726 = vunpack.c.h.bf16 %v1099
        %v2727 = vunpack.c.l.bf16 %v1100
        %v2728 = vunpack.c.h.bf16 %v1100
        %v2729 = vunpack.c.l.bf16 %v1101
        %v2730 = vunpack.c.h.bf16 %v1101
        %v2731 = vunpack.c.l.bf16 %v1102
        %v2732 = vunpack.c.h.bf16 %v1102
        %v2733 = vunpack.c.l.bf16 %v1103
        %v2734 = vunpack.c.h.bf16 %v1103
        %v2735 = vunpack.c.l.bf16 %v1104
        %v2736 = vunpack.c.h.bf16 %v1104
        %v2737 = vunpack.c.l.bf16 %v1105
        %v2738 = vunpack.c.h.bf16 %v1105
        %v2739 = vunpack.c.l.bf16 %v1106
        %v2740 = vunpack.c.h.bf16 %v1106
        %v2741 = vunpack.c.l.bf16 %v1107
        %v2742 = vunpack.c.h.bf16 %v1107
        %v2743 = vunpack.c.l.bf16 %v1108
        %v2744 = vunpack.c.h.bf16 %v1108
        %v2745 = vunpack.c.l.bf16 %v1109
        %v2746 = vunpack.c.h.bf16 %v1109
        %v2747 = vunpack.c.l.bf16 %v1110
        %v2748 = vunpack.c.h.bf16 %v1110
        %v2749 = vunpack.c.l.bf16 %v1111
        %v2750 = vunpack.c.h.bf16 %v1111
        %v2751 = vunpack.c.l.bf16 %v1112
        %v2752 = vunpack.c.h.bf16 %v1112
        %v2753 = vunpack.c.l.bf16 %v1113
        %v2754 = vunpack.c.h.bf16 %v1113
        %v2755 = vunpack.c.l.bf16 %v1114
        %v2756 = vunpack.c.h.bf16 %v1114
        %v2757 = vunpack.c.l.bf16 %v1115
        %v2758 = vunpack.c.h.bf16 %v1115
        %v2759 = vunpack.c.l.bf16 %v1116
        %v2760 = vunpack.c.h.bf16 %v1116
        %v2761 = vunpack.c.l.bf16 %v1117
        %v2762 = vunpack.c.h.bf16 %v1117
        %v2763 = vunpack.c.l.bf16 %v1118
        %v2764 = vunpack.c.h.bf16 %v1118
        %v2765 = vunpack.c.l.bf16 %v1119
        %v2766 = vunpack.c.h.bf16 %v1119
        %v2767 = vunpack.c.l.bf16 %v1120
        %v2768 = vunpack.c.h.bf16 %v1120
        %v2769 = vunpack.c.l.bf16 %v1121
        %v2770 = vunpack.c.h.bf16 %v1121
        %v2771 = vunpack.c.l.bf16 %v1122
        %v2772 = vunpack.c.h.bf16 %v1122
        %v2773 = vunpack.c.l.bf16 %v1123
        %v2774 = vunpack.c.h.bf16 %v1123
        %v2775 = vunpack.c.l.bf16 %v1124
        %v2776 = vunpack.c.h.bf16 %v1124
        %v2777 = vunpack.c.l.bf16 %v1125
        %v2778 = vunpack.c.h.bf16 %v1125
        %v2779 = vunpack.c.l.bf16 %v1126
        %v2780 = vunpack.c.h.bf16 %v1126
        %v2781 = vunpack.c.l.bf16 %v1127
        %v2782 = vunpack.c.h.bf16 %v1127
        %v2783 = vunpack.c.l.bf16 %v1128
        %v2784 = vunpack.c.h.bf16 %v1128
        %v2785 = vunpack.c.l.bf16 %v1129
        %v2786 = vunpack.c.h.bf16 %v1129
        %v2787 = vunpack.c.l.bf16 %v1130
        %v2788 = vunpack.c.h.bf16 %v1130
        %v2789 = vunpack.c.l.bf16 %v1131
        %v2790 = vunpack.c.h.bf16 %v1131
        %v2791 = vunpack.c.l.bf16 %v1132
        %v2792 = vunpack.c.h.bf16 %v1132
        %v2793 = vunpack.c.l.bf16 %v1133
        %v2794 = vunpack.c.h.bf16 %v1133
        %v2795 = vunpack.c.l.bf16 %v1134
        %v2796 = vunpack.c.h.bf16 %v1134
        %v2797 = vunpack.c.l.bf16 %v1135
        %v2798 = vunpack.c.h.bf16 %v1135
        %v2799 = vunpack.c.l.bf16 %v1136
        %v2800 = vunpack.c.h.bf16 %v1136
        %v2801 = vunpack.c.l.bf16 %v1137
        %v2802 = vunpack.c.h.bf16 %v1137
        %v2803 = vunpack.c.l.bf16 %v1138
        %v2804 = vunpack.c.h.bf16 %v1138
        %v2805 = vunpack.c.l.bf16 %v1139
        %v2806 = vunpack.c.h.bf16 %v1139
        %v2807 = vunpack.c.l.bf16 %v1140
        %v2808 = vunpack.c.h.bf16 %v1140
        %v2809 = vunpack.c.l.bf16 %v1141
        %v2810 = vunpack.c.h.bf16 %v1141
        %v2811 = vunpack.c.l.bf16 %v1142
        %v2812 = vunpack.c.h.bf16 %v1142
        %v2813 = vunpack.c.l.bf16 %v1143
        %v2814 = vunpack.c.h.bf16 %v1143
        %v2815 = vunpack.c.l.bf16 %v1144
        %v2816 = vunpack.c.h.bf16 %v1144
        %v2817 = vunpack.c.l.bf16 %v1145
        %v2818 = vunpack.c.h.bf16 %v1145
        %v2819 = vunpack.c.l.bf16 %v1146
        %v2820 = vunpack.c.h.bf16 %v1146
        %v2821 = vunpack.c.l.bf16 %v1147
        %v2822 = vunpack.c.h.bf16 %v1147
        %v2823 = vunpack.c.l.bf16 %v1148
        %v2824 = vunpack.c.h.bf16 %v1148
        %v2825 = vunpack.c.l.bf16 %v1149
        %v2826 = vunpack.c.h.bf16 %v1149
        %v2827 = vunpack.c.l.bf16 %v1150
        %v2828 = vunpack.c.h.bf16 %v1150
        %v2829 = vunpack.c.l.bf16 %v1151
        %v2830 = vunpack.c.h.bf16 %v1151
        %v2831 = vunpack.c.l.bf16 %v1152
        %v2832 = vunpack.c.h.bf16 %v1152
        %v2833 = vunpack.c.l.bf16 %v1153
        %v2834 = vunpack.c.h.bf16 %v1153
        %v2835 = vunpack.c.l.bf16 %v1154
        %v2836 = vunpack.c.h.bf16 %v1154
        %v2837 = vunpack.c.l.bf16 %v1155
        %v2838 = vunpack.c.h.bf16 %v1155
        %v2839 = vunpack.c.l.bf16 %v1156
        %v2840 = vunpack.c.h.bf16 %v1156
        %v2841 = vunpack.c.l.bf16 %v1157
        %v2842 = vunpack.c.h.bf16 %v1157
        %v2843 = vunpack.c.l.bf16 %v1158
        %v2844 = vunpack.c.h.bf16 %v1158
        %v2845 = vunpack.c.l.bf16 %v1159
        %v2846 = vunpack.c.h.bf16 %v1159
        %v2847 = vunpack.c.l.bf16 %v1160
        %v2848 = vunpack.c.h.bf16 %v1160
        %v2849 = vunpack.c.l.bf16 %v1161
        %v2850 = vunpack.c.h.bf16 %v1161
        %v2851 = vunpack.c.l.bf16 %v1162
        %v2852 = vunpack.c.h.bf16 %v1162
        %v2853 = vunpack.c.l.bf16 %v1163
        %v2854 = vunpack.c.h.bf16 %v1163
        %v2855 = vunpack.c.l.bf16 %v1164
        %v2856 = vunpack.c.h.bf16 %v1164
        %v2857 = vunpack.c.l.bf16 %v1165
        %v2858 = vunpack.c.h.bf16 %v1165
        %v2859 = vunpack.c.l.bf16 %v1166
        %v2860 = vunpack.c.h.bf16 %v1166
        %v2861 = vunpack.c.l.bf16 %v1167
        %v2862 = vunpack.c.h.bf16 %v1167
        %v2863 = vunpack.c.l.bf16 %v1168
        %v2864 = vunpack.c.h.bf16 %v1168
        %v2865 = vunpack.c.l.bf16 %v1169
        %v2866 = vunpack.c.h.bf16 %v1169
        %v2867 = vunpack.c.l.bf16 %v1170
        %v2868 = vunpack.c.h.bf16 %v1170
        %v2869 = vunpack.c.l.bf16 %v1171
        %v2870 = vunpack.c.h.bf16 %v1171
        %v2871 = vunpack.c.l.bf16 %v1172
        %v2872 = vunpack.c.h.bf16 %v1172
        %v2873 = vunpack.c.l.bf16 %v1173
        %v2874 = vunpack.c.h.bf16 %v1173
        %v2875 = vunpack.c.l.bf16 %v1174
        %v2876 = vunpack.c.h.bf16 %v1174
        %v2877 = vunpack.c.l.bf16 %v1175
        %v2878 = vunpack.c.h.bf16 %v1175
        %v2879 = vunpack.c.l.bf16 %v1176
        %v2880 = vunpack.c.h.bf16 %v1176
        %v2881 = vunpack.c.l.bf16 %v1177
        %v2882 = vunpack.c.h.bf16 %v1177
        %v2883 = vunpack.c.l.bf16 %v1178
        %v2884 = vunpack.c.h.bf16 %v1178
        %v2885 = vunpack.c.l.bf16 %v1179
        %v2886 = vunpack.c.h.bf16 %v1179
        %v2887 = vunpack.c.l.bf16 %v1180
        %v2888 = vunpack.c.h.bf16 %v1180
        %v2889 = vunpack.c.l.bf16 %v1181
        %v2890 = vunpack.c.h.bf16 %v1181
        %v2891 = vunpack.c.l.bf16 %v1182
        %v2892 = vunpack.c.h.bf16 %v1182
        %v2893 = vunpack.c.l.bf16 %v1183
        %v2894 = vunpack.c.h.bf16 %v1183
        %v2895 = vunpack.c.l.bf16 %v1184
        %v2896 = vunpack.c.h.bf16 %v1184
        %v2897 = vunpack.c.l.bf16 %v1185
        %v2898 = vunpack.c.h.bf16 %v1185
        %v2899 = vunpack.c.l.bf16 %v1186
        %v2900 = vunpack.c.h.bf16 %v1186
        %v2901 = vunpack.c.l.bf16 %v1187
        %v2902 = vunpack.c.h.bf16 %v1187
        %v2903 = vunpack.c.l.bf16 %v1188
        %v2904 = vunpack.c.h.bf16 %v1188
        %v2905 = vunpack.c.l.bf16 %v1189
        %v2906 = vunpack.c.h.bf16 %v1189
        %v2907 = vunpack.c.l.bf16 %v1190
        %v2908 = vunpack.c.h.bf16 %v1190
        %v2909 = vunpack.c.l.bf16 %v1191
        %v2910 = vunpack.c.h.bf16 %v1191
        %v2911 = vunpack.c.l.bf16 %v1192
        %v2912 = vunpack.c.h.bf16 %v1192
        %v2913 = vunpack.c.l.bf16 %v1193
        %v2914 = vunpack.c.h.bf16 %v1193
        %v2915 = vunpack.c.l.bf16 %v1194
        %v2916 = vunpack.c.h.bf16 %v1194
        %v2917 = vunpack.c.l.bf16 %v1195
        %v2918 = vunpack.c.h.bf16 %v1195
        %v2919 = vunpack.c.l.bf16 %v1196
        %v2920 = vunpack.c.h.bf16 %v1196
        %v2921 = vunpack.c.l.bf16 %v1197
        %v2922 = vunpack.c.h.bf16 %v1197
        %v2923 = vunpack.c.l.bf16 %v1198
        %v2924 = vunpack.c.h.bf16 %v1198
        %v2925 = vunpack.c.l.bf16 %v1199
        %v2926 = vunpack.c.h.bf16 %v1199
        %v2927 = vunpack.c.l.bf16 %v1200
        %v2928 = vunpack.c.h.bf16 %v1200
        %v2929 = vunpack.c.l.bf16 %v1201
        %v2930 = vunpack.c.h.bf16 %v1201
        %v2931 = vunpack.c.l.bf16 %v1202
        %v2932 = vunpack.c.h.bf16 %v1202
        %v2933 = vunpack.c.l.bf16 %v1203
        %v2934 = vunpack.c.h.bf16 %v1203
        %v2935 = vunpack.c.l.bf16 %v1204
        %v2936 = vunpack.c.h.bf16 %v1204
        %v2937 = vunpack.c.l.bf16 %v1205
        %v2938 = vunpack.c.h.bf16 %v1205
        %v2939 = vunpack.c.l.bf16 %v1206
        %v2940 = vunpack.c.h.bf16 %v1206
        %v2941 = vunpack.c.l.bf16 %v1207
        %v2942 = vunpack.c.h.bf16 %v1207
        %v2943 = vunpack.c.l.bf16 %v1208
        %v2944 = vunpack.c.h.bf16 %v1208
        %v2945 = vunpack.c.l.bf16 %v1209
        %v2946 = vunpack.c.h.bf16 %v1209
        %v2947 = vunpack.c.l.bf16 %v1210
        %v2948 = vunpack.c.h.bf16 %v1210
        %v2949 = vunpack.c.l.bf16 %v1211
        %v2950 = vunpack.c.h.bf16 %v1211
        %v2951 = vunpack.c.l.bf16 %v1212
        %v2952 = vunpack.c.h.bf16 %v1212
        %v2953 = vunpack.c.l.bf16 %v1213
        %v2954 = vunpack.c.h.bf16 %v1213
        %v2955 = vunpack.c.l.bf16 %v1214
        %v2956 = vunpack.c.h.bf16 %v1214
        %v2957 = vunpack.c.l.bf16 %v1215
        %v2958 = vunpack.c.h.bf16 %v1215
        %v2959 = vunpack.c.l.bf16 %v1216
        %v2960 = vunpack.c.h.bf16 %v1216
        %v2961 = vunpack.c.l.bf16 %v1217
        %v2962 = vunpack.c.h.bf16 %v1217
        %v2963 = vunpack.c.l.bf16 %v1218
        %v2964 = vunpack.c.h.bf16 %v1218
        %v2965 = vunpack.c.l.bf16 %v1219
        %v2966 = vunpack.c.h.bf16 %v1219
        %v2967 = vunpack.c.l.bf16 %v1220
        %v2968 = vunpack.c.h.bf16 %v1220
        %v2969 = vunpack.c.l.bf16 %v1221
        %v2970 = vunpack.c.h.bf16 %v1221
        %v2971 = vunpack.c.l.bf16 %v1222
        %v2972 = vunpack.c.h.bf16 %v1222
        %v2973 = vunpack.c.l.bf16 %v1223
        %v2974 = vunpack.c.h.bf16 %v1223
        %v2975 = vunpack.c.l.bf16 %v1224
        %v2976 = vunpack.c.h.bf16 %v1224
        %v2977 = vunpack.c.l.bf16 %v1225
        %v2978 = vunpack.c.h.bf16 %v1225
        %v2979 = vunpack.c.l.bf16 %v1226
        %v2980 = vunpack.c.h.bf16 %v1226
        %v2981 = vunpack.c.l.bf16 %v1227
        %v2982 = vunpack.c.h.bf16 %v1227
        %v2983 = vunpack.c.l.bf16 %v1228
        %v2984 = vunpack.c.h.bf16 %v1228
        %v2985 = vunpack.c.l.bf16 %v1229
        %v2986 = vunpack.c.h.bf16 %v1229
        %v2987 = vunpack.c.l.bf16 %v1230
        %v2988 = vunpack.c.h.bf16 %v1230
        %v2989 = vunpack.c.l.bf16 %v1231
        %v2990 = vunpack.c.h.bf16 %v1231
        %v2991 = vunpack.c.l.bf16 %v1232
        %v2992 = vunpack.c.h.bf16 %v1232
        %v2993 = vunpack.c.l.bf16 %v1233
        %v2994 = vunpack.c.h.bf16 %v1233
        %v2995 = vunpack.c.l.bf16 %v1234
        %v2996 = vunpack.c.h.bf16 %v1234
        %v2997 = vunpack.c.l.bf16 %v1235
        %v2998 = vunpack.c.h.bf16 %v1235
        %v2999 = vunpack.c.l.bf16 %v1236
        %v3000 = vunpack.c.h.bf16 %v1236
        %v3001 = vunpack.c.l.bf16 %v1237
        %v3002 = vunpack.c.h.bf16 %v1237
        %v3003 = vunpack.c.l.bf16 %v1238
        %v3004 = vunpack.c.h.bf16 %v1238
        %v3005 = vunpack.c.l.bf16 %v1239
        %v3006 = vunpack.c.h.bf16 %v1239
        %v3007 = vunpack.c.l.bf16 %v1240
        %v3008 = vunpack.c.h.bf16 %v1240
        %v3009 = vunpack.c.l.bf16 %v1241
        %v3010 = vunpack.c.h.bf16 %v1241
        %v3011 = vunpack.c.l.bf16 %v1242
        %v3012 = vunpack.c.h.bf16 %v1242
        %v3013 = vunpack.c.l.bf16 %v1243
        %v3014 = vunpack.c.h.bf16 %v1243
        %v3015 = vunpack.c.l.bf16 %v1244
        %v3016 = vunpack.c.h.bf16 %v1244
        %v3017 = vunpack.c.l.bf16 %v1245
        %v3018 = vunpack.c.h.bf16 %v1245
        %v3019 = vunpack.c.l.bf16 %v1246
        %v3020 = vunpack.c.h.bf16 %v1246
        %v3021 = vunpack.c.l.bf16 %v1247
        %v3022 = vunpack.c.h.bf16 %v1247
        %v3023 = vunpack.c.l.bf16 %v1248
        %v3024 = vunpack.c.h.bf16 %v1248
        %v3025 = vunpack.c.l.bf16 %v1249
        %v3026 = vunpack.c.h.bf16 %v1249
        %v3027 = vunpack.c.l.bf16 %v1250
        %v3028 = vunpack.c.h.bf16 %v1250
        %v3029 = vunpack.c.l.bf16 %v1251
        %v3030 = vunpack.c.h.bf16 %v1251
        %v3031 = vunpack.c.l.bf16 %v1252
        %v3032 = vunpack.c.h.bf16 %v1252
        %v3033 = vunpack.c.l.bf16 %v1253
        %v3034 = vunpack.c.h.bf16 %v1253
        %v3035 = vunpack.c.l.bf16 %v1254
        %v3036 = vunpack.c.h.bf16 %v1254
        %v3037 = vunpack.c.l.bf16 %v1255
        %v3038 = vunpack.c.h.bf16 %v1255
        %v3039 = vunpack.c.l.bf16 %v1256
        %v3040 = vunpack.c.h.bf16 %v1256
        %v3041 = vunpack.c.l.bf16 %v1257
        %v3042 = vunpack.c.h.bf16 %v1257
        %v3043 = vunpack.c.l.bf16 %v1258
        %v3044 = vunpack.c.h.bf16 %v1258
        %v3045 = vunpack.c.l.bf16 %v1259
        %v3046 = vunpack.c.h.bf16 %v1259
        %v3047 = vunpack.c.l.bf16 %v1260
        %v3048 = vunpack.c.h.bf16 %v1260
        %v3049 = vunpack.c.l.bf16 %v1261
        %v3050 = vunpack.c.h.bf16 %v1261
        %v3051 = vunpack.c.l.bf16 %v1262
        %v3052 = vunpack.c.h.bf16 %v1262
        %v3053 = vunpack.c.l.bf16 %v1263
        %v3054 = vunpack.c.h.bf16 %v1263
        %v3055 = vunpack.c.l.bf16 %v1264
        %v3056 = vunpack.c.h.bf16 %v1264
        %v3057 = vunpack.c.l.bf16 %v1265
        %v3058 = vunpack.c.h.bf16 %v1265
        %v3059 = vunpack.c.l.bf16 %v1266
        %v3060 = vunpack.c.h.bf16 %v1266
        %v3061 = vunpack.c.l.bf16 %v1267
        %v3062 = vunpack.c.h.bf16 %v1267
        %v3063 = vunpack.c.l.bf16 %v1268
        %v3064 = vunpack.c.h.bf16 %v1268
        %v3065 = vunpack.c.l.bf16 %v1269
        %v3066 = vunpack.c.h.bf16 %v1269
        %v3067 = vunpack.c.l.bf16 %v1270
        %v3068 = vunpack.c.h.bf16 %v1270
        %v3069 = vunpack.c.l.bf16 %v1271
        %v3070 = vunpack.c.h.bf16 %v1271
        %v3071 = vunpack.c.l.bf16 %v1272
        %v3072 = vunpack.c.h.bf16 %v1272
        %v3073 = vunpack.c.l.bf16 %v1273
        %v3074 = vunpack.c.h.bf16 %v1273
        %v3075 = vunpack.c.l.bf16 %v1274
        %v3076 = vunpack.c.h.bf16 %v1274
        %v3077 = vunpack.c.l.bf16 %v1275
        %v3078 = vunpack.c.h.bf16 %v1275
        %v3079 = vunpack.c.l.bf16 %v1276
        %v3080 = vunpack.c.h.bf16 %v1276
        %v3081 = vunpack.c.l.bf16 %v1277
        %v3082 = vunpack.c.h.bf16 %v1277
        %v3083 = vunpack.c.l.bf16 %v1278
        %v3084 = vunpack.c.h.bf16 %v1278
        %v3085 = vunpack.c.l.bf16 %v1279
        %v3086 = vunpack.c.h.bf16 %v1279
        %v3087 = vunpack.c.l.bf16 %v1280
        %v3088 = vunpack.c.h.bf16 %v1280
        %v3089 = vunpack.c.l.bf16 %v1281
        %v3090 = vunpack.c.h.bf16 %v1281
        %v3091 = vunpack.c.l.bf16 %v1282
        %v3092 = vunpack.c.h.bf16 %v1282
        %v3093 = vunpack.c.l.bf16 %v1283
        %v3094 = vunpack.c.h.bf16 %v1283
        %v3095 = vunpack.c.l.bf16 %v1284
        %v3096 = vunpack.c.h.bf16 %v1284
        %v3097 = vunpack.c.l.bf16 %v1285
        %v3098 = vunpack.c.h.bf16 %v1285
        %v3099 = vunpack.c.l.bf16 %v1286
        %v3100 = vunpack.c.h.bf16 %v1286
        %v3101 = vunpack.c.l.bf16 %v1287
        %v3102 = vunpack.c.h.bf16 %v1287
        %v3103 = vunpack.c.l.bf16 %v1288
        %v3104 = vunpack.c.h.bf16 %v1288
        %v3105 = vunpack.c.l.bf16 %v1289
        %v3106 = vunpack.c.h.bf16 %v1289
        %v3107 = vunpack.c.l.bf16 %v1290
        %v3108 = vunpack.c.h.bf16 %v1290
        %v3109 = vunpack.c.l.bf16 %v1291
        %v3110 = vunpack.c.h.bf16 %v1291
        %v3111 = vunpack.c.l.bf16 %v1292
        %v3112 = vunpack.c.h.bf16 %v1292
        %v3113 = vunpack.c.l.bf16 %v1293
        %v3114 = vunpack.c.h.bf16 %v1293
        %v3115 = vunpack.c.l.bf16 %v1294
        %v3116 = vunpack.c.h.bf16 %v1294
        %v3117 = vunpack.c.l.bf16 %v1295
        %v3118 = vunpack.c.h.bf16 %v1295
        %v3119 = vunpack.c.l.bf16 %v1296
        %v3120 = vunpack.c.h.bf16 %v1296
        %v3121 = vunpack.c.l.bf16 %v1297
        %v3122 = vunpack.c.h.bf16 %v1297
        %v3123 = vunpack.c.l.bf16 %v1298
        %v3124 = vunpack.c.h.bf16 %v1298
        %v3125 = vunpack.c.l.bf16 %v1299
        %v3126 = vunpack.c.h.bf16 %v1299
        %v3127 = vunpack.c.l.bf16 %v1300
        %v3128 = vunpack.c.h.bf16 %v1300
        %v3129 = vunpack.c.l.bf16 %v1301
        %v3130 = vunpack.c.h.bf16 %v1301
        %v3131 = vunpack.c.l.bf16 %v1302
        %v3132 = vunpack.c.h.bf16 %v1302
        %v3133 = vunpack.c.l.bf16 %v1303
        %v3134 = vunpack.c.h.bf16 %v1303
        %v3135 = vunpack.c.l.bf16 %v1304
        %v3136 = vunpack.c.h.bf16 %v1304
        %v3137 = vunpack.c.l.bf16 %v1305
        %v3138 = vunpack.c.h.bf16 %v1305
        %v3139 = vunpack.c.l.bf16 %v1306
        %v3140 = vunpack.c.h.bf16 %v1306
        %v3141 = vunpack.c.l.bf16 %v1307
        %v3142 = vunpack.c.h.bf16 %v1307
        %v3143 = vunpack.c.l.bf16 %v1308
        %v3144 = vunpack.c.h.bf16 %v1308
        %v3145 = vunpack.c.l.bf16 %v1309
        %v3146 = vunpack.c.h.bf16 %v1309
        %v3147 = vunpack.c.l.bf16 %v1310
        %v3148 = vunpack.c.h.bf16 %v1310
        %v3149 = vunpack.c.l.bf16 %v1311
        %v3150 = vunpack.c.h.bf16 %v1311
        %v3151 = vunpack.c.l.bf16 %v1312
        %v3152 = vunpack.c.h.bf16 %v1312
        %v3153 = vunpack.c.l.bf16 %v1313
        %v3154 = vunpack.c.h.bf16 %v1313
        %v3155 = vunpack.c.l.bf16 %v1314
        %v3156 = vunpack.c.h.bf16 %v1314
        %v3157 = vunpack.c.l.bf16 %v1315
        %v3158 = vunpack.c.h.bf16 %v1315
        %v3159 = vunpack.c.l.bf16 %v1316
        %v3160 = vunpack.c.h.bf16 %v1316
        %v3161 = vunpack.c.l.bf16 %v1317
        %v3162 = vunpack.c.h.bf16 %v1317
        %v3163 = vunpack.c.l.bf16 %v1318
        %v3164 = vunpack.c.h.bf16 %v1318
        %v3165 = vunpack.c.l.bf16 %v1319
        %v3166 = vunpack.c.h.bf16 %v1319
        %v3167 = vunpack.c.l.bf16 %v1320
        %v3168 = vunpack.c.h.bf16 %v1320
        %v3169 = vunpack.c.l.bf16 %v1321
        %v3170 = vunpack.c.h.bf16 %v1321
        %v3171 = vunpack.c.l.bf16 %v1322
        %v3172 = vunpack.c.h.bf16 %v1322
        %v3173 = vunpack.c.l.bf16 %v1323
        %v3174 = vunpack.c.h.bf16 %v1323
        %v3175 = vunpack.c.l.bf16 %v1324
        %v3176 = vunpack.c.h.bf16 %v1324
        %v3177 = vunpack.c.l.bf16 %v1325
        %v3178 = vunpack.c.h.bf16 %v1325
        %v3179 = vunpack.c.l.bf16 %v1326
        %v3180 = vunpack.c.h.bf16 %v1326
        %v3181 = vunpack.c.l.bf16 %v1327
        %v3182 = vunpack.c.h.bf16 %v1327
        %v3183 = vunpack.c.l.bf16 %v1328
        %v3184 = vunpack.c.h.bf16 %v1328
        %v3185 = vunpack.c.l.bf16 %v1329
        %v3186 = vunpack.c.h.bf16 %v1329
        %v3187 = vunpack.c.l.bf16 %v1330
        %v3188 = vunpack.c.h.bf16 %v1330
        %v3189 = vunpack.c.l.bf16 %v1331
        %v3190 = vunpack.c.h.bf16 %v1331
        %v3191 = vunpack.c.l.bf16 %v1332
        %v3192 = vunpack.c.h.bf16 %v1332
        %v3193 = vunpack.c.l.bf16 %v1333
        %v3194 = vunpack.c.h.bf16 %v1333
        %v3195 = vunpack.c.l.bf16 %v1334
        %v3196 = vunpack.c.h.bf16 %v1334
        %v3197 = vunpack.c.l.bf16 %v1335
        %v3198 = vunpack.c.h.bf16 %v1335
        %v3199 = vunpack.c.l.bf16 %v1336
        %v3200 = vunpack.c.h.bf16 %v1336
        %v3201 = vunpack.c.l.bf16 %v1337
        %v3202 = vunpack.c.h.bf16 %v1337
        %v3203 = vunpack.c.l.bf16 %v1338
        %v3204 = vunpack.c.h.bf16 %v1338
        %v3205 = vunpack.c.l.bf16 %v1339
        %v3206 = vunpack.c.h.bf16 %v1339
        %v3207 = vunpack.c.l.bf16 %v1340
        %v3208 = vunpack.c.h.bf16 %v1340
        %v3209 = vunpack.c.l.bf16 %v1341
        %v3210 = vunpack.c.h.bf16 %v1341
        %v3211 = vunpack.c.l.bf16 %v1342
        %v3212 = vunpack.c.h.bf16 %v1342
        %v3213 = vunpack.c.l.bf16 %v1343
        %v3214 = vunpack.c.h.bf16 %v1343
        %v3215 = vunpack.c.l.bf16 %v1344
        %v3216 = vunpack.c.h.bf16 %v1344
        %v3217 = vunpack.c.l.bf16 %v1345
        %v3218 = vunpack.c.h.bf16 %v1345
        %v3219 = vunpack.c.l.bf16 %v1346
        %v3220 = vunpack.c.h.bf16 %v1346
        %v3221 = vunpack.c.l.bf16 %v1347
        %v3222 = vunpack.c.h.bf16 %v1347
        %v3223 = vunpack.c.l.bf16 %v1348
        %v3224 = vunpack.c.h.bf16 %v1348
        %v3225 = vunpack.c.l.bf16 %v1349
        %v3226 = vunpack.c.h.bf16 %v1349
        %v3227 = vunpack.c.l.bf16 %v1350
        %v3228 = vunpack.c.h.bf16 %v1350
        %v3229 = vunpack.c.l.bf16 %v1351
        %v3230 = vunpack.c.h.bf16 %v1351
        %v3231 = vunpack.c.l.bf16 %v1352
        %v3232 = vunpack.c.h.bf16 %v1352
        %v3233 = vunpack.c.l.bf16 %v1353
        %v3234 = vunpack.c.h.bf16 %v1353
        %v3235 = vunpack.c.l.bf16 %v1354
        %v3236 = vunpack.c.h.bf16 %v1354
        %v3237 = vunpack.c.l.bf16 %v1355
        %v3238 = vunpack.c.h.bf16 %v1355
        %v3239 = vunpack.c.l.bf16 %v1356
        %v3240 = vunpack.c.h.bf16 %v1356
        %v3241 = vunpack.c.l.bf16 %v1357
        %v3242 = vunpack.c.h.bf16 %v1357
        %v3243 = vunpack.c.l.bf16 %v1358
        %v3244 = vunpack.c.h.bf16 %v1358
        %v3245 = vunpack.c.l.bf16 %v1359
        %v3246 = vunpack.c.h.bf16 %v1359
        %v3247 = vunpack.c.l.bf16 %v1360
        %v3248 = vunpack.c.h.bf16 %v1360
        %v3249 = vunpack.c.l.bf16 %v1361
        %v3250 = vunpack.c.h.bf16 %v1361
        %v3251 = vunpack.c.l.bf16 %v1362
        %v3252 = vunpack.c.h.bf16 %v1362
        %v3253 = vunpack.c.l.bf16 %v1363
        %v3254 = vunpack.c.h.bf16 %v1363
        %v3255 = vunpack.c.l.bf16 %v1364
        %v3256 = vunpack.c.h.bf16 %v1364
        %v3257 = vunpack.c.l.bf16 %v1365
        %v3258 = vunpack.c.h.bf16 %v1365
        %v3259 = vunpack.c.l.bf16 %v1366
        %v3260 = vunpack.c.h.bf16 %v1366
        %v3261 = vunpack.c.l.bf16 %v1367
        %v3262 = vunpack.c.h.bf16 %v1367
        %v3263 = vunpack.c.l.bf16 %v1368
        %v3264 = vunpack.c.h.bf16 %v1368
        %v3265 = vunpack.c.l.bf16 %v1369
        %v3266 = vunpack.c.h.bf16 %v1369
        %v3267 = vunpack.c.l.bf16 %v1370
        %v3268 = vunpack.c.h.bf16 %v1370
        %v3269 = vunpack.c.l.bf16 %v1371
        %v3270 = vunpack.c.h.bf16 %v1371
        %v3271 = vunpack.c.l.bf16 %v1372
        %v3272 = vunpack.c.h.bf16 %v1372
        %v3273 = vunpack.c.l.bf16 %v1373
        %v3274 = vunpack.c.h.bf16 %v1373
        %v3275 = vunpack.c.l.bf16 %v1374
        %v3276 = vunpack.c.h.bf16 %v1374
        %v3277 = vunpack.c.l.bf16 %v1375
        %v3278 = vunpack.c.h.bf16 %v1375
        %v3279 = vunpack.c.l.bf16 %v1376
        %v3280 = vunpack.c.h.bf16 %v1376
        %v3281 = vunpack.c.l.bf16 %v1377
        %v3282 = vunpack.c.h.bf16 %v1377
        %v3283 = vunpack.c.l.bf16 %v1378
        %v3284 = vunpack.c.h.bf16 %v1378
        %v3285 = vunpack.c.l.bf16 %v1379
        %v3286 = vunpack.c.h.bf16 %v1379
        %v3287 = vunpack.c.l.bf16 %v1380
        %v3288 = vunpack.c.h.bf16 %v1380
        %v3289 = vunpack.c.l.bf16 %v1381
        %v3290 = vunpack.c.h.bf16 %v1381
        %v3291 = vunpack.c.l.bf16 %v1382
        %v3292 = vunpack.c.h.bf16 %v1382
        %v3293 = vunpack.c.l.bf16 %v1383
        %v3294 = vunpack.c.h.bf16 %v1383
        %v3295 = vunpack.c.l.bf16 %v1384
        %v3296 = vunpack.c.h.bf16 %v1384
        %v3297 = vunpack.c.l.bf16 %v1385
        %v3298 = vunpack.c.h.bf16 %v1385
        %v3299 = vunpack.c.l.bf16 %v1386
        %v3300 = vunpack.c.h.bf16 %v1386
        %v3301 = vunpack.c.l.bf16 %v1387
        %v3302 = vunpack.c.h.bf16 %v1387
        %v3303 = vunpack.c.l.bf16 %v1388
        %v3304 = vunpack.c.h.bf16 %v1388
        %v3305 = vunpack.c.l.bf16 %v1389
        %v3306 = vunpack.c.h.bf16 %v1389
        %v3307 = vunpack.c.l.bf16 %v1390
        %v3308 = vunpack.c.h.bf16 %v1390
        %v3309 = vunpack.c.l.bf16 %v1391
        %v3310 = vunpack.c.h.bf16 %v1391
        %v3311 = vunpack.c.l.bf16 %v1392
        %v3312 = vunpack.c.h.bf16 %v1392
        %v3313 = vunpack.c.l.bf16 %v1393
        %v3314 = vunpack.c.h.bf16 %v1393
        %v3315 = vunpack.c.l.bf16 %v1394
        %v3316 = vunpack.c.h.bf16 %v1394
        %v3317 = vunpack.c.l.bf16 %v1395
        %v3318 = vunpack.c.h.bf16 %v1395
        %v3319 = vunpack.c.l.bf16 %v1396
        %v3320 = vunpack.c.h.bf16 %v1396
        %v3321 = vunpack.c.l.bf16 %v1397
        %v3322 = vunpack.c.h.bf16 %v1397
        %v3323 = vunpack.c.l.bf16 %v1398
        %v3324 = vunpack.c.h.bf16 %v1398
        %v3325 = vunpack.c.l.bf16 %v1399
        %v3326 = vunpack.c.h.bf16 %v1399
        %v3327 = vunpack.c.l.bf16 %v1400
        %v3328 = vunpack.c.h.bf16 %v1400
        %v3329 = vunpack.c.l.bf16 %v1401
        %v3330 = vunpack.c.h.bf16 %v1401
        %v3331 = vunpack.c.l.bf16 %v1402
        %v3332 = vunpack.c.h.bf16 %v1402
        %v3333 = vunpack.c.l.bf16 %v1403
        %v3334 = vunpack.c.h.bf16 %v1403
        %v3335 = vunpack.c.l.bf16 %v1404
        %v3336 = vunpack.c.h.bf16 %v1404
        %v3337 = vunpack.c.l.bf16 %v1405
        %v3338 = vunpack.c.h.bf16 %v1405
        %v3339 = vunpack.c.l.bf16 %v1406
        %v3340 = vunpack.c.h.bf16 %v1406
        %v3341 = vunpack.c.l.bf16 %v1407
        %v3342 = vunpack.c.h.bf16 %v1407
        %v3343 = vunpack.c.l.bf16 %v1408
        %v3344 = vunpack.c.h.bf16 %v1408
        %v3345 = vunpack.c.l.bf16 %v1409
        %v3346 = vunpack.c.h.bf16 %v1409
        %v3347 = vunpack.c.l.bf16 %v1410
        %v3348 = vunpack.c.h.bf16 %v1410
        %v3349 = vunpack.c.l.bf16 %v1411
        %v3350 = vunpack.c.h.bf16 %v1411
        %v3351 = vunpack.c.l.bf16 %v1412
        %v3352 = vunpack.c.h.bf16 %v1412
        %v3353 = vunpack.c.l.bf16 %v1413
        %v3354 = vunpack.c.h.bf16 %v1413
        %v3355 = vunpack.c.l.bf16 %v1414
        %v3356 = vunpack.c.h.bf16 %v1414
        %v3357 = vunpack.c.l.bf16 %v1415
        %v3358 = vunpack.c.h.bf16 %v1415
        %v3359 = vunpack.c.l.bf16 %v1416
        %v3360 = vunpack.c.h.bf16 %v1416
        %v3361 = vunpack.c.l.bf16 %v1417
        %v3362 = vunpack.c.h.bf16 %v1417
        %v3363 = vunpack.c.l.bf16 %v1418
        %v3364 = vunpack.c.h.bf16 %v1418
        %v3365 = vunpack.c.l.bf16 %v1419
        %v3366 = vunpack.c.h.bf16 %v1419
        %v3367 = vunpack.c.l.bf16 %v1420
        %v3368 = vunpack.c.h.bf16 %v1420
        %v3369 = vunpack.c.l.bf16 %v1421
        %v3370 = vunpack.c.h.bf16 %v1421
        %v3371 = vunpack.c.l.bf16 %v1422
        %v3372 = vunpack.c.h.bf16 %v1422
        %v3373 = vunpack.c.l.bf16 %v1423
        %v3374 = vunpack.c.h.bf16 %v1423
        %v3375 = vunpack.c.l.bf16 %v1424
        %v3376 = vunpack.c.h.bf16 %v1424
        %v3377 = vunpack.c.l.bf16 %v1425
        %v3378 = vunpack.c.h.bf16 %v1425
        %v3379 = vunpack.c.l.bf16 %v1426
        %v3380 = vunpack.c.h.bf16 %v1426
        %v3381 = vunpack.c.l.bf16 %v1427
        %v3382 = vunpack.c.h.bf16 %v1427
        %v3383 = vunpack.c.l.bf16 %v1428
        %v3384 = vunpack.c.h.bf16 %v1428
        %v3385 = vunpack.c.l.bf16 %v1429
        %v3386 = vunpack.c.h.bf16 %v1429
        %v3387 = vunpack.c.l.bf16 %v1430
        %v3388 = vunpack.c.h.bf16 %v1430
        %v3389 = vunpack.c.l.bf16 %v1431
        %v3390 = vunpack.c.h.bf16 %v1431
        %v3391 = vunpack.c.l.bf16 %v1432
        %v3392 = vunpack.c.h.bf16 %v1432
        %v3393 = vunpack.c.l.bf16 %v1433
        %v3394 = vunpack.c.h.bf16 %v1433
        %v3395 = vunpack.c.l.bf16 %v1434
        %v3396 = vunpack.c.h.bf16 %v1434
        %v3397 = vunpack.c.l.bf16 %v1435
        %v3398 = vunpack.c.h.bf16 %v1435
        %v3399 = vunpack.c.l.bf16 %v1436
        %v3400 = vunpack.c.h.bf16 %v1436
        %v3401 = vunpack.c.l.bf16 %v1437
        %v3402 = vunpack.c.h.bf16 %v1437
        %v3403 = vunpack.c.l.bf16 %v1438
        %v3404 = vunpack.c.h.bf16 %v1438
        %v3405 = vunpack.c.l.bf16 %v1439
        %v3406 = vunpack.c.h.bf16 %v1439
        %v3407 = vunpack.c.l.bf16 %v1440
        %v3408 = vunpack.c.h.bf16 %v1440
        %v3409 = vunpack.c.l.bf16 %v1441
        %v3410 = vunpack.c.h.bf16 %v1441
        %v3411 = vunpack.c.l.bf16 %v1442
        %v3412 = vunpack.c.h.bf16 %v1442
        %v3413 = vunpack.c.l.bf16 %v1443
        %v3414 = vunpack.c.h.bf16 %v1443
        %v3415 = vunpack.c.l.bf16 %v1444
        %v3416 = vunpack.c.h.bf16 %v1444
        %v3417 = vunpack.c.l.bf16 %v1445
        %v3418 = vunpack.c.h.bf16 %v1445
        %v3419 = vunpack.c.l.bf16 %v1446
        %v3420 = vunpack.c.h.bf16 %v1446
        %v3421 = vunpack.c.l.bf16 %v1447
        %v3422 = vunpack.c.h.bf16 %v1447
        %v3423 = vunpack.c.l.bf16 %v1448
        %v3424 = vunpack.c.h.bf16 %v1448
        %v3425 = vunpack.c.l.bf16 %v1449
        %v3426 = vunpack.c.h.bf16 %v1449
        %v3427 = vunpack.c.l.bf16 %v1450
        %v3428 = vunpack.c.h.bf16 %v1450
        %v3429 = vunpack.c.l.bf16 %v1451
        %v3430 = vunpack.c.h.bf16 %v1451
        %v3431 = vunpack.c.l.bf16 %v1452
        %v3432 = vunpack.c.h.bf16 %v1452
        %v3433 = vunpack.c.l.bf16 %v1453
        %v3434 = vunpack.c.h.bf16 %v1453
        %v3435 = vunpack.c.l.bf16 %v1454
        %v3436 = vunpack.c.h.bf16 %v1454
        %v3437 = vunpack.c.l.bf16 %v1455
        %v3438 = vunpack.c.h.bf16 %v1455
        %v3439 = vunpack.c.l.bf16 %v1456
        %v3440 = vunpack.c.h.bf16 %v1456
        %v3441 = vunpack.c.l.bf16 %v1457
        %v3442 = vunpack.c.h.bf16 %v1457
        %v3443 = vunpack.c.l.bf16 %v1458
        %v3444 = vunpack.c.h.bf16 %v1458
        %v3445 = vunpack.c.l.bf16 %v1459
        %v3446 = vunpack.c.h.bf16 %v1459
        %v3447 = vunpack.c.l.bf16 %v1460
        %v3448 = vunpack.c.h.bf16 %v1460
        %v3449 = vunpack.c.l.bf16 %v1461
        %v3450 = vunpack.c.h.bf16 %v1461
        %v3451 = vunpack.c.l.bf16 %v1462
        %v3452 = vunpack.c.h.bf16 %v1462
        %v3453 = vunpack.c.l.bf16 %v1463
        %v3454 = vunpack.c.h.bf16 %v1463
        %v3455 = vunpack.c.l.bf16 %v1464
        %v3456 = vunpack.c.h.bf16 %v1464
        %v3457 = vunpack.c.l.bf16 %v1465
        %v3458 = vunpack.c.h.bf16 %v1465
        %v3459 = vunpack.c.l.bf16 %v1466
        %v3460 = vunpack.c.h.bf16 %v1466
        %v3461 = vunpack.c.l.bf16 %v1467
        %v3462 = vunpack.c.h.bf16 %v1467
        %v3463 = vunpack.c.l.bf16 %v1468
        %v3464 = vunpack.c.h.bf16 %v1468
        %v3465 = vunpack.c.l.bf16 %v1469
        %v3466 = vunpack.c.h.bf16 %v1469
        %v3467 = vunpack.c.l.bf16 %v1470
        %v3468 = vunpack.c.h.bf16 %v1470
        %v3469 = vunpack.c.l.bf16 %v1471
        %v3470 = vunpack.c.h.bf16 %v1471
        %v3471 = vunpack.c.l.bf16 %v1472
        %v3472 = vunpack.c.h.bf16 %v1472
        %v3473 = vunpack.c.l.bf16 %v1473
        %v3474 = vunpack.c.h.bf16 %v1473
        %v3475 = vunpack.c.l.bf16 %v1474
        %v3476 = vunpack.c.h.bf16 %v1474
        %v3477 = vunpack.c.l.bf16 %v1475
        %v3478 = vunpack.c.h.bf16 %v1475
        %v3479 = vunpack.c.l.bf16 %v1476
        %v3480 = vunpack.c.h.bf16 %v1476
        %v3481 = vunpack.c.l.bf16 %v1477
        %v3482 = vunpack.c.h.bf16 %v1477
        %v3483 = vunpack.c.l.bf16 %v1478
        %v3484 = vunpack.c.h.bf16 %v1478
        %v3485 = vunpack.c.l.bf16 %v1479
        %v3486 = vunpack.c.h.bf16 %v1479
        %v3487 = vunpack.c.l.bf16 %v1480
        %v3488 = vunpack.c.h.bf16 %v1480
        %v3489 = vunpack.c.l.bf16 %v1481
        %v3490 = vunpack.c.h.bf16 %v1481
        %v3491 = vunpack.c.l.bf16 %v1482
        %v3492 = vunpack.c.h.bf16 %v1482
        %v3493 = vunpack.c.l.bf16 %v1483
        %v3494 = vunpack.c.h.bf16 %v1483
        %v3495 = vunpack.c.l.bf16 %v1484
        %v3496 = vunpack.c.h.bf16 %v1484
        %v3497 = vunpack.c.l.bf16 %v1485
        %v3498 = vunpack.c.h.bf16 %v1485
        %v3499 = vunpack.c.l.bf16 %v1486
        %v3500 = vunpack.c.h.bf16 %v1486
        %v3501 = vunpack.c.l.bf16 %v1487
        %v3502 = vunpack.c.h.bf16 %v1487
        %v3503 = vunpack.c.l.bf16 %v1488
        %v3504 = vunpack.c.h.bf16 %v1488
        %v3505 = vunpack.c.l.bf16 %v1489
        %v3506 = vunpack.c.h.bf16 %v1489
        %v3507 = vunpack.c.l.bf16 %v1490
        %v3508 = vunpack.c.h.bf16 %v1490
        %v3509 = vunpack.c.l.bf16 %v1491
        %v3510 = vunpack.c.h.bf16 %v1491
        %v3511 = vunpack.c.l.bf16 %v1492
        %v3512 = vunpack.c.h.bf16 %v1492
        %v3513 = vunpack.c.l.bf16 %v1493
        %v3514 = vunpack.c.h.bf16 %v1493
        %v3515 = vunpack.c.l.bf16 %v1494
        %v3516 = vunpack.c.h.bf16 %v1494
        %v3517 = vunpack.c.l.bf16 %v1495
        %v3518 = vunpack.c.h.bf16 %v1495
        %v3519 = vunpack.c.l.bf16 %v1496
        %v3520 = vunpack.c.h.bf16 %v1496
        %v3521 = vunpack.c.l.bf16 %v1497
        %v3522 = vunpack.c.h.bf16 %v1497
        %v3523 = vunpack.c.l.bf16 %v1498
        %v3524 = vunpack.c.h.bf16 %v1498
        %v3525 = vunpack.c.l.bf16 %v1499
        %v3526 = vunpack.c.h.bf16 %v1499
        %v3527 = vunpack.c.l.bf16 %v1500
        %v3528 = vunpack.c.h.bf16 %v1500
        %v3529 = vunpack.c.l.bf16 %v1501
        %v3530 = vunpack.c.h.bf16 %v1501
        %v3531 = vunpack.c.l.bf16 %v1502
        %v3532 = vunpack.c.h.bf16 %v1502
        %v3533 = vunpack.c.l.bf16 %v1503
        %v3534 = vunpack.c.h.bf16 %v1503
        %v3535 = vunpack.c.l.bf16 %v1504
        %v3536 = vunpack.c.h.bf16 %v1504
        %v3537 = vunpack.c.l.bf16 %v1505
        %v3538 = vunpack.c.h.bf16 %v1505
        %v3539 = vunpack.c.l.bf16 %v1506
        %v3540 = vunpack.c.h.bf16 %v1506
        %v3541 = vunpack.c.l.bf16 %v1507
        %v3542 = vunpack.c.h.bf16 %v1507
        %v3543 = vunpack.c.l.bf16 %v1508
        %v3544 = vunpack.c.h.bf16 %v1508
        %v3545 = vunpack.c.l.bf16 %v1509
        %v3546 = vunpack.c.h.bf16 %v1509
        %v3547 = vunpack.c.l.bf16 %v1510
        %v3548 = vunpack.c.h.bf16 %v1510
        %v3549 = vunpack.c.l.bf16 %v1511
        %v3550 = vunpack.c.h.bf16 %v1511
        %v3551 = vunpack.c.l.bf16 %v1512
        %v3552 = vunpack.c.h.bf16 %v1512
        %v3553 = vunpack.c.l.bf16 %v1513
        %v3554 = vunpack.c.h.bf16 %v1513
        %v3555 = vunpack.c.l.bf16 %v1514
        %v3556 = vunpack.c.h.bf16 %v1514
        %v3557 = vunpack.c.l.bf16 %v1515
        %v3558 = vunpack.c.h.bf16 %v1515
        %v3559 = vunpack.c.l.bf16 %v1516
        %v3560 = vunpack.c.h.bf16 %v1516
        %v3561 = vunpack.c.l.bf16 %v1517
        %v3562 = vunpack.c.h.bf16 %v1517
        %v3563 = vunpack.c.l.bf16 %v1518
        %v3564 = vunpack.c.h.bf16 %v1518
        %v3565 = vunpack.c.l.bf16 %v1519
        %v3566 = vunpack.c.h.bf16 %v1519
        %v3567 = vunpack.c.l.bf16 %v1520
        %v3568 = vunpack.c.h.bf16 %v1520
        %v3569 = vld [vmem:[%s339] sm:$0xff]
        %v3570 = vld [vmem:[%s339 + $0x8] sm:$0xff]
        %v3573 = vlaneseq
        %v3574 = vshrl.u32 %v3573, 7
        %v3575 = vsub.s32 0, %v3574
        %v3576 = vrot.slane %v3569, %v3575
        %v3577 = vlaneseq
        %v3578 = vshrl.u32 %v3577, 7
        %v3579 = vsub.s32 1, %v3578
        %v3580 = vrot.slane %v3569, %v3579
        %v3581 = vlaneseq
        %v3582 = vshrl.u32 %v3581, 7
        %v3583 = vsub.s32 2, %v3582
        %v3584 = vrot.slane %v3569, %v3583
        %v3585 = vlaneseq
        %v3586 = vshrl.u32 %v3585, 7
        %v3587 = vsub.s32 3, %v3586
        %v3588 = vrot.slane %v3569, %v3587
        %v3589 = vlaneseq
        %v3590 = vshrl.u32 %v3589, 7
        %v3591 = vsub.s32 4, %v3590
        %v3592 = vrot.slane %v3569, %v3591
        %v3593 = vlaneseq
        %v3594 = vshrl.u32 %v3593, 7
        %v3595 = vsub.s32 5, %v3594
        %v3596 = vrot.slane %v3569, %v3595
        %v3597 = vlaneseq
        %v3598 = vshrl.u32 %v3597, 7
        %v3599 = vsub.s32 6, %v3598
        %v3600 = vrot.slane %v3569, %v3599
        %v3601 = vlaneseq
        %v3602 = vshrl.u32 %v3601, 7
        %v3603 = vsub.s32 7, %v3602
        %v3604 = vrot.slane %v3569, %v3603
        %v3605 = vlaneseq
        %v3606 = vshrl.u32 %v3605, 7
        %v3607 = vsub.s32 0, %v3606
        %v3608 = vrot.slane %v3570, %v3607
        %v3609 = vlaneseq
        %v3610 = vshrl.u32 %v3609, 7
        %v3611 = vsub.s32 1, %v3610
        %v3612 = vrot.slane %v3570, %v3611
        %v3613 = vlaneseq
        %v3614 = vshrl.u32 %v3613, 7
        %v3615 = vsub.s32 2, %v3614
        %v3616 = vrot.slane %v3570, %v3615
        %v3617 = vlaneseq
        %v3618 = vshrl.u32 %v3617, 7
        %v3619 = vsub.s32 3, %v3618
        %v3620 = vrot.slane %v3570, %v3619
        %v3621 = vlaneseq
        %v3622 = vshrl.u32 %v3621, 7
        %v3623 = vsub.s32 4, %v3622
        %v3624 = vrot.slane %v3570, %v3623
        %v3625 = vlaneseq
        %v3626 = vshrl.u32 %v3625, 7
        %v3627 = vsub.s32 5, %v3626
        %v3628 = vrot.slane %v3570, %v3627
        %v3629 = vlaneseq
        %v3630 = vshrl.u32 %v3629, 7
        %v3631 = vsub.s32 6, %v3630
        %v3632 = vrot.slane %v3570, %v3631
        %v3633 = vlaneseq
        %v3634 = vshrl.u32 %v3633, 7
        %v3635 = vsub.s32 7, %v3634
        %v3636 = vrot.slane %v3570, %v3635
        %v3655 = vcombine.high %v495, %v495
        %v3657 = vunpack.c.l.s4 1983009808
        %v3658 = vunpack.c.0.s8 %v3657
        %v3659 = vlaneseq
        %v3660 = vshrl.u32 %v3659, 7
        %v3661 = vsub.s32 %v3658, %v3660
        %v3662 = vrot.slane %v495, %v3661
        %v3664 = vunpack.c.l.s4 1983009808
        %v3665 = vunpack.c.0.s8 %v3664
        %v3666 = vlaneseq
        %v3667 = vshrl.u32 %v3666, 7
        %v3668 = vsub.s32 %v3665, %v3667
        %v3669 = vrot.slane %v3655, %v3668
        %v3670 = vcombine.high %v3662, %v3662
        %v3671 = vcombine.high %v3669, %v3669
        %v3672 = vcombine.high %v496, %v496
        %v3674 = vunpack.c.l.s4 1983009808
        %v3675 = vunpack.c.0.s8 %v3674
        %v3676 = vlaneseq
        %v3677 = vshrl.u32 %v3676, 7
        %v3678 = vsub.s32 %v3675, %v3677
        %v3679 = vrot.slane %v496, %v3678
        %v3681 = vunpack.c.l.s4 1983009808
        %v3682 = vunpack.c.0.s8 %v3681
        %v3683 = vlaneseq
        %v3684 = vshrl.u32 %v3683, 7
        %v3685 = vsub.s32 %v3682, %v3684
        %v3686 = vrot.slane %v3672, %v3685
        %v3687 = vcombine.high %v3679, %v3679
        %v3688 = vcombine.high %v3686, %v3686
        %3697 = vmatprep.subr.mxu0 %v1522
        %3698 = vmatpush1.msra.mxu0 %v1521
        %3699 = vmatprep.subr.mxu0 %v1538
        %3700 = vmatpush1.msra.mxu0 %v1537
        %3701 = vmatprep.subr.mxu0 %v1554
        %3702 = vmatpush1.msra.mxu0 %v1553
        %3703 = vmatprep.subr.mxu0 %v1570
        %3704 = vmatpush1.msra.mxu0 %v1569
        %3705 = vmatprep.subr.mxu0 %v1586
        %3706 = vmatpush1.msra.mxu0 %v1585
        %3707 = vmatprep.subr.mxu0 %v1602
        %3708 = vmatpush1.msra.mxu0 %v1601
        %3709 = vmatprep.subr.mxu0 %v1618
        %3710 = vmatpush1.msra.mxu0 %v1617
        %3711 = vmatprep.subr.mxu0 %v1634
        %3712 = vmatpush1.msra.mxu0 %v1633
        %3713 = vmatprep.subr.mxu0 %v1650
        %3714 = vmatpush1.msra.mxu0 %v1649
        %3715 = vmatprep.subr.mxu0 %v1666
        %3716 = vmatpush1.msra.mxu0 %v1665
        %3717 = vmatprep.subr.mxu0 %v1682
        %3718 = vmatpush1.msra.mxu0 %v1681
        %3719 = vmatprep.subr.mxu0 %v1698
        %3720 = vmatpush1.msra.mxu0 %v1697
        %3721 = vmatprep.subr.mxu0 %v1714
        %3722 = vmatpush1.msra.mxu0 %v1713
        %3723 = vmatprep.subr.mxu0 %v1730
        %3724 = vmatpush1.msra.mxu0 %v1729
        %3725 = vmatprep.subr.mxu0 %v1746
        %3726 = vmatpush1.msra.mxu0 %v1745
        %3727 = vmatprep.subr.mxu0 %v1762
        %3728 = vmatpush1.msra.mxu0 %v1761
        %3729 = vmatprep.subr.mxu0 %v1778
        %3730 = vmatpush1.msra.mxu0 %v1777
        %3731 = vmatprep.subr.mxu0 %v1794
        %3732 = vmatpush1.msra.mxu0 %v1793
        %3733 = vmatprep.subr.mxu0 %v1810
        %3734 = vmatpush1.msra.mxu0 %v1809
        %3735 = vmatprep.subr.mxu0 %v1826
        %3736 = vmatpush1.msra.mxu0 %v1825
        %3737 = vmatprep.subr.mxu0 %v1842
        %3738 = vmatpush1.msra.mxu0 %v1841
        %3739 = vmatprep.subr.mxu0 %v1858
        %3740 = vmatpush1.msra.mxu0 %v1857
        %3741 = vmatprep.subr.mxu0 %v1874
        %3742 = vmatpush1.msra.mxu0 %v1873
        %3743 = vmatprep.subr.mxu0 %v1890
        %3744 = vmatpush1.msra.mxu0 %v1889
        %3745 = vmatprep.subr.mxu0 %v1906
        %3746 = vmatpush1.msra.mxu0 %v1905
        %3747 = vmatprep.subr.mxu0 %v1922
        %3748 = vmatpush1.msra.mxu0 %v1921
        %3749 = vmatprep.subr.mxu0 %v1938
        %3750 = vmatpush1.msra.mxu0 %v1937
        %3751 = vmatprep.subr.mxu0 %v1954
        %3752 = vmatpush1.msra.mxu0 %v1953
        %3753 = vmatprep.subr.mxu0 %v1970
        %3754 = vmatpush1.msra.mxu0 %v1969
        %3755 = vmatprep.subr.mxu0 %v1986
        %3756 = vmatpush1.msra.mxu0 %v1985
        %3757 = vmatprep.subr.mxu0 %v2002
        %3758 = vmatpush1.msra.mxu0 %v2001
        %3759 = vmatprep.subr.mxu0 %v2018
        %3760 = vmatpush1.msra.mxu0 %v2017
        %3761 = vmatprep.mubr.f32.mxu0 %v3670
        %3762 = vmatmul.mubr.f32.gmra.mrb[0].mxu0 %v3662
        %v3763 = vpop.f32.mrb[0].mxu0
        %v3764 = vadd.f32 %v3576, %v3763
        %v3765 = vpop.f32.mrb[0].mxu0
        %v3766 = vadd.f32 %v3580, %v3765
        %3767 = vdwg.mxu0
        %3768 = vmatprep.subr.mxu0 %v2034
        %3769 = vmatpush1.msra.mxu0 %v2033
        %3770 = vmatprep.subr.mxu0 %v2050
        %3771 = vmatpush1.msra.mxu0 %v2049
        %3772 = vmatprep.subr.mxu0 %v2066
        %3773 = vmatpush1.msra.mxu0 %v2065
        %3774 = vmatprep.subr.mxu0 %v2082
        %3775 = vmatpush1.msra.mxu0 %v2081
        %3776 = vmatprep.subr.mxu0 %v2098
        %3777 = vmatpush1.msra.mxu0 %v2097
        %3778 = vmatprep.subr.mxu0 %v2114
        %3779 = vmatpush1.msra.mxu0 %v2113
        %3780 = vmatprep.subr.mxu0 %v2130
        %3781 = vmatpush1.msra.mxu0 %v2129
        %3782 = vmatprep.subr.mxu0 %v2146
        %3783 = vmatpush1.msra.mxu0 %v2145
        %3784 = vmatprep.subr.mxu0 %v2162
        %3785 = vmatpush1.msra.mxu0 %v2161
        %3786 = vmatprep.subr.mxu0 %v2178
        %3787 = vmatpush1.msra.mxu0 %v2177
        %3788 = vmatprep.subr.mxu0 %v2194
        %3789 = vmatpush1.msra.mxu0 %v2193
        %3790 = vmatprep.subr.mxu0 %v2210
        %3791 = vmatpush1.msra.mxu0 %v2209
        %3792 = vmatprep.subr.mxu0 %v2226
        %3793 = vmatpush1.msra.mxu0 %v2225
        %3794 = vmatprep.subr.mxu0 %v2242
        %3795 = vmatpush1.msra.mxu0 %v2241
        %3796 = vmatprep.subr.mxu0 %v2258
        %3797 = vmatpush1.msra.mxu0 %v2257
        %3798 = vmatprep.subr.mxu0 %v2274
        %3799 = vmatpush1.msra.mxu0 %v2273
        %3800 = vmatprep.subr.mxu0 %v2290
        %3801 = vmatpush1.msra.mxu0 %v2289
        %3802 = vmatprep.subr.mxu0 %v2306
        %3803 = vmatpush1.msra.mxu0 %v2305
        %3804 = vmatprep.subr.mxu0 %v2322
        %3805 = vmatpush1.msra.mxu0 %v2321
        %3806 = vmatprep.subr.mxu0 %v2338
        %3807 = vmatpush1.msra.mxu0 %v2337
        %3808 = vmatprep.subr.mxu0 %v2354
        %3809 = vmatpush1.msra.mxu0 %v2353
        %3810 = vmatprep.subr.mxu0 %v2370
        %3811 = vmatpush1.msra.mxu0 %v2369
        %3812 = vmatprep.subr.mxu0 %v2386
        %3813 = vmatpush1.msra.mxu0 %v2385
        %3814 = vmatprep.subr.mxu0 %v2402
        %3815 = vmatpush1.msra.mxu0 %v2401
        %3816 = vmatprep.subr.mxu0 %v2418
        %3817 = vmatpush1.msra.mxu0 %v2417
        %3818 = vmatprep.subr.mxu0 %v2434
        %3819 = vmatpush1.msra.mxu0 %v2433
        %3820 = vmatprep.subr.mxu0 %v2450
        %3821 = vmatpush1.msra.mxu0 %v2449
        %3822 = vmatprep.subr.mxu0 %v2466
        %3823 = vmatpush1.msra.mxu0 %v2465
        %3824 = vmatprep.subr.mxu0 %v2482
        %3825 = vmatpush1.msra.mxu0 %v2481
        %3826 = vmatprep.subr.mxu0 %v2498
        %3827 = vmatpush1.msra.mxu0 %v2497
        %3828 = vmatprep.subr.mxu0 %v2514
        %3829 = vmatpush1.msra.mxu0 %v2513
        %3830 = vmatprep.subr.mxu0 %v2530
        %3831 = vmatpush1.msra.mxu0 %v2529
        %3832 = vmatprep.mubr.f32.mxu0 %v3671
        %3833 = vmatmul.mubr.f32.gmra.mrb[0].mxu0 %v3669
        %v3834 = vpop.f32.mrb[0].mxu0
        %v3835 = vadd.f32 %v3764, %v3834
        %v3836 = vpop.f32.mrb[0].mxu0
        %v3837 = vadd.f32 %v3766, %v3836
        %3838 = vdwg.mxu0
        %3839 = vmatprep.subr.mxu0 %v2546
        %3840 = vmatpush1.msra.mxu0 %v2545
        %3841 = vmatprep.subr.mxu0 %v2562
        %3842 = vmatpush1.msra.mxu0 %v2561
        %3843 = vmatprep.subr.mxu0 %v2578
        %3844 = vmatpush1.msra.mxu0 %v2577
        %3845 = vmatprep.subr.mxu0 %v2594
        %3846 = vmatpush1.msra.mxu0 %v2593
        %3847 = vmatprep.subr.mxu0 %v2610
        %3848 = vmatpush1.msra.mxu0 %v2609
        %3849 = vmatprep.subr.mxu0 %v2626
        %3850 = vmatpush1.msra.mxu0 %v2625
        %3851 = vmatprep.subr.mxu0 %v2642
        %3852 = vmatpush1.msra.mxu0 %v2641
        %3853 = vmatprep.subr.mxu0 %v2658
        %3854 = vmatpush1.msra.mxu0 %v2657
        %3855 = vmatprep.subr.mxu0 %v2674
        %3856 = vmatpush1.msra.mxu0 %v2673
        %3857 = vmatprep.subr.mxu0 %v2690
        %3858 = vmatpush1.msra.mxu0 %v2689
        %3859 = vmatprep.subr.mxu0 %v2706
        %3860 = vmatpush1.msra.mxu0 %v2705
        %3861 = vmatprep.subr.mxu0 %v2722
        %3862 = vmatpush1.msra.mxu0 %v2721
        %3863 = vmatprep.subr.mxu0 %v2738
        %3864 = vmatpush1.msra.mxu0 %v2737
        %3865 = vmatprep.subr.mxu0 %v2754
        %3866 = vmatpush1.msra.mxu0 %v2753
        %3867 = vmatprep.subr.mxu0 %v2770
        %3868 = vmatpush1.msra.mxu0 %v2769
        %3869 = vmatprep.subr.mxu0 %v2786
        %3870 = vmatpush1.msra.mxu0 %v2785
        %3871 = vmatprep.subr.mxu0 %v2802
        %3872 = vmatpush1.msra.mxu0 %v2801
        %3873 = vmatprep.subr.mxu0 %v2818
        %3874 = vmatpush1.msra.mxu0 %v2817
        %3875 = vmatprep.subr.mxu0 %v2834
        %3876 = vmatpush1.msra.mxu0 %v2833
        %3877 = vmatprep.subr.mxu0 %v2850
        %3878 = vmatpush1.msra.mxu0 %v2849
        %3879 = vmatprep.subr.mxu0 %v2866
        %3880 = vmatpush1.msra.mxu0 %v2865
        %3881 = vmatprep.subr.mxu0 %v2882
        %3882 = vmatpush1.msra.mxu0 %v2881
        %3883 = vmatprep.subr.mxu0 %v2898
        %3884 = vmatpush1.msra.mxu0 %v2897
        %3885 = vmatprep.subr.mxu0 %v2914
        %3886 = vmatpush1.msra.mxu0 %v2913
        %3887 = vmatprep.subr.mxu0 %v2930
        %3888 = vmatpush1.msra.mxu0 %v2929
        %3889 = vmatprep.subr.mxu0 %v2946
        %3890 = vmatpush1.msra.mxu0 %v2945
        %3891 = vmatprep.subr.mxu0 %v2962
        %3892 = vmatpush1.msra.mxu0 %v2961
        %3893 = vmatprep.subr.mxu0 %v2978
        %3894 = vmatpush1.msra.mxu0 %v2977
        %3895 = vmatprep.subr.mxu0 %v2994
        %3896 = vmatpush1.msra.mxu0 %v2993
        %3897 = vmatprep.subr.mxu0 %v3010
        %3898 = vmatpush1.msra.mxu0 %v3009
        %3899 = vmatprep.subr.mxu0 %v3026
        %3900 = vmatpush1.msra.mxu0 %v3025
        %3901 = vmatprep.subr.mxu0 %v3042
        %3902 = vmatpush1.msra.mxu0 %v3041
        %3903 = vmatprep.mubr.f32.mxu0 %v3687
        %3904 = vmatmul.mubr.f32.gmra.mrb[0].mxu0 %v3679
        %v3905 = vpop.f32.mrb[0].mxu0
        %v3906 = vadd.f32 %v3835, %v3905
        %v3907 = vpop.f32.mrb[0].mxu0
        %v3908 = vadd.f32 %v3837, %v3907
        %3909 = vdwg.mxu0
        %3910 = vmatprep.subr.mxu0 %v3058
        %3911 = vmatpush1.msra.mxu0 %v3057
        %3912 = vmatprep.subr.mxu0 %v3074
        %3913 = vmatpush1.msra.mxu0 %v3073
        %3914 = vmatprep.subr.mxu0 %v3090
        %3915 = vmatpush1.msra.mxu0 %v3089
        %3916 = vmatprep.subr.mxu0 %v3106
        %3917 = vmatpush1.msra.mxu0 %v3105
        %3918 = vmatprep.subr.mxu0 %v3122
        %3919 = vmatpush1.msra.mxu0 %v3121
        %3920 = vmatprep.subr.mxu0 %v3138
        %3921 = vmatpush1.msra.mxu0 %v3137
        %3922 = vmatprep.subr.mxu0 %v3154
        %3923 = vmatpush1.msra.mxu0 %v3153
        %3924 = vmatprep.subr.mxu0 %v3170
        %3925 = vmatpush1.msra.mxu0 %v3169
        %3926 = vmatprep.subr.mxu0 %v3186
        %3927 = vmatpush1.msra.mxu0 %v3185
        %3928 = vmatprep.subr.mxu0 %v3202
        %3929 = vmatpush1.msra.mxu0 %v3201
        %3930 = vmatprep.subr.mxu0 %v3218
        %3931 = vmatpush1.msra.mxu0 %v3217
        %3932 = vmatprep.subr.mxu0 %v3234
        %3933 = vmatpush1.msra.mxu0 %v3233
        %3934 = vmatprep.subr.mxu0 %v3250
        %3935 = vmatpush1.msra.mxu0 %v3249
        %3936 = vmatprep.subr.mxu0 %v3266
        %3937 = vmatpush1.msra.mxu0 %v3265
        %3938 = vmatprep.subr.mxu0 %v3282
        %3939 = vmatpush1.msra.mxu0 %v3281
        %3940 = vmatprep.subr.mxu0 %v3298
        %3941 = vmatpush1.msra.mxu0 %v3297
        %3942 = vmatprep.subr.mxu0 %v3314
        %3943 = vmatpush1.msra.mxu0 %v3313
        %3944 = vmatprep.subr.mxu0 %v3330
        %3945 = vmatpush1.msra.mxu0 %v3329
        %3946 = vmatprep.subr.mxu0 %v3346
        %3947 = vmatpush1.msra.mxu0 %v3345
        %3948 = vmatprep.subr.mxu0 %v3362
        %3949 = vmatpush1.msra.mxu0 %v3361
        %3950 = vmatprep.subr.mxu0 %v3378
        %3951 = vmatpush1.msra.mxu0 %v3377
        %3952 = vmatprep.subr.mxu0 %v3394
        %3953 = vmatpush1.msra.mxu0 %v3393
        %3954 = vmatprep.subr.mxu0 %v3410
        %3955 = vmatpush1.msra.mxu0 %v3409
        %3956 = vmatprep.subr.mxu0 %v3426
        %3957 = vmatpush1.msra.mxu0 %v3425
        %3958 = vmatprep.subr.mxu0 %v3442
        %3959 = vmatpush1.msra.mxu0 %v3441
        %3960 = vmatprep.subr.mxu0 %v3458
        %3961 = vmatpush1.msra.mxu0 %v3457
        %3962 = vmatprep.subr.mxu0 %v3474
        %3963 = vmatpush1.msra.mxu0 %v3473
        %3964 = vmatprep.subr.mxu0 %v3490
        %3965 = vmatpush1.msra.mxu0 %v3489
        %3966 = vmatprep.subr.mxu0 %v3506
        %3967 = vmatpush1.msra.mxu0 %v3505
        %3968 = vmatprep.subr.mxu0 %v3522
        %3969 = vmatpush1.msra.mxu0 %v3521
        %3970 = vmatprep.subr.mxu0 %v3538
        %3971 = vmatpush1.msra.mxu0 %v3537
        %3972 = vmatprep.subr.mxu0 %v3554
        %3973 = vmatpush1.msra.mxu0 %v3553
        %3974 = vmatprep.mubr.f32.mxu0 %v3688
        %3975 = vmatmul.mubr.f32.gmra.mrb[0].mxu0 %v3686
        %v3976 = vpop.f32.mrb[0].mxu0
        %v3977 = vadd.f32 %v3906, %v3976
        %v3978 = vpop.f32.mrb[0].mxu0
        %v3979 = vadd.f32 %v3908, %v3978
        %3980 = vdwg.mxu0
        %3981 = vmatprep.subr.mxu0 %v1524
        %3982 = vmatpush1.msra.mxu0 %v1523
        %3983 = vmatprep.subr.mxu0 %v1540
        %3984 = vmatpush1.msra.mxu0 %v1539
        %3985 = vmatprep.subr.mxu0 %v1556
        %3986 = vmatpush1.msra.mxu0 %v1555
        %3987 = vmatprep.subr.mxu0 %v1572
        %3988 = vmatpush1.msra.mxu0 %v1571
        %3989 = vmatprep.subr.mxu0 %v1588
        %3990 = vmatpush1.msra.mxu0 %v1587
        %3991 = vmatprep.subr.mxu0 %v1604
        %3992 = vmatpush1.msra.mxu0 %v1603
        %3993 = vmatprep.subr.mxu0 %v1620
        %3994 = vmatpush1.msra.mxu0 %v1619
        %3995 = vmatprep.subr.mxu0 %v1636
        %3996 = vmatpush1.msra.mxu0 %v1635
        %3997 = vmatprep.subr.mxu0 %v1652
        %3998 = vmatpush1.msra.mxu0 %v1651
        %3999 = vmatprep.subr.mxu0 %v1668
        %4000 = vmatpush1.msra.mxu0 %v1667
        %4001 = vmatprep.subr.mxu0 %v1684
        %4002 = vmatpush1.msra.mxu0 %v1683
        %4003 = vmatprep.subr.mxu0 %v1700
        %4004 = vmatpush1.msra.mxu0 %v1699
        %4005 = vmatprep.subr.mxu0 %v1716
        %4006 = vmatpush1.msra.mxu0 %v1715
        %4007 = vmatprep.subr.mxu0 %v1732
        %4008 = vmatpush1.msra.mxu0 %v1731
        %4009 = vmatprep.subr.mxu0 %v1748
        %4010 = vmatpush1.msra.mxu0 %v1747
        %4011 = vmatprep.subr.mxu0 %v1764
        %4012 = vmatpush1.msra.mxu0 %v1763
        %4013 = vmatprep.subr.mxu0 %v1780
        %4014 = vmatpush1.msra.mxu0 %v1779
        %4015 = vmatprep.subr.mxu0 %v1796
        %4016 = vmatpush1.msra.mxu0 %v1795
        %4017 = vmatprep.subr.mxu0 %v1812
        %4018 = vmatpush1.msra.mxu0 %v1811
        %4019 = vmatprep.subr.mxu0 %v1828
        %4020 = vmatpush1.msra.mxu0 %v1827
        %4021 = vmatprep.subr.mxu0 %v1844
        %4022 = vmatpush1.msra.mxu0 %v1843
        %4023 = vmatprep.subr.mxu0 %v1860
        %4024 = vmatpush1.msra.mxu0 %v1859
        %4025 = vmatprep.subr.mxu0 %v1876
        %4026 = vmatpush1.msra.mxu0 %v1875
        %4027 = vmatprep.subr.mxu0 %v1892
        %4028 = vmatpush1.msra.mxu0 %v1891
        %4029 = vmatprep.subr.mxu0 %v1908
        %4030 = vmatpush1.msra.mxu0 %v1907
        %4031 = vmatprep.subr.mxu0 %v1924
        %4032 = vmatpush1.msra.mxu0 %v1923
        %4033 = vmatprep.subr.mxu0 %v1940
        %4034 = vmatpush1.msra.mxu0 %v1939
        %4035 = vmatprep.subr.mxu0 %v1956
        %4036 = vmatpush1.msra.mxu0 %v1955
        %4037 = vmatprep.subr.mxu0 %v1972
        %4038 = vmatpush1.msra.mxu0 %v1971
        %4039 = vmatprep.subr.mxu0 %v1988
        %4040 = vmatpush1.msra.mxu0 %v1987
        %4041 = vmatprep.subr.mxu0 %v2004
        %4042 = vmatpush1.msra.mxu0 %v2003
        %4043 = vmatprep.subr.mxu0 %v2020
        %4044 = vmatpush1.msra.mxu0 %v2019
        %4045 = vmatprep.mubr.f32.mxu0 %v3670
        %4046 = vmatmul.mubr.f32.gmra.mrb[0].mxu0 %v3662
        %v4047 = vpop.f32.mrb[0].mxu0
        %v4048 = vadd.f32 %v3584, %v4047
        %v4049 = vpop.f32.mrb[0].mxu0
        %v4050 = vadd.f32 %v3588, %v4049
        %4051 = vdwg.mxu0
        %4052 = vmatprep.subr.mxu0 %v2036
        %4053 = vmatpush1.msra.mxu0 %v2035
        %4054 = vmatprep.subr.mxu0 %v2052
        %4055 = vmatpush1.msra.mxu0 %v2051
        %4056 = vmatprep.subr.mxu0 %v2068
        %4057 = vmatpush1.msra.mxu0 %v2067
        %4058 = vmatprep.subr.mxu0 %v2084
        %4059 = vmatpush1.msra.mxu0 %v2083
        %4060 = vmatprep.subr.mxu0 %v2100
        %4061 = vmatpush1.msra.mxu0 %v2099
        %4062 = vmatprep.subr.mxu0 %v2116
        %4063 = vmatpush1.msra.mxu0 %v2115
        %4064 = vmatprep.subr.mxu0 %v2132
        %4065 = vmatpush1.msra.mxu0 %v2131
        %4066 = vmatprep.subr.mxu0 %v2148
        %4067 = vmatpush1.msra.mxu0 %v2147
        %4068 = vmatprep.subr.mxu0 %v2164
        %4069 = vmatpush1.msra.mxu0 %v2163
        %4070 = vmatprep.subr.mxu0 %v2180
        %4071 = vmatpush1.msra.mxu0 %v2179
        %4072 = vmatprep.subr.mxu0 %v2196
        %4073 = vmatpush1.msra.mxu0 %v2195
        %4074 = vmatprep.subr.mxu0 %v2212
        %4075 = vmatpush1.msra.mxu0 %v2211
        %4076 = vmatprep.subr.mxu0 %v2228
        %4077 = vmatpush1.msra.mxu0 %v2227
        %4078 = vmatprep.subr.mxu0 %v2244
        %4079 = vmatpush1.msra.mxu0 %v2243
        %4080 = vmatprep.subr.mxu0 %v2260
        %4081 = vmatpush1.msra.mxu0 %v2259
        %4082 = vmatprep.subr.mxu0 %v2276
        %4083 = vmatpush1.msra.mxu0 %v2275
        %4084 = vmatprep.subr.mxu0 %v2292
        %4085 = vmatpush1.msra.mxu0 %v2291
        %4086 = vmatprep.subr.mxu0 %v2308
        %4087 = vmatpush1.msra.mxu0 %v2307
        %4088 = vmatprep.subr.mxu0 %v2324
        %4089 = vmatpush1.msra.mxu0 %v2323
        %4090 = vmatprep.subr.mxu0 %v2340
        %4091 = vmatpush1.msra.mxu0 %v2339
        %4092 = vmatprep.subr.mxu0 %v2356
        %4093 = vmatpush1.msra.mxu0 %v2355
        %4094 = vmatprep.subr.mxu0 %v2372
        %4095 = vmatpush1.msra.mxu0 %v2371
        %4096 = vmatprep.subr.mxu0 %v2388
        %4097 = vmatpush1.msra.mxu0 %v2387
        %4098 = vmatprep.subr.mxu0 %v2404
        %4099 = vmatpush1.msra.mxu0 %v2403
        %4100 = vmatprep.subr.mxu0 %v2420
        %4101 = vmatpush1.msra.mxu0 %v2419
        %4102 = vmatprep.subr.mxu0 %v2436
        %4103 = vmatpush1.msra.mxu0 %v2435
        %4104 = vmatprep.subr.mxu0 %v2452
        %4105 = vmatpush1.msra.mxu0 %v2451
        %4106 = vmatprep.subr.mxu0 %v2468
        %4107 = vmatpush1.msra.mxu0 %v2467
        %4108 = vmatprep.subr.mxu0 %v2484
        %4109 = vmatpush1.msra.mxu0 %v2483
        %4110 = vmatprep.subr.mxu0 %v2500
        %4111 = vmatpush1.msra.mxu0 %v2499
        %4112 = vmatprep.subr.mxu0 %v2516
        %4113 = vmatpush1.msra.mxu0 %v2515
        %4114 = vmatprep.subr.mxu0 %v2532
        %4115 = vmatpush1.msra.mxu0 %v2531
        %4116 = vmatprep.mubr.f32.mxu0 %v3671
        %4117 = vmatmul.mubr.f32.gmra.mrb[0].mxu0 %v3669
        %v4118 = vpop.f32.mrb[0].mxu0
        %v4119 = vadd.f32 %v4048, %v4118
        %v4120 = vpop.f32.mrb[0].mxu0
        %v4121 = vadd.f32 %v4050, %v4120
        %4122 = vdwg.mxu0
        %4123 = vmatprep.subr.mxu0 %v2548
        %4124 = vmatpush1.msra.mxu0 %v2547
        %4125 = vmatprep.subr.mxu0 %v2564
        %4126 = vmatpush1.msra.mxu0 %v2563
        %4127 = vmatprep.subr.mxu0 %v2580
        %4128 = vmatpush1.msra.mxu0 %v2579
        %4129 = vmatprep.subr.mxu0 %v2596
        %4130 = vmatpush1.msra.mxu0 %v2595
        %4131 = vmatprep.subr.mxu0 %v2612
        %4132 = vmatpush1.msra.mxu0 %v2611
        %4133 = vmatprep.subr.mxu0 %v2628
        %4134 = vmatpush1.msra.mxu0 %v2627
        %4135 = vmatprep.subr.mxu0 %v2644
        %4136 = vmatpush1.msra.mxu0 %v2643
        %4137 = vmatprep.subr.mxu0 %v2660
        %4138 = vmatpush1.msra.mxu0 %v2659
        %4139 = vmatprep.subr.mxu0 %v2676
        %4140 = vmatpush1.msra.mxu0 %v2675
        %4141 = vmatprep.subr.mxu0 %v2692
        %4142 = vmatpush1.msra.mxu0 %v2691
        %4143 = vmatprep.subr.mxu0 %v2708
        %4144 = vmatpush1.msra.mxu0 %v2707
        %4145 = vmatprep.subr.mxu0 %v2724
        %4146 = vmatpush1.msra.mxu0 %v2723
        %4147 = vmatprep.subr.mxu0 %v2740
        %4148 = vmatpush1.msra.mxu0 %v2739
        %4149 = vmatprep.subr.mxu0 %v2756
        %4150 = vmatpush1.msra.mxu0 %v2755
        %4151 = vmatprep.subr.mxu0 %v2772
        %4152 = vmatpush1.msra.mxu0 %v2771
        %4153 = vmatprep.subr.mxu0 %v2788
        %4154 = vmatpush1.msra.mxu0 %v2787
        %4155 = vmatprep.subr.mxu0 %v2804
        %4156 = vmatpush1.msra.mxu0 %v2803
        %4157 = vmatprep.subr.mxu0 %v2820
        %4158 = vmatpush1.msra.mxu0 %v2819
        %4159 = vmatprep.subr.mxu0 %v2836
        %4160 = vmatpush1.msra.mxu0 %v2835
        %4161 = vmatprep.subr.mxu0 %v2852
        %4162 = vmatpush1.msra.mxu0 %v2851
        %4163 = vmatprep.subr.mxu0 %v2868
        %4164 = vmatpush1.msra.mxu0 %v2867
        %4165 = vmatprep.subr.mxu0 %v2884
        %4166 = vmatpush1.msra.mxu0 %v2883
        %4167 = vmatprep.subr.mxu0 %v2900
        %4168 = vmatpush1.msra.mxu0 %v2899
        %4169 = vmatprep.subr.mxu0 %v2916
        %4170 = vmatpush1.msra.mxu0 %v2915
        %4171 = vmatprep.subr.mxu0 %v2932
        %4172 = vmatpush1.msra.mxu0 %v2931
        %4173 = vmatprep.subr.mxu0 %v2948
        %4174 = vmatpush1.msra.mxu0 %v2947
        %4175 = vmatprep.subr.mxu0 %v2964
        %4176 = vmatpush1.msra.mxu0 %v2963
        %4177 = vmatprep.subr.mxu0 %v2980
        %4178 = vmatpush1.msra.mxu0 %v2979
        %4179 = vmatprep.subr.mxu0 %v2996
        %4180 = vmatpush1.msra.mxu0 %v2995
        %4181 = vmatprep.subr.mxu0 %v3012
        %4182 = vmatpush1.msra.mxu0 %v3011
        %4183 = vmatprep.subr.mxu0 %v3028
        %4184 = vmatpush1.msra.mxu0 %v3027
        %4185 = vmatprep.subr.mxu0 %v3044
        %4186 = vmatpush1.msra.mxu0 %v3043
        %4187 = vmatprep.mubr.f32.mxu0 %v3687
        %4188 = vmatmul.mubr.f32.gmra.mrb[0].mxu0 %v3679
        %v4189 = vpop.f32.mrb[0].mxu0
        %v4190 = vadd.f32 %v4119, %v4189
        %v4191 = vpop.f32.mrb[0].mxu0
        %v4192 = vadd.f32 %v4121, %v4191
        %4193 = vdwg.mxu0
        %4194 = vmatprep.subr.mxu0 %v3060
        %4195 = vmatpush1.msra.mxu0 %v3059
        %4196 = vmatprep.subr.mxu0 %v3076
        %4197 = vmatpush1.msra.mxu0 %v3075
        %4198 = vmatprep.subr.mxu0 %v3092
        %4199 = vmatpush1.msra.mxu0 %v3091
        %4200 = vmatprep.subr.mxu0 %v3108
        %4201 = vmatpush1.msra.mxu0 %v3107
        %4202 = vmatprep.subr.mxu0 %v3124
        %4203 = vmatpush1.msra.mxu0 %v3123
        %4204 = vmatprep.subr.mxu0 %v3140
        %4205 = vmatpush1.msra.mxu0 %v3139
        %4206 = vmatprep.subr.mxu0 %v3156
        %4207 = vmatpush1.msra.mxu0 %v3155
        %4208 = vmatprep.subr.mxu0 %v3172
        %4209 = vmatpush1.msra.mxu0 %v3171
        %4210 = vmatprep.subr.mxu0 %v3188
        %4211 = vmatpush1.msra.mxu0 %v3187
        %4212 = vmatprep.subr.mxu0 %v3204
        %4213 = vmatpush1.msra.mxu0 %v3203
        %4214 = vmatprep.subr.mxu0 %v3220
        %4215 = vmatpush1.msra.mxu0 %v3219
        %4216 = vmatprep.subr.mxu0 %v3236
        %4217 = vmatpush1.msra.mxu0 %v3235
        %4218 = vmatprep.subr.mxu0 %v3252
        %4219 = vmatpush1.msra.mxu0 %v3251
        %4220 = vmatprep.subr.mxu0 %v3268
        %4221 = vmatpush1.msra.mxu0 %v3267
        %4222 = vmatprep.subr.mxu0 %v3284
        %4223 = vmatpush1.msra.mxu0 %v3283
        %4224 = vmatprep.subr.mxu0 %v3300
        %4225 = vmatpush1.msra.mxu0 %v3299
        %4226 = vmatprep.subr.mxu0 %v3316
        %4227 = vmatpush1.msra.mxu0 %v3315
        %4228 = vmatprep.subr.mxu0 %v3332
        %4229 = vmatpush1.msra.mxu0 %v3331
        %4230 = vmatprep.subr.mxu0 %v3348
        %4231 = vmatpush1.msra.mxu0 %v3347
        %4232 = vmatprep.subr.mxu0 %v3364
        %4233 = vmatpush1.msra.mxu0 %v3363
        %4234 = vmatprep.subr.mxu0 %v3380
        %4235 = vmatpush1.msra.mxu0 %v3379
        %4236 = vmatprep.subr.mxu0 %v3396
        %4237 = vmatpush1.msra.mxu0 %v3395
        %4238 = vmatprep.subr.mxu0 %v3412
        %4239 = vmatpush1.msra.mxu0 %v3411
        %4240 = vmatprep.subr.mxu0 %v3428
        %4241 = vmatpush1.msra.mxu0 %v3427
        %4242 = vmatprep.subr.mxu0 %v3444
        %4243 = vmatpush1.msra.mxu0 %v3443
        %4244 = vmatprep.subr.mxu0 %v3460
        %4245 = vmatpush1.msra.mxu0 %v3459
        %4246 = vmatprep.subr.mxu0 %v3476
        %4247 = vmatpush1.msra.mxu0 %v3475
        %4248 = vmatprep.subr.mxu0 %v3492
        %4249 = vmatpush1.msra.mxu0 %v3491
        %4250 = vmatprep.subr.mxu0 %v3508
        %4251 = vmatpush1.msra.mxu0 %v3507
        %4252 = vmatprep.subr.mxu0 %v3524
        %4253 = vmatpush1.msra.mxu0 %v3523
        %4254 = vmatprep.subr.mxu0 %v3540
        %4255 = vmatpush1.msra.mxu0 %v3539
        %4256 = vmatprep.subr.mxu0 %v3556
        %4257 = vmatpush1.msra.mxu0 %v3555
        %4258 = vmatprep.mubr.f32.mxu0 %v3688
        %4259 = vmatmul.mubr.f32.gmra.mrb[0].mxu0 %v3686
        %v4260 = vpop.f32.mrb[0].mxu0
        %v4261 = vadd.f32 %v4190, %v4260
        %v4262 = vpop.f32.mrb[0].mxu0
        %v4263 = vadd.f32 %v4192, %v4262
        %4264 = vdwg.mxu0
        %4265 = vmatprep.subr.mxu0 %v1526
        %4266 = vmatpush1.msra.mxu0 %v1525
        %4267 = vmatprep.subr.mxu0 %v1542
        %4268 = vmatpush1.msra.mxu0 %v1541
        %4269 = vmatprep.subr.mxu0 %v1558
        %4270 = vmatpush1.msra.mxu0 %v1557
        %4271 = vmatprep.subr.mxu0 %v1574
        %4272 = vmatpush1.msra.mxu0 %v1573
        %4273 = vmatprep.subr.mxu0 %v1590
        %4274 = vmatpush1.msra.mxu0 %v1589
        %4275 = vmatprep.subr.mxu0 %v1606
        %4276 = vmatpush1.msra.mxu0 %v1605
        %4277 = vmatprep.subr.mxu0 %v1622
        %4278 = vmatpush1.msra.mxu0 %v1621
        %4279 = vmatprep.subr.mxu0 %v1638
        %4280 = vmatpush1.msra.mxu0 %v1637
        %4281 = vmatprep.subr.mxu0 %v1654
        %4282 = vmatpush1.msra.mxu0 %v1653
        %4283 = vmatprep.subr.mxu0 %v1670
        %4284 = vmatpush1.msra.mxu0 %v1669
        %4285 = vmatprep.subr.mxu0 %v1686
        %4286 = vmatpush1.msra.mxu0 %v1685
        %4287 = vmatprep.subr.mxu0 %v1702
        %4288 = vmatpush1.msra.mxu0 %v1701
        %4289 = vmatprep.subr.mxu0 %v1718
        %4290 = vmatpush1.msra.mxu0 %v1717
        %4291 = vmatprep.subr.mxu0 %v1734
        %4292 = vmatpush1.msra.mxu0 %v1733
        %4293 = vmatprep.subr.mxu0 %v1750
        %4294 = vmatpush1.msra.mxu0 %v1749
        %4295 = vmatprep.subr.mxu0 %v1766
        %4296 = vmatpush1.msra.mxu0 %v1765
        %4297 = vmatprep.subr.mxu0 %v1782
        %4298 = vmatpush1.msra.mxu0 %v1781
        %4299 = vmatprep.subr.mxu0 %v1798
        %4300 = vmatpush1.msra.mxu0 %v1797
        %4301 = vmatprep.subr.mxu0 %v1814
        %4302 = vmatpush1.msra.mxu0 %v1813
        %4303 = vmatprep.subr.mxu0 %v1830
        %4304 = vmatpush1.msra.mxu0 %v1829
        %4305 = vmatprep.subr.mxu0 %v1846
        %4306 = vmatpush1.msra.mxu0 %v1845
        %4307 = vmatprep.subr.mxu0 %v1862
        %4308 = vmatpush1.msra.mxu0 %v1861
        %4309 = vmatprep.subr.mxu0 %v1878
        %4310 = vmatpush1.msra.mxu0 %v1877
        %4311 = vmatprep.subr.mxu0 %v1894
        %4312 = vmatpush1.msra.mxu0 %v1893
        %4313 = vmatprep.subr.mxu0 %v1910
        %4314 = vmatpush1.msra.mxu0 %v1909
        %4315 = vmatprep.subr.mxu0 %v1926
        %4316 = vmatpush1.msra.mxu0 %v1925
        %4317 = vmatprep.subr.mxu0 %v1942
        %4318 = vmatpush1.msra.mxu0 %v1941
        %4319 = vmatprep.subr.mxu0 %v1958
        %4320 = vmatpush1.msra.mxu0 %v1957
        %4321 = vmatprep.subr.mxu0 %v1974
        %4322 = vmatpush1.msra.mxu0 %v1973
        %4323 = vmatprep.subr.mxu0 %v1990
        %4324 = vmatpush1.msra.mxu0 %v1989
        %4325 = vmatprep.subr.mxu0 %v2006
        %4326 = vmatpush1.msra.mxu0 %v2005
        %4327 = vmatprep.subr.mxu0 %v2022
        %4328 = vmatpush1.msra.mxu0 %v2021
        %4329 = vmatprep.mubr.f32.mxu0 %v3670
        %4330 = vmatmul.mubr.f32.gmra.mrb[0].mxu0 %v3662
        %v4331 = vpop.f32.mrb[0].mxu0
        %v4332 = vadd.f32 %v3592, %v4331
        %v4333 = vpop.f32.mrb[0].mxu0
        %v4334 = vadd.f32 %v3596, %v4333
        %4335 = vdwg.mxu0
        %4336 = vmatprep.subr.mxu0 %v2038
        %4337 = vmatpush1.msra.mxu0 %v2037
        %4338 = vmatprep.subr.mxu0 %v2054
        %4339 = vmatpush1.msra.mxu0 %v2053
        %4340 = vmatprep.subr.mxu0 %v2070
        %4341 = vmatpush1.msra.mxu0 %v2069
        %4342 = vmatprep.subr.mxu0 %v2086
        %4343 = vmatpush1.msra.mxu0 %v2085
        %4344 = vmatprep.subr.mxu0 %v2102
        %4345 = vmatpush1.msra.mxu0 %v2101
        %4346 = vmatprep.subr.mxu0 %v2118
        %4347 = vmatpush1.msra.mxu0 %v2117
        %4348 = vmatprep.subr.mxu0 %v2134
        %4349 = vmatpush1.msra.mxu0 %v2133
        %4350 = vmatprep.subr.mxu0 %v2150
        %4351 = vmatpush1.msra.mxu0 %v2149
        %4352 = vmatprep.subr.mxu0 %v2166
        %4353 = vmatpush1.msra.mxu0 %v2165
        %4354 = vmatprep.subr.mxu0 %v2182
        %4355 = vmatpush1.msra.mxu0 %v2181
        %4356 = vmatprep.subr.mxu0 %v2198
        %4357 = vmatpush1.msra.mxu0 %v2197
        %4358 = vmatprep.subr.mxu0 %v2214
        %4359 = vmatpush1.msra.mxu0 %v2213
        %4360 = vmatprep.subr.mxu0 %v2230
        %4361 = vmatpush1.msra.mxu0 %v2229
        %4362 = vmatprep.subr.mxu0 %v2246
        %4363 = vmatpush1.msra.mxu0 %v2245
        %4364 = vmatprep.subr.mxu0 %v2262
        %4365 = vmatpush1.msra.mxu0 %v2261
        %4366 = vmatprep.subr.mxu0 %v2278
        %4367 = vmatpush1.msra.mxu0 %v2277
        %4368 = vmatprep.subr.mxu0 %v2294
        %4369 = vmatpush1.msra.mxu0 %v2293
        %4370 = vmatprep.subr.mxu0 %v2310
        %4371 = vmatpush1.msra.mxu0 %v2309
        %4372 = vmatprep.subr.mxu0 %v2326
        %4373 = vmatpush1.msra.mxu0 %v2325
        %4374 = vmatprep.subr.mxu0 %v2342
        %4375 = vmatpush1.msra.mxu0 %v2341
        %4376 = vmatprep.subr.mxu0 %v2358
        %4377 = vmatpush1.msra.mxu0 %v2357
        %4378 = vmatprep.subr.mxu0 %v2374
        %4379 = vmatpush1.msra.mxu0 %v2373
        %4380 = vmatprep.subr.mxu0 %v2390
        %4381 = vmatpush1.msra.mxu0 %v2389
        %4382 = vmatprep.subr.mxu0 %v2406
        %4383 = vmatpush1.msra.mxu0 %v2405
        %4384 = vmatprep.subr.mxu0 %v2422
        %4385 = vmatpush1.msra.mxu0 %v2421
        %4386 = vmatprep.subr.mxu0 %v2438
        %4387 = vmatpush1.msra.mxu0 %v2437
        %4388 = vmatprep.subr.mxu0 %v2454
        %4389 = vmatpush1.msra.mxu0 %v2453
        %4390 = vmatprep.subr.mxu0 %v2470
        %4391 = vmatpush1.msra.mxu0 %v2469
        %4392 = vmatprep.subr.mxu0 %v2486
        %4393 = vmatpush1.msra.mxu0 %v2485
        %4394 = vmatprep.subr.mxu0 %v2502
        %4395 = vmatpush1.msra.mxu0 %v2501
        %4396 = vmatprep.subr.mxu0 %v2518
        %4397 = vmatpush1.msra.mxu0 %v2517
        %4398 = vmatprep.subr.mxu0 %v2534
        %4399 = vmatpush1.msra.mxu0 %v2533
        %4400 = vmatprep.mubr.f32.mxu0 %v3671
        %4401 = vmatmul.mubr.f32.gmra.mrb[0].mxu0 %v3669
        %v4402 = vpop.f32.mrb[0].mxu0
        %v4403 = vadd.f32 %v4332, %v4402
        %v4404 = vpop.f32.mrb[0].mxu0
        %v4405 = vadd.f32 %v4334, %v4404
        %4406 = vdwg.mxu0
        %4407 = vmatprep.subr.mxu0 %v2550
        %4408 = vmatpush1.msra.mxu0 %v2549
        %4409 = vmatprep.subr.mxu0 %v2566
        %4410 = vmatpush1.msra.mxu0 %v2565
        %4411 = vmatprep.subr.mxu0 %v2582
        %4412 = vmatpush1.msra.mxu0 %v2581
        %4413 = vmatprep.subr.mxu0 %v2598
        %4414 = vmatpush1.msra.mxu0 %v2597
        %4415 = vmatprep.subr.mxu0 %v2614
        %4416 = vmatpush1.msra.mxu0 %v2613
        %4417 = vmatprep.subr.mxu0 %v2630
        %4418 = vmatpush1.msra.mxu0 %v2629
        %4419 = vmatprep.subr.mxu0 %v2646
        %4420 = vmatpush1.msra.mxu0 %v2645
        %4421 = vmatprep.subr.mxu0 %v2662
        %4422 = vmatpush1.msra.mxu0 %v2661
        %4423 = vmatprep.subr.mxu0 %v2678
        %4424 = vmatpush1.msra.mxu0 %v2677
        %4425 = vmatprep.subr.mxu0 %v2694
        %4426 = vmatpush1.msra.mxu0 %v2693
        %4427 = vmatprep.subr.mxu0 %v2710
        %4428 = vmatpush1.msra.mxu0 %v2709
        %4429 = vmatprep.subr.mxu0 %v2726
        %4430 = vmatpush1.msra.mxu0 %v2725
        %4431 = vmatprep.subr.mxu0 %v2742
        %4432 = vmatpush1.msra.mxu0 %v2741
        %4433 = vmatprep.subr.mxu0 %v2758
        %4434 = vmatpush1.msra.mxu0 %v2757
        %4435 = vmatprep.subr.mxu0 %v2774
        %4436 = vmatpush1.msra.mxu0 %v2773
        %4437 = vmatprep.subr.mxu0 %v2790
        %4438 = vmatpush1.msra.mxu0 %v2789
        %4439 = vmatprep.subr.mxu0 %v2806
        %4440 = vmatpush1.msra.mxu0 %v2805
        %4441 = vmatprep.subr.mxu0 %v2822
        %4442 = vmatpush1.msra.mxu0 %v2821
        %4443 = vmatprep.subr.mxu0 %v2838
        %4444 = vmatpush1.msra.mxu0 %v2837
        %4445 = vmatprep.subr.mxu0 %v2854
        %4446 = vmatpush1.msra.mxu0 %v2853
        %4447 = vmatprep.subr.mxu0 %v2870
        %4448 = vmatpush1.msra.mxu0 %v2869
        %4449 = vmatprep.subr.mxu0 %v2886
        %4450 = vmatpush1.msra.mxu0 %v2885
        %4451 = vmatprep.subr.mxu0 %v2902
        %4452 = vmatpush1.msra.mxu0 %v2901
        %4453 = vmatprep.subr.mxu0 %v2918
        %4454 = vmatpush1.msra.mxu0 %v2917
        %4455 = vmatprep.subr.mxu0 %v2934
        %4456 = vmatpush1.msra.mxu0 %v2933
        %4457 = vmatprep.subr.mxu0 %v2950
        %4458 = vmatpush1.msra.mxu0 %v2949
        %4459 = vmatprep.subr.mxu0 %v2966
        %4460 = vmatpush1.msra.mxu0 %v2965
        %4461 = vmatprep.subr.mxu0 %v2982
        %4462 = vmatpush1.msra.mxu0 %v2981
        %4463 = vmatprep.subr.mxu0 %v2998
        %4464 = vmatpush1.msra.mxu0 %v2997
        %4465 = vmatprep.subr.mxu0 %v3014
        %4466 = vmatpush1.msra.mxu0 %v3013
        %4467 = vmatprep.subr.mxu0 %v3030
        %4468 = vmatpush1.msra.mxu0 %v3029
        %4469 = vmatprep.subr.mxu0 %v3046
        %4470 = vmatpush1.msra.mxu0 %v3045
        %4471 = vmatprep.mubr.f32.mxu0 %v3687
        %4472 = vmatmul.mubr.f32.gmra.mrb[0].mxu0 %v3679
        %v4473 = vpop.f32.mrb[0].mxu0
        %v4474 = vadd.f32 %v4403, %v4473
        %v4475 = vpop.f32.mrb[0].mxu0
        %v4476 = vadd.f32 %v4405, %v4475
        %4477 = vdwg.mxu0
        %4478 = vmatprep.subr.mxu0 %v3062
        %4479 = vmatpush1.msra.mxu0 %v3061
        %4480 = vmatprep.subr.mxu0 %v3078
        %4481 = vmatpush1.msra.mxu0 %v3077
        %4482 = vmatprep.subr.mxu0 %v3094
        %4483 = vmatpush1.msra.mxu0 %v3093
        %4484 = vmatprep.subr.mxu0 %v3110
        %4485 = vmatpush1.msra.mxu0 %v3109
        %4486 = vmatprep.subr.mxu0 %v3126
        %4487 = vmatpush1.msra.mxu0 %v3125
        %4488 = vmatprep.subr.mxu0 %v3142
        %4489 = vmatpush1.msra.mxu0 %v3141
        %4490 = vmatprep.subr.mxu0 %v3158
        %4491 = vmatpush1.msra.mxu0 %v3157
        %4492 = vmatprep.subr.mxu0 %v3174
        %4493 = vmatpush1.msra.mxu0 %v3173
        %4494 = vmatprep.subr.mxu0 %v3190
        %4495 = vmatpush1.msra.mxu0 %v3189
        %4496 = vmatprep.subr.mxu0 %v3206
        %4497 = vmatpush1.msra.mxu0 %v3205
        %4498 = vmatprep.subr.mxu0 %v3222
        %4499 = vmatpush1.msra.mxu0 %v3221
        %4500 = vmatprep.subr.mxu0 %v3238
        %4501 = vmatpush1.msra.mxu0 %v3237
        %4502 = vmatprep.subr.mxu0 %v3254
        %4503 = vmatpush1.msra.mxu0 %v3253
        %4504 = vmatprep.subr.mxu0 %v3270
        %4505 = vmatpush1.msra.mxu0 %v3269
        %4506 = vmatprep.subr.mxu0 %v3286
        %4507 = vmatpush1.msra.mxu0 %v3285
        %4508 = vmatprep.subr.mxu0 %v3302
        %4509 = vmatpush1.msra.mxu0 %v3301
        %4510 = vmatprep.subr.mxu0 %v3318
        %4511 = vmatpush1.msra.mxu0 %v3317
        %4512 = vmatprep.subr.mxu0 %v3334
        %4513 = vmatpush1.msra.mxu0 %v3333
        %4514 = vmatprep.subr.mxu0 %v3350
        %4515 = vmatpush1.msra.mxu0 %v3349
        %4516 = vmatprep.subr.mxu0 %v3366
        %4517 = vmatpush1.msra.mxu0 %v3365
        %4518 = vmatprep.subr.mxu0 %v3382
        %4519 = vmatpush1.msra.mxu0 %v3381
        %4520 = vmatprep.subr.mxu0 %v3398
        %4521 = vmatpush1.msra.mxu0 %v3397
        %4522 = vmatprep.subr.mxu0 %v3414
        %4523 = vmatpush1.msra.mxu0 %v3413
        %4524 = vmatprep.subr.mxu0 %v3430
        %4525 = vmatpush1.msra.mxu0 %v3429
        %4526 = vmatprep.subr.mxu0 %v3446
        %4527 = vmatpush1.msra.mxu0 %v3445
        %4528 = vmatprep.subr.mxu0 %v3462
        %4529 = vmatpush1.msra.mxu0 %v3461
        %4530 = vmatprep.subr.mxu0 %v3478
        %4531 = vmatpush1.msra.mxu0 %v3477
        %4532 = vmatprep.subr.mxu0 %v3494
        %4533 = vmatpush1.msra.mxu0 %v3493
        %4534 = vmatprep.subr.mxu0 %v3510
        %4535 = vmatpush1.msra.mxu0 %v3509
        %4536 = vmatprep.subr.mxu0 %v3526
        %4537 = vmatpush1.msra.mxu0 %v3525
        %4538 = vmatprep.subr.mxu0 %v3542
        %4539 = vmatpush1.msra.mxu0 %v3541
        %4540 = vmatprep.subr.mxu0 %v3558
        %4541 = vmatpush1.msra.mxu0 %v3557
        %4542 = vmatprep.mubr.f32.mxu0 %v3688
        %4543 = vmatmul.mubr.f32.gmra.mrb[0].mxu0 %v3686
        %v4544 = vpop.f32.mrb[0].mxu0
        %v4545 = vadd.f32 %v4474, %v4544
        %v4546 = vpop.f32.mrb[0].mxu0
        %v4547 = vadd.f32 %v4476, %v4546
        %4548 = vdwg.mxu0
        %4549 = vmatprep.subr.mxu0 %v1528
        %4550 = vmatpush1.msra.mxu0 %v1527
        %4551 = vmatprep.subr.mxu0 %v1544
        %4552 = vmatpush1.msra.mxu0 %v1543
        %4553 = vmatprep.subr.mxu0 %v1560
        %4554 = vmatpush1.msra.mxu0 %v1559
        %4555 = vmatprep.subr.mxu0 %v1576
        %4556 = vmatpush1.msra.mxu0 %v1575
        %4557 = vmatprep.subr.mxu0 %v1592
        %4558 = vmatpush1.msra.mxu0 %v1591
        %4559 = vmatprep.subr.mxu0 %v1608
        %4560 = vmatpush1.msra.mxu0 %v1607
        %4561 = vmatprep.subr.mxu0 %v1624
        %4562 = vmatpush1.msra.mxu0 %v1623
        %4563 = vmatprep.subr.mxu0 %v1640
        %4564 = vmatpush1.msra.mxu0 %v1639
        %4565 = vmatprep.subr.mxu0 %v1656
        %4566 = vmatpush1.msra.mxu0 %v1655
        %4567 = vmatprep.subr.mxu0 %v1672
        %4568 = vmatpush1.msra.mxu0 %v1671
        %4569 = vmatprep.subr.mxu0 %v1688
        %4570 = vmatpush1.msra.mxu0 %v1687
        %4571 = vmatprep.subr.mxu0 %v1704
        %4572 = vmatpush1.msra.mxu0 %v1703
        %4573 = vmatprep.subr.mxu0 %v1720
        %4574 = vmatpush1.msra.mxu0 %v1719
        %4575 = vmatprep.subr.mxu0 %v1736
        %4576 = vmatpush1.msra.mxu0 %v1735
        %4577 = vmatprep.subr.mxu0 %v1752
        %4578 = vmatpush1.msra.mxu0 %v1751
        %4579 = vmatprep.subr.mxu0 %v1768
        %4580 = vmatpush1.msra.mxu0 %v1767
        %4581 = vmatprep.subr.mxu0 %v1784
        %4582 = vmatpush1.msra.mxu0 %v1783
        %4583 = vmatprep.subr.mxu0 %v1800
        %4584 = vmatpush1.msra.mxu0 %v1799
        %4585 = vmatprep.subr.mxu0 %v1816
        %4586 = vmatpush1.msra.mxu0 %v1815
        %4587 = vmatprep.subr.mxu0 %v1832
        %4588 = vmatpush1.msra.mxu0 %v1831
        %4589 = vmatprep.subr.mxu0 %v1848
        %4590 = vmatpush1.msra.mxu0 %v1847
        %4591 = vmatprep.subr.mxu0 %v1864
        %4592 = vmatpush1.msra.mxu0 %v1863
        %4593 = vmatprep.subr.mxu0 %v1880
        %4594 = vmatpush1.msra.mxu0 %v1879
        %4595 = vmatprep.subr.mxu0 %v1896
        %4596 = vmatpush1.msra.mxu0 %v1895
        %4597 = vmatprep.subr.mxu0 %v1912
        %4598 = vmatpush1.msra.mxu0 %v1911
        %4599 = vmatprep.subr.mxu0 %v1928
        %4600 = vmatpush1.msra.mxu0 %v1927
        %4601 = vmatprep.subr.mxu0 %v1944
        %4602 = vmatpush1.msra.mxu0 %v1943
        %4603 = vmatprep.subr.mxu0 %v1960
        %4604 = vmatpush1.msra.mxu0 %v1959
        %4605 = vmatprep.subr.mxu0 %v1976
        %4606 = vmatpush1.msra.mxu0 %v1975
        %4607 = vmatprep.subr.mxu0 %v1992
        %4608 = vmatpush1.msra.mxu0 %v1991
        %4609 = vmatprep.subr.mxu0 %v2008
        %4610 = vmatpush1.msra.mxu0 %v2007
        %4611 = vmatprep.subr.mxu0 %v2024
        %4612 = vmatpush1.msra.mxu0 %v2023
        %4613 = vmatprep.mubr.f32.mxu0 %v3670
        %4614 = vmatmul.mubr.f32.gmra.mrb[0].mxu0 %v3662
        %v4615 = vpop.f32.mrb[0].mxu0
        %v4616 = vadd.f32 %v3600, %v4615
        %v4617 = vpop.f32.mrb[0].mxu0
        %v4618 = vadd.f32 %v3604, %v4617
        %4619 = vdwg.mxu0
        %4620 = vmatprep.subr.mxu0 %v2040
        %4621 = vmatpush1.msra.mxu0 %v2039
        %4622 = vmatprep.subr.mxu0 %v2056
        %4623 = vmatpush1.msra.mxu0 %v2055
        %4624 = vmatprep.subr.mxu0 %v2072
        %4625 = vmatpush1.msra.mxu0 %v2071
        %4626 = vmatprep.subr.mxu0 %v2088
        %4627 = vmatpush1.msra.mxu0 %v2087
        %4628 = vmatprep.subr.mxu0 %v2104
        %4629 = vmatpush1.msra.mxu0 %v2103
        %4630 = vmatprep.subr.mxu0 %v2120
        %4631 = vmatpush1.msra.mxu0 %v2119
        %4632 = vmatprep.subr.mxu0 %v2136
        %4633 = vmatpush1.msra.mxu0 %v2135
        %4634 = vmatprep.subr.mxu0 %v2152
        %4635 = vmatpush1.msra.mxu0 %v2151
        %4636 = vmatprep.subr.mxu0 %v2168
        %4637 = vmatpush1.msra.mxu0 %v2167
        %4638 = vmatprep.subr.mxu0 %v2184
        %4639 = vmatpush1.msra.mxu0 %v2183
        %4640 = vmatprep.subr.mxu0 %v2200
        %4641 = vmatpush1.msra.mxu0 %v2199
        %4642 = vmatprep.subr.mxu0 %v2216
        %4643 = vmatpush1.msra.mxu0 %v2215
        %4644 = vmatprep.subr.mxu0 %v2232
        %4645 = vmatpush1.msra.mxu0 %v2231
        %4646 = vmatprep.subr.mxu0 %v2248
        %4647 = vmatpush1.msra.mxu0 %v2247
        %4648 = vmatprep.subr.mxu0 %v2264
        %4649 = vmatpush1.msra.mxu0 %v2263
        %4650 = vmatprep.subr.mxu0 %v2280
        %4651 = vmatpush1.msra.mxu0 %v2279
        %4652 = vmatprep.subr.mxu0 %v2296
        %4653 = vmatpush1.msra.mxu0 %v2295
        %4654 = vmatprep.subr.mxu0 %v2312
        %4655 = vmatpush1.msra.mxu0 %v2311
        %4656 = vmatprep.subr.mxu0 %v2328
        %4657 = vmatpush1.msra.mxu0 %v2327
        %4658 = vmatprep.subr.mxu0 %v2344
        %4659 = vmatpush1.msra.mxu0 %v2343
        %4660 = vmatprep.subr.mxu0 %v2360
        %4661 = vmatpush1.msra.mxu0 %v2359
        %4662 = vmatprep.subr.mxu0 %v2376
        %4663 = vmatpush1.msra.mxu0 %v2375
        %4664 = vmatprep.subr.mxu0 %v2392
        %4665 = vmatpush1.msra.mxu0 %v2391
        %4666 = vmatprep.subr.mxu0 %v2408
        %4667 = vmatpush1.msra.mxu0 %v2407
        %4668 = vmatprep.subr.mxu0 %v2424
        %4669 = vmatpush1.msra.mxu0 %v2423
        %4670 = vmatprep.subr.mxu0 %v2440
        %4671 = vmatpush1.msra.mxu0 %v2439
        %4672 = vmatprep.subr.mxu0 %v2456
        %4673 = vmatpush1.msra.mxu0 %v2455
        %4674 = vmatprep.subr.mxu0 %v2472
        %4675 = vmatpush1.msra.mxu0 %v2471
        %4676 = vmatprep.subr.mxu0 %v2488
        %4677 = vmatpush1.msra.mxu0 %v2487
        %4678 = vmatprep.subr.mxu0 %v2504
        %4679 = vmatpush1.msra.mxu0 %v2503
        %4680 = vmatprep.subr.mxu0 %v2520
        %4681 = vmatpush1.msra.mxu0 %v2519
        %4682 = vmatprep.subr.mxu0 %v2536
        %4683 = vmatpush1.msra.mxu0 %v2535
        %4684 = vmatprep.mubr.f32.mxu0 %v3671
        %4685 = vmatmul.mubr.f32.gmra.mrb[0].mxu0 %v3669
        %v4686 = vpop.f32.mrb[0].mxu0
        %v4687 = vadd.f32 %v4616, %v4686
        %v4688 = vpop.f32.mrb[0].mxu0
        %v4689 = vadd.f32 %v4618, %v4688
        %4690 = vdwg.mxu0
        %4691 = vmatprep.subr.mxu0 %v2552
        %4692 = vmatpush1.msra.mxu0 %v2551
        %4693 = vmatprep.subr.mxu0 %v2568
        %4694 = vmatpush1.msra.mxu0 %v2567
        %4695 = vmatprep.subr.mxu0 %v2584
        %4696 = vmatpush1.msra.mxu0 %v2583
        %4697 = vmatprep.subr.mxu0 %v2600
        %4698 = vmatpush1.msra.mxu0 %v2599
        %4699 = vmatprep.subr.mxu0 %v2616
        %4700 = vmatpush1.msra.mxu0 %v2615
        %4701 = vmatprep.subr.mxu0 %v2632
        %4702 = vmatpush1.msra.mxu0 %v2631
        %4703 = vmatprep.subr.mxu0 %v2648
        %4704 = vmatpush1.msra.mxu0 %v2647
        %4705 = vmatprep.subr.mxu0 %v2664
        %4706 = vmatpush1.msra.mxu0 %v2663
        %4707 = vmatprep.subr.mxu0 %v2680
        %4708 = vmatpush1.msra.mxu0 %v2679
        %4709 = vmatprep.subr.mxu0 %v2696
        %4710 = vmatpush1.msra.mxu0 %v2695
        %4711 = vmatprep.subr.mxu0 %v2712
        %4712 = vmatpush1.msra.mxu0 %v2711
        %4713 = vmatprep.subr.mxu0 %v2728
        %4714 = vmatpush1.msra.mxu0 %v2727
        %4715 = vmatprep.subr.mxu0 %v2744
        %4716 = vmatpush1.msra.mxu0 %v2743
        %4717 = vmatprep.subr.mxu0 %v2760
        %4718 = vmatpush1.msra.mxu0 %v2759
        %4719 = vmatprep.subr.mxu0 %v2776
        %4720 = vmatpush1.msra.mxu0 %v2775
        %4721 = vmatprep.subr.mxu0 %v2792
        %4722 = vmatpush1.msra.mxu0 %v2791
        %4723 = vmatprep.subr.mxu0 %v2808
        %4724 = vmatpush1.msra.mxu0 %v2807
        %4725 = vmatprep.subr.mxu0 %v2824
        %4726 = vmatpush1.msra.mxu0 %v2823
        %4727 = vmatprep.subr.mxu0 %v2840
        %4728 = vmatpush1.msra.mxu0 %v2839
        %4729 = vmatprep.subr.mxu0 %v2856
        %4730 = vmatpush1.msra.mxu0 %v2855
        %4731 = vmatprep.subr.mxu0 %v2872
        %4732 = vmatpush1.msra.mxu0 %v2871
        %4733 = vmatprep.subr.mxu0 %v2888
        %4734 = vmatpush1.msra.mxu0 %v2887
        %4735 = vmatprep.subr.mxu0 %v2904
        %4736 = vmatpush1.msra.mxu0 %v2903
        %4737 = vmatprep.subr.mxu0 %v2920
        %4738 = vmatpush1.msra.mxu0 %v2919
        %4739 = vmatprep.subr.mxu0 %v2936
        %4740 = vmatpush1.msra.mxu0 %v2935
        %4741 = vmatprep.subr.mxu0 %v2952
        %4742 = vmatpush1.msra.mxu0 %v2951
        %4743 = vmatprep.subr.mxu0 %v2968
        %4744 = vmatpush1.msra.mxu0 %v2967
        %4745 = vmatprep.subr.mxu0 %v2984
        %4746 = vmatpush1.msra.mxu0 %v2983
        %4747 = vmatprep.subr.mxu0 %v3000
        %4748 = vmatpush1.msra.mxu0 %v2999
        %4749 = vmatprep.subr.mxu0 %v3016
        %4750 = vmatpush1.msra.mxu0 %v3015
        %4751 = vmatprep.subr.mxu0 %v3032
        %4752 = vmatpush1.msra.mxu0 %v3031
        %4753 = vmatprep.subr.mxu0 %v3048
        %4754 = vmatpush1.msra.mxu0 %v3047
        %4755 = vmatprep.mubr.f32.mxu0 %v3687
        %4756 = vmatmul.mubr.f32.gmra.mrb[0].mxu0 %v3679
        %v4757 = vpop.f32.mrb[0].mxu0
        %v4758 = vadd.f32 %v4687, %v4757
        %v4759 = vpop.f32.mrb[0].mxu0
        %v4760 = vadd.f32 %v4689, %v4759
        %4761 = vdwg.mxu0
        %4762 = vmatprep.subr.mxu0 %v3064
        %4763 = vmatpush1.msra.mxu0 %v3063
        %4764 = vmatprep.subr.mxu0 %v3080
        %4765 = vmatpush1.msra.mxu0 %v3079
        %4766 = vmatprep.subr.mxu0 %v3096
        %4767 = vmatpush1.msra.mxu0 %v3095
        %4768 = vmatprep.subr.mxu0 %v3112
        %4769 = vmatpush1.msra.mxu0 %v3111
        %4770 = vmatprep.subr.mxu0 %v3128
        %4771 = vmatpush1.msra.mxu0 %v3127
        %4772 = vmatprep.subr.mxu0 %v3144
        %4773 = vmatpush1.msra.mxu0 %v3143
        %4774 = vmatprep.subr.mxu0 %v3160
        %4775 = vmatpush1.msra.mxu0 %v3159
        %4776 = vmatprep.subr.mxu0 %v3176
        %4777 = vmatpush1.msra.mxu0 %v3175
        %4778 = vmatprep.subr.mxu0 %v3192
        %4779 = vmatpush1.msra.mxu0 %v3191
        %4780 = vmatprep.subr.mxu0 %v3208
        %4781 = vmatpush1.msra.mxu0 %v3207
        %4782 = vmatprep.subr.mxu0 %v3224
        %4783 = vmatpush1.msra.mxu0 %v3223
        %4784 = vmatprep.subr.mxu0 %v3240
        %4785 = vmatpush1.msra.mxu0 %v3239
        %4786 = vmatprep.subr.mxu0 %v3256
        %4787 = vmatpush1.msra.mxu0 %v3255
        %4788 = vmatprep.subr.mxu0 %v3272
        %4789 = vmatpush1.msra.mxu0 %v3271
        %4790 = vmatprep.subr.mxu0 %v3288
        %4791 = vmatpush1.msra.mxu0 %v3287
        %4792 = vmatprep.subr.mxu0 %v3304
        %4793 = vmatpush1.msra.mxu0 %v3303
        %4794 = vmatprep.subr.mxu0 %v3320
        %4795 = vmatpush1.msra.mxu0 %v3319
        %4796 = vmatprep.subr.mxu0 %v3336
        %4797 = vmatpush1.msra.mxu0 %v3335
        %4798 = vmatprep.subr.mxu0 %v3352
        %4799 = vmatpush1.msra.mxu0 %v3351
        %4800 = vmatprep.subr.mxu0 %v3368
        %4801 = vmatpush1.msra.mxu0 %v3367
        %4802 = vmatprep.subr.mxu0 %v3384
        %4803 = vmatpush1.msra.mxu0 %v3383
        %4804 = vmatprep.subr.mxu0 %v3400
        %4805 = vmatpush1.msra.mxu0 %v3399
        %4806 = vmatprep.subr.mxu0 %v3416
        %4807 = vmatpush1.msra.mxu0 %v3415
        %4808 = vmatprep.subr.mxu0 %v3432
        %4809 = vmatpush1.msra.mxu0 %v3431
        %4810 = vmatprep.subr.mxu0 %v3448
        %4811 = vmatpush1.msra.mxu0 %v3447
        %4812 = vmatprep.subr.mxu0 %v3464
        %4813 = vmatpush1.msra.mxu0 %v3463
        %4814 = vmatprep.subr.mxu0 %v3480
        %4815 = vmatpush1.msra.mxu0 %v3479
        %4816 = vmatprep.subr.mxu0 %v3496
        %4817 = vmatpush1.msra.mxu0 %v3495
        %4818 = vmatprep.subr.mxu0 %v3512
        %4819 = vmatpush1.msra.mxu0 %v3511
        %4820 = vmatprep.subr.mxu0 %v3528
        %4821 = vmatpush1.msra.mxu0 %v3527
        %4822 = vmatprep.subr.mxu0 %v3544
        %4823 = vmatpush1.msra.mxu0 %v3543
        %4824 = vmatprep.subr.mxu0 %v3560
        %4825 = vmatpush1.msra.mxu0 %v3559
        %4826 = vmatprep.mubr.f32.mxu0 %v3688
        %4827 = vmatmul.mubr.f32.gmra.mrb[0].mxu0 %v3686
        %v4828 = vpop.f32.mrb[0].mxu0
        %v4829 = vadd.f32 %v4758, %v4828
        %v4830 = vpop.f32.mrb[0].mxu0
        %v4831 = vadd.f32 %v4760, %v4830
        %4832 = vdwg.mxu0
        %4833 = vmatprep.subr.mxu0 %v1530
        %4834 = vmatpush1.msra.mxu0 %v1529
        %4835 = vmatprep.subr.mxu0 %v1546
        %4836 = vmatpush1.msra.mxu0 %v1545
        %4837 = vmatprep.subr.mxu0 %v1562
        %4838 = vmatpush1.msra.mxu0 %v1561
        %4839 = vmatprep.subr.mxu0 %v1578
        %4840 = vmatpush1.msra.mxu0 %v1577
        %4841 = vmatprep.subr.mxu0 %v1594
        %4842 = vmatpush1.msra.mxu0 %v1593
        %4843 = vmatprep.subr.mxu0 %v1610
        %4844 = vmatpush1.msra.mxu0 %v1609
        %4845 = vmatprep.subr.mxu0 %v1626
        %4846 = vmatpush1.msra.mxu0 %v1625
        %4847 = vmatprep.subr.mxu0 %v1642
        %4848 = vmatpush1.msra.mxu0 %v1641
        %4849 = vmatprep.subr.mxu0 %v1658
        %4850 = vmatpush1.msra.mxu0 %v1657
        %4851 = vmatprep.subr.mxu0 %v1674
        %4852 = vmatpush1.msra.mxu0 %v1673
        %4853 = vmatprep.subr.mxu0 %v1690
        %4854 = vmatpush1.msra.mxu0 %v1689
        %4855 = vmatprep.subr.mxu0 %v1706
        %4856 = vmatpush1.msra.mxu0 %v1705
        %4857 = vmatprep.subr.mxu0 %v1722
        %4858 = vmatpush1.msra.mxu0 %v1721
        %4859 = vmatprep.subr.mxu0 %v1738
        %4860 = vmatpush1.msra.mxu0 %v1737
        %4861 = vmatprep.subr.mxu0 %v1754
        %4862 = vmatpush1.msra.mxu0 %v1753
        %4863 = vmatprep.subr.mxu0 %v1770
        %4864 = vmatpush1.msra.mxu0 %v1769
        %4865 = vmatprep.subr.mxu0 %v1786
        %4866 = vmatpush1.msra.mxu0 %v1785
        %4867 = vmatprep.subr.mxu0 %v1802
        %4868 = vmatpush1.msra.mxu0 %v1801
        %4869 = vmatprep.subr.mxu0 %v1818
        %4870 = vmatpush1.msra.mxu0 %v1817
        %4871 = vmatprep.subr.mxu0 %v1834
        %4872 = vmatpush1.msra.mxu0 %v1833
        %4873 = vmatprep.subr.mxu0 %v1850
        %4874 = vmatpush1.msra.mxu0 %v1849
        %4875 = vmatprep.subr.mxu0 %v1866
        %4876 = vmatpush1.msra.mxu0 %v1865
        %4877 = vmatprep.subr.mxu0 %v1882
        %4878 = vmatpush1.msra.mxu0 %v1881
        %4879 = vmatprep.subr.mxu0 %v1898
        %4880 = vmatpush1.msra.mxu0 %v1897
        %4881 = vmatprep.subr.mxu0 %v1914
        %4882 = vmatpush1.msra.mxu0 %v1913
        %4883 = vmatprep.subr.mxu0 %v1930
        %4884 = vmatpush1.msra.mxu0 %v1929
        %4885 = vmatprep.subr.mxu0 %v1946
        %4886 = vmatpush1.msra.mxu0 %v1945
        %4887 = vmatprep.subr.mxu0 %v1962
        %4888 = vmatpush1.msra.mxu0 %v1961
        %4889 = vmatprep.subr.mxu0 %v1978
        %4890 = vmatpush1.msra.mxu0 %v1977
        %4891 = vmatprep.subr.mxu0 %v1994
        %4892 = vmatpush1.msra.mxu0 %v1993
        %4893 = vmatprep.subr.mxu0 %v2010
        %4894 = vmatpush1.msra.mxu0 %v2009
        %4895 = vmatprep.subr.mxu0 %v2026
        %4896 = vmatpush1.msra.mxu0 %v2025
        %4897 = vmatprep.mubr.f32.mxu0 %v3670
        %4898 = vmatmul.mubr.f32.gmra.mrb[0].mxu0 %v3662
        %v4899 = vpop.f32.mrb[0].mxu0
        %v4900 = vadd.f32 %v3608, %v4899
        %v4901 = vpop.f32.mrb[0].mxu0
        %v4902 = vadd.f32 %v3612, %v4901
        %4903 = vdwg.mxu0
        %4904 = vmatprep.subr.mxu0 %v2042
        %4905 = vmatpush1.msra.mxu0 %v2041
        %4906 = vmatprep.subr.mxu0 %v2058
        %4907 = vmatpush1.msra.mxu0 %v2057
        %4908 = vmatprep.subr.mxu0 %v2074
        %4909 = vmatpush1.msra.mxu0 %v2073
        %4910 = vmatprep.subr.mxu0 %v2090
        %4911 = vmatpush1.msra.mxu0 %v2089
        %4912 = vmatprep.subr.mxu0 %v2106
        %4913 = vmatpush1.msra.mxu0 %v2105
        %4914 = vmatprep.subr.mxu0 %v2122
        %4915 = vmatpush1.msra.mxu0 %v2121
        %4916 = vmatprep.subr.mxu0 %v2138
        %4917 = vmatpush1.msra.mxu0 %v2137
        %4918 = vmatprep.subr.mxu0 %v2154
        %4919 = vmatpush1.msra.mxu0 %v2153
        %4920 = vmatprep.subr.mxu0 %v2170
        %4921 = vmatpush1.msra.mxu0 %v2169
        %4922 = vmatprep.subr.mxu0 %v2186
        %4923 = vmatpush1.msra.mxu0 %v2185
        %4924 = vmatprep.subr.mxu0 %v2202
        %4925 = vmatpush1.msra.mxu0 %v2201
        %4926 = vmatprep.subr.mxu0 %v2218
        %4927 = vmatpush1.msra.mxu0 %v2217
        %4928 = vmatprep.subr.mxu0 %v2234
        %4929 = vmatpush1.msra.mxu0 %v2233
        %4930 = vmatprep.subr.mxu0 %v2250
        %4931 = vmatpush1.msra.mxu0 %v2249
        %4932 = vmatprep.subr.mxu0 %v2266
        %4933 = vmatpush1.msra.mxu0 %v2265
        %4934 = vmatprep.subr.mxu0 %v2282
        %4935 = vmatpush1.msra.mxu0 %v2281
        %4936 = vmatprep.subr.mxu0 %v2298
        %4937 = vmatpush1.msra.mxu0 %v2297
        %4938 = vmatprep.subr.mxu0 %v2314
        %4939 = vmatpush1.msra.mxu0 %v2313
        %4940 = vmatprep.subr.mxu0 %v2330
        %4941 = vmatpush1.msra.mxu0 %v2329
        %4942 = vmatprep.subr.mxu0 %v2346
        %4943 = vmatpush1.msra.mxu0 %v2345
        %4944 = vmatprep.subr.mxu0 %v2362
        %4945 = vmatpush1.msra.mxu0 %v2361
        %4946 = vmatprep.subr.mxu0 %v2378
        %4947 = vmatpush1.msra.mxu0 %v2377
        %4948 = vmatprep.subr.mxu0 %v2394
        %4949 = vmatpush1.msra.mxu0 %v2393
        %4950 = vmatprep.subr.mxu0 %v2410
        %4951 = vmatpush1.msra.mxu0 %v2409
        %4952 = vmatprep.subr.mxu0 %v2426
        %4953 = vmatpush1.msra.mxu0 %v2425
        %4954 = vmatprep.subr.mxu0 %v2442
        %4955 = vmatpush1.msra.mxu0 %v2441
        %4956 = vmatprep.subr.mxu0 %v2458
        %4957 = vmatpush1.msra.mxu0 %v2457
        %4958 = vmatprep.subr.mxu0 %v2474
        %4959 = vmatpush1.msra.mxu0 %v2473
        %4960 = vmatprep.subr.mxu0 %v2490
        %4961 = vmatpush1.msra.mxu0 %v2489
        %4962 = vmatprep.subr.mxu0 %v2506
        %4963 = vmatpush1.msra.mxu0 %v2505
        %4964 = vmatprep.subr.mxu0 %v2522
        %4965 = vmatpush1.msra.mxu0 %v2521
        %4966 = vmatprep.subr.mxu0 %v2538
        %4967 = vmatpush1.msra.mxu0 %v2537
        %4968 = vmatprep.mubr.f32.mxu0 %v3671
        %4969 = vmatmul.mubr.f32.gmra.mrb[0].mxu0 %v3669
        %v4970 = vpop.f32.mrb[0].mxu0
        %v4971 = vadd.f32 %v4900, %v4970
        %v4972 = vpop.f32.mrb[0].mxu0
        %v4973 = vadd.f32 %v4902, %v4972
        %4974 = vdwg.mxu0
        %4975 = vmatprep.subr.mxu0 %v2554
        %4976 = vmatpush1.msra.mxu0 %v2553
        %4977 = vmatprep.subr.mxu0 %v2570
        %4978 = vmatpush1.msra.mxu0 %v2569
        %4979 = vmatprep.subr.mxu0 %v2586
        %4980 = vmatpush1.msra.mxu0 %v2585
        %4981 = vmatprep.subr.mxu0 %v2602
        %4982 = vmatpush1.msra.mxu0 %v2601
        %4983 = vmatprep.subr.mxu0 %v2618
        %4984 = vmatpush1.msra.mxu0 %v2617
        %4985 = vmatprep.subr.mxu0 %v2634
        %4986 = vmatpush1.msra.mxu0 %v2633
        %4987 = vmatprep.subr.mxu0 %v2650
        %4988 = vmatpush1.msra.mxu0 %v2649
        %4989 = vmatprep.subr.mxu0 %v2666
        %4990 = vmatpush1.msra.mxu0 %v2665
        %4991 = vmatprep.subr.mxu0 %v2682
        %4992 = vmatpush1.msra.mxu0 %v2681
        %4993 = vmatprep.subr.mxu0 %v2698
        %4994 = vmatpush1.msra.mxu0 %v2697
        %4995 = vmatprep.subr.mxu0 %v2714
        %4996 = vmatpush1.msra.mxu0 %v2713
        %4997 = vmatprep.subr.mxu0 %v2730
        %4998 = vmatpush1.msra.mxu0 %v2729
        %4999 = vmatprep.subr.mxu0 %v2746
        %5000 = vmatpush1.msra.mxu0 %v2745
        %5001 = vmatprep.subr.mxu0 %v2762
        %5002 = vmatpush1.msra.mxu0 %v2761
        %5003 = vmatprep.subr.mxu0 %v2778
        %5004 = vmatpush1.msra.mxu0 %v2777
        %5005 = vmatprep.subr.mxu0 %v2794
        %5006 = vmatpush1.msra.mxu0 %v2793
        %5007 = vmatprep.subr.mxu0 %v2810
        %5008 = vmatpush1.msra.mxu0 %v2809
        %5009 = vmatprep.subr.mxu0 %v2826
        %5010 = vmatpush1.msra.mxu0 %v2825
        %5011 = vmatprep.subr.mxu0 %v2842
        %5012 = vmatpush1.msra.mxu0 %v2841
        %5013 = vmatprep.subr.mxu0 %v2858
        %5014 = vmatpush1.msra.mxu0 %v2857
        %5015 = vmatprep.subr.mxu0 %v2874
        %5016 = vmatpush1.msra.mxu0 %v2873
        %5017 = vmatprep.subr.mxu0 %v2890
        %5018 = vmatpush1.msra.mxu0 %v2889
        %5019 = vmatprep.subr.mxu0 %v2906
        %5020 = vmatpush1.msra.mxu0 %v2905
        %5021 = vmatprep.subr.mxu0 %v2922
        %5022 = vmatpush1.msra.mxu0 %v2921
        %5023 = vmatprep.subr.mxu0 %v2938
        %5024 = vmatpush1.msra.mxu0 %v2937
        %5025 = vmatprep.subr.mxu0 %v2954
        %5026 = vmatpush1.msra.mxu0 %v2953
        %5027 = vmatprep.subr.mxu0 %v2970
        %5028 = vmatpush1.msra.mxu0 %v2969
        %5029 = vmatprep.subr.mxu0 %v2986
        %5030 = vmatpush1.msra.mxu0 %v2985
        %5031 = vmatprep.subr.mxu0 %v3002
        %5032 = vmatpush1.msra.mxu0 %v3001
        %5033 = vmatprep.subr.mxu0 %v3018
        %5034 = vmatpush1.msra.mxu0 %v3017
        %5035 = vmatprep.subr.mxu0 %v3034
        %5036 = vmatpush1.msra.mxu0 %v3033
        %5037 = vmatprep.subr.mxu0 %v3050
        %5038 = vmatpush1.msra.mxu0 %v3049
        %5039 = vmatprep.mubr.f32.mxu0 %v3687
        %5040 = vmatmul.mubr.f32.gmra.mrb[0].mxu0 %v3679
        %v5041 = vpop.f32.mrb[0].mxu0
        %v5042 = vadd.f32 %v4971, %v5041
        %v5043 = vpop.f32.mrb[0].mxu0
        %v5044 = vadd.f32 %v4973, %v5043
        %5045 = vdwg.mxu0
        %5046 = vmatprep.subr.mxu0 %v3066
        %5047 = vmatpush1.msra.mxu0 %v3065
        %5048 = vmatprep.subr.mxu0 %v3082
        %5049 = vmatpush1.msra.mxu0 %v3081
        %5050 = vmatprep.subr.mxu0 %v3098
        %5051 = vmatpush1.msra.mxu0 %v3097
        %5052 = vmatprep.subr.mxu0 %v3114
        %5053 = vmatpush1.msra.mxu0 %v3113
        %5054 = vmatprep.subr.mxu0 %v3130
        %5055 = vmatpush1.msra.mxu0 %v3129
        %5056 = vmatprep.subr.mxu0 %v3146
        %5057 = vmatpush1.msra.mxu0 %v3145
        %5058 = vmatprep.subr.mxu0 %v3162
        %5059 = vmatpush1.msra.mxu0 %v3161
        %5060 = vmatprep.subr.mxu0 %v3178
        %5061 = vmatpush1.msra.mxu0 %v3177
        %5062 = vmatprep.subr.mxu0 %v3194
        %5063 = vmatpush1.msra.mxu0 %v3193
        %5064 = vmatprep.subr.mxu0 %v3210
        %5065 = vmatpush1.msra.mxu0 %v3209
        %5066 = vmatprep.subr.mxu0 %v3226
        %5067 = vmatpush1.msra.mxu0 %v3225
        %5068 = vmatprep.subr.mxu0 %v3242
        %5069 = vmatpush1.msra.mxu0 %v3241
        %5070 = vmatprep.subr.mxu0 %v3258
        %5071 = vmatpush1.msra.mxu0 %v3257
        %5072 = vmatprep.subr.mxu0 %v3274
        %5073 = vmatpush1.msra.mxu0 %v3273
        %5074 = vmatprep.subr.mxu0 %v3290
        %5075 = vmatpush1.msra.mxu0 %v3289
        %5076 = vmatprep.subr.mxu0 %v3306
        %5077 = vmatpush1.msra.mxu0 %v3305
        %5078 = vmatprep.subr.mxu0 %v3322
        %5079 = vmatpush1.msra.mxu0 %v3321
        %5080 = vmatprep.subr.mxu0 %v3338
        %5081 = vmatpush1.msra.mxu0 %v3337
        %5082 = vmatprep.subr.mxu0 %v3354
        %5083 = vmatpush1.msra.mxu0 %v3353
        %5084 = vmatprep.subr.mxu0 %v3370
        %5085 = vmatpush1.msra.mxu0 %v3369
        %5086 = vmatprep.subr.mxu0 %v3386
        %5087 = vmatpush1.msra.mxu0 %v3385
        %5088 = vmatprep.subr.mxu0 %v3402
        %5089 = vmatpush1.msra.mxu0 %v3401
        %5090 = vmatprep.subr.mxu0 %v3418
        %5091 = vmatpush1.msra.mxu0 %v3417
        %5092 = vmatprep.subr.mxu0 %v3434
        %5093 = vmatpush1.msra.mxu0 %v3433
        %5094 = vmatprep.subr.mxu0 %v3450
        %5095 = vmatpush1.msra.mxu0 %v3449
        %5096 = vmatprep.subr.mxu0 %v3466
        %5097 = vmatpush1.msra.mxu0 %v3465
        %5098 = vmatprep.subr.mxu0 %v3482
        %5099 = vmatpush1.msra.mxu0 %v3481
        %5100 = vmatprep.subr.mxu0 %v3498
        %5101 = vmatpush1.msra.mxu0 %v3497
        %5102 = vmatprep.subr.mxu0 %v3514
        %5103 = vmatpush1.msra.mxu0 %v3513
        %5104 = vmatprep.subr.mxu0 %v3530
        %5105 = vmatpush1.msra.mxu0 %v3529
        %5106 = vmatprep.subr.mxu0 %v3546
        %5107 = vmatpush1.msra.mxu0 %v3545
        %5108 = vmatprep.subr.mxu0 %v3562
        %5109 = vmatpush1.msra.mxu0 %v3561
        %5110 = vmatprep.mubr.f32.mxu0 %v3688
        %5111 = vmatmul.mubr.f32.gmra.mrb[0].mxu0 %v3686
        %v5112 = vpop.f32.mrb[0].mxu0
        %v5113 = vadd.f32 %v5042, %v5112
        %v5114 = vpop.f32.mrb[0].mxu0
        %v5115 = vadd.f32 %v5044, %v5114
        %5116 = vdwg.mxu0
        %5117 = vmatprep.subr.mxu0 %v1532
        %5118 = vmatpush1.msra.mxu0 %v1531
        %5119 = vmatprep.subr.mxu0 %v1548
        %5120 = vmatpush1.msra.mxu0 %v1547
        %5121 = vmatprep.subr.mxu0 %v1564
        %5122 = vmatpush1.msra.mxu0 %v1563
        %5123 = vmatprep.subr.mxu0 %v1580
        %5124 = vmatpush1.msra.mxu0 %v1579
        %5125 = vmatprep.subr.mxu0 %v1596
        %5126 = vmatpush1.msra.mxu0 %v1595
        %5127 = vmatprep.subr.mxu0 %v1612
        %5128 = vmatpush1.msra.mxu0 %v1611
        %5129 = vmatprep.subr.mxu0 %v1628
        %5130 = vmatpush1.msra.mxu0 %v1627
        %5131 = vmatprep.subr.mxu0 %v1644
        %5132 = vmatpush1.msra.mxu0 %v1643
        %5133 = vmatprep.subr.mxu0 %v1660
        %5134 = vmatpush1.msra.mxu0 %v1659
        %5135 = vmatprep.subr.mxu0 %v1676
        %5136 = vmatpush1.msra.mxu0 %v1675
        %5137 = vmatprep.subr.mxu0 %v1692
        %5138 = vmatpush1.msra.mxu0 %v1691
        %5139 = vmatprep.subr.mxu0 %v1708
        %5140 = vmatpush1.msra.mxu0 %v1707
        %5141 = vmatprep.subr.mxu0 %v1724
        %5142 = vmatpush1.msra.mxu0 %v1723
        %5143 = vmatprep.subr.mxu0 %v1740
        %5144 = vmatpush1.msra.mxu0 %v1739
        %5145 = vmatprep.subr.mxu0 %v1756
        %5146 = vmatpush1.msra.mxu0 %v1755
        %5147 = vmatprep.subr.mxu0 %v1772
        %5148 = vmatpush1.msra.mxu0 %v1771
        %5149 = vmatprep.subr.mxu0 %v1788
        %5150 = vmatpush1.msra.mxu0 %v1787
        %5151 = vmatprep.subr.mxu0 %v1804
        %5152 = vmatpush1.msra.mxu0 %v1803
        %5153 = vmatprep.subr.mxu0 %v1820
        %5154 = vmatpush1.msra.mxu0 %v1819
        %5155 = vmatprep.subr.mxu0 %v1836
        %5156 = vmatpush1.msra.mxu0 %v1835
        %5157 = vmatprep.subr.mxu0 %v1852
        %5158 = vmatpush1.msra.mxu0 %v1851
        %5159 = vmatprep.subr.mxu0 %v1868
        %5160 = vmatpush1.msra.mxu0 %v1867
        %5161 = vmatprep.subr.mxu0 %v1884
        %5162 = vmatpush1.msra.mxu0 %v1883
        %5163 = vmatprep.subr.mxu0 %v1900
        %5164 = vmatpush1.msra.mxu0 %v1899
        %5165 = vmatprep.subr.mxu0 %v1916
        %5166 = vmatpush1.msra.mxu0 %v1915
        %5167 = vmatprep.subr.mxu0 %v1932
        %5168 = vmatpush1.msra.mxu0 %v1931
        %5169 = vmatprep.subr.mxu0 %v1948
        %5170 = vmatpush1.msra.mxu0 %v1947
        %5171 = vmatprep.subr.mxu0 %v1964
        %5172 = vmatpush1.msra.mxu0 %v1963
        %5173 = vmatprep.subr.mxu0 %v1980
        %5174 = vmatpush1.msra.mxu0 %v1979
        %5175 = vmatprep.subr.mxu0 %v1996
        %5176 = vmatpush1.msra.mxu0 %v1995
        %5177 = vmatprep.subr.mxu0 %v2012
        %5178 = vmatpush1.msra.mxu0 %v2011
        %5179 = vmatprep.subr.mxu0 %v2028
        %5180 = vmatpush1.msra.mxu0 %v2027
        %5181 = vmatprep.mubr.f32.mxu0 %v3670
        %5182 = vmatmul.mubr.f32.gmra.mrb[0].mxu0 %v3662
        %v5183 = vpop.f32.mrb[0].mxu0
        %v5184 = vadd.f32 %v3616, %v5183
        %v5185 = vpop.f32.mrb[0].mxu0
        %v5186 = vadd.f32 %v3620, %v5185
        %5187 = vdwg.mxu0
        %5188 = vmatprep.subr.mxu0 %v2044
        %5189 = vmatpush1.msra.mxu0 %v2043
        %5190 = vmatprep.subr.mxu0 %v2060
        %5191 = vmatpush1.msra.mxu0 %v2059
        %5192 = vmatprep.subr.mxu0 %v2076
        %5193 = vmatpush1.msra.mxu0 %v2075
        %5194 = vmatprep.subr.mxu0 %v2092
        %5195 = vmatpush1.msra.mxu0 %v2091
        %5196 = vmatprep.subr.mxu0 %v2108
        %5197 = vmatpush1.msra.mxu0 %v2107
        %5198 = vmatprep.subr.mxu0 %v2124
        %5199 = vmatpush1.msra.mxu0 %v2123
        %5200 = vmatprep.subr.mxu0 %v2140
        %5201 = vmatpush1.msra.mxu0 %v2139
        %5202 = vmatprep.subr.mxu0 %v2156
        %5203 = vmatpush1.msra.mxu0 %v2155
        %5204 = vmatprep.subr.mxu0 %v2172
        %5205 = vmatpush1.msra.mxu0 %v2171
        %5206 = vmatprep.subr.mxu0 %v2188
        %5207 = vmatpush1.msra.mxu0 %v2187
        %5208 = vmatprep.subr.mxu0 %v2204
        %5209 = vmatpush1.msra.mxu0 %v2203
        %5210 = vmatprep.subr.mxu0 %v2220
        %5211 = vmatpush1.msra.mxu0 %v2219
        %5212 = vmatprep.subr.mxu0 %v2236
        %5213 = vmatpush1.msra.mxu0 %v2235
        %5214 = vmatprep.subr.mxu0 %v2252
        %5215 = vmatpush1.msra.mxu0 %v2251
        %5216 = vmatprep.subr.mxu0 %v2268
        %5217 = vmatpush1.msra.mxu0 %v2267
        %5218 = vmatprep.subr.mxu0 %v2284
        %5219 = vmatpush1.msra.mxu0 %v2283
        %5220 = vmatprep.subr.mxu0 %v2300
        %5221 = vmatpush1.msra.mxu0 %v2299
        %5222 = vmatprep.subr.mxu0 %v2316
        %5223 = vmatpush1.msra.mxu0 %v2315
        %5224 = vmatprep.subr.mxu0 %v2332
        %5225 = vmatpush1.msra.mxu0 %v2331
        %5226 = vmatprep.subr.mxu0 %v2348
        %5227 = vmatpush1.msra.mxu0 %v2347
        %5228 = vmatprep.subr.mxu0 %v2364
        %5229 = vmatpush1.msra.mxu0 %v2363
        %5230 = vmatprep.subr.mxu0 %v2380
        %5231 = vmatpush1.msra.mxu0 %v2379
        %5232 = vmatprep.subr.mxu0 %v2396
        %5233 = vmatpush1.msra.mxu0 %v2395
        %5234 = vmatprep.subr.mxu0 %v2412
        %5235 = vmatpush1.msra.mxu0 %v2411
        %5236 = vmatprep.subr.mxu0 %v2428
        %5237 = vmatpush1.msra.mxu0 %v2427
        %5238 = vmatprep.subr.mxu0 %v2444
        %5239 = vmatpush1.msra.mxu0 %v2443
        %5240 = vmatprep.subr.mxu0 %v2460
        %5241 = vmatpush1.msra.mxu0 %v2459
        %5242 = vmatprep.subr.mxu0 %v2476
        %5243 = vmatpush1.msra.mxu0 %v2475
        %5244 = vmatprep.subr.mxu0 %v2492
        %5245 = vmatpush1.msra.mxu0 %v2491
        %5246 = vmatprep.subr.mxu0 %v2508
        %5247 = vmatpush1.msra.mxu0 %v2507
        %5248 = vmatprep.subr.mxu0 %v2524
        %5249 = vmatpush1.msra.mxu0 %v2523
        %5250 = vmatprep.subr.mxu0 %v2540
        %5251 = vmatpush1.msra.mxu0 %v2539
        %5252 = vmatprep.mubr.f32.mxu0 %v3671
        %5253 = vmatmul.mubr.f32.gmra.mrb[0].mxu0 %v3669
        %v5254 = vpop.f32.mrb[0].mxu0
        %v5255 = vadd.f32 %v5184, %v5254
        %v5256 = vpop.f32.mrb[0].mxu0
        %v5257 = vadd.f32 %v5186, %v5256
        %5258 = vdwg.mxu0
        %5259 = vmatprep.subr.mxu0 %v2556
        %5260 = vmatpush1.msra.mxu0 %v2555
        %5261 = vmatprep.subr.mxu0 %v2572
        %5262 = vmatpush1.msra.mxu0 %v2571
        %5263 = vmatprep.subr.mxu0 %v2588
        %5264 = vmatpush1.msra.mxu0 %v2587
        %5265 = vmatprep.subr.mxu0 %v2604
        %5266 = vmatpush1.msra.mxu0 %v2603
        %5267 = vmatprep.subr.mxu0 %v2620
        %5268 = vmatpush1.msra.mxu0 %v2619
        %5269 = vmatprep.subr.mxu0 %v2636
        %5270 = vmatpush1.msra.mxu0 %v2635
        %5271 = vmatprep.subr.mxu0 %v2652
        %5272 = vmatpush1.msra.mxu0 %v2651
        %5273 = vmatprep.subr.mxu0 %v2668
        %5274 = vmatpush1.msra.mxu0 %v2667
        %5275 = vmatprep.subr.mxu0 %v2684
        %5276 = vmatpush1.msra.mxu0 %v2683
        %5277 = vmatprep.subr.mxu0 %v2700
        %5278 = vmatpush1.msra.mxu0 %v2699
        %5279 = vmatprep.subr.mxu0 %v2716
        %5280 = vmatpush1.msra.mxu0 %v2715
        %5281 = vmatprep.subr.mxu0 %v2732
        %5282 = vmatpush1.msra.mxu0 %v2731
        %5283 = vmatprep.subr.mxu0 %v2748
        %5284 = vmatpush1.msra.mxu0 %v2747
        %5285 = vmatprep.subr.mxu0 %v2764
        %5286 = vmatpush1.msra.mxu0 %v2763
        %5287 = vmatprep.subr.mxu0 %v2780
        %5288 = vmatpush1.msra.mxu0 %v2779
        %5289 = vmatprep.subr.mxu0 %v2796
        %5290 = vmatpush1.msra.mxu0 %v2795
        %5291 = vmatprep.subr.mxu0 %v2812
        %5292 = vmatpush1.msra.mxu0 %v2811
        %5293 = vmatprep.subr.mxu0 %v2828
        %5294 = vmatpush1.msra.mxu0 %v2827
        %5295 = vmatprep.subr.mxu0 %v2844
        %5296 = vmatpush1.msra.mxu0 %v2843
        %5297 = vmatprep.subr.mxu0 %v2860
        %5298 = vmatpush1.msra.mxu0 %v2859
        %5299 = vmatprep.subr.mxu0 %v2876
        %5300 = vmatpush1.msra.mxu0 %v2875
        %5301 = vmatprep.subr.mxu0 %v2892
        %5302 = vmatpush1.msra.mxu0 %v2891
        %5303 = vmatprep.subr.mxu0 %v2908
        %5304 = vmatpush1.msra.mxu0 %v2907
        %5305 = vmatprep.subr.mxu0 %v2924
        %5306 = vmatpush1.msra.mxu0 %v2923
        %5307 = vmatprep.subr.mxu0 %v2940
        %5308 = vmatpush1.msra.mxu0 %v2939
        %5309 = vmatprep.subr.mxu0 %v2956
        %5310 = vmatpush1.msra.mxu0 %v2955
        %5311 = vmatprep.subr.mxu0 %v2972
        %5312 = vmatpush1.msra.mxu0 %v2971
        %5313 = vmatprep.subr.mxu0 %v2988
        %5314 = vmatpush1.msra.mxu0 %v2987
        %5315 = vmatprep.subr.mxu0 %v3004
        %5316 = vmatpush1.msra.mxu0 %v3003
        %5317 = vmatprep.subr.mxu0 %v3020
        %5318 = vmatpush1.msra.mxu0 %v3019
        %5319 = vmatprep.subr.mxu0 %v3036
        %5320 = vmatpush1.msra.mxu0 %v3035
        %5321 = vmatprep.subr.mxu0 %v3052
        %5322 = vmatpush1.msra.mxu0 %v3051
        %5323 = vmatprep.mubr.f32.mxu0 %v3687
        %5324 = vmatmul.mubr.f32.gmra.mrb[0].mxu0 %v3679
        %v5325 = vpop.f32.mrb[0].mxu0
        %v5326 = vadd.f32 %v5255, %v5325
        %v5327 = vpop.f32.mrb[0].mxu0
        %v5328 = vadd.f32 %v5257, %v5327
        %5329 = vdwg.mxu0
        %5330 = vmatprep.subr.mxu0 %v3068
        %5331 = vmatpush1.msra.mxu0 %v3067
        %5332 = vmatprep.subr.mxu0 %v3084
        %5333 = vmatpush1.msra.mxu0 %v3083
        %5334 = vmatprep.subr.mxu0 %v3100
        %5335 = vmatpush1.msra.mxu0 %v3099
        %5336 = vmatprep.subr.mxu0 %v3116
        %5337 = vmatpush1.msra.mxu0 %v3115
        %5338 = vmatprep.subr.mxu0 %v3132
        %5339 = vmatpush1.msra.mxu0 %v3131
        %5340 = vmatprep.subr.mxu0 %v3148
        %5341 = vmatpush1.msra.mxu0 %v3147
        %5342 = vmatprep.subr.mxu0 %v3164
        %5343 = vmatpush1.msra.mxu0 %v3163
        %5344 = vmatprep.subr.mxu0 %v3180
        %5345 = vmatpush1.msra.mxu0 %v3179
        %5346 = vmatprep.subr.mxu0 %v3196
        %5347 = vmatpush1.msra.mxu0 %v3195
        %5348 = vmatprep.subr.mxu0 %v3212
        %5349 = vmatpush1.msra.mxu0 %v3211
        %5350 = vmatprep.subr.mxu0 %v3228
        %5351 = vmatpush1.msra.mxu0 %v3227
        %5352 = vmatprep.subr.mxu0 %v3244
        %5353 = vmatpush1.msra.mxu0 %v3243
        %5354 = vmatprep.subr.mxu0 %v3260
        %5355 = vmatpush1.msra.mxu0 %v3259
        %5356 = vmatprep.subr.mxu0 %v3276
        %5357 = vmatpush1.msra.mxu0 %v3275
        %5358 = vmatprep.subr.mxu0 %v3292
        %5359 = vmatpush1.msra.mxu0 %v3291
        %5360 = vmatprep.subr.mxu0 %v3308
        %5361 = vmatpush1.msra.mxu0 %v3307
        %5362 = vmatprep.subr.mxu0 %v3324
        %5363 = vmatpush1.msra.mxu0 %v3323
        %5364 = vmatprep.subr.mxu0 %v3340
        %5365 = vmatpush1.msra.mxu0 %v3339
        %5366 = vmatprep.subr.mxu0 %v3356
        %5367 = vmatpush1.msra.mxu0 %v3355
        %5368 = vmatprep.subr.mxu0 %v3372
        %5369 = vmatpush1.msra.mxu0 %v3371
        %5370 = vmatprep.subr.mxu0 %v3388
        %5371 = vmatpush1.msra.mxu0 %v3387
        %5372 = vmatprep.subr.mxu0 %v3404
        %5373 = vmatpush1.msra.mxu0 %v3403
        %5374 = vmatprep.subr.mxu0 %v3420
        %5375 = vmatpush1.msra.mxu0 %v3419
        %5376 = vmatprep.subr.mxu0 %v3436
        %5377 = vmatpush1.msra.mxu0 %v3435
        %5378 = vmatprep.subr.mxu0 %v3452
        %5379 = vmatpush1.msra.mxu0 %v3451
        %5380 = vmatprep.subr.mxu0 %v3468
        %5381 = vmatpush1.msra.mxu0 %v3467
        %5382 = vmatprep.subr.mxu0 %v3484
        %5383 = vmatpush1.msra.mxu0 %v3483
        %5384 = vmatprep.subr.mxu0 %v3500
        %5385 = vmatpush1.msra.mxu0 %v3499
        %5386 = vmatprep.subr.mxu0 %v3516
        %5387 = vmatpush1.msra.mxu0 %v3515
        %5388 = vmatprep.subr.mxu0 %v3532
        %5389 = vmatpush1.msra.mxu0 %v3531
        %5390 = vmatprep.subr.mxu0 %v3548
        %5391 = vmatpush1.msra.mxu0 %v3547
        %5392 = vmatprep.subr.mxu0 %v3564
        %5393 = vmatpush1.msra.mxu0 %v3563
        %5394 = vmatprep.mubr.f32.mxu0 %v3688
        %5395 = vmatmul.mubr.f32.gmra.mrb[0].mxu0 %v3686
        %v5396 = vpop.f32.mrb[0].mxu0
        %v5397 = vadd.f32 %v5326, %v5396
        %v5398 = vpop.f32.mrb[0].mxu0
        %v5399 = vadd.f32 %v5328, %v5398
        %5400 = vdwg.mxu0
        %5401 = vmatprep.subr.mxu0 %v1534
        %5402 = vmatpush1.msra.mxu0 %v1533
        %5403 = vmatprep.subr.mxu0 %v1550
        %5404 = vmatpush1.msra.mxu0 %v1549
        %5405 = vmatprep.subr.mxu0 %v1566
        %5406 = vmatpush1.msra.mxu0 %v1565
        %5407 = vmatprep.subr.mxu0 %v1582
        %5408 = vmatpush1.msra.mxu0 %v1581
        %5409 = vmatprep.subr.mxu0 %v1598
        %5410 = vmatpush1.msra.mxu0 %v1597
        %5411 = vmatprep.subr.mxu0 %v1614
        %5412 = vmatpush1.msra.mxu0 %v1613
        %5413 = vmatprep.subr.mxu0 %v1630
        %5414 = vmatpush1.msra.mxu0 %v1629
        %5415 = vmatprep.subr.mxu0 %v1646
        %5416 = vmatpush1.msra.mxu0 %v1645
        %5417 = vmatprep.subr.mxu0 %v1662
        %5418 = vmatpush1.msra.mxu0 %v1661
        %5419 = vmatprep.subr.mxu0 %v1678
        %5420 = vmatpush1.msra.mxu0 %v1677
        %5421 = vmatprep.subr.mxu0 %v1694
        %5422 = vmatpush1.msra.mxu0 %v1693
        %5423 = vmatprep.subr.mxu0 %v1710
        %5424 = vmatpush1.msra.mxu0 %v1709
        %5425 = vmatprep.subr.mxu0 %v1726
        %5426 = vmatpush1.msra.mxu0 %v1725
        %5427 = vmatprep.subr.mxu0 %v1742
        %5428 = vmatpush1.msra.mxu0 %v1741
        %5429 = vmatprep.subr.mxu0 %v1758
        %5430 = vmatpush1.msra.mxu0 %v1757
        %5431 = vmatprep.subr.mxu0 %v1774
        %5432 = vmatpush1.msra.mxu0 %v1773
        %5433 = vmatprep.subr.mxu0 %v1790
        %5434 = vmatpush1.msra.mxu0 %v1789
        %5435 = vmatprep.subr.mxu0 %v1806
        %5436 = vmatpush1.msra.mxu0 %v1805
        %5437 = vmatprep.subr.mxu0 %v1822
        %5438 = vmatpush1.msra.mxu0 %v1821
        %5439 = vmatprep.subr.mxu0 %v1838
        %5440 = vmatpush1.msra.mxu0 %v1837
        %5441 = vmatprep.subr.mxu0 %v1854
        %5442 = vmatpush1.msra.mxu0 %v1853
        %5443 = vmatprep.subr.mxu0 %v1870
        %5444 = vmatpush1.msra.mxu0 %v1869
        %5445 = vmatprep.subr.mxu0 %v1886
        %5446 = vmatpush1.msra.mxu0 %v1885
        %5447 = vmatprep.subr.mxu0 %v1902
        %5448 = vmatpush1.msra.mxu0 %v1901
        %5449 = vmatprep.subr.mxu0 %v1918
        %5450 = vmatpush1.msra.mxu0 %v1917
        %5451 = vmatprep.subr.mxu0 %v1934
        %5452 = vmatpush1.msra.mxu0 %v1933
        %5453 = vmatprep.subr.mxu0 %v1950
        %5454 = vmatpush1.msra.mxu0 %v1949
        %5455 = vmatprep.subr.mxu0 %v1966
        %5456 = vmatpush1.msra.mxu0 %v1965
        %5457 = vmatprep.subr.mxu0 %v1982
        %5458 = vmatpush1.msra.mxu0 %v1981
        %5459 = vmatprep.subr.mxu0 %v1998
        %5460 = vmatpush1.msra.mxu0 %v1997
        %5461 = vmatprep.subr.mxu0 %v2014
        %5462 = vmatpush1.msra.mxu0 %v2013
        %5463 = vmatprep.subr.mxu0 %v2030
        %5464 = vmatpush1.msra.mxu0 %v2029
        %5465 = vmatprep.mubr.f32.mxu0 %v3670
        %5466 = vmatmul.mubr.f32.gmra.mrb[0].mxu0 %v3662
        %v5467 = vpop.f32.mrb[0].mxu0
        %v5468 = vadd.f32 %v3624, %v5467
        %v5469 = vpop.f32.mrb[0].mxu0
        %v5470 = vadd.f32 %v3628, %v5469
        %5471 = vdwg.mxu0
        %5472 = vmatprep.subr.mxu0 %v2046
        %5473 = vmatpush1.msra.mxu0 %v2045
        %5474 = vmatprep.subr.mxu0 %v2062
        %5475 = vmatpush1.msra.mxu0 %v2061
        %5476 = vmatprep.subr.mxu0 %v2078
        %5477 = vmatpush1.msra.mxu0 %v2077
        %5478 = vmatprep.subr.mxu0 %v2094
        %5479 = vmatpush1.msra.mxu0 %v2093
        %5480 = vmatprep.subr.mxu0 %v2110
        %5481 = vmatpush1.msra.mxu0 %v2109
        %5482 = vmatprep.subr.mxu0 %v2126
        %5483 = vmatpush1.msra.mxu0 %v2125
        %5484 = vmatprep.subr.mxu0 %v2142
        %5485 = vmatpush1.msra.mxu0 %v2141
        %5486 = vmatprep.subr.mxu0 %v2158
        %5487 = vmatpush1.msra.mxu0 %v2157
        %5488 = vmatprep.subr.mxu0 %v2174
        %5489 = vmatpush1.msra.mxu0 %v2173
        %5490 = vmatprep.subr.mxu0 %v2190
        %5491 = vmatpush1.msra.mxu0 %v2189
        %5492 = vmatprep.subr.mxu0 %v2206
        %5493 = vmatpush1.msra.mxu0 %v2205
        %5494 = vmatprep.subr.mxu0 %v2222
        %5495 = vmatpush1.msra.mxu0 %v2221
        %5496 = vmatprep.subr.mxu0 %v2238
        %5497 = vmatpush1.msra.mxu0 %v2237
        %5498 = vmatprep.subr.mxu0 %v2254
        %5499 = vmatpush1.msra.mxu0 %v2253
        %5500 = vmatprep.subr.mxu0 %v2270
        %5501 = vmatpush1.msra.mxu0 %v2269
        %5502 = vmatprep.subr.mxu0 %v2286
        %5503 = vmatpush1.msra.mxu0 %v2285
        %5504 = vmatprep.subr.mxu0 %v2302
        %5505 = vmatpush1.msra.mxu0 %v2301
        %5506 = vmatprep.subr.mxu0 %v2318
        %5507 = vmatpush1.msra.mxu0 %v2317
        %5508 = vmatprep.subr.mxu0 %v2334
        %5509 = vmatpush1.msra.mxu0 %v2333
        %5510 = vmatprep.subr.mxu0 %v2350
        %5511 = vmatpush1.msra.mxu0 %v2349
        %5512 = vmatprep.subr.mxu0 %v2366
        %5513 = vmatpush1.msra.mxu0 %v2365
        %5514 = vmatprep.subr.mxu0 %v2382
        %5515 = vmatpush1.msra.mxu0 %v2381
        %5516 = vmatprep.subr.mxu0 %v2398
        %5517 = vmatpush1.msra.mxu0 %v2397
        %5518 = vmatprep.subr.mxu0 %v2414
        %5519 = vmatpush1.msra.mxu0 %v2413
        %5520 = vmatprep.subr.mxu0 %v2430
        %5521 = vmatpush1.msra.mxu0 %v2429
        %5522 = vmatprep.subr.mxu0 %v2446
        %5523 = vmatpush1.msra.mxu0 %v2445
        %5524 = vmatprep.subr.mxu0 %v2462
        %5525 = vmatpush1.msra.mxu0 %v2461
        %5526 = vmatprep.subr.mxu0 %v2478
        %5527 = vmatpush1.msra.mxu0 %v2477
        %5528 = vmatprep.subr.mxu0 %v2494
        %5529 = vmatpush1.msra.mxu0 %v2493
        %5530 = vmatprep.subr.mxu0 %v2510
        %5531 = vmatpush1.msra.mxu0 %v2509
        %5532 = vmatprep.subr.mxu0 %v2526
        %5533 = vmatpush1.msra.mxu0 %v2525
        %5534 = vmatprep.subr.mxu0 %v2542
        %5535 = vmatpush1.msra.mxu0 %v2541
        %5536 = vmatprep.mubr.f32.mxu0 %v3671
        %5537 = vmatmul.mubr.f32.gmra.mrb[0].mxu0 %v3669
        %v5538 = vpop.f32.mrb[0].mxu0
        %v5539 = vadd.f32 %v5468, %v5538
        %v5540 = vpop.f32.mrb[0].mxu0
        %v5541 = vadd.f32 %v5470, %v5540
        %5542 = vdwg.mxu0
        %5543 = vmatprep.subr.mxu0 %v2558
        %5544 = vmatpush1.msra.mxu0 %v2557
        %5545 = vmatprep.subr.mxu0 %v2574
        %5546 = vmatpush1.msra.mxu0 %v2573
        %5547 = vmatprep.subr.mxu0 %v2590
        %5548 = vmatpush1.msra.mxu0 %v2589
        %5549 = vmatprep.subr.mxu0 %v2606
        %5550 = vmatpush1.msra.mxu0 %v2605
        %5551 = vmatprep.subr.mxu0 %v2622
        %5552 = vmatpush1.msra.mxu0 %v2621
        %5553 = vmatprep.subr.mxu0 %v2638
        %5554 = vmatpush1.msra.mxu0 %v2637
        %5555 = vmatprep.subr.mxu0 %v2654
        %5556 = vmatpush1.msra.mxu0 %v2653
        %5557 = vmatprep.subr.mxu0 %v2670
        %5558 = vmatpush1.msra.mxu0 %v2669
        %5559 = vmatprep.subr.mxu0 %v2686
        %5560 = vmatpush1.msra.mxu0 %v2685
        %5561 = vmatprep.subr.mxu0 %v2702
        %5562 = vmatpush1.msra.mxu0 %v2701
        %5563 = vmatprep.subr.mxu0 %v2718
        %5564 = vmatpush1.msra.mxu0 %v2717
        %5565 = vmatprep.subr.mxu0 %v2734
        %5566 = vmatpush1.msra.mxu0 %v2733
        %5567 = vmatprep.subr.mxu0 %v2750
        %5568 = vmatpush1.msra.mxu0 %v2749
        %5569 = vmatprep.subr.mxu0 %v2766
        %5570 = vmatpush1.msra.mxu0 %v2765
        %5571 = vmatprep.subr.mxu0 %v2782
        %5572 = vmatpush1.msra.mxu0 %v2781
        %5573 = vmatprep.subr.mxu0 %v2798
        %5574 = vmatpush1.msra.mxu0 %v2797
        %5575 = vmatprep.subr.mxu0 %v2814
        %5576 = vmatpush1.msra.mxu0 %v2813
        %5577 = vmatprep.subr.mxu0 %v2830
        %5578 = vmatpush1.msra.mxu0 %v2829
        %5579 = vmatprep.subr.mxu0 %v2846
        %5580 = vmatpush1.msra.mxu0 %v2845
        %5581 = vmatprep.subr.mxu0 %v2862
        %5582 = vmatpush1.msra.mxu0 %v2861
        %5583 = vmatprep.subr.mxu0 %v2878
        %5584 = vmatpush1.msra.mxu0 %v2877
        %5585 = vmatprep.subr.mxu0 %v2894
        %5586 = vmatpush1.msra.mxu0 %v2893
        %5587 = vmatprep.subr.mxu0 %v2910
        %5588 = vmatpush1.msra.mxu0 %v2909
        %5589 = vmatprep.subr.mxu0 %v2926
        %5590 = vmatpush1.msra.mxu0 %v2925
        %5591 = vmatprep.subr.mxu0 %v2942
        %5592 = vmatpush1.msra.mxu0 %v2941
        %5593 = vmatprep.subr.mxu0 %v2958
        %5594 = vmatpush1.msra.mxu0 %v2957
        %5595 = vmatprep.subr.mxu0 %v2974
        %5596 = vmatpush1.msra.mxu0 %v2973
        %5597 = vmatprep.subr.mxu0 %v2990
        %5598 = vmatpush1.msra.mxu0 %v2989
        %5599 = vmatprep.subr.mxu0 %v3006
        %5600 = vmatpush1.msra.mxu0 %v3005
        %5601 = vmatprep.subr.mxu0 %v3022
        %5602 = vmatpush1.msra.mxu0 %v3021
        %5603 = vmatprep.subr.mxu0 %v3038
        %5604 = vmatpush1.msra.mxu0 %v3037
        %5605 = vmatprep.subr.mxu0 %v3054
        %5606 = vmatpush1.msra.mxu0 %v3053
        %5607 = vmatprep.mubr.f32.mxu0 %v3687
        %5608 = vmatmul.mubr.f32.gmra.mrb[0].mxu0 %v3679
        %v5609 = vpop.f32.mrb[0].mxu0
        %v5610 = vadd.f32 %v5539, %v5609
        %v5611 = vpop.f32.mrb[0].mxu0
        %v5612 = vadd.f32 %v5541, %v5611
        %5613 = vdwg.mxu0
        %5614 = vmatprep.subr.mxu0 %v3070
        %5615 = vmatpush1.msra.mxu0 %v3069
        %5616 = vmatprep.subr.mxu0 %v3086
        %5617 = vmatpush1.msra.mxu0 %v3085
        %5618 = vmatprep.subr.mxu0 %v3102
        %5619 = vmatpush1.msra.mxu0 %v3101
        %5620 = vmatprep.subr.mxu0 %v3118
        %5621 = vmatpush1.msra.mxu0 %v3117
        %5622 = vmatprep.subr.mxu0 %v3134
        %5623 = vmatpush1.msra.mxu0 %v3133
        %5624 = vmatprep.subr.mxu0 %v3150
        %5625 = vmatpush1.msra.mxu0 %v3149
        %5626 = vmatprep.subr.mxu0 %v3166
        %5627 = vmatpush1.msra.mxu0 %v3165
        %5628 = vmatprep.subr.mxu0 %v3182
        %5629 = vmatpush1.msra.mxu0 %v3181
        %5630 = vmatprep.subr.mxu0 %v3198
        %5631 = vmatpush1.msra.mxu0 %v3197
        %5632 = vmatprep.subr.mxu0 %v3214
        %5633 = vmatpush1.msra.mxu0 %v3213
        %5634 = vmatprep.subr.mxu0 %v3230
        %5635 = vmatpush1.msra.mxu0 %v3229
        %5636 = vmatprep.subr.mxu0 %v3246
        %5637 = vmatpush1.msra.mxu0 %v3245
        %5638 = vmatprep.subr.mxu0 %v3262
        %5639 = vmatpush1.msra.mxu0 %v3261
        %5640 = vmatprep.subr.mxu0 %v3278
        %5641 = vmatpush1.msra.mxu0 %v3277
        %5642 = vmatprep.subr.mxu0 %v3294
        %5643 = vmatpush1.msra.mxu0 %v3293
        %5644 = vmatprep.subr.mxu0 %v3310
        %5645 = vmatpush1.msra.mxu0 %v3309
        %5646 = vmatprep.subr.mxu0 %v3326
        %5647 = vmatpush1.msra.mxu0 %v3325
        %5648 = vmatprep.subr.mxu0 %v3342
        %5649 = vmatpush1.msra.mxu0 %v3341
        %5650 = vmatprep.subr.mxu0 %v3358
        %5651 = vmatpush1.msra.mxu0 %v3357
        %5652 = vmatprep.subr.mxu0 %v3374
        %5653 = vmatpush1.msra.mxu0 %v3373
        %5654 = vmatprep.subr.mxu0 %v3390
        %5655 = vmatpush1.msra.mxu0 %v3389
        %5656 = vmatprep.subr.mxu0 %v3406
        %5657 = vmatpush1.msra.mxu0 %v3405
        %5658 = vmatprep.subr.mxu0 %v3422
        %5659 = vmatpush1.msra.mxu0 %v3421
        %5660 = vmatprep.subr.mxu0 %v3438
        %5661 = vmatpush1.msra.mxu0 %v3437
        %5662 = vmatprep.subr.mxu0 %v3454
        %5663 = vmatpush1.msra.mxu0 %v3453
        %5664 = vmatprep.subr.mxu0 %v3470
        %5665 = vmatpush1.msra.mxu0 %v3469
        %5666 = vmatprep.subr.mxu0 %v3486
        %5667 = vmatpush1.msra.mxu0 %v3485
        %5668 = vmatprep.subr.mxu0 %v3502
        %5669 = vmatpush1.msra.mxu0 %v3501
        %5670 = vmatprep.subr.mxu0 %v3518
        %5671 = vmatpush1.msra.mxu0 %v3517
        %5672 = vmatprep.subr.mxu0 %v3534
        %5673 = vmatpush1.msra.mxu0 %v3533
        %5674 = vmatprep.subr.mxu0 %v3550
        %5675 = vmatpush1.msra.mxu0 %v3549
        %5676 = vmatprep.subr.mxu0 %v3566
        %5677 = vmatpush1.msra.mxu0 %v3565
        %5678 = vmatprep.mubr.f32.mxu0 %v3688
        %5679 = vmatmul.mubr.f32.gmra.mrb[0].mxu0 %v3686
        %v5680 = vpop.f32.mrb[0].mxu0
        %v5681 = vadd.f32 %v5610, %v5680
        %v5682 = vpop.f32.mrb[0].mxu0
        %v5683 = vadd.f32 %v5612, %v5682
        %5684 = vdwg.mxu0
        %5685 = vmatprep.subr.mxu0 %v1536
        %5686 = vmatpush1.msra.mxu0 %v1535
        %5687 = vmatprep.subr.mxu0 %v1552
        %5688 = vmatpush1.msra.mxu0 %v1551
        %5689 = vmatprep.subr.mxu0 %v1568
        %5690 = vmatpush1.msra.mxu0 %v1567
        %5691 = vmatprep.subr.mxu0 %v1584
        %5692 = vmatpush1.msra.mxu0 %v1583
        %5693 = vmatprep.subr.mxu0 %v1600
        %5694 = vmatpush1.msra.mxu0 %v1599
        %5695 = vmatprep.subr.mxu0 %v1616
        %5696 = vmatpush1.msra.mxu0 %v1615
        %5697 = vmatprep.subr.mxu0 %v1632
        %5698 = vmatpush1.msra.mxu0 %v1631
        %5699 = vmatprep.subr.mxu0 %v1648
        %5700 = vmatpush1.msra.mxu0 %v1647
        %5701 = vmatprep.subr.mxu0 %v1664
        %5702 = vmatpush1.msra.mxu0 %v1663
        %5703 = vmatprep.subr.mxu0 %v1680
        %5704 = vmatpush1.msra.mxu0 %v1679
        %5705 = vmatprep.subr.mxu0 %v1696
        %5706 = vmatpush1.msra.mxu0 %v1695
        %5707 = vmatprep.subr.mxu0 %v1712
        %5708 = vmatpush1.msra.mxu0 %v1711
        %5709 = vmatprep.subr.mxu0 %v1728
        %5710 = vmatpush1.msra.mxu0 %v1727
        %5711 = vmatprep.subr.mxu0 %v1744
        %5712 = vmatpush1.msra.mxu0 %v1743
        %5713 = vmatprep.subr.mxu0 %v1760
        %5714 = vmatpush1.msra.mxu0 %v1759
        %5715 = vmatprep.subr.mxu0 %v1776
        %5716 = vmatpush1.msra.mxu0 %v1775
        %5717 = vmatprep.subr.mxu0 %v1792
        %5718 = vmatpush1.msra.mxu0 %v1791
        %5719 = vmatprep.subr.mxu0 %v1808
        %5720 = vmatpush1.msra.mxu0 %v1807
        %5721 = vmatprep.subr.mxu0 %v1824
        %5722 = vmatpush1.msra.mxu0 %v1823
        %5723 = vmatprep.subr.mxu0 %v1840
        %5724 = vmatpush1.msra.mxu0 %v1839
        %5725 = vmatprep.subr.mxu0 %v1856
        %5726 = vmatpush1.msra.mxu0 %v1855
        %5727 = vmatprep.subr.mxu0 %v1872
        %5728 = vmatpush1.msra.mxu0 %v1871
        %5729 = vmatprep.subr.mxu0 %v1888
        %5730 = vmatpush1.msra.mxu0 %v1887
        %5731 = vmatprep.subr.mxu0 %v1904
        %5732 = vmatpush1.msra.mxu0 %v1903
        %5733 = vmatprep.subr.mxu0 %v1920
        %5734 = vmatpush1.msra.mxu0 %v1919
        %5735 = vmatprep.subr.mxu0 %v1936
        %5736 = vmatpush1.msra.mxu0 %v1935
        %5737 = vmatprep.subr.mxu0 %v1952
        %5738 = vmatpush1.msra.mxu0 %v1951
        %5739 = vmatprep.subr.mxu0 %v1968
        %5740 = vmatpush1.msra.mxu0 %v1967
        %5741 = vmatprep.subr.mxu0 %v1984
        %5742 = vmatpush1.msra.mxu0 %v1983
        %5743 = vmatprep.subr.mxu0 %v2000
        %5744 = vmatpush1.msra.mxu0 %v1999
        %5745 = vmatprep.subr.mxu0 %v2016
        %5746 = vmatpush1.msra.mxu0 %v2015
        %5747 = vmatprep.subr.mxu0 %v2032
        %5748 = vmatpush1.msra.mxu0 %v2031
        %5749 = vmatprep.mubr.f32.mxu0 %v3670
        %5750 = vmatmul.mubr.f32.gmra.mrb[0].mxu0 %v3662
        %v5751 = vpop.f32.mrb[0].mxu0
        %v5752 = vadd.f32 %v3632, %v5751
        %v5753 = vpop.f32.mrb[0].mxu0
        %v5754 = vadd.f32 %v3636, %v5753
        %5755 = vdwg.mxu0
        %5756 = vmatprep.subr.mxu0 %v2048
        %5757 = vmatpush1.msra.mxu0 %v2047
        %5758 = vmatprep.subr.mxu0 %v2064
        %5759 = vmatpush1.msra.mxu0 %v2063
        %5760 = vmatprep.subr.mxu0 %v2080
        %5761 = vmatpush1.msra.mxu0 %v2079
        %5762 = vmatprep.subr.mxu0 %v2096
        %5763 = vmatpush1.msra.mxu0 %v2095
        %5764 = vmatprep.subr.mxu0 %v2112
        %5765 = vmatpush1.msra.mxu0 %v2111
        %5766 = vmatprep.subr.mxu0 %v2128
        %5767 = vmatpush1.msra.mxu0 %v2127
        %5768 = vmatprep.subr.mxu0 %v2144
        %5769 = vmatpush1.msra.mxu0 %v2143
        %5770 = vmatprep.subr.mxu0 %v2160
        %5771 = vmatpush1.msra.mxu0 %v2159
        %5772 = vmatprep.subr.mxu0 %v2176
        %5773 = vmatpush1.msra.mxu0 %v2175
        %5774 = vmatprep.subr.mxu0 %v2192
        %5775 = vmatpush1.msra.mxu0 %v2191
        %5776 = vmatprep.subr.mxu0 %v2208
        %5777 = vmatpush1.msra.mxu0 %v2207
        %5778 = vmatprep.subr.mxu0 %v2224
        %5779 = vmatpush1.msra.mxu0 %v2223
        %5780 = vmatprep.subr.mxu0 %v2240
        %5781 = vmatpush1.msra.mxu0 %v2239
        %5782 = vmatprep.subr.mxu0 %v2256
        %5783 = vmatpush1.msra.mxu0 %v2255
        %5784 = vmatprep.subr.mxu0 %v2272
        %5785 = vmatpush1.msra.mxu0 %v2271
        %5786 = vmatprep.subr.mxu0 %v2288
        %5787 = vmatpush1.msra.mxu0 %v2287
        %5788 = vmatprep.subr.mxu0 %v2304
        %5789 = vmatpush1.msra.mxu0 %v2303
        %5790 = vmatprep.subr.mxu0 %v2320
        %5791 = vmatpush1.msra.mxu0 %v2319
        %5792 = vmatprep.subr.mxu0 %v2336
        %5793 = vmatpush1.msra.mxu0 %v2335
        %5794 = vmatprep.subr.mxu0 %v2352
        %5795 = vmatpush1.msra.mxu0 %v2351
        %5796 = vmatprep.subr.mxu0 %v2368
        %5797 = vmatpush1.msra.mxu0 %v2367
        %5798 = vmatprep.subr.mxu0 %v2384
        %5799 = vmatpush1.msra.mxu0 %v2383
        %5800 = vmatprep.subr.mxu0 %v2400
        %5801 = vmatpush1.msra.mxu0 %v2399
        %5802 = vmatprep.subr.mxu0 %v2416
        %5803 = vmatpush1.msra.mxu0 %v2415
        %5804 = vmatprep.subr.mxu0 %v2432
        %5805 = vmatpush1.msra.mxu0 %v2431
        %5806 = vmatprep.subr.mxu0 %v2448
        %5807 = vmatpush1.msra.mxu0 %v2447
        %5808 = vmatprep.subr.mxu0 %v2464
        %5809 = vmatpush1.msra.mxu0 %v2463
        %5810 = vmatprep.subr.mxu0 %v2480
        %5811 = vmatpush1.msra.mxu0 %v2479
        %5812 = vmatprep.subr.mxu0 %v2496
        %5813 = vmatpush1.msra.mxu0 %v2495
        %5814 = vmatprep.subr.mxu0 %v2512
        %5815 = vmatpush1.msra.mxu0 %v2511
        %5816 = vmatprep.subr.mxu0 %v2528
        %5817 = vmatpush1.msra.mxu0 %v2527
        %5818 = vmatprep.subr.mxu0 %v2544
        %5819 = vmatpush1.msra.mxu0 %v2543
        %5820 = vmatprep.mubr.f32.mxu0 %v3671
        %5821 = vmatmul.mubr.f32.gmra.mrb[0].mxu0 %v3669
        %v5822 = vpop.f32.mrb[0].mxu0
        %v5823 = vadd.f32 %v5752, %v5822
        %v5824 = vpop.f32.mrb[0].mxu0
        %v5825 = vadd.f32 %v5754, %v5824
        %5826 = vdwg.mxu0
        %5827 = vmatprep.subr.mxu0 %v2560
        %5828 = vmatpush1.msra.mxu0 %v2559
        %5829 = vmatprep.subr.mxu0 %v2576
        %5830 = vmatpush1.msra.mxu0 %v2575
        %5831 = vmatprep.subr.mxu0 %v2592
        %5832 = vmatpush1.msra.mxu0 %v2591
        %5833 = vmatprep.subr.mxu0 %v2608
        %5834 = vmatpush1.msra.mxu0 %v2607
        %5835 = vmatprep.subr.mxu0 %v2624
        %5836 = vmatpush1.msra.mxu0 %v2623
        %5837 = vmatprep.subr.mxu0 %v2640
        %5838 = vmatpush1.msra.mxu0 %v2639
        %5839 = vmatprep.subr.mxu0 %v2656
        %5840 = vmatpush1.msra.mxu0 %v2655
        %5841 = vmatprep.subr.mxu0 %v2672
        %5842 = vmatpush1.msra.mxu0 %v2671
        %5843 = vmatprep.subr.mxu0 %v2688
        %5844 = vmatpush1.msra.mxu0 %v2687
        %5845 = vmatprep.subr.mxu0 %v2704
        %5846 = vmatpush1.msra.mxu0 %v2703
        %5847 = vmatprep.subr.mxu0 %v2720
        %5848 = vmatpush1.msra.mxu0 %v2719
        %5849 = vmatprep.subr.mxu0 %v2736
        %5850 = vmatpush1.msra.mxu0 %v2735
        %5851 = vmatprep.subr.mxu0 %v2752
        %5852 = vmatpush1.msra.mxu0 %v2751
        %5853 = vmatprep.subr.mxu0 %v2768
        %5854 = vmatpush1.msra.mxu0 %v2767
        %5855 = vmatprep.subr.mxu0 %v2784
        %5856 = vmatpush1.msra.mxu0 %v2783
        %5857 = vmatprep.subr.mxu0 %v2800
        %5858 = vmatpush1.msra.mxu0 %v2799
        %5859 = vmatprep.subr.mxu0 %v2816
        %5860 = vmatpush1.msra.mxu0 %v2815
        %5861 = vmatprep.subr.mxu0 %v2832
        %5862 = vmatpush1.msra.mxu0 %v2831
        %5863 = vmatprep.subr.mxu0 %v2848
        %5864 = vmatpush1.msra.mxu0 %v2847
        %5865 = vmatprep.subr.mxu0 %v2864
        %5866 = vmatpush1.msra.mxu0 %v2863
        %5867 = vmatprep.subr.mxu0 %v2880
        %5868 = vmatpush1.msra.mxu0 %v2879
        %5869 = vmatprep.subr.mxu0 %v2896
        %5870 = vmatpush1.msra.mxu0 %v2895
        %5871 = vmatprep.subr.mxu0 %v2912
        %5872 = vmatpush1.msra.mxu0 %v2911
        %5873 = vmatprep.subr.mxu0 %v2928
        %5874 = vmatpush1.msra.mxu0 %v2927
        %5875 = vmatprep.subr.mxu0 %v2944
        %5876 = vmatpush1.msra.mxu0 %v2943
        %5877 = vmatprep.subr.mxu0 %v2960
        %5878 = vmatpush1.msra.mxu0 %v2959
        %5879 = vmatprep.subr.mxu0 %v2976
        %5880 = vmatpush1.msra.mxu0 %v2975
        %5881 = vmatprep.subr.mxu0 %v2992
        %5882 = vmatpush1.msra.mxu0 %v2991
        %5883 = vmatprep.subr.mxu0 %v3008
        %5884 = vmatpush1.msra.mxu0 %v3007
        %5885 = vmatprep.subr.mxu0 %v3024
        %5886 = vmatpush1.msra.mxu0 %v3023
        %5887 = vmatprep.subr.mxu0 %v3040
        %5888 = vmatpush1.msra.mxu0 %v3039
        %5889 = vmatprep.subr.mxu0 %v3056
        %5890 = vmatpush1.msra.mxu0 %v3055
        %5891 = vmatprep.mubr.f32.mxu0 %v3687
        %5892 = vmatmul.mubr.f32.gmra.mrb[0].mxu0 %v3679
        %v5893 = vpop.f32.mrb[0].mxu0
        %v5894 = vadd.f32 %v5823, %v5893
        %v5895 = vpop.f32.mrb[0].mxu0
        %v5896 = vadd.f32 %v5825, %v5895
        %5897 = vdwg.mxu0
        %5898 = vmatprep.subr.mxu0 %v3072
        %5899 = vmatpush1.msra.mxu0 %v3071
        %5900 = vmatprep.subr.mxu0 %v3088
        %5901 = vmatpush1.msra.mxu0 %v3087
        %5902 = vmatprep.subr.mxu0 %v3104
        %5903 = vmatpush1.msra.mxu0 %v3103
        %5904 = vmatprep.subr.mxu0 %v3120
        %5905 = vmatpush1.msra.mxu0 %v3119
        %5906 = vmatprep.subr.mxu0 %v3136
        %5907 = vmatpush1.msra.mxu0 %v3135
        %5908 = vmatprep.subr.mxu0 %v3152
        %5909 = vmatpush1.msra.mxu0 %v3151
        %5910 = vmatprep.subr.mxu0 %v3168
        %5911 = vmatpush1.msra.mxu0 %v3167
        %5912 = vmatprep.subr.mxu0 %v3184
        %5913 = vmatpush1.msra.mxu0 %v3183
        %5914 = vmatprep.subr.mxu0 %v3200
        %5915 = vmatpush1.msra.mxu0 %v3199
        %5916 = vmatprep.subr.mxu0 %v3216
        %5917 = vmatpush1.msra.mxu0 %v3215
        %5918 = vmatprep.subr.mxu0 %v3232
        %5919 = vmatpush1.msra.mxu0 %v3231
        %5920 = vmatprep.subr.mxu0 %v3248
        %5921 = vmatpush1.msra.mxu0 %v3247
        %5922 = vmatprep.subr.mxu0 %v3264
        %5923 = vmatpush1.msra.mxu0 %v3263
        %5924 = vmatprep.subr.mxu0 %v3280
        %5925 = vmatpush1.msra.mxu0 %v3279
        %5926 = vmatprep.subr.mxu0 %v3296
        %5927 = vmatpush1.msra.mxu0 %v3295
        %5928 = vmatprep.subr.mxu0 %v3312
        %5929 = vmatpush1.msra.mxu0 %v3311
        %5930 = vmatprep.subr.mxu0 %v3328
        %5931 = vmatpush1.msra.mxu0 %v3327
        %5932 = vmatprep.subr.mxu0 %v3344
        %5933 = vmatpush1.msra.mxu0 %v3343
        %5934 = vmatprep.subr.mxu0 %v3360
        %5935 = vmatpush1.msra.mxu0 %v3359
        %5936 = vmatprep.subr.mxu0 %v3376
        %5937 = vmatpush1.msra.mxu0 %v3375
        %5938 = vmatprep.subr.mxu0 %v3392
        %5939 = vmatpush1.msra.mxu0 %v3391
        %5940 = vmatprep.subr.mxu0 %v3408
        %5941 = vmatpush1.msra.mxu0 %v3407
        %5942 = vmatprep.subr.mxu0 %v3424
        %5943 = vmatpush1.msra.mxu0 %v3423
        %5944 = vmatprep.subr.mxu0 %v3440
        %5945 = vmatpush1.msra.mxu0 %v3439
        %5946 = vmatprep.subr.mxu0 %v3456
        %5947 = vmatpush1.msra.mxu0 %v3455
        %5948 = vmatprep.subr.mxu0 %v3472
        %5949 = vmatpush1.msra.mxu0 %v3471
        %5950 = vmatprep.subr.mxu0 %v3488
        %5951 = vmatpush1.msra.mxu0 %v3487
        %5952 = vmatprep.subr.mxu0 %v3504
        %5953 = vmatpush1.msra.mxu0 %v3503
        %5954 = vmatprep.subr.mxu0 %v3520
        %5955 = vmatpush1.msra.mxu0 %v3519
        %5956 = vmatprep.subr.mxu0 %v3536
        %5957 = vmatpush1.msra.mxu0 %v3535
        %5958 = vmatprep.subr.mxu0 %v3552
        %5959 = vmatpush1.msra.mxu0 %v3551
        %5960 = vmatprep.subr.mxu0 %v3568
        %5961 = vmatpush1.msra.mxu0 %v3567
        %5962 = vmatprep.mubr.f32.mxu0 %v3688
        %5963 = vmatmul.mubr.f32.gmra.mrb[0].mxu0 %v3686
        %v5964 = vpop.f32.mrb[0].mxu0
        %v5965 = vadd.f32 %v5894, %v5964
        %v5966 = vpop.f32.mrb[0].mxu0
        %v5967 = vadd.f32 %v5896, %v5966
        %5968 = vdwg.mxu0
        %vm5969 = vcmp.ge.f32.partialorder %v3977, 0.0
        %vm5970 = vcmp.ge.f32.partialorder %v3979, 0.0
        %vm5971 = vcmp.ge.f32.partialorder %v4261, 0.0
        %vm5972 = vcmp.ge.f32.partialorder %v4263, 0.0
        %vm5973 = vcmp.ge.f32.partialorder %v4545, 0.0
        %vm5974 = vcmp.ge.f32.partialorder %v4547, 0.0
        %vm5975 = vcmp.ge.f32.partialorder %v4829, 0.0
        %vm5976 = vcmp.ge.f32.partialorder %v4831, 0.0
        %vm5977 = vcmp.ge.f32.partialorder %v5113, 0.0
        %vm5978 = vcmp.ge.f32.partialorder %v5115, 0.0
        %vm5979 = vcmp.ge.f32.partialorder %v5397, 0.0
        %vm5980 = vcmp.ge.f32.partialorder %v5399, 0.0
        %vm5981 = vcmp.ge.f32.partialorder %v5681, 0.0
        %vm5982 = vcmp.ge.f32.partialorder %v5683, 0.0
        %vm5983 = vcmp.ge.f32.partialorder %v5965, 0.0
        %vm5984 = vcmp.ge.f32.partialorder %v5967, 0.0
        %v5985 = vmul.f32 %v3977, 0.2
        %v5986 = vmul.f32 %v3979, 0.2
        %v5987 = vmul.f32 %v4261, 0.2
        %v5988 = vmul.f32 %v4263, 0.2
        %v5989 = vmul.f32 %v4545, 0.2
        %v5990 = vmul.f32 %v4547, 0.2
        %v5991 = vmul.f32 %v4829, 0.2
        %v5992 = vmul.f32 %v4831, 0.2
        %v5993 = vmul.f32 %v5113, 0.2
        %v5994 = vmul.f32 %v5115, 0.2
        %v5995 = vmul.f32 %v5397, 0.2
        %v5996 = vmul.f32 %v5399, 0.2
        %v5997 = vmul.f32 %v5681, 0.2
        %v5998 = vmul.f32 %v5683, 0.2
        %v5999 = vmul.f32 %v5965, 0.2
        %v6000 = vmul.f32 %v5967, 0.2
        %v6001 = vsel %vm5969, %v3977, %v5985
        %v6002 = vsel %vm5970, %v3979, %v5986
        %v6003 = vsel %vm5971, %v4261, %v5987
        %v6004 = vsel %vm5972, %v4263, %v5988
        %v6005 = vsel %vm5973, %v4545, %v5989
        %v6006 = vsel %vm5974, %v4547, %v5990
        %v6007 = vsel %vm5975, %v4829, %v5991
        %v6008 = vsel %vm5976, %v4831, %v5992
        %v6009 = vsel %vm5977, %v5113, %v5993
        %v6010 = vsel %vm5978, %v5115, %v5994
        %v6011 = vsel %vm5979, %v5397, %v5995
        %v6012 = vsel %vm5980, %v5399, %v5996
        %v6013 = vsel %vm5981, %v5681, %v5997
        %v6014 = vsel %vm5982, %v5683, %v5998
        %v6015 = vsel %vm5983, %v5965, %v5999
        %v6016 = vsel %vm5984, %v5967, %v6000
        %s6017 = smul.u32 %s24, 2
        %s6018 = sadd.s32 %s6017, 1
        %v6021 = vcombine.low %v6001, %v6002
        %v6023 = vunpack.c.l.s4 1966171168
        %v6024 = vunpack.c.0.s8 %v6023
        %v6025 = vlaneseq
        %v6026 = vshrl.u32 %v6025, 7
        %v6027 = vsub.s32 %v6024, %v6026
        %v6028 = vrot.slane %v6021, %v6027
        %v6029 = vcombine.high %v6028, %v6028
        %v6031 = vunpack.c.l.s4 1966171168
        %v6032 = vunpack.c.0.s8 %v6031
        %v6033 = vlaneseq
        %v6034 = vshrl.u32 %v6033, 7
        %v6035 = vsub.s32 %v6032, %v6034
        %v6036 = vrot.slane %v6028, %v6035
        %v6038 = vunpack.c.l.s4 1966171168
        %v6039 = vunpack.c.0.s8 %v6038
        %v6040 = vlaneseq
        %v6041 = vshrl.u32 %v6040, 7
        %v6042 = vsub.s32 %v6039, %v6041
        %v6043 = vrot.slane %v6029, %v6042
        %s6046 = smul.u32 %s6018, 2
        %s6047 = smul.addr %s6046, 8
        %s6048 = scalar_lea.vmem [#allocation2], %s6047
        %v6049 = vlaneseq
        %vm6050 = vcmp.ge.s32.totalorder %v6049, 0
        %vm6051 = vcmp.lt.s32.totalorder %v6049, 256
        %vm6052 = vmand %vm6050, %vm6051
        %s6053 = scalar_lea.vmem %s6048, 1 [#allocation2]
        %6054 = vst.msk [vmem:[%s6053] ss:$8 sm:$0x3] %vm6052, %v6036
        %6055 = vst.msk [vmem:[%s6053] ss:$8 sm:$0x0] %vm6052, %v6036
        %s6056 = scalar_lea.vmem %s6048, 97 [#allocation2]
        %6057 = vst.msk [vmem:[%s6056] ss:$8 sm:$0x3] %vm6052, %v6043
        %6058 = vst.msk [vmem:[%s6056] ss:$8 sm:$0x0] %vm6052, %v6043
        %v6061 = vcombine.low %v6003, %v6004
        %v6063 = vunpack.c.l.s4 1966171168
        %v6064 = vunpack.c.0.s8 %v6063
        %v6065 = vlaneseq
        %v6066 = vshrl.u32 %v6065, 7
        %v6067 = vsub.s32 %v6064, %v6066
        %v6068 = vrot.slane %v6061, %v6067
        %v6069 = vcombine.high %v6068, %v6068
        %v6071 = vunpack.c.l.s4 1966171168
        %v6072 = vunpack.c.0.s8 %v6071
        %v6073 = vlaneseq
        %v6074 = vshrl.u32 %v6073, 7
        %v6075 = vsub.s32 %v6072, %v6074
        %v6076 = vrot.slane %v6068, %v6075
        %v6078 = vunpack.c.l.s4 1966171168
        %v6079 = vunpack.c.0.s8 %v6078
        %v6080 = vlaneseq
        %v6081 = vshrl.u32 %v6080, 7
        %v6082 = vsub.s32 %v6079, %v6081
        %v6083 = vrot.slane %v6069, %v6082
        %s6086 = scalar_lea.vmem %s6048, 2 [#allocation2]
        %6087 = vst.msk [vmem:[%s6086] ss:$8 sm:$0x3] %vm6052, %v6076
        %6088 = vst.msk [vmem:[%s6086] ss:$8 sm:$0x0] %vm6052, %v6076
        %s6089 = scalar_lea.vmem %s6048, 98 [#allocation2]
        %6090 = vst.msk [vmem:[%s6089] ss:$8 sm:$0x3] %vm6052, %v6083
        %6091 = vst.msk [vmem:[%s6089] ss:$8 sm:$0x0] %vm6052, %v6083
        %v6094 = vcombine.low %v6005, %v6006
        %v6096 = vunpack.c.l.s4 1966171168
        %v6097 = vunpack.c.0.s8 %v6096
        %v6098 = vlaneseq
        %v6099 = vshrl.u32 %v6098, 7
        %v6100 = vsub.s32 %v6097, %v6099
        %v6101 = vrot.slane %v6094, %v6100
        %v6102 = vcombine.high %v6101, %v6101
        %v6104 = vunpack.c.l.s4 1966171168
        %v6105 = vunpack.c.0.s8 %v6104
        %v6106 = vlaneseq
        %v6107 = vshrl.u32 %v6106, 7
        %v6108 = vsub.s32 %v6105, %v6107
        %v6109 = vrot.slane %v6101, %v6108
        %v6111 = vunpack.c.l.s4 1966171168
        %v6112 = vunpack.c.0.s8 %v6111
        %v6113 = vlaneseq
        %v6114 = vshrl.u32 %v6113, 7
        %v6115 = vsub.s32 %v6112, %v6114
        %v6116 = vrot.slane %v6102, %v6115
        %s6119 = scalar_lea.vmem %s6048, 3 [#allocation2]
        %6120 = vst.msk [vmem:[%s6119] ss:$8 sm:$0x3] %vm6052, %v6109
        %6121 = vst.msk [vmem:[%s6119] ss:$8 sm:$0x0] %vm6052, %v6109
        %s6122 = scalar_lea.vmem %s6048, 99 [#allocation2]
        %6123 = vst.msk [vmem:[%s6122] ss:$8 sm:$0x3] %vm6052, %v6116
        %6124 = vst.msk [vmem:[%s6122] ss:$8 sm:$0x0] %vm6052, %v6116
        %v6127 = vcombine.low %v6007, %v6008
        %v6129 = vunpack.c.l.s4 1966171168
        %v6130 = vunpack.c.0.s8 %v6129
        %v6131 = vlaneseq
        %v6132 = vshrl.u32 %v6131, 7
        %v6133 = vsub.s32 %v6130, %v6132
        %v6134 = vrot.slane %v6127, %v6133
        %v6135 = vcombine.high %v6134, %v6134
        %v6137 = vunpack.c.l.s4 1966171168
        %v6138 = vunpack.c.0.s8 %v6137
        %v6139 = vlaneseq
        %v6140 = vshrl.u32 %v6139, 7
        %v6141 = vsub.s32 %v6138, %v6140
        %v6142 = vrot.slane %v6134, %v6141
        %v6144 = vunpack.c.l.s4 1966171168
        %v6145 = vunpack.c.0.s8 %v6144
        %v6146 = vlaneseq
        %v6147 = vshrl.u32 %v6146, 7
        %v6148 = vsub.s32 %v6145, %v6147
        %v6149 = vrot.slane %v6135, %v6148
        %s6152 = scalar_lea.vmem %s6048, 4 [#allocation2]
        %6153 = vst.msk [vmem:[%s6152] ss:$8 sm:$0x3] %vm6052, %v6142
        %6154 = vst.msk [vmem:[%s6152] ss:$8 sm:$0x0] %vm6052, %v6142
        %s6155 = scalar_lea.vmem %s6048, 100 [#allocation2]
        %6156 = vst.msk [vmem:[%s6155] ss:$8 sm:$0x3] %vm6052, %v6149
        %6157 = vst.msk [vmem:[%s6155] ss:$8 sm:$0x0] %vm6052, %v6149
        %s6158 = sadd.s32 %s6017, 2
        %v6161 = vcombine.low %v6009, %v6010
        %v6163 = vunpack.c.l.s4 1966171168
        %v6164 = vunpack.c.0.s8 %v6163
        %v6165 = vlaneseq
        %v6166 = vshrl.u32 %v6165, 7
        %v6167 = vsub.s32 %v6164, %v6166
        %v6168 = vrot.slane %v6161, %v6167
        %v6169 = vcombine.high %v6168, %v6168
        %v6171 = vunpack.c.l.s4 1966171168
        %v6172 = vunpack.c.0.s8 %v6171
        %v6173 = vlaneseq
        %v6174 = vshrl.u32 %v6173, 7
        %v6175 = vsub.s32 %v6172, %v6174
        %v6176 = vrot.slane %v6168, %v6175
        %v6178 = vunpack.c.l.s4 1966171168
        %v6179 = vunpack.c.0.s8 %v6178
        %v6180 = vlaneseq
        %v6181 = vshrl.u32 %v6180, 7
        %v6182 = vsub.s32 %v6179, %v6181
        %v6183 = vrot.slane %v6169, %v6182
        %s6186 = smul.u32 %s6158, 2
        %s6187 = smul.addr %s6186, 8
        %s6188 = scalar_lea.vmem [#allocation2], %s6187
        %s6189 = scalar_lea.vmem %s6188, 1 [#allocation2]
        %6190 = vst.msk [vmem:[%s6189] ss:$8 sm:$0x3] %vm6052, %v6176
        %6191 = vst.msk [vmem:[%s6189] ss:$8 sm:$0x0] %vm6052, %v6176
        %s6192 = scalar_lea.vmem %s6188, 97 [#allocation2]
        %6193 = vst.msk [vmem:[%s6192] ss:$8 sm:$0x3] %vm6052, %v6183
        %6194 = vst.msk [vmem:[%s6192] ss:$8 sm:$0x0] %vm6052, %v6183
        %v6197 = vcombine.low %v6011, %v6012
        %v6199 = vunpack.c.l.s4 1966171168
        %v6200 = vunpack.c.0.s8 %v6199
        %v6201 = vlaneseq
        %v6202 = vshrl.u32 %v6201, 7
        %v6203 = vsub.s32 %v6200, %v6202
        %v6204 = vrot.slane %v6197, %v6203
        %v6205 = vcombine.high %v6204, %v6204
        %v6207 = vunpack.c.l.s4 1966171168
        %v6208 = vunpack.c.0.s8 %v6207
        %v6209 = vlaneseq
        %v6210 = vshrl.u32 %v6209, 7
        %v6211 = vsub.s32 %v6208, %v6210
        %v6212 = vrot.slane %v6204, %v6211
        %v6214 = vunpack.c.l.s4 1966171168
        %v6215 = vunpack.c.0.s8 %v6214
        %v6216 = vlaneseq
        %v6217 = vshrl.u32 %v6216, 7
        %v6218 = vsub.s32 %v6215, %v6217
        %v6219 = vrot.slane %v6205, %v6218
        %s6222 = scalar_lea.vmem %s6188, 2 [#allocation2]
        %6223 = vst.msk [vmem:[%s6222] ss:$8 sm:$0x3] %vm6052, %v6212
        %6224 = vst.msk [vmem:[%s6222] ss:$8 sm:$0x0] %vm6052, %v6212
        %s6225 = scalar_lea.vmem %s6188, 98 [#allocation2]
        %6226 = vst.msk [vmem:[%s6225] ss:$8 sm:$0x3] %vm6052, %v6219
        %6227 = vst.msk [vmem:[%s6225] ss:$8 sm:$0x0] %vm6052, %v6219
        %v6230 = vcombine.low %v6013, %v6014
        %v6232 = vunpack.c.l.s4 1966171168
        %v6233 = vunpack.c.0.s8 %v6232
        %v6234 = vlaneseq
        %v6235 = vshrl.u32 %v6234, 7
        %v6236 = vsub.s32 %v6233, %v6235
        %v6237 = vrot.slane %v6230, %v6236
        %v6238 = vcombine.high %v6237, %v6237
        %v6240 = vunpack.c.l.s4 1966171168
        %v6241 = vunpack.c.0.s8 %v6240
        %v6242 = vlaneseq
        %v6243 = vshrl.u32 %v6242, 7
        %v6244 = vsub.s32 %v6241, %v6243
        %v6245 = vrot.slane %v6237, %v6244
        %v6247 = vunpack.c.l.s4 1966171168
        %v6248 = vunpack.c.0.s8 %v6247
        %v6249 = vlaneseq
        %v6250 = vshrl.u32 %v6249, 7
        %v6251 = vsub.s32 %v6248, %v6250
        %v6252 = vrot.slane %v6238, %v6251
        %s6255 = scalar_lea.vmem %s6188, 3 [#allocation2]
        %6256 = vst.msk [vmem:[%s6255] ss:$8 sm:$0x3] %vm6052, %v6245
        %6257 = vst.msk [vmem:[%s6255] ss:$8 sm:$0x0] %vm6052, %v6245
        %s6258 = scalar_lea.vmem %s6188, 99 [#allocation2]
        %6259 = vst.msk [vmem:[%s6258] ss:$8 sm:$0x3] %vm6052, %v6252
        %6260 = vst.msk [vmem:[%s6258] ss:$8 sm:$0x0] %vm6052, %v6252
        %v6263 = vcombine.low %v6015, %v6016
        %v6265 = vunpack.c.l.s4 1966171168
        %v6266 = vunpack.c.0.s8 %v6265
        %v6267 = vlaneseq
        %v6268 = vshrl.u32 %v6267, 7
        %v6269 = vsub.s32 %v6266, %v6268
        %v6270 = vrot.slane %v6263, %v6269
        %v6271 = vcombine.high %v6270, %v6270
        %v6273 = vunpack.c.l.s4 1966171168
        %v6274 = vunpack.c.0.s8 %v6273
        %v6275 = vlaneseq
        %v6276 = vshrl.u32 %v6275, 7
        %v6277 = vsub.s32 %v6274, %v6276
        %v6278 = vrot.slane %v6270, %v6277
        %v6280 = vunpack.c.l.s4 1966171168
        %v6281 = vunpack.c.0.s8 %v6280
        %v6282 = vlaneseq
        %v6283 = vshrl.u32 %v6282, 7
        %v6284 = vsub.s32 %v6281, %v6283
        %v6285 = vrot.slane %v6271, %v6284
        %s6288 = scalar_lea.vmem %s6188, 4 [#allocation2]
        %6289 = vst.msk [vmem:[%s6288] ss:$8 sm:$0x3] %vm6052, %v6278
        %6290 = vst.msk [vmem:[%s6288] ss:$8 sm:$0x0] %vm6052, %v6278
        %s6291 = scalar_lea.vmem %s6188, 100 [#allocation2]
        %6292 = vst.msk [vmem:[%s6291] ss:$8 sm:$0x3] %vm6052, %v6285
        %6293 = vst.msk [vmem:[%s6291] ss:$8 sm:$0x0] %vm6052, %v6285
        %p6294 = scmp.eq.s32.totalorder %s24, 1
        // Predicated region
        $region81: #{generator_forward.1} parent=47 // pred_check
          %p6295 = pneg %p6294
        $region82: #{generator_forward.1} parent=47 // pred_check_branch
          %6297 = sbr.rel (%p6295) target = $region84
        $region83: #{generator_forward.1} parent=47 // pred_region
          %v6298 = vld [vmem:[#allocation2] sm:$0x3f]
          %v6299 = vld [vmem:[#allocation2 + $0x8] sm:$0x3f]
          %v6300 = vld [vmem:[#allocation2 + $0x10] sm:$0x3f]
          %v6301 = vld [vmem:[#allocation2 + $0x18] sm:$0x3f]
          %v6302 = vld [vmem:[#allocation2 + $0x20] sm:$0x3f]
          %v6303 = vld [vmem:[#allocation2 + $0x28] sm:$0x3f]
          %v6304 = vld [vmem:[#allocation2 + $0x30] sm:$0x3f]
          %v6305 = vld [vmem:[#allocation2 + $0x38] sm:$0x3f]
          %v6306 = vld [vmem:[#allocation2 + $0x40] sm:$0x3f]
          %v6307 = vld [vmem:[#allocation2 + $0x48] sm:$0x3f]
          %v6308 = vld [vmem:[#allocation2 + $0x50] sm:$0x3f]
          %v6309 = vld [vmem:[#allocation2 + $0x58] sm:$0x3f]
          %v6310 = vld [vmem:[#allocation2 + $0x60] sm:$0x3f]
          %v6311 = vld [vmem:[#allocation2 + $0x68] sm:$0x3f]
          %v6312 = vld [vmem:[#allocation2 + $0x70] sm:$0x3f]
          %v6313 = vld [vmem:[#allocation2 + $0x78] sm:$0x3f]
          %v6314 = vld [vmem:[#allocation2 + $0x80] sm:$0x3f]
          %v6315 = vld [vmem:[#allocation2 + $0x88] sm:$0x3f]
          %v6316 = vld [vmem:[#allocation2 + $0x90] sm:$0x3f]
          %v6317 = vld [vmem:[#allocation2 + $0x98] sm:$0x3f]
          %v6318 = vld [vmem:[#allocation2 + $0xa0] sm:$0x3f]
          %v6319 = vld [vmem:[#allocation2 + $0xa8] sm:$0x3f]
          %v6320 = vld [vmem:[#allocation2 + $0xb0] sm:$0x3f]
          %v6321 = vld [vmem:[#allocation2 + $0xb8] sm:$0x3f]
          %v6322 = vmul.f32 %v6298, %v6298
          %v6323 = vmul.f32 %v6299, %v6299
          %v6324 = vmul.f32 %v6300, %v6300
          %v6325 = vmul.f32 %v6301, %v6301
          %v6326 = vmul.f32 %v6302, %v6302
          %v6327 = vmul.f32 %v6303, %v6303
          %v6328 = vmul.f32 %v6304, %v6304
          %v6329 = vmul.f32 %v6305, %v6305
          %v6330 = vmul.f32 %v6306, %v6306
          %v6331 = vmul.f32 %v6307, %v6307
          %v6332 = vmul.f32 %v6308, %v6308
          %v6333 = vmul.f32 %v6309, %v6309
          %v6334 = vmul.f32 %v6310, %v6310
          %v6335 = vmul.f32 %v6311, %v6311
          %v6336 = vmul.f32 %v6312, %v6312
          %v6337 = vmul.f32 %v6313, %v6313
          %v6338 = vmul.f32 %v6314, %v6314
          %v6339 = vmul.f32 %v6315, %v6315
          %v6340 = vmul.f32 %v6316, %v6316
          %v6341 = vmul.f32 %v6317, %v6317
          %v6342 = vmul.f32 %v6318, %v6318
          %v6343 = vmul.f32 %v6319, %v6319
          %v6344 = vmul.f32 %v6320, %v6320
          %v6345 = vmul.f32 %v6321, %v6321
          %vm6346 = vcmask 1045504
          %v6347 = vsel %vm6346, %v6322, 0.0
          %v6348 = vsel %vm6346, %v6323, 0.0
          %v6349 = vadd.f32 %v6347, %v6348
          %6350 = vadd.xlane.f32.xlu0 %v6349
          %v6351 = vpop.xlane.xlu0 %6350
          %v6352 = vsel %vm6346, %v6324, 0.0
          %v6353 = vsel %vm6346, %v6325, 0.0
          %v6354 = vadd.f32 %v6352, %v6353
          %6355 = vadd.xlane.f32.xlu0 %v6354
          %v6356 = vpop.xlane.xlu0 %6355
          %v6357 = vsel %vm6346, %v6326, 0.0
          %v6358 = vsel %vm6346, %v6327, 0.0
          %v6359 = vadd.f32 %v6357, %v6358
          %6360 = vadd.xlane.f32.xlu0 %v6359
          %v6361 = vpop.xlane.xlu0 %6360
          %v6362 = vsel %vm6346, %v6328, 0.0
          %v6363 = vsel %vm6346, %v6329, 0.0
          %v6364 = vadd.f32 %v6362, %v6363
          %6365 = vadd.xlane.f32.xlu0 %v6364
          %v6366 = vpop.xlane.xlu0 %6365
          %v6367 = vsel %vm6346, %v6330, 0.0
          %v6368 = vsel %vm6346, %v6331, 0.0
          %v6369 = vadd.f32 %v6367, %v6368
          %6370 = vadd.xlane.f32.xlu0 %v6369
          %v6371 = vpop.xlane.xlu0 %6370
          %v6372 = vsel %vm6346, %v6332, 0.0
          %v6373 = vsel %vm6346, %v6333, 0.0
          %v6374 = vadd.f32 %v6372, %v6373
          %6375 = vadd.xlane.f32.xlu0 %v6374
          %v6376 = vpop.xlane.xlu0 %6375
          %v6377 = vsel %vm6346, %v6334, 0.0
          %v6378 = vsel %vm6346, %v6335, 0.0
          %v6379 = vadd.f32 %v6377, %v6378
          %6380 = vadd.xlane.f32.xlu0 %v6379
          %v6381 = vpop.xlane.xlu0 %6380
          %v6382 = vsel %vm6346, %v6336, 0.0
          %v6383 = vsel %vm6346, %v6337, 0.0
          %v6384 = vadd.f32 %v6382, %v6383
          %6385 = vadd.xlane.f32.xlu0 %v6384
          %v6386 = vpop.xlane.xlu0 %6385
          %v6387 = vsel %vm6346, %v6338, 0.0
          %v6388 = vsel %vm6346, %v6339, 0.0
          %v6389 = vadd.f32 %v6387, %v6388
          %6390 = vadd.xlane.f32.xlu0 %v6389
          %v6391 = vpop.xlane.xlu0 %6390
          %v6392 = vsel %vm6346, %v6340, 0.0
          %v6393 = vsel %vm6346, %v6341, 0.0
          %v6394 = vadd.f32 %v6392, %v6393
          %6395 = vadd.xlane.f32.xlu0 %v6394
          %v6396 = vpop.xlane.xlu0 %6395
          %v6397 = vsel %vm6346, %v6342, 0.0
          %v6398 = vsel %vm6346, %v6343, 0.0
          %v6399 = vadd.f32 %v6397, %v6398
          %6400 = vadd.xlane.f32.xlu0 %v6399
          %v6401 = vpop.xlane.xlu0 %6400
          %v6402 = vsel %vm6346, %v6344, 0.0
          %v6403 = vsel %vm6346, %v6345, 0.0
          %v6404 = vadd.f32 %v6402, %v6403
          %6405 = vadd.xlane.f32.xlu0 %v6404
          %v6406 = vpop.xlane.xlu0 %6405
          %v6407 = vrcp.pop 256.0
          %v6408 = vmul.f32 %v6351, %v6407
          %v6409 = vmul.f32 %v6356, %v6407
          %v6410 = vmul.f32 %v6361, %v6407
          %v6411 = vmul.f32 %v6366, %v6407
          %v6412 = vmul.f32 %v6371, %v6407
          %v6413 = vmul.f32 %v6376, %v6407
          %v6414 = vmul.f32 %v6381, %v6407
          %v6415 = vmul.f32 %v6386, %v6407
          %v6416 = vmul.f32 %v6391, %v6407
          %v6417 = vmul.f32 %v6396, %v6407
          %v6418 = vmul.f32 %v6401, %v6407
          %v6419 = vmul.f32 %v6406, %v6407
          %v6420 = vadd.f32 %v6408, 1e-08
          %v6421 = vadd.f32 %v6409, 1e-08
          %v6422 = vadd.f32 %v6410, 1e-08
          %v6423 = vadd.f32 %v6411, 1e-08
          %v6424 = vadd.f32 %v6412, 1e-08
          %v6425 = vadd.f32 %v6413, 1e-08
          %v6426 = vadd.f32 %v6414, 1e-08
          %v6427 = vadd.f32 %v6415, 1e-08
          %v6428 = vadd.f32 %v6416, 1e-08
          %v6429 = vadd.f32 %v6417, 1e-08
          %v6430 = vadd.f32 %v6418, 1e-08
          %v6431 = vadd.f32 %v6419, 1e-08
          %v6432 = vrsqrt.pop %v6420
          %v6433 = vrsqrt.pop %v6421
          %v6434 = vrsqrt.pop %v6422
          %v6435 = vrsqrt.pop %v6423
          %v6436 = vrsqrt.pop %v6424
          %v6437 = vrsqrt.pop %v6425
          %v6438 = vrsqrt.pop %v6426
          %v6439 = vrsqrt.pop %v6427
          %v6440 = vrsqrt.pop %v6428
          %v6441 = vrsqrt.pop %v6429
          %v6442 = vrsqrt.pop %v6430
          %v6443 = vrsqrt.pop %v6431
          %v6444 = vmul.f32 %v6298, %v6432
          %v6445 = vmul.f32 %v6299, %v6432
          %v6446 = vmul.f32 %v6300, %v6433
          %v6447 = vmul.f32 %v6301, %v6433
          %v6448 = vmul.f32 %v6302, %v6434
          %v6449 = vmul.f32 %v6303, %v6434
          %v6450 = vmul.f32 %v6304, %v6435
          %v6451 = vmul.f32 %v6305, %v6435
          %v6452 = vmul.f32 %v6306, %v6436
          %v6453 = vmul.f32 %v6307, %v6436
          %v6454 = vmul.f32 %v6308, %v6437
          %v6455 = vmul.f32 %v6309, %v6437
          %v6456 = vmul.f32 %v6310, %v6438
          %v6457 = vmul.f32 %v6311, %v6438
          %v6458 = vmul.f32 %v6312, %v6439
          %v6459 = vmul.f32 %v6313, %v6439
          %v6460 = vmul.f32 %v6314, %v6440
          %v6461 = vmul.f32 %v6315, %v6440
          %v6462 = vmul.f32 %v6316, %v6441
          %v6463 = vmul.f32 %v6317, %v6441
          %v6464 = vmul.f32 %v6318, %v6442
          %v6465 = vmul.f32 %v6319, %v6442
          %v6466 = vmul.f32 %v6320, %v6443
          %v6467 = vmul.f32 %v6321, %v6443
          %v6468 = vld [vmem:[#allocation8] sm:$0xff]
          %v6469 = vld [vmem:[#allocation8 + $0x8] sm:$0xff]
          %v6470 = vld [vmem:[#allocation8 + $0x10] sm:$0xff]
          %v6471 = vld [vmem:[#allocation8 + $0x18] sm:$0xff]
          %v6472 = vld [vmem:[#allocation8 + $0x20] sm:$0xff]
          %v6473 = vld [vmem:[#allocation8 + $0x28] sm:$0xff]
          %v6474 = vld [vmem:[#allocation8 + $0x30] sm:$0xff]
          %v6475 = vld [vmem:[#allocation8 + $0x38] sm:$0xff]
          %v6476 = vld [vmem:[#allocation8 + $0x40] sm:$0xff]
          %v6477 = vld [vmem:[#allocation8 + $0x48] sm:$0xff]
          %v6478 = vld [vmem:[#allocation8 + $0x50] sm:$0xff]
          %v6479 = vld [vmem:[#allocation8 + $0x58] sm:$0xff]
          %v6480 = vld [vmem:[#allocation8 + $0x60] sm:$0xff]
          %v6481 = vld [vmem:[#allocation8 + $0x68] sm:$0xff]
          %v6482 = vld [vmem:[#allocation8 + $0x70] sm:$0xff]
          %v6483 = vld [vmem:[#allocation8 + $0x78] sm:$0xff]
          %v6484 = vld [vmem:[#allocation8 + $0x80] sm:$0xff]
          %v6485 = vld [vmem:[#allocation8 + $0x88] sm:$0xff]
          %v6486 = vld [vmem:[#allocation8 + $0x90] sm:$0xff]
          %v6487 = vld [vmem:[#allocation8 + $0x98] sm:$0xff]
          %v6488 = vld [vmem:[#allocation8 + $0xa0] sm:$0xff]
          %v6489 = vld [vmem:[#allocation8 + $0xa8] sm:$0xff]
          %v6490 = vld [vmem:[#allocation8 + $0xb0] sm:$0xff]
          %v6491 = vld [vmem:[#allocation8 + $0xb8] sm:$0xff]
          %v6492 = vld [vmem:[#allocation8 + $0xc0] sm:$0xff]
          %v6493 = vld [vmem:[#allocation8 + $0xc8] sm:$0xff]
          %v6494 = vld [vmem:[#allocation8 + $0xd0] sm:$0xff]
          %v6495 = vld [vmem:[#allocation8 + $0xd8] sm:$0xff]
          %v6496 = vld [vmem:[#allocation8 + $0xe0] sm:$0xff]
          %v6497 = vld [vmem:[#allocation8 + $0xe8] sm:$0xff]
          %v6498 = vld [vmem:[#allocation8 + $0xf0] sm:$0xff]
          %v6499 = vld [vmem:[#allocation8 + $0xf8] sm:$0xff]
          %v6500 = vunpack.c.l.bf16 %v6468
          %v6501 = vunpack.c.h.bf16 %v6468
          %v6502 = vunpack.c.l.bf16 %v6469
          %v6503 = vunpack.c.h.bf16 %v6469
          %v6504 = vunpack.c.l.bf16 %v6470
          %v6505 = vunpack.c.h.bf16 %v6470
          %v6506 = vunpack.c.l.bf16 %v6471
          %v6507 = vunpack.c.h.bf16 %v6471
          %v6508 = vunpack.c.l.bf16 %v6472
          %v6509 = vunpack.c.h.bf16 %v6472
          %v6510 = vunpack.c.l.bf16 %v6473
          %v6511 = vunpack.c.h.bf16 %v6473
          %v6512 = vunpack.c.l.bf16 %v6474
          %v6513 = vunpack.c.h.bf16 %v6474
          %v6514 = vunpack.c.l.bf16 %v6475
          %v6515 = vunpack.c.h.bf16 %v6475
          %v6516 = vunpack.c.l.bf16 %v6476
          %v6517 = vunpack.c.h.bf16 %v6476
          %v6518 = vunpack.c.l.bf16 %v6477
          %v6519 = vunpack.c.h.bf16 %v6477
          %v6520 = vunpack.c.l.bf16 %v6478
          %v6521 = vunpack.c.h.bf16 %v6478
          %v6522 = vunpack.c.l.bf16 %v6479
          %v6523 = vunpack.c.h.bf16 %v6479
          %v6524 = vunpack.c.l.bf16 %v6480
          %v6525 = vunpack.c.h.bf16 %v6480
          %v6526 = vunpack.c.l.bf16 %v6481
          %v6527 = vunpack.c.h.bf16 %v6481
          %v6528 = vunpack.c.l.bf16 %v6482
          %v6529 = vunpack.c.h.bf16 %v6482
          %v6530 = vunpack.c.l.bf16 %v6483
          %v6531 = vunpack.c.h.bf16 %v6483
          %v6532 = vunpack.c.l.bf16 %v6484
          %v6533 = vunpack.c.h.bf16 %v6484
          %v6534 = vunpack.c.l.bf16 %v6485
          %v6535 = vunpack.c.h.bf16 %v6485
          %v6536 = vunpack.c.l.bf16 %v6486
          %v6537 = vunpack.c.h.bf16 %v6486
          %v6538 = vunpack.c.l.bf16 %v6487
          %v6539 = vunpack.c.h.bf16 %v6487
          %v6540 = vunpack.c.l.bf16 %v6488
          %v6541 = vunpack.c.h.bf16 %v6488
          %v6542 = vunpack.c.l.bf16 %v6489
          %v6543 = vunpack.c.h.bf16 %v6489
          %v6544 = vunpack.c.l.bf16 %v6490
          %v6545 = vunpack.c.h.bf16 %v6490
          %v6546 = vunpack.c.l.bf16 %v6491
          %v6547 = vunpack.c.h.bf16 %v6491
          %v6548 = vunpack.c.l.bf16 %v6492
          %v6549 = vunpack.c.h.bf16 %v6492
          %v6550 = vunpack.c.l.bf16 %v6493
          %v6551 = vunpack.c.h.bf16 %v6493
          %v6552 = vunpack.c.l.bf16 %v6494
          %v6553 = vunpack.c.h.bf16 %v6494
          %v6554 = vunpack.c.l.bf16 %v6495
          %v6555 = vunpack.c.h.bf16 %v6495
          %v6556 = vunpack.c.l.bf16 %v6496
          %v6557 = vunpack.c.h.bf16 %v6496
          %v6558 = vunpack.c.l.bf16 %v6497
          %v6559 = vunpack.c.h.bf16 %v6497
          %v6560 = vunpack.c.l.bf16 %v6498
          %v6561 = vunpack.c.h.bf16 %v6498
          %v6562 = vunpack.c.l.bf16 %v6499
          %v6563 = vunpack.c.h.bf16 %v6499
          %s6564 = scalar_lea.vmem [#allocation8], 256
          %v6565 = vld [vmem:[%s6564] sm:$0xff]
          %v6566 = vld [vmem:[%s6564 + $0x8] sm:$0xff]
          %v6567 = vld [vmem:[%s6564 + $0x10] sm:$0xff]
          %v6568 = vld [vmem:[%s6564 + $0x18] sm:$0xff]
          %v6569 = vld [vmem:[%s6564 + $0x20] sm:$0xff]
          %v6570 = vld [vmem:[%s6564 + $0x28] sm:$0xff]
          %v6571 = vld [vmem:[%s6564 + $0x30] sm:$0xff]
          %v6572 = vld [vmem:[%s6564 + $0x38] sm:$0xff]
          %v6573 = vld [vmem:[%s6564 + $0x40] sm:$0xff]
          %v6574 = vld [vmem:[%s6564 + $0x48] sm:$0xff]
          %v6575 = vld [vmem:[%s6564 + $0x50] sm:$0xff]
          %v6576 = vld [vmem:[%s6564 + $0x58] sm:$0xff]
          %v6577 = vld [vmem:[%s6564 + $0x60] sm:$0xff]
          %v6578 = vld [vmem:[%s6564 + $0x68] sm:$0xff]
          %v6579 = vld [vmem:[%s6564 + $0x70] sm:$0xff]
          %v6580 = vld [vmem:[%s6564 + $0x78] sm:$0xff]
          %v6581 = vld [vmem:[%s6564 + $0x80] sm:$0xff]
          %v6582 = vld [vmem:[%s6564 + $0x88] sm:$0xff]
          %v6583 = vld [vmem:[%s6564 + $0x90] sm:$0xff]
          %v6584 = vld [vmem:[%s6564 + $0x98] sm:$0xff]
          %v6585 = vld [vmem:[%s6564 + $0xa0] sm:$0xff]
          %v6586 = vld [vmem:[%s6564 + $0xa8] sm:$0xff]
          %v6587 = vld [vmem:[%s6564 + $0xb0] sm:$0xff]
          %v6588 = vld [vmem:[%s6564 + $0xb8] sm:$0xff]
          %v6589 = vld [vmem:[%s6564 + $0xc0] sm:$0xff]
          %v6590 = vld [vmem:[%s6564 + $0xc8] sm:$0xff]
          %v6591 = vld [vmem:[%s6564 + $0xd0] sm:$0xff]
          %v6592 = vld [vmem:[%s6564 + $0xd8] sm:$0xff]
          %v6593 = vld [vmem:[%s6564 + $0xe0] sm:$0xff]
          %v6594 = vld [vmem:[%s6564 + $0xe8] sm:$0xff]
          %v6595 = vld [vmem:[%s6564 + $0xf0] sm:$0xff]
          %v6596 = vld [vmem:[%s6564 + $0xf8] sm:$0xff]
          %v6597 = vunpack.c.l.bf16 %v6565
          %v6598 = vunpack.c.h.bf16 %v6565
          %v6599 = vunpack.c.l.bf16 %v6566
          %v6600 = vunpack.c.h.bf16 %v6566
          %v6601 = vunpack.c.l.bf16 %v6567
          %v6602 = vunpack.c.h.bf16 %v6567
          %v6603 = vunpack.c.l.bf16 %v6568
          %v6604 = vunpack.c.h.bf16 %v6568
          %v6605 = vunpack.c.l.bf16 %v6569
          %v6606 = vunpack.c.h.bf16 %v6569
          %v6607 = vunpack.c.l.bf16 %v6570
          %v6608 = vunpack.c.h.bf16 %v6570
          %v6609 = vunpack.c.l.bf16 %v6571
          %v6610 = vunpack.c.h.bf16 %v6571
          %v6611 = vunpack.c.l.bf16 %v6572
          %v6612 = vunpack.c.h.bf16 %v6572
          %v6613 = vunpack.c.l.bf16 %v6573
          %v6614 = vunpack.c.h.bf16 %v6573
          %v6615 = vunpack.c.l.bf16 %v6574
          %v6616 = vunpack.c.h.bf16 %v6574
          %v6617 = vunpack.c.l.bf16 %v6575
          %v6618 = vunpack.c.h.bf16 %v6575
          %v6619 = vunpack.c.l.bf16 %v6576
          %v6620 = vunpack.c.h.bf16 %v6576
          %v6621 = vunpack.c.l.bf16 %v6577
          %v6622 = vunpack.c.h.bf16 %v6577
          %v6623 = vunpack.c.l.bf16 %v6578
          %v6624 = vunpack.c.h.bf16 %v6578
          %v6625 = vunpack.c.l.bf16 %v6579
          %v6626 = vunpack.c.h.bf16 %v6579
          %v6627 = vunpack.c.l.bf16 %v6580
          %v6628 = vunpack.c.h.bf16 %v6580
          %v6629 = vunpack.c.l.bf16 %v6581
          %v6630 = vunpack.c.h.bf16 %v6581
          %v6631 = vunpack.c.l.bf16 %v6582
          %v6632 = vunpack.c.h.bf16 %v6582
          %v6633 = vunpack.c.l.bf16 %v6583
          %v6634 = vunpack.c.h.bf16 %v6583
          %v6635 = vunpack.c.l.bf16 %v6584
          %v6636 = vunpack.c.h.bf16 %v6584
          %v6637 = vunpack.c.l.bf16 %v6585
          %v6638 = vunpack.c.h.bf16 %v6585
          %v6639 = vunpack.c.l.bf16 %v6586
          %v6640 = vunpack.c.h.bf16 %v6586
          %v6641 = vunpack.c.l.bf16 %v6587
          %v6642 = vunpack.c.h.bf16 %v6587
          %v6643 = vunpack.c.l.bf16 %v6588
          %v6644 = vunpack.c.h.bf16 %v6588
          %v6645 = vunpack.c.l.bf16 %v6589
          %v6646 = vunpack.c.h.bf16 %v6589
          %v6647 = vunpack.c.l.bf16 %v6590
          %v6648 = vunpack.c.h.bf16 %v6590
          %v6649 = vunpack.c.l.bf16 %v6591
          %v6650 = vunpack.c.h.bf16 %v6591
          %v6651 = vunpack.c.l.bf16 %v6592
          %v6652 = vunpack.c.h.bf16 %v6592
          %v6653 = vunpack.c.l.bf16 %v6593
          %v6654 = vunpack.c.h.bf16 %v6593
          %v6655 = vunpack.c.l.bf16 %v6594
          %v6656 = vunpack.c.h.bf16 %v6594
          %v6657 = vunpack.c.l.bf16 %v6595
          %v6658 = vunpack.c.h.bf16 %v6595
          %v6659 = vunpack.c.l.bf16 %v6596
          %v6660 = vunpack.c.h.bf16 %v6596
          %v6677 = vcombine.low %v6444, %v6445
          %v6678 = vcombine.high %v6444, %v6445
          %v6679 = vcombine.low %v6446, %v6447
          %v6680 = vcombine.high %v6446, %v6447
          %v6681 = vcombine.low %v6448, %v6449
          %v6682 = vcombine.high %v6448, %v6449
          %v6683 = vcombine.low %v6450, %v6451
          %v6684 = vcombine.high %v6450, %v6451
          %v6685 = vcombine.low %v6456, %v6457
          %v6686 = vcombine.high %v6456, %v6457
          %v6687 = vcombine.low %v6458, %v6459
          %v6688 = vcombine.high %v6458, %v6459
          %v6689 = vcombine.low %v6460, %v6461
          %v6690 = vcombine.high %v6460, %v6461
          %v6691 = vcombine.low %v6462, %v6463
          %v6692 = vcombine.high %v6462, %v6463
          %vm6693 = vcmask 1042432
          %vm6694 = vcmask 1046532
          %vm6695 = vmor %vm6693, %vm6694
          %v6696 = vrot.slane %v6677, 5
          %v6697 = vrot.slane %v6696, 4
          %v6698 = vrot.slane %v6678, 5
          %v6699 = vsel %vm6695, %v6697, %v6698
          %v6700 = vrot.slane %v6679, 5
          %v6701 = vrot.slane %v6700, 4
          %v6702 = vrot.slane %v6680, 5
          %v6703 = vsel %vm6695, %v6701, %v6702
          %v6704 = vrot.slane %v6681, 5
          %v6705 = vrot.slane %v6704, 4
          %v6706 = vrot.slane %v6682, 5
          %v6707 = vsel %vm6695, %v6705, %v6706
          %v6708 = vrot.slane %v6683, 5
          %v6709 = vrot.slane %v6708, 4
          %v6710 = vrot.slane %v6684, 5
          %v6711 = vsel %vm6695, %v6709, %v6710
          %v6712 = vrot.slane %v6685, 5
          %v6713 = vrot.slane %v6712, 4
          %v6714 = vrot.slane %v6686, 5
          %v6715 = vsel %vm6695, %v6713, %v6714
          %v6716 = vrot.slane %v6687, 5
          %v6717 = vrot.slane %v6716, 4
          %v6718 = vrot.slane %v6688, 5
          %v6719 = vsel %vm6695, %v6717, %v6718
          %v6720 = vrot.slane %v6689, 5
          %v6721 = vrot.slane %v6720, 4
          %v6722 = vrot.slane %v6690, 5
          %v6723 = vsel %vm6695, %v6721, %v6722
          %v6724 = vrot.slane %v6691, 5
          %v6725 = vrot.slane %v6724, 4
          %v6726 = vrot.slane %v6692, 5
          %v6727 = vsel %vm6695, %v6725, %v6726
          %v6728 = vcombine.low %v6699, %v6703
          %v6729 = vcombine.high %v6699, %v6703
          %v6730 = vcombine.low %v6707, %v6711
          %v6731 = vcombine.high %v6707, %v6711
          %v6732 = vcombine.low %v6715, %v6719
          %v6733 = vcombine.high %v6715, %v6719
          %v6734 = vcombine.low %v6723, %v6727
          %v6735 = vcombine.high %v6723, %v6727
          %6744 = vmatprep.subr.mxu0 %v6598
          %6745 = vmatpush1.msra.mxu0 %v6597
          %6746 = vmatprep.subr.mxu0 %v6600
          %6747 = vmatpush1.msra.mxu0 %v6599
          %6748 = vmatprep.subr.mxu0 %v6602
          %6749 = vmatpush1.msra.mxu0 %v6601
          %6750 = vmatprep.subr.mxu0 %v6604
          %6751 = vmatpush1.msra.mxu0 %v6603
          %6752 = vmatprep.subr.mxu0 %v6606
          %6753 = vmatpush1.msra.mxu0 %v6605
          %6754 = vmatprep.subr.mxu0 %v6608
          %6755 = vmatpush1.msra.mxu0 %v6607
          %6756 = vmatprep.subr.mxu0 %v6610
          %6757 = vmatpush1.msra.mxu0 %v6609
          %6758 = vmatprep.subr.mxu0 %v6612
          %6759 = vmatpush1.msra.mxu0 %v6611
          %6760 = vmatprep.subr.mxu0 %v6614
          %6761 = vmatpush1.msra.mxu0 %v6613
          %6762 = vmatprep.subr.mxu0 %v6616
          %6763 = vmatpush1.msra.mxu0 %v6615
          %6764 = vmatprep.subr.mxu0 %v6618
          %6765 = vmatpush1.msra.mxu0 %v6617
          %6766 = vmatprep.subr.mxu0 %v6620
          %6767 = vmatpush1.msra.mxu0 %v6619
          %6768 = vmatprep.subr.mxu0 %v6622
          %6769 = vmatpush1.msra.mxu0 %v6621
          %6770 = vmatprep.subr.mxu0 %v6624
          %6771 = vmatpush1.msra.mxu0 %v6623
          %6772 = vmatprep.subr.mxu0 %v6626
          %6773 = vmatpush1.msra.mxu0 %v6625
          %6774 = vmatprep.subr.mxu0 %v6628
          %6775 = vmatpush1.msra.mxu0 %v6627
          %6776 = vmatprep.subr.mxu0 %v6630
          %6777 = vmatpush1.msra.mxu0 %v6629
          %6778 = vmatprep.subr.mxu0 %v6632
          %6779 = vmatpush1.msra.mxu0 %v6631
          %6780 = vmatprep.subr.mxu0 %v6634
          %6781 = vmatpush1.msra.mxu0 %v6633
          %6782 = vmatprep.subr.mxu0 %v6636
          %6783 = vmatpush1.msra.mxu0 %v6635
          %6784 = vmatprep.subr.mxu0 %v6638
          %6785 = vmatpush1.msra.mxu0 %v6637
          %6786 = vmatprep.subr.mxu0 %v6640
          %6787 = vmatpush1.msra.mxu0 %v6639
          %6788 = vmatprep.subr.mxu0 %v6642
          %6789 = vmatpush1.msra.mxu0 %v6641
          %6790 = vmatprep.subr.mxu0 %v6644
          %6791 = vmatpush1.msra.mxu0 %v6643
          %6792 = vmatprep.subr.mxu0 %v6646
          %6793 = vmatpush1.msra.mxu0 %v6645
          %6794 = vmatprep.subr.mxu0 %v6648
          %6795 = vmatpush1.msra.mxu0 %v6647
          %6796 = vmatprep.subr.mxu0 %v6650
          %6797 = vmatpush1.msra.mxu0 %v6649
          %6798 = vmatprep.subr.mxu0 %v6652
          %6799 = vmatpush1.msra.mxu0 %v6651
          %6800 = vmatprep.subr.mxu0 %v6654
          %6801 = vmatpush1.msra.mxu0 %v6653
          %6802 = vmatprep.subr.mxu0 %v6656
          %6803 = vmatpush1.msra.mxu0 %v6655
          %6804 = vmatprep.subr.mxu0 %v6658
          %6805 = vmatpush1.msra.mxu0 %v6657
          %6806 = vmatprep.subr.mxu0 %v6660
          %6807 = vmatpush1.msra.mxu0 %v6659
          %6808 = vmatprep.mubr.f32.mxu0 %v6729
          %6809 = vmatmul.mubr.f32.gmra.mrb[0].mxu0 %v6728
          %v6810 = vpop.f32.mrb[0].mxu0
          %v6811 = vadd.f32 0.0, %v6810
          %v6812 = vpop.f32.mrb[0].mxu0
          %v6813 = vadd.f32 0.0, %v6812
          %6814 = vmatprep.mubr.f32.mxu0 %v6731
          %6815 = vmatmul.mubr.f32.gmra.mrb[0].mxu0 %v6730
          %v6816 = vpop.f32.mrb[0].mxu0
          %v6817 = vadd.f32 0.0, %v6816
          %v6818 = vpop.f32.mrb[0].mxu0
          %v6819 = vadd.f32 0.0, %v6818
          %6820 = vmatprep.mubr.f32.mxu0 %v6733
          %6821 = vmatmul.mubr.f32.gmra.mrb[0].mxu0 %v6732
          %v6822 = vpop.f32.mrb[0].mxu0
          %v6823 = vadd.f32 0.0, %v6822
          %v6824 = vpop.f32.mrb[0].mxu0
          %v6825 = vadd.f32 0.0, %v6824
          %6826 = vmatprep.mubr.f32.mxu0 %v6735
          %6827 = vmatmul.mubr.f32.gmra.mrb[0].mxu0 %v6734
          %v6828 = vpop.f32.mrb[0].mxu0
          %v6829 = vadd.f32 0.0, %v6828
          %v6830 = vpop.f32.mrb[0].mxu0
          %v6831 = vadd.f32 0.0, %v6830
          %6832 = vdwg.mxu0
          %v6833 = vcombine.low %v6677, %v6679
          %v6834 = vcombine.high %v6677, %v6679
          %v6835 = vcombine.low %v6681, %v6683
          %v6836 = vcombine.high %v6681, %v6683
          %v6837 = vcombine.low %v6685, %v6687
          %v6838 = vcombine.high %v6685, %v6687
          %v6839 = vcombine.low %v6689, %v6691
          %v6840 = vcombine.high %v6689, %v6691
          %6849 = vmatprep.subr.mxu0 %v6501
          %6850 = vmatpush1.msra.mxu0 %v6500
          %6851 = vmatprep.subr.mxu0 %v6503
          %6852 = vmatpush1.msra.mxu0 %v6502
          %6853 = vmatprep.subr.mxu0 %v6505
          %6854 = vmatpush1.msra.mxu0 %v6504
          %6855 = vmatprep.subr.mxu0 %v6507
          %6856 = vmatpush1.msra.mxu0 %v6506
          %6857 = vmatprep.subr.mxu0 %v6509
          %6858 = vmatpush1.msra.mxu0 %v6508
          %6859 = vmatprep.subr.mxu0 %v6511
          %6860 = vmatpush1.msra.mxu0 %v6510
          %6861 = vmatprep.subr.mxu0 %v6513
          %6862 = vmatpush1.msra.mxu0 %v6512
          %6863 = vmatprep.subr.mxu0 %v6515
          %6864 = vmatpush1.msra.mxu0 %v6514
          %6865 = vmatprep.subr.mxu0 %v6517
          %6866 = vmatpush1.msra.mxu0 %v6516
          %6867 = vmatprep.subr.mxu0 %v6519
          %6868 = vmatpush1.msra.mxu0 %v6518
          %6869 = vmatprep.subr.mxu0 %v6521
          %6870 = vmatpush1.msra.mxu0 %v6520
          %6871 = vmatprep.subr.mxu0 %v6523
          %6872 = vmatpush1.msra.mxu0 %v6522
          %6873 = vmatprep.subr.mxu0 %v6525
          %6874 = vmatpush1.msra.mxu0 %v6524
          %6875 = vmatprep.subr.mxu0 %v6527
          %6876 = vmatpush1.msra.mxu0 %v6526
          %6877 = vmatprep.subr.mxu0 %v6529
          %6878 = vmatpush1.msra.mxu0 %v6528
          %6879 = vmatprep.subr.mxu0 %v6531
          %6880 = vmatpush1.msra.mxu0 %v6530
          %6881 = vmatprep.subr.mxu0 %v6533
          %6882 = vmatpush1.msra.mxu0 %v6532
          %6883 = vmatprep.subr.mxu0 %v6535
          %6884 = vmatpush1.msra.mxu0 %v6534
          %6885 = vmatprep.subr.mxu0 %v6537
          %6886 = vmatpush1.msra.mxu0 %v6536
          %6887 = vmatprep.subr.mxu0 %v6539
          %6888 = vmatpush1.msra.mxu0 %v6538
          %6889 = vmatprep.subr.mxu0 %v6541
          %6890 = vmatpush1.msra.mxu0 %v6540
          %6891 = vmatprep.subr.mxu0 %v6543
          %6892 = vmatpush1.msra.mxu0 %v6542
          %6893 = vmatprep.subr.mxu0 %v6545
          %6894 = vmatpush1.msra.mxu0 %v6544
          %6895 = vmatprep.subr.mxu0 %v6547
          %6896 = vmatpush1.msra.mxu0 %v6546
          %6897 = vmatprep.subr.mxu0 %v6549
          %6898 = vmatpush1.msra.mxu0 %v6548
          %6899 = vmatprep.subr.mxu0 %v6551
          %6900 = vmatpush1.msra.mxu0 %v6550
          %6901 = vmatprep.subr.mxu0 %v6553
          %6902 = vmatpush1.msra.mxu0 %v6552
          %6903 = vmatprep.subr.mxu0 %v6555
          %6904 = vmatpush1.msra.mxu0 %v6554
          %6905 = vmatprep.subr.mxu0 %v6557
          %6906 = vmatpush1.msra.mxu0 %v6556
          %6907 = vmatprep.subr.mxu0 %v6559
          %6908 = vmatpush1.msra.mxu0 %v6558
          %6909 = vmatprep.subr.mxu0 %v6561
          %6910 = vmatpush1.msra.mxu0 %v6560
          %6911 = vmatprep.subr.mxu0 %v6563
          %6912 = vmatpush1.msra.mxu0 %v6562
          %6913 = vmatprep.mubr.f32.mxu0 %v6834
          %6914 = vmatmul.mubr.f32.gmra.mrb[0].mxu0 %v6833
          %v6915 = vpop.f32.mrb[0].mxu0
          %v6916 = vadd.f32 %v6811, %v6915
          %v6917 = vpop.f32.mrb[0].mxu0
          %v6918 = vadd.f32 %v6813, %v6917
          %6919 = vmatprep.mubr.f32.mxu0 %v6836
          %6920 = vmatmul.mubr.f32.gmra.mrb[0].mxu0 %v6835
          %v6921 = vpop.f32.mrb[0].mxu0
          %v6922 = vadd.f32 %v6817, %v6921
          %v6923 = vpop.f32.mrb[0].mxu0
          %v6924 = vadd.f32 %v6819, %v6923
          %6925 = vmatprep.mubr.f32.mxu0 %v6838
          %6926 = vmatmul.mubr.f32.gmra.mrb[0].mxu0 %v6837
          %v6927 = vpop.f32.mrb[0].mxu0
          %v6928 = vadd.f32 %v6823, %v6927
          %v6929 = vpop.f32.mrb[0].mxu0
          %v6930 = vadd.f32 %v6825, %v6929
          %6931 = vmatprep.mubr.f32.mxu0 %v6840
          %6932 = vmatmul.mubr.f32.gmra.mrb[0].mxu0 %v6839
          %v6933 = vpop.f32.mrb[0].mxu0
          %v6934 = vadd.f32 %v6829, %v6933
          %v6935 = vpop.f32.mrb[0].mxu0
          %v6936 = vadd.f32 %v6831, %v6935
          %6937 = vdwg.mxu0
          %v6946 = vcombine.low %v6916, %v6918
          %v6947 = vcombine.high %v6916, %v6918
          %v6948 = vcombine.low %v6922, %v6924
          %v6949 = vcombine.high %v6922, %v6924
          %v6950 = vcombine.low %v6928, %v6930
          %v6951 = vcombine.high %v6928, %v6930
          %v6952 = vcombine.low %v6934, %v6936
          %v6953 = vcombine.high %v6934, %v6936
          %s6962 = scalar_lea.vmem [#allocation8], 512
          %v6963 = vld [vmem:[%s6962] sm:$0xff]
          %v6964 = vld [vmem:[%s6962 + $0x8] sm:$0xff]
          %v6965 = vld [vmem:[%s6962 + $0x10] sm:$0xff]
          %v6966 = vld [vmem:[%s6962 + $0x18] sm:$0xff]
          %v6967 = vld [vmem:[%s6962 + $0x20] sm:$0xff]
          %v6968 = vld [vmem:[%s6962 + $0x28] sm:$0xff]
          %v6969 = vld [vmem:[%s6962 + $0x30] sm:$0xff]
          %v6970 = vld [vmem:[%s6962 + $0x38] sm:$0xff]
          %v6971 = vld [vmem:[%s6962 + $0x40] sm:$0xff]
          %v6972 = vld [vmem:[%s6962 + $0x48] sm:$0xff]
          %v6973 = vld [vmem:[%s6962 + $0x50] sm:$0xff]
          %v6974 = vld [vmem:[%s6962 + $0x58] sm:$0xff]
          %v6975 = vld [vmem:[%s6962 + $0x60] sm:$0xff]
          %v6976 = vld [vmem:[%s6962 + $0x68] sm:$0xff]
          %v6977 = vld [vmem:[%s6962 + $0x70] sm:$0xff]
          %v6978 = vld [vmem:[%s6962 + $0x78] sm:$0xff]
          %v6979 = vld [vmem:[%s6962 + $0x80] sm:$0xff]
          %v6980 = vld [vmem:[%s6962 + $0x88] sm:$0xff]
          %v6981 = vld [vmem:[%s6962 + $0x90] sm:$0xff]
          %v6982 = vld [vmem:[%s6962 + $0x98] sm:$0xff]
          %v6983 = vld [vmem:[%s6962 + $0xa0] sm:$0xff]
          %v6984 = vld [vmem:[%s6962 + $0xa8] sm:$0xff]
          %v6985 = vld [vmem:[%s6962 + $0xb0] sm:$0xff]
          %v6986 = vld [vmem:[%s6962 + $0xb8] sm:$0xff]
          %v6987 = vld [vmem:[%s6962 + $0xc0] sm:$0xff]
          %v6988 = vld [vmem:[%s6962 + $0xc8] sm:$0xff]
          %v6989 = vld [vmem:[%s6962 + $0xd0] sm:$0xff]
          %v6990 = vld [vmem:[%s6962 + $0xd8] sm:$0xff]
          %v6991 = vld [vmem:[%s6962 + $0xe0] sm:$0xff]
          %v6992 = vld [vmem:[%s6962 + $0xe8] sm:$0xff]
          %v6993 = vld [vmem:[%s6962 + $0xf0] sm:$0xff]
          %v6994 = vld [vmem:[%s6962 + $0xf8] sm:$0xff]
          %v6995 = vunpack.c.l.bf16 %v6963
          %v6996 = vunpack.c.h.bf16 %v6963
          %v6997 = vunpack.c.l.bf16 %v6964
          %v6998 = vunpack.c.h.bf16 %v6964
          %v6999 = vunpack.c.l.bf16 %v6965
          %v7000 = vunpack.c.h.bf16 %v6965
          %v7001 = vunpack.c.l.bf16 %v6966
          %v7002 = vunpack.c.h.bf16 %v6966
          %v7003 = vunpack.c.l.bf16 %v6967
          %v7004 = vunpack.c.h.bf16 %v6967
          %v7005 = vunpack.c.l.bf16 %v6968
          %v7006 = vunpack.c.h.bf16 %v6968
          %v7007 = vunpack.c.l.bf16 %v6969
          %v7008 = vunpack.c.h.bf16 %v6969
          %v7009 = vunpack.c.l.bf16 %v6970
          %v7010 = vunpack.c.h.bf16 %v6970
          %v7011 = vunpack.c.l.bf16 %v6971
          %v7012 = vunpack.c.h.bf16 %v6971
          %v7013 = vunpack.c.l.bf16 %v6972
          %v7014 = vunpack.c.h.bf16 %v6972
          %v7015 = vunpack.c.l.bf16 %v6973
          %v7016 = vunpack.c.h.bf16 %v6973
          %v7017 = vunpack.c.l.bf16 %v6974
          %v7018 = vunpack.c.h.bf16 %v6974
          %v7019 = vunpack.c.l.bf16 %v6975
          %v7020 = vunpack.c.h.bf16 %v6975
          %v7021 = vunpack.c.l.bf16 %v6976
          %v7022 = vunpack.c.h.bf16 %v6976
          %v7023 = vunpack.c.l.bf16 %v6977
          %v7024 = vunpack.c.h.bf16 %v6977
          %v7025 = vunpack.c.l.bf16 %v6978
          %v7026 = vunpack.c.h.bf16 %v6978
          %v7027 = vunpack.c.l.bf16 %v6979
          %v7028 = vunpack.c.h.bf16 %v6979
          %v7029 = vunpack.c.l.bf16 %v6980
          %v7030 = vunpack.c.h.bf16 %v6980
          %v7031 = vunpack.c.l.bf16 %v6981
          %v7032 = vunpack.c.h.bf16 %v6981
          %v7033 = vunpack.c.l.bf16 %v6982
          %v7034 = vunpack.c.h.bf16 %v6982
          %v7035 = vunpack.c.l.bf16 %v6983
          %v7036 = vunpack.c.h.bf16 %v6983
          %v7037 = vunpack.c.l.bf16 %v6984
          %v7038 = vunpack.c.h.bf16 %v6984
          %v7039 = vunpack.c.l.bf16 %v6985
          %v7040 = vunpack.c.h.bf16 %v6985
          %v7041 = vunpack.c.l.bf16 %v6986
          %v7042 = vunpack.c.h.bf16 %v6986
          %v7043 = vunpack.c.l.bf16 %v6987
          %v7044 = vunpack.c.h.bf16 %v6987
          %v7045 = vunpack.c.l.bf16 %v6988
          %v7046 = vunpack.c.h.bf16 %v6988
          %v7047 = vunpack.c.l.bf16 %v6989
          %v7048 = vunpack.c.h.bf16 %v6989
          %v7049 = vunpack.c.l.bf16 %v6990
          %v7050 = vunpack.c.h.bf16 %v6990
          %v7051 = vunpack.c.l.bf16 %v6991
          %v7052 = vunpack.c.h.bf16 %v6991
          %v7053 = vunpack.c.l.bf16 %v6992
          %v7054 = vunpack.c.h.bf16 %v6992
          %v7055 = vunpack.c.l.bf16 %v6993
          %v7056 = vunpack.c.h.bf16 %v6993
          %v7057 = vunpack.c.l.bf16 %v6994
          %v7058 = vunpack.c.h.bf16 %v6994
          %vm7059 = vcmask 1045508
          %vm7060 = vmor %vm464, %vm7059
          %v7061 = vrot.slane %v6677, 6
          %v7062 = vrot.slane %v7061, 4
          %v7063 = vrot.slane %v6678, 6
          %v7064 = vsel %vm7060, %v7062, %v7063
          %v7065 = vrot.slane %v6679, 6
          %v7066 = vrot.slane %v7065, 4
          %v7067 = vrot.slane %v6680, 6
          %v7068 = vsel %vm7060, %v7066, %v7067
          %v7069 = vrot.slane %v6681, 6
          %v7070 = vrot.slane %v7069, 4
          %v7071 = vrot.slane %v6682, 6
          %v7072 = vsel %vm7060, %v7070, %v7071
          %v7073 = vrot.slane %v6683, 6
          %v7074 = vrot.slane %v7073, 4
          %v7075 = vrot.slane %v6684, 6
          %v7076 = vsel %vm7060, %v7074, %v7075
          %v7077 = vrot.slane %v6685, 6
          %v7078 = vrot.slane %v7077, 4
          %v7079 = vrot.slane %v6686, 6
          %v7080 = vsel %vm7060, %v7078, %v7079
          %v7081 = vrot.slane %v6687, 6
          %v7082 = vrot.slane %v7081, 4
          %v7083 = vrot.slane %v6688, 6
          %v7084 = vsel %vm7060, %v7082, %v7083
          %v7085 = vrot.slane %v6689, 6
          %v7086 = vrot.slane %v7085, 4
          %v7087 = vrot.slane %v6690, 6
          %v7088 = vsel %vm7060, %v7086, %v7087
          %v7089 = vrot.slane %v6691, 6
          %v7090 = vrot.slane %v7089, 4
          %v7091 = vrot.slane %v6692, 6
          %v7092 = vsel %vm7060, %v7090, %v7091
          %v7093 = vcombine.low %v7064, %v7068
          %v7094 = vcombine.high %v7064, %v7068
          %v7095 = vcombine.low %v7072, %v7076
          %v7096 = vcombine.high %v7072, %v7076
          %v7097 = vcombine.low %v7080, %v7084
          %v7098 = vcombine.high %v7080, %v7084
          %v7099 = vcombine.low %v7088, %v7092
          %v7100 = vcombine.high %v7088, %v7092
          %7109 = vmatprep.subr.mxu0 %v6996
          %7110 = vmatpush1.msra.mxu0 %v6995
          %7111 = vmatprep.subr.mxu0 %v6998
          %7112 = vmatpush1.msra.mxu0 %v6997
          %7113 = vmatprep.subr.mxu0 %v7000
          %7114 = vmatpush1.msra.mxu0 %v6999
          %7115 = vmatprep.subr.mxu0 %v7002
          %7116 = vmatpush1.msra.mxu0 %v7001
          %7117 = vmatprep.subr.mxu0 %v7004
          %7118 = vmatpush1.msra.mxu0 %v7003
          %7119 = vmatprep.subr.mxu0 %v7006
          %7120 = vmatpush1.msra.mxu0 %v7005
          %7121 = vmatprep.subr.mxu0 %v7008
          %7122 = vmatpush1.msra.mxu0 %v7007
          %7123 = vmatprep.subr.mxu0 %v7010
          %7124 = vmatpush1.msra.mxu0 %v7009
          %7125 = vmatprep.subr.mxu0 %v7012
          %7126 = vmatpush1.msra.mxu0 %v7011
          %7127 = vmatprep.subr.mxu0 %v7014
          %7128 = vmatpush1.msra.mxu0 %v7013
          %7129 = vmatprep.subr.mxu0 %v7016
          %7130 = vmatpush1.msra.mxu0 %v7015
          %7131 = vmatprep.subr.mxu0 %v7018
          %7132 = vmatpush1.msra.mxu0 %v7017
          %7133 = vmatprep.subr.mxu0 %v7020
          %7134 = vmatpush1.msra.mxu0 %v7019
          %7135 = vmatprep.subr.mxu0 %v7022
          %7136 = vmatpush1.msra.mxu0 %v7021
          %7137 = vmatprep.subr.mxu0 %v7024
          %7138 = vmatpush1.msra.mxu0 %v7023
          %7139 = vmatprep.subr.mxu0 %v7026
          %7140 = vmatpush1.msra.mxu0 %v7025
          %7141 = vmatprep.subr.mxu0 %v7028
          %7142 = vmatpush1.msra.mxu0 %v7027
          %7143 = vmatprep.subr.mxu0 %v7030
          %7144 = vmatpush1.msra.mxu0 %v7029
          %7145 = vmatprep.subr.mxu0 %v7032
          %7146 = vmatpush1.msra.mxu0 %v7031
          %7147 = vmatprep.subr.mxu0 %v7034
          %7148 = vmatpush1.msra.mxu0 %v7033
          %7149 = vmatprep.subr.mxu0 %v7036
          %7150 = vmatpush1.msra.mxu0 %v7035
          %7151 = vmatprep.subr.mxu0 %v7038
          %7152 = vmatpush1.msra.mxu0 %v7037
          %7153 = vmatprep.subr.mxu0 %v7040
          %7154 = vmatpush1.msra.mxu0 %v7039
          %7155 = vmatprep.subr.mxu0 %v7042
          %7156 = vmatpush1.msra.mxu0 %v7041
          %7157 = vmatprep.subr.mxu0 %v7044
          %7158 = vmatpush1.msra.mxu0 %v7043
          %7159 = vmatprep.subr.mxu0 %v7046
          %7160 = vmatpush1.msra.mxu0 %v7045
          %7161 = vmatprep.subr.mxu0 %v7048
          %7162 = vmatpush1.msra.mxu0 %v7047
          %7163 = vmatprep.subr.mxu0 %v7050
          %7164 = vmatpush1.msra.mxu0 %v7049
          %7165 = vmatprep.subr.mxu0 %v7052
          %7166 = vmatpush1.msra.mxu0 %v7051
          %7167 = vmatprep.subr.mxu0 %v7054
          %7168 = vmatpush1.msra.mxu0 %v7053
          %7169 = vmatprep.subr.mxu0 %v7056
          %7170 = vmatpush1.msra.mxu0 %v7055
          %7171 = vmatprep.subr.mxu0 %v7058
          %7172 = vmatpush1.msra.mxu0 %v7057
          %7173 = vmatprep.mubr.f32.mxu0 %v7094
          %7174 = vmatmul.mubr.f32.gmra.mrb[0].mxu0 %v7093
          %v7175 = vpop.f32.mrb[0].mxu0
          %v7176 = vadd.f32 0.0, %v7175
          %v7177 = vpop.f32.mrb[0].mxu0
          %v7178 = vadd.f32 0.0, %v7177
          %7179 = vmatprep.mubr.f32.mxu0 %v7096
          %7180 = vmatmul.mubr.f32.gmra.mrb[0].mxu0 %v7095
          %v7181 = vpop.f32.mrb[0].mxu0
          %v7182 = vadd.f32 0.0, %v7181
          %v7183 = vpop.f32.mrb[0].mxu0
          %v7184 = vadd.f32 0.0, %v7183
          %7185 = vmatprep.mubr.f32.mxu0 %v7098
          %7186 = vmatmul.mubr.f32.gmra.mrb[0].mxu0 %v7097
          %v7187 = vpop.f32.mrb[0].mxu0
          %v7188 = vadd.f32 0.0, %v7187
          %v7189 = vpop.f32.mrb[0].mxu0
          %v7190 = vadd.f32 0.0, %v7189
          %7191 = vmatprep.mubr.f32.mxu0 %v7100
          %7192 = vmatmul.mubr.f32.gmra.mrb[0].mxu0 %v7099
          %v7193 = vpop.f32.mrb[0].mxu0
          %v7194 = vadd.f32 0.0, %v7193
          %v7195 = vpop.f32.mrb[0].mxu0
          %v7196 = vadd.f32 0.0, %v7195
          %7197 = vdwg.mxu0
          %v7206 = vcombine.low %v7176, %v7178
          %v7207 = vcombine.high %v7176, %v7178
          %v7208 = vcombine.low %v7182, %v7184
          %v7209 = vcombine.high %v7182, %v7184
          %v7210 = vcombine.low %v7188, %v7190
          %v7211 = vcombine.high %v7188, %v7190
          %v7212 = vcombine.low %v7194, %v7196
          %v7213 = vcombine.high %v7194, %v7196
          %v7222 = vadd.f32 %v6946, %v7206
          %v7223 = vadd.f32 %v6947, %v7207
          %v7224 = vadd.f32 %v6948, %v7208
          %v7225 = vadd.f32 %v6949, %v7209
          %v7226 = vadd.f32 %v6950, %v7210
          %v7227 = vadd.f32 %v6951, %v7211
          %v7228 = vadd.f32 %v6952, %v7212
          %v7229 = vadd.f32 %v6953, %v7213
          %s7230 = scalar_lea.vmem [#allocation8], 768
          %v7231 = vld [vmem:[%s7230] sm:$0xff]
          %v7232 = vld [vmem:[%s7230 + $0x8] sm:$0xff]
          %v7233 = vld [vmem:[%s7230 + $0x10] sm:$0xff]
          %v7234 = vld [vmem:[%s7230 + $0x18] sm:$0xff]
          %v7235 = vld [vmem:[%s7230 + $0x20] sm:$0xff]
          %v7236 = vld [vmem:[%s7230 + $0x28] sm:$0xff]
          %v7237 = vld [vmem:[%s7230 + $0x30] sm:$0xff]
          %v7238 = vld [vmem:[%s7230 + $0x38] sm:$0xff]
          %v7239 = vld [vmem:[%s7230 + $0x40] sm:$0xff]
          %v7240 = vld [vmem:[%s7230 + $0x48] sm:$0xff]
          %v7241 = vld [vmem:[%s7230 + $0x50] sm:$0xff]
          %v7242 = vld [vmem:[%s7230 + $0x58] sm:$0xff]
          %v7243 = vld [vmem:[%s7230 + $0x60] sm:$0xff]
          %v7244 = vld [vmem:[%s7230 + $0x68] sm:$0xff]
          %v7245 = vld [vmem:[%s7230 + $0x70] sm:$0xff]
          %v7246 = vld [vmem:[%s7230 + $0x78] sm:$0xff]
          %v7247 = vld [vmem:[%s7230 + $0x80] sm:$0xff]
          %v7248 = vld [vmem:[%s7230 + $0x88] sm:$0xff]
          %v7249 = vld [vmem:[%s7230 + $0x90] sm:$0xff]
          %v7250 = vld [vmem:[%s7230 + $0x98] sm:$0xff]
          %v7251 = vld [vmem:[%s7230 + $0xa0] sm:$0xff]
          %v7252 = vld [vmem:[%s7230 + $0xa8] sm:$0xff]
          %v7253 = vld [vmem:[%s7230 + $0xb0] sm:$0xff]
          %v7254 = vld [vmem:[%s7230 + $0xb8] sm:$0xff]
          %v7255 = vld [vmem:[%s7230 + $0xc0] sm:$0xff]
          %v7256 = vld [vmem:[%s7230 + $0xc8] sm:$0xff]
          %v7257 = vld [vmem:[%s7230 + $0xd0] sm:$0xff]
          %v7258 = vld [vmem:[%s7230 + $0xd8] sm:$0xff]
          %v7259 = vld [vmem:[%s7230 + $0xe0] sm:$0xff]
          %v7260 = vld [vmem:[%s7230 + $0xe8] sm:$0xff]
          %v7261 = vld [vmem:[%s7230 + $0xf0] sm:$0xff]
          %v7262 = vld [vmem:[%s7230 + $0xf8] sm:$0xff]
          %v7263 = vunpack.c.l.bf16 %v7231
          %v7264 = vunpack.c.h.bf16 %v7231
          %v7265 = vunpack.c.l.bf16 %v7232
          %v7266 = vunpack.c.h.bf16 %v7232
          %v7267 = vunpack.c.l.bf16 %v7233
          %v7268 = vunpack.c.h.bf16 %v7233
          %v7269 = vunpack.c.l.bf16 %v7234
          %v7270 = vunpack.c.h.bf16 %v7234
          %v7271 = vunpack.c.l.bf16 %v7235
          %v7272 = vunpack.c.h.bf16 %v7235
          %v7273 = vunpack.c.l.bf16 %v7236
          %v7274 = vunpack.c.h.bf16 %v7236
          %v7275 = vunpack.c.l.bf16 %v7237
          %v7276 = vunpack.c.h.bf16 %v7237
          %v7277 = vunpack.c.l.bf16 %v7238
          %v7278 = vunpack.c.h.bf16 %v7238
          %v7279 = vunpack.c.l.bf16 %v7239
          %v7280 = vunpack.c.h.bf16 %v7239
          %v7281 = vunpack.c.l.bf16 %v7240
          %v7282 = vunpack.c.h.bf16 %v7240
          %v7283 = vunpack.c.l.bf16 %v7241
          %v7284 = vunpack.c.h.bf16 %v7241
          %v7285 = vunpack.c.l.bf16 %v7242
          %v7286 = vunpack.c.h.bf16 %v7242
          %v7287 = vunpack.c.l.bf16 %v7243
          %v7288 = vunpack.c.h.bf16 %v7243
          %v7289 = vunpack.c.l.bf16 %v7244
          %v7290 = vunpack.c.h.bf16 %v7244
          %v7291 = vunpack.c.l.bf16 %v7245
          %v7292 = vunpack.c.h.bf16 %v7245
          %v7293 = vunpack.c.l.bf16 %v7246
          %v7294 = vunpack.c.h.bf16 %v7246
          %v7295 = vunpack.c.l.bf16 %v7247
          %v7296 = vunpack.c.h.bf16 %v7247
          %v7297 = vunpack.c.l.bf16 %v7248
          %v7298 = vunpack.c.h.bf16 %v7248
          %v7299 = vunpack.c.l.bf16 %v7249
          %v7300 = vunpack.c.h.bf16 %v7249
          %v7301 = vunpack.c.l.bf16 %v7250
          %v7302 = vunpack.c.h.bf16 %v7250
          %v7303 = vunpack.c.l.bf16 %v7251
          %v7304 = vunpack.c.h.bf16 %v7251
          %v7305 = vunpack.c.l.bf16 %v7252
          %v7306 = vunpack.c.h.bf16 %v7252
          %v7307 = vunpack.c.l.bf16 %v7253
          %v7308 = vunpack.c.h.bf16 %v7253
          %v7309 = vunpack.c.l.bf16 %v7254
          %v7310 = vunpack.c.h.bf16 %v7254
          %v7311 = vunpack.c.l.bf16 %v7255
          %v7312 = vunpack.c.h.bf16 %v7255
          %v7313 = vunpack.c.l.bf16 %v7256
          %v7314 = vunpack.c.h.bf16 %v7256
          %v7315 = vunpack.c.l.bf16 %v7257
          %v7316 = vunpack.c.h.bf16 %v7257
          %v7317 = vunpack.c.l.bf16 %v7258
          %v7318 = vunpack.c.h.bf16 %v7258
          %v7319 = vunpack.c.l.bf16 %v7259
          %v7320 = vunpack.c.h.bf16 %v7259
          %v7321 = vunpack.c.l.bf16 %v7260
          %v7322 = vunpack.c.h.bf16 %v7260
          %v7323 = vunpack.c.l.bf16 %v7261
          %v7324 = vunpack.c.h.bf16 %v7261
          %v7325 = vunpack.c.l.bf16 %v7262
          %v7326 = vunpack.c.h.bf16 %v7262
          %v7331 = vcombine.low %v6452, %v6453
          %v7332 = vcombine.low %v6464, %v6465
          %v7333 = vcombine.low %v6679, %v6681
          %v7334 = vcombine.high %v6679, %v6681
          %v7335 = vcombine.low %v6683, %v7331
          %v7336 = vcombine.high %v6683, %v7331
          %v7337 = vcombine.low %v6687, %v6689
          %v7338 = vcombine.high %v6687, %v6689
          %v7339 = vcombine.low %v6691, %v7332
          %v7340 = vcombine.high %v6691, %v7332
          %7349 = vmatprep.subr.mxu0 %v7264
          %7350 = vmatpush1.msra.mxu0 %v7263
          %7351 = vmatprep.subr.mxu0 %v7266
          %7352 = vmatpush1.msra.mxu0 %v7265
          %7353 = vmatprep.subr.mxu0 %v7268
          %7354 = vmatpush1.msra.mxu0 %v7267
          %7355 = vmatprep.subr.mxu0 %v7270
          %7356 = vmatpush1.msra.mxu0 %v7269
          %7357 = vmatprep.subr.mxu0 %v7272
          %7358 = vmatpush1.msra.mxu0 %v7271
          %7359 = vmatprep.subr.mxu0 %v7274
          %7360 = vmatpush1.msra.mxu0 %v7273
          %7361 = vmatprep.subr.mxu0 %v7276
          %7362 = vmatpush1.msra.mxu0 %v7275
          %7363 = vmatprep.subr.mxu0 %v7278
          %7364 = vmatpush1.msra.mxu0 %v7277
          %7365 = vmatprep.subr.mxu0 %v7280
          %7366 = vmatpush1.msra.mxu0 %v7279
          %7367 = vmatprep.subr.mxu0 %v7282
          %7368 = vmatpush1.msra.mxu0 %v7281
          %7369 = vmatprep.subr.mxu0 %v7284
          %7370 = vmatpush1.msra.mxu0 %v7283
          %7371 = vmatprep.subr.mxu0 %v7286
          %7372 = vmatpush1.msra.mxu0 %v7285
          %7373 = vmatprep.subr.mxu0 %v7288
          %7374 = vmatpush1.msra.mxu0 %v7287
          %7375 = vmatprep.subr.mxu0 %v7290
          %7376 = vmatpush1.msra.mxu0 %v7289
          %7377 = vmatprep.subr.mxu0 %v7292
          %7378 = vmatpush1.msra.mxu0 %v7291
          %7379 = vmatprep.subr.mxu0 %v7294
          %7380 = vmatpush1.msra.mxu0 %v7293
          %7381 = vmatprep.subr.mxu0 %v7296
          %7382 = vmatpush1.msra.mxu0 %v7295
          %7383 = vmatprep.subr.mxu0 %v7298
          %7384 = vmatpush1.msra.mxu0 %v7297
          %7385 = vmatprep.subr.mxu0 %v7300
          %7386 = vmatpush1.msra.mxu0 %v7299
          %7387 = vmatprep.subr.mxu0 %v7302
          %7388 = vmatpush1.msra.mxu0 %v7301
          %7389 = vmatprep.subr.mxu0 %v7304
          %7390 = vmatpush1.msra.mxu0 %v7303
          %7391 = vmatprep.subr.mxu0 %v7306
          %7392 = vmatpush1.msra.mxu0 %v7305
          %7393 = vmatprep.subr.mxu0 %v7308
          %7394 = vmatpush1.msra.mxu0 %v7307
          %7395 = vmatprep.subr.mxu0 %v7310
          %7396 = vmatpush1.msra.mxu0 %v7309
          %7397 = vmatprep.subr.mxu0 %v7312
          %7398 = vmatpush1.msra.mxu0 %v7311
          %7399 = vmatprep.subr.mxu0 %v7314
          %7400 = vmatpush1.msra.mxu0 %v7313
          %7401 = vmatprep.subr.mxu0 %v7316
          %7402 = vmatpush1.msra.mxu0 %v7315
          %7403 = vmatprep.subr.mxu0 %v7318
          %7404 = vmatpush1.msra.mxu0 %v7317
          %7405 = vmatprep.subr.mxu0 %v7320
          %7406 = vmatpush1.msra.mxu0 %v7319
          %7407 = vmatprep.subr.mxu0 %v7322
          %7408 = vmatpush1.msra.mxu0 %v7321
          %7409 = vmatprep.subr.mxu0 %v7324
          %7410 = vmatpush1.msra.mxu0 %v7323
          %7411 = vmatprep.subr.mxu0 %v7326
          %7412 = vmatpush1.msra.mxu0 %v7325
          %7413 = vmatprep.mubr.f32.mxu0 %v7334
          %7414 = vmatmul.mubr.f32.gmra.mrb[0].mxu0 %v7333
          %v7415 = vpop.f32.mrb[0].mxu0
          %v7416 = vadd.f32 0.0, %v7415
          %v7417 = vpop.f32.mrb[0].mxu0
          %v7418 = vadd.f32 0.0, %v7417
          %7419 = vmatprep.mubr.f32.mxu0 %v7336
          %7420 = vmatmul.mubr.f32.gmra.mrb[0].mxu0 %v7335
          %v7421 = vpop.f32.mrb[0].mxu0
          %v7422 = vadd.f32 0.0, %v7421
          %v7423 = vpop.f32.mrb[0].mxu0
          %v7424 = vadd.f32 0.0, %v7423
          %7425 = vmatprep.mubr.f32.mxu0 %v7338
          %7426 = vmatmul.mubr.f32.gmra.mrb[0].mxu0 %v7337
          %v7427 = vpop.f32.mrb[0].mxu0
          %v7428 = vadd.f32 0.0, %v7427
          %v7429 = vpop.f32.mrb[0].mxu0
          %v7430 = vadd.f32 0.0, %v7429
          %7431 = vmatprep.mubr.f32.mxu0 %v7340
          %7432 = vmatmul.mubr.f32.gmra.mrb[0].mxu0 %v7339
          %v7433 = vpop.f32.mrb[0].mxu0
          %v7434 = vadd.f32 0.0, %v7433
          %v7435 = vpop.f32.mrb[0].mxu0
          %v7436 = vadd.f32 0.0, %v7435
          %7437 = vdwg.mxu0
          %v7446 = vcombine.low %v7416, %v7418
          %v7447 = vcombine.high %v7416, %v7418
          %v7448 = vcombine.low %v7422, %v7424
          %v7449 = vcombine.high %v7422, %v7424
          %v7450 = vcombine.low %v7428, %v7430
          %v7451 = vcombine.high %v7428, %v7430
          %v7452 = vcombine.low %v7434, %v7436
          %v7453 = vcombine.high %v7434, %v7436
          %v7462 = vadd.f32 %v7222, %v7446
          %v7463 = vadd.f32 %v7223, %v7447
          %v7464 = vadd.f32 %v7224, %v7448
          %v7465 = vadd.f32 %v7225, %v7449
          %v7466 = vadd.f32 %v7226, %v7450
          %v7467 = vadd.f32 %v7227, %v7451
          %v7468 = vadd.f32 %v7228, %v7452
          %v7469 = vadd.f32 %v7229, %v7453
          %s7470 = scalar_lea.vmem [#allocation8], 1024
          %v7471 = vld [vmem:[%s7470] sm:$0xff]
          %v7472 = vld [vmem:[%s7470 + $0x8] sm:$0xff]
          %v7473 = vld [vmem:[%s7470 + $0x10] sm:$0xff]
          %v7474 = vld [vmem:[%s7470 + $0x18] sm:$0xff]
          %v7475 = vld [vmem:[%s7470 + $0x20] sm:$0xff]
          %v7476 = vld [vmem:[%s7470 + $0x28] sm:$0xff]
          %v7477 = vld [vmem:[%s7470 + $0x30] sm:$0xff]
          %v7478 = vld [vmem:[%s7470 + $0x38] sm:$0xff]
          %v7479 = vld [vmem:[%s7470 + $0x40] sm:$0xff]
          %v7480 = vld [vmem:[%s7470 + $0x48] sm:$0xff]
          %v7481 = vld [vmem:[%s7470 + $0x50] sm:$0xff]
          %v7482 = vld [vmem:[%s7470 + $0x58] sm:$0xff]
          %v7483 = vld [vmem:[%s7470 + $0x60] sm:$0xff]
          %v7484 = vld [vmem:[%s7470 + $0x68] sm:$0xff]
          %v7485 = vld [vmem:[%s7470 + $0x70] sm:$0xff]
          %v7486 = vld [vmem:[%s7470 + $0x78] sm:$0xff]
          %v7487 = vld [vmem:[%s7470 + $0x80] sm:$0xff]
          %v7488 = vld [vmem:[%s7470 + $0x88] sm:$0xff]
          %v7489 = vld [vmem:[%s7470 + $0x90] sm:$0xff]
          %v7490 = vld [vmem:[%s7470 + $0x98] sm:$0xff]
          %v7491 = vld [vmem:[%s7470 + $0xa0] sm:$0xff]
          %v7492 = vld [vmem:[%s7470 + $0xa8] sm:$0xff]
          %v7493 = vld [vmem:[%s7470 + $0xb0] sm:$0xff]
          %v7494 = vld [vmem:[%s7470 + $0xb8] sm:$0xff]
          %v7495 = vld [vmem:[%s7470 + $0xc0] sm:$0xff]
          %v7496 = vld [vmem:[%s7470 + $0xc8] sm:$0xff]
          %v7497 = vld [vmem:[%s7470 + $0xd0] sm:$0xff]
          %v7498 = vld [vmem:[%s7470 + $0xd8] sm:$0xff]
          %v7499 = vld [vmem:[%s7470 + $0xe0] sm:$0xff]
          %v7500 = vld [vmem:[%s7470 + $0xe8] sm:$0xff]
          %v7501 = vld [vmem:[%s7470 + $0xf0] sm:$0xff]
          %v7502 = vld [vmem:[%s7470 + $0xf8] sm:$0xff]
          %v7503 = vunpack.c.l.bf16 %v7471
          %v7504 = vunpack.c.h.bf16 %v7471
          %v7505 = vunpack.c.l.bf16 %v7472
          %v7506 = vunpack.c.h.bf16 %v7472
          %v7507 = vunpack.c.l.bf16 %v7473
          %v7508 = vunpack.c.h.bf16 %v7473
          %v7509 = vunpack.c.l.bf16 %v7474
          %v7510 = vunpack.c.h.bf16 %v7474
          %v7511 = vunpack.c.l.bf16 %v7475
          %v7512 = vunpack.c.h.bf16 %v7475
          %v7513 = vunpack.c.l.bf16 %v7476
          %v7514 = vunpack.c.h.bf16 %v7476
          %v7515 = vunpack.c.l.bf16 %v7477
          %v7516 = vunpack.c.h.bf16 %v7477
          %v7517 = vunpack.c.l.bf16 %v7478
          %v7518 = vunpack.c.h.bf16 %v7478
          %v7519 = vunpack.c.l.bf16 %v7479
          %v7520 = vunpack.c.h.bf16 %v7479
          %v7521 = vunpack.c.l.bf16 %v7480
          %v7522 = vunpack.c.h.bf16 %v7480
          %v7523 = vunpack.c.l.bf16 %v7481
          %v7524 = vunpack.c.h.bf16 %v7481
          %v7525 = vunpack.c.l.bf16 %v7482
          %v7526 = vunpack.c.h.bf16 %v7482
          %v7527 = vunpack.c.l.bf16 %v7483
          %v7528 = vunpack.c.h.bf16 %v7483
          %v7529 = vunpack.c.l.bf16 %v7484
          %v7530 = vunpack.c.h.bf16 %v7484
          %v7531 = vunpack.c.l.bf16 %v7485
          %v7532 = vunpack.c.h.bf16 %v7485
          %v7533 = vunpack.c.l.bf16 %v7486
          %v7534 = vunpack.c.h.bf16 %v7486
          %v7535 = vunpack.c.l.bf16 %v7487
          %v7536 = vunpack.c.h.bf16 %v7487
          %v7537 = vunpack.c.l.bf16 %v7488
          %v7538 = vunpack.c.h.bf16 %v7488
          %v7539 = vunpack.c.l.bf16 %v7489
          %v7540 = vunpack.c.h.bf16 %v7489
          %v7541 = vunpack.c.l.bf16 %v7490
          %v7542 = vunpack.c.h.bf16 %v7490
          %v7543 = vunpack.c.l.bf16 %v7491
          %v7544 = vunpack.c.h.bf16 %v7491
          %v7545 = vunpack.c.l.bf16 %v7492
          %v7546 = vunpack.c.h.bf16 %v7492
          %v7547 = vunpack.c.l.bf16 %v7493
          %v7548 = vunpack.c.h.bf16 %v7493
          %v7549 = vunpack.c.l.bf16 %v7494
          %v7550 = vunpack.c.h.bf16 %v7494
          %v7551 = vunpack.c.l.bf16 %v7495
          %v7552 = vunpack.c.h.bf16 %v7495
          %v7553 = vunpack.c.l.bf16 %v7496
          %v7554 = vunpack.c.h.bf16 %v7496
          %v7555 = vunpack.c.l.bf16 %v7497
          %v7556 = vunpack.c.h.bf16 %v7497
          %v7557 = vunpack.c.l.bf16 %v7498
          %v7558 = vunpack.c.h.bf16 %v7498
          %v7559 = vunpack.c.l.bf16 %v7499
          %v7560 = vunpack.c.h.bf16 %v7499
          %v7561 = vunpack.c.l.bf16 %v7500
          %v7562 = vunpack.c.h.bf16 %v7500
          %v7563 = vunpack.c.l.bf16 %v7501
          %v7564 = vunpack.c.h.bf16 %v7501
          %v7565 = vunpack.c.l.bf16 %v7502
          %v7566 = vunpack.c.h.bf16 %v7502
          %v7567 = vcombine.high %v6452, %v6453
          %v7568 = vcombine.high %v6464, %v6465
          %v7569 = vrot.slane %v7331, 5
          %v7570 = vrot.slane %v7569, 4
          %v7571 = vrot.slane %v7567, 5
          %v7572 = vsel %vm6695, %v7570, %v7571
          %v7573 = vrot.slane %v7332, 5
          %v7574 = vrot.slane %v7573, 4
          %v7575 = vrot.slane %v7568, 5
          %v7576 = vsel %vm6695, %v7574, %v7575
          %v7577 = vcombine.low %v6703, %v6707
          %v7578 = vcombine.high %v6703, %v6707
          %v7579 = vcombine.low %v6711, %v7572
          %v7580 = vcombine.high %v6711, %v7572
          %v7581 = vcombine.low %v6719, %v6723
          %v7582 = vcombine.high %v6719, %v6723
          %v7583 = vcombine.low %v6727, %v7576
          %v7584 = vcombine.high %v6727, %v7576
          %7593 = vmatprep.subr.mxu0 %v7504
          %7594 = vmatpush1.msra.mxu0 %v7503
          %7595 = vmatprep.subr.mxu0 %v7506
          %7596 = vmatpush1.msra.mxu0 %v7505
          %7597 = vmatprep.subr.mxu0 %v7508
          %7598 = vmatpush1.msra.mxu0 %v7507
          %7599 = vmatprep.subr.mxu0 %v7510
          %7600 = vmatpush1.msra.mxu0 %v7509
          %7601 = vmatprep.subr.mxu0 %v7512
          %7602 = vmatpush1.msra.mxu0 %v7511
          %7603 = vmatprep.subr.mxu0 %v7514
          %7604 = vmatpush1.msra.mxu0 %v7513
          %7605 = vmatprep.subr.mxu0 %v7516
          %7606 = vmatpush1.msra.mxu0 %v7515
          %7607 = vmatprep.subr.mxu0 %v7518
          %7608 = vmatpush1.msra.mxu0 %v7517
          %7609 = vmatprep.subr.mxu0 %v7520
          %7610 = vmatpush1.msra.mxu0 %v7519
          %7611 = vmatprep.subr.mxu0 %v7522
          %7612 = vmatpush1.msra.mxu0 %v7521
          %7613 = vmatprep.subr.mxu0 %v7524
          %7614 = vmatpush1.msra.mxu0 %v7523
          %7615 = vmatprep.subr.mxu0 %v7526
          %7616 = vmatpush1.msra.mxu0 %v7525
          %7617 = vmatprep.subr.mxu0 %v7528
          %7618 = vmatpush1.msra.mxu0 %v7527
          %7619 = vmatprep.subr.mxu0 %v7530
          %7620 = vmatpush1.msra.mxu0 %v7529
          %7621 = vmatprep.subr.mxu0 %v7532
          %7622 = vmatpush1.msra.mxu0 %v7531
          %7623 = vmatprep.subr.mxu0 %v7534
          %7624 = vmatpush1.msra.mxu0 %v7533
          %7625 = vmatprep.subr.mxu0 %v7536
          %7626 = vmatpush1.msra.mxu0 %v7535
          %7627 = vmatprep.subr.mxu0 %v7538
          %7628 = vmatpush1.msra.mxu0 %v7537
          %7629 = vmatprep.subr.mxu0 %v7540
          %7630 = vmatpush1.msra.mxu0 %v7539
          %7631 = vmatprep.subr.mxu0 %v7542
          %7632 = vmatpush1.msra.mxu0 %v7541
          %7633 = vmatprep.subr.mxu0 %v7544
          %7634 = vmatpush1.msra.mxu0 %v7543
          %7635 = vmatprep.subr.mxu0 %v7546
          %7636 = vmatpush1.msra.mxu0 %v7545
          %7637 = vmatprep.subr.mxu0 %v7548
          %7638 = vmatpush1.msra.mxu0 %v7547
          %7639 = vmatprep.subr.mxu0 %v7550
          %7640 = vmatpush1.msra.mxu0 %v7549
          %7641 = vmatprep.subr.mxu0 %v7552
          %7642 = vmatpush1.msra.mxu0 %v7551
          %7643 = vmatprep.subr.mxu0 %v7554
          %7644 = vmatpush1.msra.mxu0 %v7553
          %7645 = vmatprep.subr.mxu0 %v7556
          %7646 = vmatpush1.msra.mxu0 %v7555
          %7647 = vmatprep.subr.mxu0 %v7558
          %7648 = vmatpush1.msra.mxu0 %v7557
          %7649 = vmatprep.subr.mxu0 %v7560
          %7650 = vmatpush1.msra.mxu0 %v7559
          %7651 = vmatprep.subr.mxu0 %v7562
          %7652 = vmatpush1.msra.mxu0 %v7561
          %7653 = vmatprep.subr.mxu0 %v7564
          %7654 = vmatpush1.msra.mxu0 %v7563
          %7655 = vmatprep.subr.mxu0 %v7566
          %7656 = vmatpush1.msra.mxu0 %v7565
          %7657 = vmatprep.mubr.f32.mxu0 %v7578
          %7658 = vmatmul.mubr.f32.gmra.mrb[0].mxu0 %v7577
          %v7659 = vpop.f32.mrb[0].mxu0
          %v7660 = vadd.f32 0.0, %v7659
          %v7661 = vpop.f32.mrb[0].mxu0
          %v7662 = vadd.f32 0.0, %v7661
          %7663 = vmatprep.mubr.f32.mxu0 %v7580
          %7664 = vmatmul.mubr.f32.gmra.mrb[0].mxu0 %v7579
          %v7665 = vpop.f32.mrb[0].mxu0
          %v7666 = vadd.f32 0.0, %v7665
          %v7667 = vpop.f32.mrb[0].mxu0
          %v7668 = vadd.f32 0.0, %v7667
          %7669 = vmatprep.mubr.f32.mxu0 %v7582
          %7670 = vmatmul.mubr.f32.gmra.mrb[0].mxu0 %v7581
          %v7671 = vpop.f32.mrb[0].mxu0
          %v7672 = vadd.f32 0.0, %v7671
          %v7673 = vpop.f32.mrb[0].mxu0
          %v7674 = vadd.f32 0.0, %v7673
          %7675 = vmatprep.mubr.f32.mxu0 %v7584
          %7676 = vmatmul.mubr.f32.gmra.mrb[0].mxu0 %v7583
          %v7677 = vpop.f32.mrb[0].mxu0
          %v7678 = vadd.f32 0.0, %v7677
          %v7679 = vpop.f32.mrb[0].mxu0
          %v7680 = vadd.f32 0.0, %v7679
          %7681 = vdwg.mxu0
          %v7690 = vcombine.low %v7660, %v7662
          %v7691 = vcombine.high %v7660, %v7662
          %v7692 = vcombine.low %v7666, %v7668
          %v7693 = vcombine.high %v7666, %v7668
          %v7694 = vcombine.low %v7672, %v7674
          %v7695 = vcombine.high %v7672, %v7674
          %v7696 = vcombine.low %v7678, %v7680
          %v7697 = vcombine.high %v7678, %v7680
          %v7706 = vadd.f32 %v7462, %v7690
          %v7707 = vadd.f32 %v7463, %v7691
          %v7708 = vadd.f32 %v7464, %v7692
          %v7709 = vadd.f32 %v7465, %v7693
          %v7710 = vadd.f32 %v7466, %v7694
          %v7711 = vadd.f32 %v7467, %v7695
          %v7712 = vadd.f32 %v7468, %v7696
          %v7713 = vadd.f32 %v7469, %v7697
          %s7714 = scalar_lea.vmem [#allocation8], 1280
          %v7715 = vld [vmem:[%s7714] sm:$0xff]
          %v7716 = vld [vmem:[%s7714 + $0x8] sm:$0xff]
          %v7717 = vld [vmem:[%s7714 + $0x10] sm:$0xff]
          %v7718 = vld [vmem:[%s7714 + $0x18] sm:$0xff]
          %v7719 = vld [vmem:[%s7714 + $0x20] sm:$0xff]
          %v7720 = vld [vmem:[%s7714 + $0x28] sm:$0xff]
          %v7721 = vld [vmem:[%s7714 + $0x30] sm:$0xff]
          %v7722 = vld [vmem:[%s7714 + $0x38] sm:$0xff]
          %v7723 = vld [vmem:[%s7714 + $0x40] sm:$0xff]
          %v7724 = vld [vmem:[%s7714 + $0x48] sm:$0xff]
          %v7725 = vld [vmem:[%s7714 + $0x50] sm:$0xff]
          %v7726 = vld [vmem:[%s7714 + $0x58] sm:$0xff]
          %v7727 = vld [vmem:[%s7714 + $0x60] sm:$0xff]
          %v7728 = vld [vmem:[%s7714 + $0x68] sm:$0xff]
          %v7729 = vld [vmem:[%s7714 + $0x70] sm:$0xff]
          %v7730 = vld [vmem:[%s7714 + $0x78] sm:$0xff]
          %v7731 = vld [vmem:[%s7714 + $0x80] sm:$0xff]
          %v7732 = vld [vmem:[%s7714 + $0x88] sm:$0xff]
          %v7733 = vld [vmem:[%s7714 + $0x90] sm:$0xff]
          %v7734 = vld [vmem:[%s7714 + $0x98] sm:$0xff]
          %v7735 = vld [vmem:[%s7714 + $0xa0] sm:$0xff]
          %v7736 = vld [vmem:[%s7714 + $0xa8] sm:$0xff]
          %v7737 = vld [vmem:[%s7714 + $0xb0] sm:$0xff]
          %v7738 = vld [vmem:[%s7714 + $0xb8] sm:$0xff]
          %v7739 = vld [vmem:[%s7714 + $0xc0] sm:$0xff]
          %v7740 = vld [vmem:[%s7714 + $0xc8] sm:$0xff]
          %v7741 = vld [vmem:[%s7714 + $0xd0] sm:$0xff]
          %v7742 = vld [vmem:[%s7714 + $0xd8] sm:$0xff]
          %v7743 = vld [vmem:[%s7714 + $0xe0] sm:$0xff]
          %v7744 = vld [vmem:[%s7714 + $0xe8] sm:$0xff]
          %v7745 = vld [vmem:[%s7714 + $0xf0] sm:$0xff]
          %v7746 = vld [vmem:[%s7714 + $0xf8] sm:$0xff]
          %v7747 = vunpack.c.l.bf16 %v7715
          %v7748 = vunpack.c.h.bf16 %v7715
          %v7749 = vunpack.c.l.bf16 %v7716
          %v7750 = vunpack.c.h.bf16 %v7716
          %v7751 = vunpack.c.l.bf16 %v7717
          %v7752 = vunpack.c.h.bf16 %v7717
          %v7753 = vunpack.c.l.bf16 %v7718
          %v7754 = vunpack.c.h.bf16 %v7718
          %v7755 = vunpack.c.l.bf16 %v7719
          %v7756 = vunpack.c.h.bf16 %v7719
          %v7757 = vunpack.c.l.bf16 %v7720
          %v7758 = vunpack.c.h.bf16 %v7720
          %v7759 = vunpack.c.l.bf16 %v7721
          %v7760 = vunpack.c.h.bf16 %v7721
          %v7761 = vunpack.c.l.bf16 %v7722
          %v7762 = vunpack.c.h.bf16 %v7722
          %v7763 = vunpack.c.l.bf16 %v7723
          %v7764 = vunpack.c.h.bf16 %v7723
          %v7765 = vunpack.c.l.bf16 %v7724
          %v7766 = vunpack.c.h.bf16 %v7724
          %v7767 = vunpack.c.l.bf16 %v7725
          %v7768 = vunpack.c.h.bf16 %v7725
          %v7769 = vunpack.c.l.bf16 %v7726
          %v7770 = vunpack.c.h.bf16 %v7726
          %v7771 = vunpack.c.l.bf16 %v7727
          %v7772 = vunpack.c.h.bf16 %v7727
          %v7773 = vunpack.c.l.bf16 %v7728
          %v7774 = vunpack.c.h.bf16 %v7728
          %v7775 = vunpack.c.l.bf16 %v7729
          %v7776 = vunpack.c.h.bf16 %v7729
          %v7777 = vunpack.c.l.bf16 %v7730
          %v7778 = vunpack.c.h.bf16 %v7730
          %v7779 = vunpack.c.l.bf16 %v7731
          %v7780 = vunpack.c.h.bf16 %v7731
          %v7781 = vunpack.c.l.bf16 %v7732
          %v7782 = vunpack.c.h.bf16 %v7732
          %v7783 = vunpack.c.l.bf16 %v7733
          %v7784 = vunpack.c.h.bf16 %v7733
          %v7785 = vunpack.c.l.bf16 %v7734
          %v7786 = vunpack.c.h.bf16 %v7734
          %v7787 = vunpack.c.l.bf16 %v7735
          %v7788 = vunpack.c.h.bf16 %v7735
          %v7789 = vunpack.c.l.bf16 %v7736
          %v7790 = vunpack.c.h.bf16 %v7736
          %v7791 = vunpack.c.l.bf16 %v7737
          %v7792 = vunpack.c.h.bf16 %v7737
          %v7793 = vunpack.c.l.bf16 %v7738
          %v7794 = vunpack.c.h.bf16 %v7738
          %v7795 = vunpack.c.l.bf16 %v7739
          %v7796 = vunpack.c.h.bf16 %v7739
          %v7797 = vunpack.c.l.bf16 %v7740
          %v7798 = vunpack.c.h.bf16 %v7740
          %v7799 = vunpack.c.l.bf16 %v7741
          %v7800 = vunpack.c.h.bf16 %v7741
          %v7801 = vunpack.c.l.bf16 %v7742
          %v7802 = vunpack.c.h.bf16 %v7742
          %v7803 = vunpack.c.l.bf16 %v7743
          %v7804 = vunpack.c.h.bf16 %v7743
          %v7805 = vunpack.c.l.bf16 %v7744
          %v7806 = vunpack.c.h.bf16 %v7744
          %v7807 = vunpack.c.l.bf16 %v7745
          %v7808 = vunpack.c.h.bf16 %v7745
          %v7809 = vunpack.c.l.bf16 %v7746
          %v7810 = vunpack.c.h.bf16 %v7746
          %v7811 = vrot.slane %v7331, 6
          %v7812 = vrot.slane %v7811, 4
          %v7813 = vrot.slane %v7567, 6
          %v7814 = vsel %vm7060, %v7812, %v7813
          %v7815 = vrot.slane %v7332, 6
          %v7816 = vrot.slane %v7815, 4
          %v7817 = vrot.slane %v7568, 6
          %v7818 = vsel %vm7060, %v7816, %v7817
          %v7819 = vcombine.low %v7068, %v7072
          %v7820 = vcombine.high %v7068, %v7072
          %v7821 = vcombine.low %v7076, %v7814
          %v7822 = vcombine.high %v7076, %v7814
          %v7823 = vcombine.low %v7084, %v7088
          %v7824 = vcombine.high %v7084, %v7088
          %v7825 = vcombine.low %v7092, %v7818
          %v7826 = vcombine.high %v7092, %v7818
          %7835 = vmatprep.subr.mxu0 %v7748
          %7836 = vmatpush1.msra.mxu0 %v7747
          %7837 = vmatprep.subr.mxu0 %v7750
          %7838 = vmatpush1.msra.mxu0 %v7749
          %7839 = vmatprep.subr.mxu0 %v7752
          %7840 = vmatpush1.msra.mxu0 %v7751
          %7841 = vmatprep.subr.mxu0 %v7754
          %7842 = vmatpush1.msra.mxu0 %v7753
          %7843 = vmatprep.subr.mxu0 %v7756
          %7844 = vmatpush1.msra.mxu0 %v7755
          %7845 = vmatprep.subr.mxu0 %v7758
          %7846 = vmatpush1.msra.mxu0 %v7757
          %7847 = vmatprep.subr.mxu0 %v7760
          %7848 = vmatpush1.msra.mxu0 %v7759
          %7849 = vmatprep.subr.mxu0 %v7762
          %7850 = vmatpush1.msra.mxu0 %v7761
          %7851 = vmatprep.subr.mxu0 %v7764
          %7852 = vmatpush1.msra.mxu0 %v7763
          %7853 = vmatprep.subr.mxu0 %v7766
          %7854 = vmatpush1.msra.mxu0 %v7765
          %7855 = vmatprep.subr.mxu0 %v7768
          %7856 = vmatpush1.msra.mxu0 %v7767
          %7857 = vmatprep.subr.mxu0 %v7770
          %7858 = vmatpush1.msra.mxu0 %v7769
          %7859 = vmatprep.subr.mxu0 %v7772
          %7860 = vmatpush1.msra.mxu0 %v7771
          %7861 = vmatprep.subr.mxu0 %v7774
          %7862 = vmatpush1.msra.mxu0 %v7773
          %7863 = vmatprep.subr.mxu0 %v7776
          %7864 = vmatpush1.msra.mxu0 %v7775
          %7865 = vmatprep.subr.mxu0 %v7778
          %7866 = vmatpush1.msra.mxu0 %v7777
          %7867 = vmatprep.subr.mxu0 %v7780
          %7868 = vmatpush1.msra.mxu0 %v7779
          %7869 = vmatprep.subr.mxu0 %v7782
          %7870 = vmatpush1.msra.mxu0 %v7781
          %7871 = vmatprep.subr.mxu0 %v7784
          %7872 = vmatpush1.msra.mxu0 %v7783
          %7873 = vmatprep.subr.mxu0 %v7786
          %7874 = vmatpush1.msra.mxu0 %v7785
          %7875 = vmatprep.subr.mxu0 %v7788
          %7876 = vmatpush1.msra.mxu0 %v7787
          %7877 = vmatprep.subr.mxu0 %v7790
          %7878 = vmatpush1.msra.mxu0 %v7789
          %7879 = vmatprep.subr.mxu0 %v7792
          %7880 = vmatpush1.msra.mxu0 %v7791
          %7881 = vmatprep.subr.mxu0 %v7794
          %7882 = vmatpush1.msra.mxu0 %v7793
          %7883 = vmatprep.subr.mxu0 %v7796
          %7884 = vmatpush1.msra.mxu0 %v7795
          %7885 = vmatprep.subr.mxu0 %v7798
          %7886 = vmatpush1.msra.mxu0 %v7797
          %7887 = vmatprep.subr.mxu0 %v7800
          %7888 = vmatpush1.msra.mxu0 %v7799
          %7889 = vmatprep.subr.mxu0 %v7802
          %7890 = vmatpush1.msra.mxu0 %v7801
          %7891 = vmatprep.subr.mxu0 %v7804
          %7892 = vmatpush1.msra.mxu0 %v7803
          %7893 = vmatprep.subr.mxu0 %v7806
          %7894 = vmatpush1.msra.mxu0 %v7805
          %7895 = vmatprep.subr.mxu0 %v7808
          %7896 = vmatpush1.msra.mxu0 %v7807
          %7897 = vmatprep.subr.mxu0 %v7810
          %7898 = vmatpush1.msra.mxu0 %v7809
          %7899 = vmatprep.mubr.f32.mxu0 %v7820
          %7900 = vmatmul.mubr.f32.gmra.mrb[0].mxu0 %v7819
          %v7901 = vpop.f32.mrb[0].mxu0
          %v7902 = vadd.f32 0.0, %v7901
          %v7903 = vpop.f32.mrb[0].mxu0
          %v7904 = vadd.f32 0.0, %v7903
          %7905 = vmatprep.mubr.f32.mxu0 %v7822
          %7906 = vmatmul.mubr.f32.gmra.mrb[0].mxu0 %v7821
          %v7907 = vpop.f32.mrb[0].mxu0
          %v7908 = vadd.f32 0.0, %v7907
          %v7909 = vpop.f32.mrb[0].mxu0
          %v7910 = vadd.f32 0.0, %v7909
          %7911 = vmatprep.mubr.f32.mxu0 %v7824
          %7912 = vmatmul.mubr.f32.gmra.mrb[0].mxu0 %v7823
          %v7913 = vpop.f32.mrb[0].mxu0
          %v7914 = vadd.f32 0.0, %v7913
          %v7915 = vpop.f32.mrb[0].mxu0
          %v7916 = vadd.f32 0.0, %v7915
          %7917 = vmatprep.mubr.f32.mxu0 %v7826
          %7918 = vmatmul.mubr.f32.gmra.mrb[0].mxu0 %v7825
          %v7919 = vpop.f32.mrb[0].mxu0
          %v7920 = vadd.f32 0.0, %v7919
          %v7921 = vpop.f32.mrb[0].mxu0
          %v7922 = vadd.f32 0.0, %v7921
          %7923 = vdwg.mxu0
          %v7932 = vcombine.low %v7902, %v7904
          %v7933 = vcombine.high %v7902, %v7904
          %v7934 = vcombine.low %v7908, %v7910
          %v7935 = vcombine.high %v7908, %v7910
          %v7936 = vcombine.low %v7914, %v7916
          %v7937 = vcombine.high %v7914, %v7916
          %v7938 = vcombine.low %v7920, %v7922
          %v7939 = vcombine.high %v7920, %v7922
          %v7948 = vadd.f32 %v7706, %v7932
          %v7949 = vadd.f32 %v7707, %v7933
          %v7950 = vadd.f32 %v7708, %v7934
          %v7951 = vadd.f32 %v7709, %v7935
          %v7952 = vadd.f32 %v7710, %v7936
          %v7953 = vadd.f32 %v7711, %v7937
          %v7954 = vadd.f32 %v7712, %v7938
          %v7955 = vadd.f32 %v7713, %v7939
          %s7956 = scalar_lea.vmem [#allocation8], 1536
          %v7957 = vld [vmem:[%s7956] sm:$0xff]
          %v7958 = vld [vmem:[%s7956 + $0x8] sm:$0xff]
          %v7959 = vld [vmem:[%s7956 + $0x10] sm:$0xff]
          %v7960 = vld [vmem:[%s7956 + $0x18] sm:$0xff]
          %v7961 = vld [vmem:[%s7956 + $0x20] sm:$0xff]
          %v7962 = vld [vmem:[%s7956 + $0x28] sm:$0xff]
          %v7963 = vld [vmem:[%s7956 + $0x30] sm:$0xff]
          %v7964 = vld [vmem:[%s7956 + $0x38] sm:$0xff]
          %v7965 = vld [vmem:[%s7956 + $0x40] sm:$0xff]
          %v7966 = vld [vmem:[%s7956 + $0x48] sm:$0xff]
          %v7967 = vld [vmem:[%s7956 + $0x50] sm:$0xff]
          %v7968 = vld [vmem:[%s7956 + $0x58] sm:$0xff]
          %v7969 = vld [vmem:[%s7956 + $0x60] sm:$0xff]
          %v7970 = vld [vmem:[%s7956 + $0x68] sm:$0xff]
          %v7971 = vld [vmem:[%s7956 + $0x70] sm:$0xff]
          %v7972 = vld [vmem:[%s7956 + $0x78] sm:$0xff]
          %v7973 = vld [vmem:[%s7956 + $0x80] sm:$0xff]
          %v7974 = vld [vmem:[%s7956 + $0x88] sm:$0xff]
          %v7975 = vld [vmem:[%s7956 + $0x90] sm:$0xff]
          %v7976 = vld [vmem:[%s7956 + $0x98] sm:$0xff]
          %v7977 = vld [vmem:[%s7956 + $0xa0] sm:$0xff]
          %v7978 = vld [vmem:[%s7956 + $0xa8] sm:$0xff]
          %v7979 = vld [vmem:[%s7956 + $0xb0] sm:$0xff]
          %v7980 = vld [vmem:[%s7956 + $0xb8] sm:$0xff]
          %v7981 = vld [vmem:[%s7956 + $0xc0] sm:$0xff]
          %v7982 = vld [vmem:[%s7956 + $0xc8] sm:$0xff]
          %v7983 = vld [vmem:[%s7956 + $0xd0] sm:$0xff]
          %v7984 = vld [vmem:[%s7956 + $0xd8] sm:$0xff]
          %v7985 = vld [vmem:[%s7956 + $0xe0] sm:$0xff]
          %v7986 = vld [vmem:[%s7956 + $0xe8] sm:$0xff]
          %v7987 = vld [vmem:[%s7956 + $0xf0] sm:$0xff]
          %v7988 = vld [vmem:[%s7956 + $0xf8] sm:$0xff]
          %v7989 = vunpack.c.l.bf16 %v7957
          %v7990 = vunpack.c.h.bf16 %v7957
          %v7991 = vunpack.c.l.bf16 %v7958
          %v7992 = vunpack.c.h.bf16 %v7958
          %v7993 = vunpack.c.l.bf16 %v7959
          %v7994 = vunpack.c.h.bf16 %v7959
          %v7995 = vunpack.c.l.bf16 %v7960
          %v7996 = vunpack.c.h.bf16 %v7960
          %v7997 = vunpack.c.l.bf16 %v7961
          %v7998 = vunpack.c.h.bf16 %v7961
          %v7999 = vunpack.c.l.bf16 %v7962
          %v8000 = vunpack.c.h.bf16 %v7962
          %v8001 = vunpack.c.l.bf16 %v7963
          %v8002 = vunpack.c.h.bf16 %v7963
          %v8003 = vunpack.c.l.bf16 %v7964
          %v8004 = vunpack.c.h.bf16 %v7964
          %v8005 = vunpack.c.l.bf16 %v7965
          %v8006 = vunpack.c.h.bf16 %v7965
          %v8007 = vunpack.c.l.bf16 %v7966
          %v8008 = vunpack.c.h.bf16 %v7966
          %v8009 = vunpack.c.l.bf16 %v7967
          %v8010 = vunpack.c.h.bf16 %v7967
          %v8011 = vunpack.c.l.bf16 %v7968
          %v8012 = vunpack.c.h.bf16 %v7968
          %v8013 = vunpack.c.l.bf16 %v7969
          %v8014 = vunpack.c.h.bf16 %v7969
          %v8015 = vunpack.c.l.bf16 %v7970
          %v8016 = vunpack.c.h.bf16 %v7970
          %v8017 = vunpack.c.l.bf16 %v7971
          %v8018 = vunpack.c.h.bf16 %v7971
          %v8019 = vunpack.c.l.bf16 %v7972
          %v8020 = vunpack.c.h.bf16 %v7972
          %v8021 = vunpack.c.l.bf16 %v7973
          %v8022 = vunpack.c.h.bf16 %v7973
          %v8023 = vunpack.c.l.bf16 %v7974
          %v8024 = vunpack.c.h.bf16 %v7974
          %v8025 = vunpack.c.l.bf16 %v7975
          %v8026 = vunpack.c.h.bf16 %v7975
          %v8027 = vunpack.c.l.bf16 %v7976
          %v8028 = vunpack.c.h.bf16 %v7976
          %v8029 = vunpack.c.l.bf16 %v7977
          %v8030 = vunpack.c.h.bf16 %v7977
          %v8031 = vunpack.c.l.bf16 %v7978
          %v8032 = vunpack.c.h.bf16 %v7978
          %v8033 = vunpack.c.l.bf16 %v7979
          %v8034 = vunpack.c.h.bf16 %v7979
          %v8035 = vunpack.c.l.bf16 %v7980
          %v8036 = vunpack.c.h.bf16 %v7980
          %v8037 = vunpack.c.l.bf16 %v7981
          %v8038 = vunpack.c.h.bf16 %v7981
          %v8039 = vunpack.c.l.bf16 %v7982
          %v8040 = vunpack.c.h.bf16 %v7982
          %v8041 = vunpack.c.l.bf16 %v7983
          %v8042 = vunpack.c.h.bf16 %v7983
          %v8043 = vunpack.c.l.bf16 %v7984
          %v8044 = vunpack.c.h.bf16 %v7984
          %v8045 = vunpack.c.l.bf16 %v7985
          %v8046 = vunpack.c.h.bf16 %v7985
          %v8047 = vunpack.c.l.bf16 %v7986
          %v8048 = vunpack.c.h.bf16 %v7986
          %v8049 = vunpack.c.l.bf16 %v7987
          %v8050 = vunpack.c.h.bf16 %v7987
          %v8051 = vunpack.c.l.bf16 %v7988
          %v8052 = vunpack.c.h.bf16 %v7988
          %v8057 = vcombine.low %v6454, %v6455
          %v8058 = vcombine.low %v6466, %v6467
          %v8059 = vcombine.low %v7331, %v8057
          %v8060 = vcombine.high %v7331, %v8057
          %v8061 = vcombine.low %v7332, %v8058
          %v8062 = vcombine.high %v7332, %v8058
          %8067 = vmatprep.subr.mxu0 %v7990
          %8068 = vmatpush1.msra.mxu0 %v7989
          %8069 = vmatprep.subr.mxu0 %v7992
          %8070 = vmatpush1.msra.mxu0 %v7991
          %8071 = vmatprep.subr.mxu0 %v7994
          %8072 = vmatpush1.msra.mxu0 %v7993
          %8073 = vmatprep.subr.mxu0 %v7996
          %8074 = vmatpush1.msra.mxu0 %v7995
          %8075 = vmatprep.subr.mxu0 %v7998
          %8076 = vmatpush1.msra.mxu0 %v7997
          %8077 = vmatprep.subr.mxu0 %v8000
          %8078 = vmatpush1.msra.mxu0 %v7999
          %8079 = vmatprep.subr.mxu0 %v8002
          %8080 = vmatpush1.msra.mxu0 %v8001
          %8081 = vmatprep.subr.mxu0 %v8004
          %8082 = vmatpush1.msra.mxu0 %v8003
          %8083 = vmatprep.subr.mxu0 %v8006
          %8084 = vmatpush1.msra.mxu0 %v8005
          %8085 = vmatprep.subr.mxu0 %v8008
          %8086 = vmatpush1.msra.mxu0 %v8007
          %8087 = vmatprep.subr.mxu0 %v8010
          %8088 = vmatpush1.msra.mxu0 %v8009
          %8089 = vmatprep.subr.mxu0 %v8012
          %8090 = vmatpush1.msra.mxu0 %v8011
          %8091 = vmatprep.subr.mxu0 %v8014
          %8092 = vmatpush1.msra.mxu0 %v8013
          %8093 = vmatprep.subr.mxu0 %v8016
          %8094 = vmatpush1.msra.mxu0 %v8015
          %8095 = vmatprep.subr.mxu0 %v8018
          %8096 = vmatpush1.msra.mxu0 %v8017
          %8097 = vmatprep.subr.mxu0 %v8020
          %8098 = vmatpush1.msra.mxu0 %v8019
          %8099 = vmatprep.subr.mxu0 %v8022
          %8100 = vmatpush1.msra.mxu0 %v8021
          %8101 = vmatprep.subr.mxu0 %v8024
          %8102 = vmatpush1.msra.mxu0 %v8023
          %8103 = vmatprep.subr.mxu0 %v8026
          %8104 = vmatpush1.msra.mxu0 %v8025
          %8105 = vmatprep.subr.mxu0 %v8028
          %8106 = vmatpush1.msra.mxu0 %v8027
          %8107 = vmatprep.subr.mxu0 %v8030
          %8108 = vmatpush1.msra.mxu0 %v8029
          %8109 = vmatprep.subr.mxu0 %v8032
          %8110 = vmatpush1.msra.mxu0 %v8031
          %8111 = vmatprep.subr.mxu0 %v8034
          %8112 = vmatpush1.msra.mxu0 %v8033
          %8113 = vmatprep.subr.mxu0 %v8036
          %8114 = vmatpush1.msra.mxu0 %v8035
          %8115 = vmatprep.subr.mxu0 %v8038
          %8116 = vmatpush1.msra.mxu0 %v8037
          %8117 = vmatprep.subr.mxu0 %v8040
          %8118 = vmatpush1.msra.mxu0 %v8039
          %8119 = vmatprep.subr.mxu0 %v8042
          %8120 = vmatpush1.msra.mxu0 %v8041
          %8121 = vmatprep.subr.mxu0 %v8044
          %8122 = vmatpush1.msra.mxu0 %v8043
          %8123 = vmatprep.subr.mxu0 %v8046
          %8124 = vmatpush1.msra.mxu0 %v8045
          %8125 = vmatprep.subr.mxu0 %v8048
          %8126 = vmatpush1.msra.mxu0 %v8047
          %8127 = vmatprep.subr.mxu0 %v8050
          %8128 = vmatpush1.msra.mxu0 %v8049
          %8129 = vmatprep.subr.mxu0 %v8052
          %8130 = vmatpush1.msra.mxu0 %v8051
          %8131 = vmatprep.mubr.f32.mxu0 %v6836
          %8132 = vmatmul.mubr.f32.gmra.mrb[0].mxu0 %v6835
          %v8133 = vpop.f32.mrb[0].mxu0
          %v8134 = vadd.f32 0.0, %v8133
          %v8135 = vpop.f32.mrb[0].mxu0
          %v8136 = vadd.f32 0.0, %v8135
          %8137 = vmatprep.mubr.f32.mxu0 %v8060
          %8138 = vmatmul.mubr.f32.gmra.mrb[0].mxu0 %v8059
          %v8139 = vpop.f32.mrb[0].mxu0
          %v8140 = vadd.f32 0.0, %v8139
          %v8141 = vpop.f32.mrb[0].mxu0
          %v8142 = vadd.f32 0.0, %v8141
          %8143 = vmatprep.mubr.f32.mxu0 %v6840
          %8144 = vmatmul.mubr.f32.gmra.mrb[0].mxu0 %v6839
          %v8145 = vpop.f32.mrb[0].mxu0
          %v8146 = vadd.f32 0.0, %v8145
          %v8147 = vpop.f32.mrb[0].mxu0
          %v8148 = vadd.f32 0.0, %v8147
          %8149 = vmatprep.mubr.f32.mxu0 %v8062
          %8150 = vmatmul.mubr.f32.gmra.mrb[0].mxu0 %v8061
          %v8151 = vpop.f32.mrb[0].mxu0
          %v8152 = vadd.f32 0.0, %v8151
          %v8153 = vpop.f32.mrb[0].mxu0
          %v8154 = vadd.f32 0.0, %v8153
          %8155 = vdwg.mxu0
          %v8164 = vcombine.low %v8134, %v8136
          %v8165 = vcombine.high %v8134, %v8136
          %v8166 = vcombine.low %v8140, %v8142
          %v8167 = vcombine.high %v8140, %v8142
          %v8168 = vcombine.low %v8146, %v8148
          %v8169 = vcombine.high %v8146, %v8148
          %v8170 = vcombine.low %v8152, %v8154
          %v8171 = vcombine.high %v8152, %v8154
          %v8180 = vadd.f32 %v7948, %v8164
          %v8181 = vadd.f32 %v7949, %v8165
          %v8182 = vadd.f32 %v7950, %v8166
          %v8183 = vadd.f32 %v7951, %v8167
          %v8184 = vadd.f32 %v7952, %v8168
          %v8185 = vadd.f32 %v7953, %v8169
          %v8186 = vadd.f32 %v7954, %v8170
          %v8187 = vadd.f32 %v7955, %v8171
          %s8188 = scalar_lea.vmem [#allocation8], 1792
          %v8189 = vld [vmem:[%s8188] sm:$0xff]
          %v8190 = vld [vmem:[%s8188 + $0x8] sm:$0xff]
          %v8191 = vld [vmem:[%s8188 + $0x10] sm:$0xff]
          %v8192 = vld [vmem:[%s8188 + $0x18] sm:$0xff]
          %v8193 = vld [vmem:[%s8188 + $0x20] sm:$0xff]
          %v8194 = vld [vmem:[%s8188 + $0x28] sm:$0xff]
          %v8195 = vld [vmem:[%s8188 + $0x30] sm:$0xff]
          %v8196 = vld [vmem:[%s8188 + $0x38] sm:$0xff]
          %v8197 = vld [vmem:[%s8188 + $0x40] sm:$0xff]
          %v8198 = vld [vmem:[%s8188 + $0x48] sm:$0xff]
          %v8199 = vld [vmem:[%s8188 + $0x50] sm:$0xff]
          %v8200 = vld [vmem:[%s8188 + $0x58] sm:$0xff]
          %v8201 = vld [vmem:[%s8188 + $0x60] sm:$0xff]
          %v8202 = vld [vmem:[%s8188 + $0x68] sm:$0xff]
          %v8203 = vld [vmem:[%s8188 + $0x70] sm:$0xff]
          %v8204 = vld [vmem:[%s8188 + $0x78] sm:$0xff]
          %v8205 = vld [vmem:[%s8188 + $0x80] sm:$0xff]
          %v8206 = vld [vmem:[%s8188 + $0x88] sm:$0xff]
          %v8207 = vld [vmem:[%s8188 + $0x90] sm:$0xff]
          %v8208 = vld [vmem:[%s8188 + $0x98] sm:$0xff]
          %v8209 = vld [vmem:[%s8188 + $0xa0] sm:$0xff]
          %v8210 = vld [vmem:[%s8188 + $0xa8] sm:$0xff]
          %v8211 = vld [vmem:[%s8188 + $0xb0] sm:$0xff]
          %v8212 = vld [vmem:[%s8188 + $0xb8] sm:$0xff]
          %v8213 = vld [vmem:[%s8188 + $0xc0] sm:$0xff]
          %v8214 = vld [vmem:[%s8188 + $0xc8] sm:$0xff]
          %v8215 = vld [vmem:[%s8188 + $0xd0] sm:$0xff]
          %v8216 = vld [vmem:[%s8188 + $0xd8] sm:$0xff]
          %v8217 = vld [vmem:[%s8188 + $0xe0] sm:$0xff]
          %v8218 = vld [vmem:[%s8188 + $0xe8] sm:$0xff]
          %v8219 = vld [vmem:[%s8188 + $0xf0] sm:$0xff]
          %v8220 = vld [vmem:[%s8188 + $0xf8] sm:$0xff]
          %v8221 = vunpack.c.l.bf16 %v8189
          %v8222 = vunpack.c.h.bf16 %v8189
          %v8223 = vunpack.c.l.bf16 %v8190
          %v8224 = vunpack.c.h.bf16 %v8190
          %v8225 = vunpack.c.l.bf16 %v8191
          %v8226 = vunpack.c.h.bf16 %v8191
          %v8227 = vunpack.c.l.bf16 %v8192
          %v8228 = vunpack.c.h.bf16 %v8192
          %v8229 = vunpack.c.l.bf16 %v8193
          %v8230 = vunpack.c.h.bf16 %v8193
          %v8231 = vunpack.c.l.bf16 %v8194
          %v8232 = vunpack.c.h.bf16 %v8194
          %v8233 = vunpack.c.l.bf16 %v8195
          %v8234 = vunpack.c.h.bf16 %v8195
          %v8235 = vunpack.c.l.bf16 %v8196
          %v8236 = vunpack.c.h.bf16 %v8196
          %v8237 = vunpack.c.l.bf16 %v8197
          %v8238 = vunpack.c.h.bf16 %v8197
          %v8239 = vunpack.c.l.bf16 %v8198
          %v8240 = vunpack.c.h.bf16 %v8198
          %v8241 = vunpack.c.l.bf16 %v8199
          %v8242 = vunpack.c.h.bf16 %v8199
          %v8243 = vunpack.c.l.bf16 %v8200
          %v8244 = vunpack.c.h.bf16 %v8200
          %v8245 = vunpack.c.l.bf16 %v8201
          %v8246 = vunpack.c.h.bf16 %v8201
          %v8247 = vunpack.c.l.bf16 %v8202
          %v8248 = vunpack.c.h.bf16 %v8202
          %v8249 = vunpack.c.l.bf16 %v8203
          %v8250 = vunpack.c.h.bf16 %v8203
          %v8251 = vunpack.c.l.bf16 %v8204
          %v8252 = vunpack.c.h.bf16 %v8204
          %v8253 = vunpack.c.l.bf16 %v8205
          %v8254 = vunpack.c.h.bf16 %v8205
          %v8255 = vunpack.c.l.bf16 %v8206
          %v8256 = vunpack.c.h.bf16 %v8206
          %v8257 = vunpack.c.l.bf16 %v8207
          %v8258 = vunpack.c.h.bf16 %v8207
          %v8259 = vunpack.c.l.bf16 %v8208
          %v8260 = vunpack.c.h.bf16 %v8208
          %v8261 = vunpack.c.l.bf16 %v8209
          %v8262 = vunpack.c.h.bf16 %v8209
          %v8263 = vunpack.c.l.bf16 %v8210
          %v8264 = vunpack.c.h.bf16 %v8210
          %v8265 = vunpack.c.l.bf16 %v8211
          %v8266 = vunpack.c.h.bf16 %v8211
          %v8267 = vunpack.c.l.bf16 %v8212
          %v8268 = vunpack.c.h.bf16 %v8212
          %v8269 = vunpack.c.l.bf16 %v8213
          %v8270 = vunpack.c.h.bf16 %v8213
          %v8271 = vunpack.c.l.bf16 %v8214
          %v8272 = vunpack.c.h.bf16 %v8214
          %v8273 = vunpack.c.l.bf16 %v8215
          %v8274 = vunpack.c.h.bf16 %v8215
          %v8275 = vunpack.c.l.bf16 %v8216
          %v8276 = vunpack.c.h.bf16 %v8216
          %v8277 = vunpack.c.l.bf16 %v8217
          %v8278 = vunpack.c.h.bf16 %v8217
          %v8279 = vunpack.c.l.bf16 %v8218
          %v8280 = vunpack.c.h.bf16 %v8218
          %v8281 = vunpack.c.l.bf16 %v8219
          %v8282 = vunpack.c.h.bf16 %v8219
          %v8283 = vunpack.c.l.bf16 %v8220
          %v8284 = vunpack.c.h.bf16 %v8220
          %v8285 = vcombine.high %v6454, %v6455
          %v8286 = vcombine.high %v6466, %v6467
          %v8287 = vrot.slane %v8057, 5
          %v8288 = vrot.slane %v8287, 4
          %v8289 = vrot.slane %v8285, 5
          %v8290 = vsel %vm6695, %v8288, %v8289
          %v8291 = vrot.slane %v8058, 5
          %v8292 = vrot.slane %v8291, 4
          %v8293 = vrot.slane %v8286, 5
          %v8294 = vsel %vm6695, %v8292, %v8293
          %v8295 = vcombine.low %v7572, %v8290
          %v8296 = vcombine.high %v7572, %v8290
          %v8297 = vcombine.low %v7576, %v8294
          %v8298 = vcombine.high %v7576, %v8294
          %8303 = vmatprep.subr.mxu0 %v8222
          %8304 = vmatpush1.msra.mxu0 %v8221
          %8305 = vmatprep.subr.mxu0 %v8224
          %8306 = vmatpush1.msra.mxu0 %v8223
          %8307 = vmatprep.subr.mxu0 %v8226
          %8308 = vmatpush1.msra.mxu0 %v8225
          %8309 = vmatprep.subr.mxu0 %v8228
          %8310 = vmatpush1.msra.mxu0 %v8227
          %8311 = vmatprep.subr.mxu0 %v8230
          %8312 = vmatpush1.msra.mxu0 %v8229
          %8313 = vmatprep.subr.mxu0 %v8232
          %8314 = vmatpush1.msra.mxu0 %v8231
          %8315 = vmatprep.subr.mxu0 %v8234
          %8316 = vmatpush1.msra.mxu0 %v8233
          %8317 = vmatprep.subr.mxu0 %v8236
          %8318 = vmatpush1.msra.mxu0 %v8235
          %8319 = vmatprep.subr.mxu0 %v8238
          %8320 = vmatpush1.msra.mxu0 %v8237
          %8321 = vmatprep.subr.mxu0 %v8240
          %8322 = vmatpush1.msra.mxu0 %v8239
          %8323 = vmatprep.subr.mxu0 %v8242
          %8324 = vmatpush1.msra.mxu0 %v8241
          %8325 = vmatprep.subr.mxu0 %v8244
          %8326 = vmatpush1.msra.mxu0 %v8243
          %8327 = vmatprep.subr.mxu0 %v8246
          %8328 = vmatpush1.msra.mxu0 %v8245
          %8329 = vmatprep.subr.mxu0 %v8248
          %8330 = vmatpush1.msra.mxu0 %v8247
          %8331 = vmatprep.subr.mxu0 %v8250
          %8332 = vmatpush1.msra.mxu0 %v8249
          %8333 = vmatprep.subr.mxu0 %v8252
          %8334 = vmatpush1.msra.mxu0 %v8251
          %8335 = vmatprep.subr.mxu0 %v8254
          %8336 = vmatpush1.msra.mxu0 %v8253
          %8337 = vmatprep.subr.mxu0 %v8256
          %8338 = vmatpush1.msra.mxu0 %v8255
          %8339 = vmatprep.subr.mxu0 %v8258
          %8340 = vmatpush1.msra.mxu0 %v8257
          %8341 = vmatprep.subr.mxu0 %v8260
          %8342 = vmatpush1.msra.mxu0 %v8259
          %8343 = vmatprep.subr.mxu0 %v8262
          %8344 = vmatpush1.msra.mxu0 %v8261
          %8345 = vmatprep.subr.mxu0 %v8264
          %8346 = vmatpush1.msra.mxu0 %v8263
          %8347 = vmatprep.subr.mxu0 %v8266
          %8348 = vmatpush1.msra.mxu0 %v8265
          %8349 = vmatprep.subr.mxu0 %v8268
          %8350 = vmatpush1.msra.mxu0 %v8267
          %8351 = vmatprep.subr.mxu0 %v8270
          %8352 = vmatpush1.msra.mxu0 %v8269
          %8353 = vmatprep.subr.mxu0 %v8272
          %8354 = vmatpush1.msra.mxu0 %v8271
          %8355 = vmatprep.subr.mxu0 %v8274
          %8356 = vmatpush1.msra.mxu0 %v8273
          %8357 = vmatprep.subr.mxu0 %v8276
          %8358 = vmatpush1.msra.mxu0 %v8275
          %8359 = vmatprep.subr.mxu0 %v8278
          %8360 = vmatpush1.msra.mxu0 %v8277
          %8361 = vmatprep.subr.mxu0 %v8280
          %8362 = vmatpush1.msra.mxu0 %v8279
          %8363 = vmatprep.subr.mxu0 %v8282
          %8364 = vmatpush1.msra.mxu0 %v8281
          %8365 = vmatprep.subr.mxu0 %v8284
          %8366 = vmatpush1.msra.mxu0 %v8283
          %8367 = vmatprep.mubr.f32.mxu0 %v6731
          %8368 = vmatmul.mubr.f32.gmra.mrb[0].mxu0 %v6730
          %v8369 = vpop.f32.mrb[0].mxu0
          %v8370 = vadd.f32 0.0, %v8369
          %v8371 = vpop.f32.mrb[0].mxu0
          %v8372 = vadd.f32 0.0, %v8371
          %8373 = vmatprep.mubr.f32.mxu0 %v8296
          %8374 = vmatmul.mubr.f32.gmra.mrb[0].mxu0 %v8295
          %v8375 = vpop.f32.mrb[0].mxu0
          %v8376 = vadd.f32 0.0, %v8375
          %v8377 = vpop.f32.mrb[0].mxu0
          %v8378 = vadd.f32 0.0, %v8377
          %8379 = vmatprep.mubr.f32.mxu0 %v6735
          %8380 = vmatmul.mubr.f32.gmra.mrb[0].mxu0 %v6734
          %v8381 = vpop.f32.mrb[0].mxu0
          %v8382 = vadd.f32 0.0, %v8381
          %v8383 = vpop.f32.mrb[0].mxu0
          %v8384 = vadd.f32 0.0, %v8383
          %8385 = vmatprep.mubr.f32.mxu0 %v8298
          %8386 = vmatmul.mubr.f32.gmra.mrb[0].mxu0 %v8297
          %v8387 = vpop.f32.mrb[0].mxu0
          %v8388 = vadd.f32 0.0, %v8387
          %v8389 = vpop.f32.mrb[0].mxu0
          %v8390 = vadd.f32 0.0, %v8389
          %8391 = vdwg.mxu0
          %v8400 = vcombine.low %v8370, %v8372
          %v8401 = vcombine.high %v8370, %v8372
          %v8402 = vcombine.low %v8376, %v8378
          %v8403 = vcombine.high %v8376, %v8378
          %v8404 = vcombine.low %v8382, %v8384
          %v8405 = vcombine.high %v8382, %v8384
          %v8406 = vcombine.low %v8388, %v8390
          %v8407 = vcombine.high %v8388, %v8390
          %v8416 = vadd.f32 %v8180, %v8400
          %v8417 = vadd.f32 %v8181, %v8401
          %v8418 = vadd.f32 %v8182, %v8402
          %v8419 = vadd.f32 %v8183, %v8403
          %v8420 = vadd.f32 %v8184, %v8404
          %v8421 = vadd.f32 %v8185, %v8405
          %v8422 = vadd.f32 %v8186, %v8406
          %v8423 = vadd.f32 %v8187, %v8407
          %s8424 = scalar_lea.vmem [#allocation8], 2048
          %v8425 = vld [vmem:[%s8424] sm:$0xff]
          %v8426 = vld [vmem:[%s8424 + $0x8] sm:$0xff]
          %v8427 = vld [vmem:[%s8424 + $0x10] sm:$0xff]
          %v8428 = vld [vmem:[%s8424 + $0x18] sm:$0xff]
          %v8429 = vld [vmem:[%s8424 + $0x20] sm:$0xff]
          %v8430 = vld [vmem:[%s8424 + $0x28] sm:$0xff]
          %v8431 = vld [vmem:[%s8424 + $0x30] sm:$0xff]
          %v8432 = vld [vmem:[%s8424 + $0x38] sm:$0xff]
          %v8433 = vld [vmem:[%s8424 + $0x40] sm:$0xff]
          %v8434 = vld [vmem:[%s8424 + $0x48] sm:$0xff]
          %v8435 = vld [vmem:[%s8424 + $0x50] sm:$0xff]
          %v8436 = vld [vmem:[%s8424 + $0x58] sm:$0xff]
          %v8437 = vld [vmem:[%s8424 + $0x60] sm:$0xff]
          %v8438 = vld [vmem:[%s8424 + $0x68] sm:$0xff]
          %v8439 = vld [vmem:[%s8424 + $0x70] sm:$0xff]
          %v8440 = vld [vmem:[%s8424 + $0x78] sm:$0xff]
          %v8441 = vld [vmem:[%s8424 + $0x80] sm:$0xff]
          %v8442 = vld [vmem:[%s8424 + $0x88] sm:$0xff]
          %v8443 = vld [vmem:[%s8424 + $0x90] sm:$0xff]
          %v8444 = vld [vmem:[%s8424 + $0x98] sm:$0xff]
          %v8445 = vld [vmem:[%s8424 + $0xa0] sm:$0xff]
          %v8446 = vld [vmem:[%s8424 + $0xa8] sm:$0xff]
          %v8447 = vld [vmem:[%s8424 + $0xb0] sm:$0xff]
          %v8448 = vld [vmem:[%s8424 + $0xb8] sm:$0xff]
          %v8449 = vld [vmem:[%s8424 + $0xc0] sm:$0xff]
          %v8450 = vld [vmem:[%s8424 + $0xc8] sm:$0xff]
          %v8451 = vld [vmem:[%s8424 + $0xd0] sm:$0xff]
          %v8452 = vld [vmem:[%s8424 + $0xd8] sm:$0xff]
          %v8453 = vld [vmem:[%s8424 + $0xe0] sm:$0xff]
          %v8454 = vld [vmem:[%s8424 + $0xe8] sm:$0xff]
          %v8455 = vld [vmem:[%s8424 + $0xf0] sm:$0xff]
          %v8456 = vld [vmem:[%s8424 + $0xf8] sm:$0xff]
          %v8457 = vunpack.c.l.bf16 %v8425
          %v8458 = vunpack.c.h.bf16 %v8425
          %v8459 = vunpack.c.l.bf16 %v8426
          %v8460 = vunpack.c.h.bf16 %v8426
          %v8461 = vunpack.c.l.bf16 %v8427
          %v8462 = vunpack.c.h.bf16 %v8427
          %v8463 = vunpack.c.l.bf16 %v8428
          %v8464 = vunpack.c.h.bf16 %v8428
          %v8465 = vunpack.c.l.bf16 %v8429
          %v8466 = vunpack.c.h.bf16 %v8429
          %v8467 = vunpack.c.l.bf16 %v8430
          %v8468 = vunpack.c.h.bf16 %v8430
          %v8469 = vunpack.c.l.bf16 %v8431
          %v8470 = vunpack.c.h.bf16 %v8431
          %v8471 = vunpack.c.l.bf16 %v8432
          %v8472 = vunpack.c.h.bf16 %v8432
          %v8473 = vunpack.c.l.bf16 %v8433
          %v8474 = vunpack.c.h.bf16 %v8433
          %v8475 = vunpack.c.l.bf16 %v8434
          %v8476 = vunpack.c.h.bf16 %v8434
          %v8477 = vunpack.c.l.bf16 %v8435
          %v8478 = vunpack.c.h.bf16 %v8435
          %v8479 = vunpack.c.l.bf16 %v8436
          %v8480 = vunpack.c.h.bf16 %v8436
          %v8481 = vunpack.c.l.bf16 %v8437
          %v8482 = vunpack.c.h.bf16 %v8437
          %v8483 = vunpack.c.l.bf16 %v8438
          %v8484 = vunpack.c.h.bf16 %v8438
          %v8485 = vunpack.c.l.bf16 %v8439
          %v8486 = vunpack.c.h.bf16 %v8439
          %v8487 = vunpack.c.l.bf16 %v8440
          %v8488 = vunpack.c.h.bf16 %v8440
          %v8489 = vunpack.c.l.bf16 %v8441
          %v8490 = vunpack.c.h.bf16 %v8441
          %v8491 = vunpack.c.l.bf16 %v8442
          %v8492 = vunpack.c.h.bf16 %v8442
          %v8493 = vunpack.c.l.bf16 %v8443
          %v8494 = vunpack.c.h.bf16 %v8443
          %v8495 = vunpack.c.l.bf16 %v8444
          %v8496 = vunpack.c.h.bf16 %v8444
          %v8497 = vunpack.c.l.bf16 %v8445
          %v8498 = vunpack.c.h.bf16 %v8445
          %v8499 = vunpack.c.l.bf16 %v8446
          %v8500 = vunpack.c.h.bf16 %v8446
          %v8501 = vunpack.c.l.bf16 %v8447
          %v8502 = vunpack.c.h.bf16 %v8447
          %v8503 = vunpack.c.l.bf16 %v8448
          %v8504 = vunpack.c.h.bf16 %v8448
          %v8505 = vunpack.c.l.bf16 %v8449
          %v8506 = vunpack.c.h.bf16 %v8449
          %v8507 = vunpack.c.l.bf16 %v8450
          %v8508 = vunpack.c.h.bf16 %v8450
          %v8509 = vunpack.c.l.bf16 %v8451
          %v8510 = vunpack.c.h.bf16 %v8451
          %v8511 = vunpack.c.l.bf16 %v8452
          %v8512 = vunpack.c.h.bf16 %v8452
          %v8513 = vunpack.c.l.bf16 %v8453
          %v8514 = vunpack.c.h.bf16 %v8453
          %v8515 = vunpack.c.l.bf16 %v8454
          %v8516 = vunpack.c.h.bf16 %v8454
          %v8517 = vunpack.c.l.bf16 %v8455
          %v8518 = vunpack.c.h.bf16 %v8455
          %v8519 = vunpack.c.l.bf16 %v8456
          %v8520 = vunpack.c.h.bf16 %v8456
          %v8521 = vrot.slane %v8057, 6
          %v8522 = vrot.slane %v8521, 4
          %v8523 = vrot.slane %v8285, 6
          %v8524 = vsel %vm7060, %v8522, %v8523
          %v8525 = vrot.slane %v8058, 6
          %v8526 = vrot.slane %v8525, 4
          %v8527 = vrot.slane %v8286, 6
          %v8528 = vsel %vm7060, %v8526, %v8527
          %v8529 = vcombine.low %v7814, %v8524
          %v8530 = vcombine.high %v7814, %v8524
          %v8531 = vcombine.low %v7818, %v8528
          %v8532 = vcombine.high %v7818, %v8528
          %8537 = vmatprep.subr.mxu0 %v8458
          %8538 = vmatpush1.msra.mxu0 %v8457
          %8539 = vmatprep.subr.mxu0 %v8460
          %8540 = vmatpush1.msra.mxu0 %v8459
          %8541 = vmatprep.subr.mxu0 %v8462
          %8542 = vmatpush1.msra.mxu0 %v8461
          %8543 = vmatprep.subr.mxu0 %v8464
          %8544 = vmatpush1.msra.mxu0 %v8463
          %8545 = vmatprep.subr.mxu0 %v8466
          %8546 = vmatpush1.msra.mxu0 %v8465
          %8547 = vmatprep.subr.mxu0 %v8468
          %8548 = vmatpush1.msra.mxu0 %v8467
          %8549 = vmatprep.subr.mxu0 %v8470
          %8550 = vmatpush1.msra.mxu0 %v8469
          %8551 = vmatprep.subr.mxu0 %v8472
          %8552 = vmatpush1.msra.mxu0 %v8471
          %8553 = vmatprep.subr.mxu0 %v8474
          %8554 = vmatpush1.msra.mxu0 %v8473
          %8555 = vmatprep.subr.mxu0 %v8476
          %8556 = vmatpush1.msra.mxu0 %v8475
          %8557 = vmatprep.subr.mxu0 %v8478
          %8558 = vmatpush1.msra.mxu0 %v8477
          %8559 = vmatprep.subr.mxu0 %v8480
          %8560 = vmatpush1.msra.mxu0 %v8479
          %8561 = vmatprep.subr.mxu0 %v8482
          %8562 = vmatpush1.msra.mxu0 %v8481
          %8563 = vmatprep.subr.mxu0 %v8484
          %8564 = vmatpush1.msra.mxu0 %v8483
          %8565 = vmatprep.subr.mxu0 %v8486
          %8566 = vmatpush1.msra.mxu0 %v8485
          %8567 = vmatprep.subr.mxu0 %v8488
          %8568 = vmatpush1.msra.mxu0 %v8487
          %8569 = vmatprep.subr.mxu0 %v8490
          %8570 = vmatpush1.msra.mxu0 %v8489
          %8571 = vmatprep.subr.mxu0 %v8492
          %8572 = vmatpush1.msra.mxu0 %v8491
          %8573 = vmatprep.subr.mxu0 %v8494
          %8574 = vmatpush1.msra.mxu0 %v8493
          %8575 = vmatprep.subr.mxu0 %v8496
          %8576 = vmatpush1.msra.mxu0 %v8495
          %8577 = vmatprep.subr.mxu0 %v8498
          %8578 = vmatpush1.msra.mxu0 %v8497
          %8579 = vmatprep.subr.mxu0 %v8500
          %8580 = vmatpush1.msra.mxu0 %v8499
          %8581 = vmatprep.subr.mxu0 %v8502
          %8582 = vmatpush1.msra.mxu0 %v8501
          %8583 = vmatprep.subr.mxu0 %v8504
          %8584 = vmatpush1.msra.mxu0 %v8503
          %8585 = vmatprep.subr.mxu0 %v8506
          %8586 = vmatpush1.msra.mxu0 %v8505
          %8587 = vmatprep.subr.mxu0 %v8508
          %8588 = vmatpush1.msra.mxu0 %v8507
          %8589 = vmatprep.subr.mxu0 %v8510
          %8590 = vmatpush1.msra.mxu0 %v8509
          %8591 = vmatprep.subr.mxu0 %v8512
          %8592 = vmatpush1.msra.mxu0 %v8511
          %8593 = vmatprep.subr.mxu0 %v8514
          %8594 = vmatpush1.msra.mxu0 %v8513
          %8595 = vmatprep.subr.mxu0 %v8516
          %8596 = vmatpush1.msra.mxu0 %v8515
          %8597 = vmatprep.subr.mxu0 %v8518
          %8598 = vmatpush1.msra.mxu0 %v8517
          %8599 = vmatprep.subr.mxu0 %v8520
          %8600 = vmatpush1.msra.mxu0 %v8519
          %8601 = vmatprep.mubr.f32.mxu0 %v7096
          %8602 = vmatmul.mubr.f32.gmra.mrb[0].mxu0 %v7095
          %v8603 = vpop.f32.mrb[0].mxu0
          %v8604 = vadd.f32 0.0, %v8603
          %v8605 = vpop.f32.mrb[0].mxu0
          %v8606 = vadd.f32 0.0, %v8605
          %8607 = vmatprep.mubr.f32.mxu0 %v8530
          %8608 = vmatmul.mubr.f32.gmra.mrb[0].mxu0 %v8529
          %v8609 = vpop.f32.mrb[0].mxu0
          %v8610 = vadd.f32 0.0, %v8609
          %v8611 = vpop.f32.mrb[0].mxu0
          %v8612 = vadd.f32 0.0, %v8611
          %8613 = vmatprep.mubr.f32.mxu0 %v7100
          %8614 = vmatmul.mubr.f32.gmra.mrb[0].mxu0 %v7099
          %v8615 = vpop.f32.mrb[0].mxu0
          %v8616 = vadd.f32 0.0, %v8615
          %v8617 = vpop.f32.mrb[0].mxu0
          %v8618 = vadd.f32 0.0, %v8617
          %8619 = vmatprep.mubr.f32.mxu0 %v8532
          %8620 = vmatmul.mubr.f32.gmra.mrb[0].mxu0 %v8531
          %v8621 = vpop.f32.mrb[0].mxu0
          %v8622 = vadd.f32 0.0, %v8621
          %v8623 = vpop.f32.mrb[0].mxu0
          %v8624 = vadd.f32 0.0, %v8623
          %8625 = vdwg.mxu0
          %v8634 = vcombine.low %v8604, %v8606
          %v8635 = vcombine.high %v8604, %v8606
          %v8636 = vcombine.low %v8610, %v8612
          %v8637 = vcombine.high %v8610, %v8612
          %v8638 = vcombine.low %v8616, %v8618
          %v8639 = vcombine.high %v8616, %v8618
          %v8640 = vcombine.low %v8622, %v8624
          %v8641 = vcombine.high %v8622, %v8624
          %v8650 = vadd.f32 %v8416, %v8634
          %v8651 = vadd.f32 %v8417, %v8635
          %v8652 = vadd.f32 %v8418, %v8636
          %v8653 = vadd.f32 %v8419, %v8637
          %v8654 = vadd.f32 %v8420, %v8638
          %v8655 = vadd.f32 %v8421, %v8639
          %v8656 = vadd.f32 %v8422, %v8640
          %v8657 = vadd.f32 %v8423, %v8641
          %v8658 = vld [vmem:[#allocation10] sm:$0x3]
          %v8660 = vlaneseq
          %v8661 = vshrl.u32 %v8660, 7
          %v8662 = vsub.s32 0, %v8661
          %v8663 = vrot.slane %v8658, %v8662
          %v8664 = vlaneseq
          %v8665 = vshrl.u32 %v8664, 7
          %v8666 = vsub.s32 1, %v8665
          %v8667 = vrot.slane %v8658, %v8666
          %v8668 = vcombine.low %v8663, %v8667
          %v8670 = vadd.f32 %v8650, %v8668
          %v8671 = vadd.f32 %v8651, %v8668
          %v8672 = vadd.f32 %v8652, %v8668
          %v8673 = vadd.f32 %v8653, %v8668
          %v8674 = vadd.f32 %v8654, %v8668
          %v8675 = vadd.f32 %v8655, %v8668
          %v8676 = vadd.f32 %v8656, %v8668
          %v8677 = vadd.f32 %v8657, %v8668
          %vm8678 = vcmp.ge.f32.partialorder %v8670, 0.0
          %vm8679 = vcmp.ge.f32.partialorder %v8671, 0.0
          %vm8680 = vcmp.ge.f32.partialorder %v8672, 0.0
          %vm8681 = vcmp.ge.f32.partialorder %v8673, 0.0
          %vm8682 = vcmp.ge.f32.partialorder %v8674, 0.0
          %vm8683 = vcmp.ge.f32.partialorder %v8675, 0.0
          %vm8684 = vcmp.ge.f32.partialorder %v8676, 0.0
          %vm8685 = vcmp.ge.f32.partialorder %v8677, 0.0
          %v8686 = vmul.f32 %v8670, 0.2
          %v8687 = vmul.f32 %v8671, 0.2
          %v8688 = vmul.f32 %v8672, 0.2
          %v8689 = vmul.f32 %v8673, 0.2
          %v8690 = vmul.f32 %v8674, 0.2
          %v8691 = vmul.f32 %v8675, 0.2
          %v8692 = vmul.f32 %v8676, 0.2
          %v8693 = vmul.f32 %v8677, 0.2
          %v8694 = vsel %vm8678, %v8670, %v8686
          %v8695 = vsel %vm8679, %v8671, %v8687
          %v8696 = vsel %vm8680, %v8672, %v8688
          %v8697 = vsel %vm8681, %v8673, %v8689
          %v8698 = vsel %vm8682, %v8674, %v8690
          %v8699 = vsel %vm8683, %v8675, %v8691
          %v8700 = vsel %vm8684, %v8676, %v8692
          %v8701 = vsel %vm8685, %v8677, %v8693
          %v8702 = vmul.f32 %v8694, %v8694
          %v8703 = vmul.f32 %v8695, %v8695
          %v8704 = vmul.f32 %v8696, %v8696
          %v8705 = vmul.f32 %v8697, %v8697
          %v8706 = vmul.f32 %v8698, %v8698
          %v8707 = vmul.f32 %v8699, %v8699
          %v8708 = vmul.f32 %v8700, %v8700
          %v8709 = vmul.f32 %v8701, %v8701
          %v8718 = vcombine.high %v8702, %v8702
          %v8719 = vcombine.high %v8703, %v8703
          %v8720 = vcombine.high %v8704, %v8704
          %v8721 = vcombine.high %v8705, %v8705
          %v8722 = vcombine.high %v8706, %v8706
          %v8723 = vcombine.high %v8707, %v8707
          %v8724 = vcombine.high %v8708, %v8708
          %v8725 = vcombine.high %v8709, %v8709
          %vm8734 = vcmask 1043456
          %v8735 = vsel %vm8734, %v8702, 0.0
          %v8736 = vsel %vm8734, %v8718, 0.0
          %v8737 = vadd.f32 %v8735, %v8736
          %8738 = vadd.xlane.f32.xlu0 %v8737
          %v8739 = vpop.xlane.xlu0 %8738
          %v8740 = vsel %vm8734, %v8703, 0.0
          %v8741 = vsel %vm8734, %v8719, 0.0
          %v8742 = vadd.f32 %v8740, %v8741
          %8743 = vadd.xlane.f32.xlu0 %v8742
          %v8744 = vpop.xlane.xlu0 %8743
          %v8745 = vsel %vm8734, %v8704, 0.0
          %v8746 = vsel %vm8734, %v8720, 0.0
          %v8747 = vadd.f32 %v8745, %v8746
          %8748 = vadd.xlane.f32.xlu0 %v8747
          %v8749 = vpop.xlane.xlu0 %8748
          %v8750 = vsel %vm8734, %v8705, 0.0
          %v8751 = vsel %vm8734, %v8721, 0.0
          %v8752 = vadd.f32 %v8750, %v8751
          %8753 = vadd.xlane.f32.xlu0 %v8752
          %v8754 = vpop.xlane.xlu0 %8753
          %v8755 = vsel %vm8734, %v8706, 0.0
          %v8756 = vsel %vm8734, %v8722, 0.0
          %v8757 = vadd.f32 %v8755, %v8756
          %8758 = vadd.xlane.f32.xlu0 %v8757
          %v8759 = vpop.xlane.xlu0 %8758
          %v8760 = vsel %vm8734, %v8707, 0.0
          %v8761 = vsel %vm8734, %v8723, 0.0
          %v8762 = vadd.f32 %v8760, %v8761
          %8763 = vadd.xlane.f32.xlu0 %v8762
          %v8764 = vpop.xlane.xlu0 %8763
          %v8765 = vsel %vm8734, %v8708, 0.0
          %v8766 = vsel %vm8734, %v8724, 0.0
          %v8767 = vadd.f32 %v8765, %v8766
          %8768 = vadd.xlane.f32.xlu0 %v8767
          %v8769 = vpop.xlane.xlu0 %8768
          %v8770 = vsel %vm8734, %v8709, 0.0
          %v8771 = vsel %vm8734, %v8725, 0.0
          %v8772 = vadd.f32 %v8770, %v8771
          %8773 = vadd.xlane.f32.xlu0 %v8772
          %v8774 = vpop.xlane.xlu0 %8773
          %v8775 = vmul.f32 %v8739, %v6407
          %v8776 = vmul.f32 %v8744, %v6407
          %v8777 = vmul.f32 %v8749, %v6407
          %v8778 = vmul.f32 %v8754, %v6407
          %v8779 = vmul.f32 %v8759, %v6407
          %v8780 = vmul.f32 %v8764, %v6407
          %v8781 = vmul.f32 %v8769, %v6407
          %v8782 = vmul.f32 %v8774, %v6407
          %v8783 = vadd.f32 %v8775, 1e-08
          %v8784 = vadd.f32 %v8776, 1e-08
          %v8785 = vadd.f32 %v8777, 1e-08
          %v8786 = vadd.f32 %v8778, 1e-08
          %v8787 = vadd.f32 %v8779, 1e-08
          %v8788 = vadd.f32 %v8780, 1e-08
          %v8789 = vadd.f32 %v8781, 1e-08
          %v8790 = vadd.f32 %v8782, 1e-08
          %v8791 = vrsqrt.pop %v8783
          %v8792 = vrsqrt.pop %v8784
          %v8793 = vrsqrt.pop %v8785
          %v8794 = vrsqrt.pop %v8786
          %v8795 = vrsqrt.pop %v8787
          %v8796 = vrsqrt.pop %v8788
          %v8797 = vrsqrt.pop %v8789
          %v8798 = vrsqrt.pop %v8790
          %v8808 = vunpack.c.l.s4 839922192
          %v8809 = vunpack.c.0.s8 %v8808
          %v8810 = vlaneseq
          %v8811 = vshrl.u32 %v8810, 7
          %v8812 = vsub.s32 %v8809, %v8811
          %v8813 = vrot.slane %v8791, %v8812
          %v8815 = vunpack.c.l.s4 839922192
          %v8816 = vunpack.c.0.s8 %v8815
          %v8817 = vlaneseq
          %v8818 = vshrl.u32 %v8817, 7
          %v8819 = vsub.s32 %v8816, %v8818
          %v8820 = vrot.slane %v8792, %v8819
          %v8822 = vunpack.c.l.s4 839922192
          %v8823 = vunpack.c.0.s8 %v8822
          %v8824 = vlaneseq
          %v8825 = vshrl.u32 %v8824, 7
          %v8826 = vsub.s32 %v8823, %v8825
          %v8827 = vrot.slane %v8793, %v8826
          %v8829 = vunpack.c.l.s4 839922192
          %v8830 = vunpack.c.0.s8 %v8829
          %v8831 = vlaneseq
          %v8832 = vshrl.u32 %v8831, 7
          %v8833 = vsub.s32 %v8830, %v8832
          %v8834 = vrot.slane %v8794, %v8833
          %v8836 = vunpack.c.l.s4 839922192
          %v8837 = vunpack.c.0.s8 %v8836
          %v8838 = vlaneseq
          %v8839 = vshrl.u32 %v8838, 7
          %v8840 = vsub.s32 %v8837, %v8839
          %v8841 = vrot.slane %v8795, %v8840
          %v8843 = vunpack.c.l.s4 839922192
          %v8844 = vunpack.c.0.s8 %v8843
          %v8845 = vlaneseq
          %v8846 = vshrl.u32 %v8845, 7
          %v8847 = vsub.s32 %v8844, %v8846
          %v8848 = vrot.slane %v8796, %v8847
          %v8850 = vunpack.c.l.s4 839922192
          %v8851 = vunpack.c.0.s8 %v8850
          %v8852 = vlaneseq
          %v8853 = vshrl.u32 %v8852, 7
          %v8854 = vsub.s32 %v8851, %v8853
          %v8855 = vrot.slane %v8797, %v8854
          %v8857 = vunpack.c.l.s4 839922192
          %v8858 = vunpack.c.0.s8 %v8857
          %v8859 = vlaneseq
          %v8860 = vshrl.u32 %v8859, 7
          %v8861 = vsub.s32 %v8858, %v8860
          %v8862 = vrot.slane %v8798, %v8861
          %v8871 = vmul.f32 %v8694, %v8813
          %v8872 = vmul.f32 %v8695, %v8820
          %v8873 = vmul.f32 %v8696, %v8827
          %v8874 = vmul.f32 %v8697, %v8834
          %v8875 = vmul.f32 %v8698, %v8841
          %v8876 = vmul.f32 %v8699, %v8848
          %v8877 = vmul.f32 %v8700, %v8855
          %v8878 = vmul.f32 %v8701, %v8862
          %v8879 = vld [vmem:[#allocation11] sm:$0xf]
          %v8880 = vld [vmem:[#allocation11 + $0x4] sm:$0xf]
          %v8881 = vld [vmem:[#allocation11 + $0x8] sm:$0xf]
          %v8882 = vld [vmem:[#allocation11 + $0xc] sm:$0xf]
          %v8883 = vld [vmem:[#allocation11 + $0x10] sm:$0xf]
          %v8884 = vld [vmem:[#allocation11 + $0x14] sm:$0xf]
          %v8885 = vld [vmem:[#allocation11 + $0x18] sm:$0xf]
          %v8886 = vld [vmem:[#allocation11 + $0x1c] sm:$0xf]
          %v8887 = vld [vmem:[#allocation11 + $0x20] sm:$0xf]
          %v8888 = vld [vmem:[#allocation11 + $0x24] sm:$0xf]
          %v8889 = vld [vmem:[#allocation11 + $0x28] sm:$0xf]
          %v8890 = vld [vmem:[#allocation11 + $0x2c] sm:$0xf]
          %v8891 = vld [vmem:[#allocation11 + $0x30] sm:$0xf]
          %v8892 = vld [vmem:[#allocation11 + $0x34] sm:$0xf]
          %v8893 = vld [vmem:[#allocation11 + $0x38] sm:$0xf]
          %v8894 = vld [vmem:[#allocation11 + $0x3c] sm:$0xf]
          %v8895 = vld [vmem:[#allocation11 + $0x40] sm:$0xf]
          %v8896 = vld [vmem:[#allocation11 + $0x44] sm:$0xf]
          %v8897 = vld [vmem:[#allocation11 + $0x48] sm:$0xf]
          %v8898 = vld [vmem:[#allocation11 + $0x4c] sm:$0xf]
          %v8899 = vld [vmem:[#allocation11 + $0x50] sm:$0xf]
          %v8900 = vld [vmem:[#allocation11 + $0x54] sm:$0xf]
          %v8901 = vld [vmem:[#allocation11 + $0x58] sm:$0xf]
          %v8902 = vld [vmem:[#allocation11 + $0x5c] sm:$0xf]
          %v8903 = vld [vmem:[#allocation11 + $0x60] sm:$0xf]
          %v8904 = vld [vmem:[#allocation11 + $0x64] sm:$0xf]
          %v8905 = vld [vmem:[#allocation11 + $0x68] sm:$0xf]
          %v8906 = vld [vmem:[#allocation11 + $0x6c] sm:$0xf]
          %v8907 = vld [vmem:[#allocation11 + $0x70] sm:$0xf]
          %v8908 = vld [vmem:[#allocation11 + $0x74] sm:$0xf]
          %v8909 = vld [vmem:[#allocation11 + $0x78] sm:$0xf]
          %v8910 = vld [vmem:[#allocation11 + $0x7c] sm:$0xf]
          %v8911 = vunpack.c.l.bf16 %v8879
          %v8912 = vunpack.c.l.bf16 %v8880
          %v8913 = vunpack.c.l.bf16 %v8881
          %v8914 = vunpack.c.l.bf16 %v8882
          %v8915 = vunpack.c.l.bf16 %v8883
          %v8916 = vunpack.c.l.bf16 %v8884
          %v8917 = vunpack.c.l.bf16 %v8885
          %v8918 = vunpack.c.l.bf16 %v8886
          %v8919 = vunpack.c.l.bf16 %v8887
          %v8920 = vunpack.c.l.bf16 %v8888
          %v8921 = vunpack.c.l.bf16 %v8889
          %v8922 = vunpack.c.l.bf16 %v8890
          %v8923 = vunpack.c.l.bf16 %v8891
          %v8924 = vunpack.c.l.bf16 %v8892
          %v8925 = vunpack.c.l.bf16 %v8893
          %v8926 = vunpack.c.l.bf16 %v8894
          %v8927 = vunpack.c.l.bf16 %v8895
          %v8928 = vunpack.c.l.bf16 %v8896
          %v8929 = vunpack.c.l.bf16 %v8897
          %v8930 = vunpack.c.l.bf16 %v8898
          %v8931 = vunpack.c.l.bf16 %v8899
          %v8932 = vunpack.c.l.bf16 %v8900
          %v8933 = vunpack.c.l.bf16 %v8901
          %v8934 = vunpack.c.l.bf16 %v8902
          %v8935 = vunpack.c.l.bf16 %v8903
          %v8936 = vunpack.c.l.bf16 %v8904
          %v8937 = vunpack.c.l.bf16 %v8905
          %v8938 = vunpack.c.l.bf16 %v8906
          %v8939 = vunpack.c.l.bf16 %v8907
          %v8940 = vunpack.c.l.bf16 %v8908
          %v8941 = vunpack.c.l.bf16 %v8909
          %v8942 = vunpack.c.l.bf16 %v8910
          %v8943 = vld [vmem:[#allocation13] sm:$0x1]
          %v8945 = vlaneseq
          %v8946 = vshrl.u32 %v8945, 7
          %v8947 = vsub.s32 0, %v8946
          %v8948 = vrot.slane %v8943, %v8947
          %v8957 = vcombine.low %v8871, %v8872
          %v8958 = vcombine.high %v8871, %v8872
          %v8959 = vcombine.low %v8873, %v8874
          %v8960 = vcombine.high %v8873, %v8874
          %v8961 = vcombine.low %v8875, %v8876
          %v8962 = vcombine.high %v8875, %v8876
          %v8963 = vcombine.low %v8877, %v8878
          %v8964 = vcombine.high %v8877, %v8878
          %v8973 = vcombine.low %v8948, %v8948
          %8975 = vmatprep.subr.mxu0 0.0
          %8976 = vmatpush1.msra.mxu0 %v8911
          %8977 = vmatprep.subr.mxu0 0.0
          %8978 = vmatpush1.msra.mxu0 %v8912
          %8979 = vmatprep.subr.mxu0 0.0
          %8980 = vmatpush1.msra.mxu0 %v8913
          %8981 = vmatprep.subr.mxu0 0.0
          %8982 = vmatpush1.msra.mxu0 %v8914
          %8983 = vmatprep.subr.mxu0 0.0
          %8984 = vmatpush1.msra.mxu0 %v8915
          %8985 = vmatprep.subr.mxu0 0.0
          %8986 = vmatpush1.msra.mxu0 %v8916
          %8987 = vmatprep.subr.mxu0 0.0
          %8988 = vmatpush1.msra.mxu0 %v8917
          %8989 = vmatprep.subr.mxu0 0.0
          %8990 = vmatpush1.msra.mxu0 %v8918
          %8991 = vmatprep.subr.mxu0 0.0
          %8992 = vmatpush1.msra.mxu0 %v8919
          %8993 = vmatprep.subr.mxu0 0.0
          %8994 = vmatpush1.msra.mxu0 %v8920
          %8995 = vmatprep.subr.mxu0 0.0
          %8996 = vmatpush1.msra.mxu0 %v8921
          %8997 = vmatprep.subr.mxu0 0.0
          %8998 = vmatpush1.msra.mxu0 %v8922
          %8999 = vmatprep.subr.mxu0 0.0
          %9000 = vmatpush1.msra.mxu0 %v8923
          %9001 = vmatprep.subr.mxu0 0.0
          %9002 = vmatpush1.msra.mxu0 %v8924
          %9003 = vmatprep.subr.mxu0 0.0
          %9004 = vmatpush1.msra.mxu0 %v8925
          %9005 = vmatprep.subr.mxu0 0.0
          %9006 = vmatpush1.msra.mxu0 %v8926
          %9007 = vmatprep.subr.mxu0 0.0
          %9008 = vmatpush1.msra.mxu0 %v8927
          %9009 = vmatprep.subr.mxu0 0.0
          %9010 = vmatpush1.msra.mxu0 %v8928
          %9011 = vmatprep.subr.mxu0 0.0
          %9012 = vmatpush1.msra.mxu0 %v8929
          %9013 = vmatprep.subr.mxu0 0.0
          %9014 = vmatpush1.msra.mxu0 %v8930
          %9015 = vmatprep.subr.mxu0 0.0
          %9016 = vmatpush1.msra.mxu0 %v8931
          %9017 = vmatprep.subr.mxu0 0.0
          %9018 = vmatpush1.msra.mxu0 %v8932
          %9019 = vmatprep.subr.mxu0 0.0
          %9020 = vmatpush1.msra.mxu0 %v8933
          %9021 = vmatprep.subr.mxu0 0.0
          %9022 = vmatpush1.msra.mxu0 %v8934
          %9023 = vmatprep.subr.mxu0 0.0
          %9024 = vmatpush1.msra.mxu0 %v8935
          %9025 = vmatprep.subr.mxu0 0.0
          %9026 = vmatpush1.msra.mxu0 %v8936
          %9027 = vmatprep.subr.mxu0 0.0
          %9028 = vmatpush1.msra.mxu0 %v8937
          %9029 = vmatprep.subr.mxu0 0.0
          %9030 = vmatpush1.msra.mxu0 %v8938
          %9031 = vmatprep.subr.mxu0 0.0
          %9032 = vmatpush1.msra.mxu0 %v8939
          %9033 = vmatprep.subr.mxu0 0.0
          %9034 = vmatpush1.msra.mxu0 %v8940
          %9035 = vmatprep.subr.mxu0 0.0
          %9036 = vmatpush1.msra.mxu0 %v8941
          %9037 = vmatprep.subr.mxu0 0.0
          %9038 = vmatpush1.msra.mxu0 %v8942
          %9039 = vmatprep.mubr.f32.mxu0 %v8958
          %9040 = vmatmul.mubr.f32.gmra.mrb[0].mxu0 %v8957
          %v9041 = vpop.f32.mrb[0].mxu0
          %v9042 = vadd.f32 %v8973, %v9041
          %v9043 = vpop.f32.mrb[0].mxu0
          %9044 = vmatprep.mubr.f32.mxu0 %v8960
          %9045 = vmatmul.mubr.f32.gmra.mrb[0].mxu0 %v8959
          %v9046 = vpop.f32.mrb[0].mxu0
          %v9047 = vadd.f32 %v8973, %v9046
          %v9048 = vpop.f32.mrb[0].mxu0
          %9049 = vmatprep.mubr.f32.mxu0 %v8962
          %9050 = vmatmul.mubr.f32.gmra.mrb[0].mxu0 %v8961
          %v9051 = vpop.f32.mrb[0].mxu0
          %v9052 = vadd.f32 %v8973, %v9051
          %v9053 = vpop.f32.mrb[0].mxu0
          %9054 = vmatprep.mubr.f32.mxu0 %v8964
          %9055 = vmatmul.mubr.f32.gmra.mrb[0].mxu0 %v8963
          %v9056 = vpop.f32.mrb[0].mxu0
          %v9057 = vadd.f32 %v8973, %v9056
          %v9058 = vpop.f32.mrb[0].mxu0
          %9059 = vdwg.mxu0
          %v9064 = vcombine.high %v9042, %v9042
          %v9065 = vcombine.high %v9047, %v9047
          %v9066 = vcombine.high %v9052, %v9052
          %v9067 = vcombine.high %v9057, %v9057
          %9072 = vst [vmem:[%s7] sm:$0xf] %v9042
          %9073 = vst [vmem:[%s7 + $0x4] sm:$0xf] %v9064
          %9074 = vst [vmem:[%s7 + $0x8] sm:$0xf] %v9047
          %9075 = vst [vmem:[%s7 + $0xc] sm:$0xf] %v9065
          %9076 = vst [vmem:[%s7 + $0x10] sm:$0xf] %v9052
          %9077 = vst [vmem:[%s7 + $0x14] sm:$0xf] %v9066
          %9078 = vst [vmem:[%s7 + $0x18] sm:$0xf] %v9057
          %9079 = vst [vmem:[%s7 + $0x1c] sm:$0xf] %v9067
        $region84: #{generator_forward.1} parent=47 // pred_fallthru
          _
        // Predicated region
        $region85: #{generator_forward.1} parent=47 // pred_check
          %p9080 = pneg %p194
        $region86: #{generator_forward.1} parent=47 // pred_check_branch
          %9082 = sbr.rel (%p9080) target = $region88
        $region87: #{generator_forward.1} parent=47 // pred_region
          _
        $region88: #{generator_forward.1} parent=47 // pred_fallthru
          _
        // Predicated region
        $region89: #{generator_forward.1} parent=47 // pred_check
          %p9083 = pneg %p194
        $region90: #{generator_forward.1} parent=47 // pred_check_branch
          %9085 = sbr.rel (%p9083) target = $region92
        $region91: #{generator_forward.1} parent=47 // pred_region
          _
        $region92: #{generator_forward.1} parent=47 // pred_fallthru
          _
      $region48: #{generator_forward.1} parent=5 // pred_fallthru
        _
      %p9086 = scmp.le.s32.totalorder 2, %s19
      // Predicated region
      $region93: #{generator_forward.1} parent=5 // pred_check
        %p9087 = pneg %p9086
      $region94: #{generator_forward.1} parent=5 // pred_check_branch
        %9089 = sbr.rel (%p9087) target = $region96
      $region95: #{generator_forward.1} parent=5 // pred_region
        %s9090 = ssub.s32 %s19, 2
      $region96: #{generator_forward.1} parent=5 // pred_fallthru
        _
    $region6: #{generator_forward.1} parent=1 // loop_footer
      %s23 = sadd.s32 1, %s19
    $region7: #{generator_forward.1} parent=1 // loop_footer_branch
      %18 = sbr.rel target = $region3
    $region8: #{generator_forward.1} parent=1 // loop_exit
      _
    %9091 = vsyncpa [#allocation4], 1
    %s9092 = scalar_lea.sflag [#allocation4], 1
    %9093 = vsyncpa %s9092, 1
    %9094 = vsyncpa [#allocation6], 1
    %s9095 = scalar_lea.sflag [#allocation6], 1
    %9096 = vsyncpa %s9095, 1
    %9097 = vsyncpa [#allocation9], 1
    %9098 = vsyncpa [#allocation12], 1

</llo_original>
